<compile_context>
chip_gen: v7x
topology: tpu7x:2x2x1
jax: 0.10.0
libtpu: 0.0.40
codegen_flags: <defaults>
</compile_context>

<pallas_src>
import math
import functools

import jax
import jax.numpy as jnp
from jax.experimental import pallas as pl
from jax.experimental.pallas import tpu as pltpu


# ----------------------------------------------------------------------------
# In-kernel helpers
# ----------------------------------------------------------------------------
def _split_heads(t2d, num_head, cdt):
    """(n, H*dh) -> (H, n, dh) via static lane slices + leading-axis stack."""
    n, d = t2d.shape
    dh = d // num_head
    parts = [t2d[:, h * dh:(h + 1) * dh] for h in range(num_head)]
    return jnp.stack(parts, axis=0).astype(cdt)


def _merge_heads(t3d):
    """(H, n, dh) -> (n, H*dh) via leading index + lane concat."""
    num_head = t3d.shape[0]
    return jnp.concatenate([t3d[h] for h in range(num_head)], axis=-1)


def _mha(x_q, x_kv, wq, wk, wv, wo, num_head, key_mask, cdt):
    """Multi-head self-attention: head-batched softmax, ONE Wo matmul."""
    f32 = jnp.float32
    q = jnp.dot(x_q, wq, preferred_element_type=f32)          # (tq, D)
    k = jnp.dot(x_kv, wk, preferred_element_type=f32)         # (tk, D)
    v = jnp.dot(x_kv, wv, preferred_element_type=f32)         # (tk, D)
    d = wo.shape[0]
    dh = d // num_head
    qh = _split_heads(q, num_head, cdt)                       # (H, tq, dh)
    kh = _split_heads(k, num_head, cdt)                       # (H, tk, dh)
    vh = _split_heads(v, num_head, cdt)                       # (H, tk, dh)
    sc = jnp.einsum("hqd,hkd->hqk", qh, kh,
                    preferred_element_type=f32) * (1.0 / math.sqrt(dh))
    if key_mask is not None:
        sc = jnp.where(key_mask, sc, -1e30)                   # f32 scores
    sc = sc - jnp.max(sc, axis=-1, keepdims=True)
    p = jnp.exp(sc)
    p = p * pl.reciprocal(jnp.sum(p, axis=-1, keepdims=True), approx=True)
    ctx = jnp.einsum("hqk,hkd->hqd", p.astype(cdt), vh,
                     preferred_element_type=f32)              # (H, tq, dh)
    ctx = _merge_heads(ctx).astype(cdt)                       # (tq, D)
    return jnp.dot(ctx, wo, preferred_element_type=f32)       # (tq, F)


# ----------------------------------------------------------------------------
# Fused kernel: one batch row per grid step
# ----------------------------------------------------------------------------
def _multi_attention_kernel(
        x_ref, wq_g_ref, wk_g_ref, wv_g_ref, wo_g_ref,
        wq_l_ref, wk_l_ref, wv_l_ref, wo_l_ref, wfc_ref, bfc_ref, o_ref, *,
        t_valid, num_segments, seg, num_head_global, num_head_local,
        compute_dtype):
    f32 = jnp.float32
    cdt = compute_dtype

    x = x_ref[0]                                  # (t_pad, F), compute dtype
    t_pad = x.shape[0]
    wfc = wfc_ref[...]                            # (F, F), compute dtype
    bfc = bfc_ref[...].astype(f32)                # (1, F)

    # ---- global attention over the full (padded) sequence.
    g_mask = None
    if t_valid < t_pad:                           # static: only when padded
        g_mask = (jax.lax.broadcasted_iota(jnp.int32, (1, 1, t_pad), 2)
                  < t_valid)
    glob = _mha(x, x, wq_g_ref[...], wk_g_ref[...], wv_g_ref[...],
                wo_g_ref[...], num_head_global, g_mask, cdt)   # (t_pad, F)

    # ---- per-segment local attention (distinct weights per segment).
    loc_parts = []
    for s in range(num_segments):                 # static segment loop
        xs = x[s * seg:(s + 1) * seg, :]          # (seg, F) static slice
        valid = min(max(t_valid - s * seg, 0), seg)
        l_mask = None
        if 0 < valid < seg:
            l_mask = (jax.lax.broadcasted_iota(jnp.int32, (1, 1, seg), 2)
                      < valid)
        loc_parts.append(
            _mha(xs, xs, wq_l_ref[s], wk_l_ref[s], wv_l_ref[s], wo_l_ref[s],
                 num_head_local, l_mask, cdt))
    loc = jnp.concatenate(loc_parts, axis=0)      # (t_pad, F)

    # ---- shared fc = Linear(F, F) + ReLU applied to both streams.
    g_fc = jnp.maximum(
        jnp.dot(glob.astype(cdt), wfc, preferred_element_type=f32) + bfc, 0.0)
    l_fc = jnp.maximum(
        jnp.dot(loc.astype(cdt), wfc, preferred_element_type=f32) + bfc, 0.0)

    # ---- F.normalize(p=2, dim=-1) on both streams, then add (rsqrt -> EUP).
    eps2 = 1e-24                                  # (torch eps 1e-12)^2
    gn = g_fc * jax.lax.rsqrt(
        jnp.maximum(jnp.sum(g_fc * g_fc, axis=-1, keepdims=True), eps2))
    ln = l_fc * jax.lax.rsqrt(
        jnp.maximum(jnp.sum(l_fc * l_fc, axis=-1, keepdims=True), eps2))

    o_ref[0] = (gn + ln).astype(o_ref.dtype)


# ----------------------------------------------------------------------------
# Wrapper
# ----------------------------------------------------------------------------
def multi_attention_forward(x, params, num_segments=5,
                            compute_dtype=jnp.float32):
    """JAX/Pallas equivalent of MultiAttention.forward (single fused launch)."""
    B, T, F = x.shape
    S = num_segments
    seg = math.ceil(T / S)
    t_pad = seg * S
    out_dtype = x.dtype
    cdt = compute_dtype

    x_pad = x if t_pad == T else jnp.pad(x, ((0, 0), (0, t_pad - T), (0, 0)))
    # Pre-cast operands to the MXU compute dtype in the wrapper (halves weight
    # DMA bytes for bf16 and removes per-step in-kernel casts).  Bias stays f32.
    x_c = x_pad.astype(cdt)
    wq_g, wk_g, wv_g, wo_g = (w.astype(cdt) for w in params["global"])
    wq_l, wk_l, wv_l, wo_l = (w.astype(cdt) for w in params["local"])
    wfc, bfc = params["fc"]
    wfc = wfc.astype(cdt)
    bfc = bfc.astype(jnp.float32)
    hg, hl = params["num_head"], params["local_head"]
    d_g = wo_g.shape[0]
    d_l = wo_l.shape[2]
    isz = jnp.dtype(cdt).itemsize

    kernel = functools.partial(
        _multi_attention_kernel, t_valid=T, num_segments=S, seg=seg,
        num_head_global=hg, num_head_local=hl, compute_dtype=cdt)

    flops = 2 * B * (
        3 * t_pad * F * d_g            # global Q/K/V projections
        + 2 * t_pad * t_pad * d_g      # global scores + AV
        + t_pad * d_g * F              # global output projection
        + 3 * t_pad * F * d_l          # local Q/K/V projections (all segments)
        + 2 * S * seg * seg * d_l      # local scores + AV
        + t_pad * d_l * F              # local output projections
        + 2 * t_pad * F * F)           # shared fc (both streams)
    transcendentals = B * (hg * t_pad * t_pad + S * hl * seg * seg
                           + hg * t_pad + S * hl * seg + 2 * t_pad)
    weight_bytes = isz * (wq_g.size + wk_g.size + wv_g.size + wo_g.size
                          + wq_l.size + wk_l.size + wv_l.size + wo_l.size
                          + wfc.size) + 4 * bfc.size
    bytes_accessed = (B * t_pad * F * (isz + jnp.dtype(out_dtype).itemsize)
                      + weight_bytes)

    out = pl.pallas_call(
        kernel,
        out_shape=jax.ShapeDtypeStruct((B, t_pad, F), out_dtype),
        grid=(B,),
        in_specs=[
            pl.BlockSpec((1, t_pad, F), lambda b: (b, 0, 0)),   # x (one row)
            pl.BlockSpec((F, d_g), lambda b: (0, 0)),           # Wq_g
            pl.BlockSpec((F, d_g), lambda b: (0, 0)),           # Wk_g
            pl.BlockSpec((F, d_g), lambda b: (0, 0)),           # Wv_g
            pl.BlockSpec((d_g, F), lambda b: (0, 0)),           # Wo_g
            pl.BlockSpec((S, F, d_l), lambda b: (0, 0, 0)),     # Wq_l (stacked)
            pl.BlockSpec((S, F, d_l), lambda b: (0, 0, 0)),     # Wk_l
            pl.BlockSpec((S, F, d_l), lambda b: (0, 0, 0)),     # Wv_l
            pl.BlockSpec((S, d_l, F), lambda b: (0, 0, 0)),     # Wo_l
            pl.BlockSpec((F, F), lambda b: (0, 0)),             # Wfc
            pl.BlockSpec((1, F), lambda b: (0, 0)),             # bfc
        ],
        out_specs=pl.BlockSpec((1, t_pad, F), lambda b: (b, 0, 0)),
        compiler_params=pltpu.CompilerParams(
            dimension_semantics=("parallel",),
            vmem_limit_bytes=64 * 1024 * 1024),
        cost_estimate=pl.CostEstimate(
            flops=flops, transcendentals=transcendentals,
            bytes_accessed=bytes_accessed),
    )(x_c, wq_g, wk_g, wv_g, wo_g, wq_l, wk_l, wv_l, wo_l, wfc, bfc)

    return out[:, :T, :]


# ----------------------------------------------------------------------------
# Deterministic parameter construction
# ----------------------------------------------------------------------------
def init_attention_params(key, num_feature, num_head):
    dh = num_feature // num_head
    d = num_head * dh
    kq, kk, kv, ko = jax.random.split(key, 4)
    scale = 1.0 / math.sqrt(num_feature)
    wq = jax.random.normal(kq, (num_feature, d), jnp.float32) * scale
    wk = jax.random.normal(kk, (num_feature, d), jnp.float32) * scale
    wv = jax.random.normal(kv, (num_feature, d), jnp.float32) * scale
    wo = jax.random.normal(ko, (d, num_feature), jnp.float32) * scale
    return wq, wk, wv, wo


def init_fc_params(key, num_feature):
    k1, k2 = jax.random.split(key)
    scale = 1.0 / math.sqrt(num_feature)
    wfc = jax.random.normal(k1, (num_feature, num_feature), jnp.float32) * scale
    bfc = jax.random.normal(k2, (1, num_feature), jnp.float32) * scale
    return wfc, bfc


def init_multi_attention(key, num_feature, num_segments, num_head, local_head):
    keys = jax.random.split(key, num_segments + 2)
    global_w = init_attention_params(keys[0], num_feature, num_head)
    wfc, bfc = init_fc_params(keys[1], num_feature)
    wq_l, wk_l, wv_l, wo_l = [], [], [], []
    for s in range(num_segments):
        wq, wk, wv, wo = init_attention_params(keys[2 + s], num_feature,
                                               local_head)
        wq_l.append(wq); wk_l.append(wk); wv_l.append(wv); wo_l.append(wo)
    return {
        "global": global_w,
        "fc": (wfc, bfc),
        "local": (jnp.stack(wq_l), jnp.stack(wk_l),
                  jnp.stack(wv_l), jnp.stack(wo_l)),
        "num_head": num_head,
        "local_head": local_head,
    }


# ----------------------------------------------------------------------------
# Pure-JAX reference (mirrors the PyTorch module)
# ----------------------------------------------------------------------------
def _ref_attention(xq, xkv, wq, wk, wv, wo, num_head):
    d = wo.shape[0]
    dh = d // num_head
    B, tq, _ = xq.shape
    tk = xkv.shape[1]
    q = (xq @ wq).reshape(B, tq, num_head, dh)
    k = (xkv @ wk).reshape(B, tk, num_head, dh)
    v = (xkv @ wv).reshape(B, tk, num_head, dh)
    s = jnp.einsum("bqhd,bkhd->bhqk", q, k) / math.sqrt(dh)
    p = jax.nn.softmax(s, axis=-1)
    o = jnp.einsum("bhqk,bkhd->bqhd", p, v).reshape(B, tq, d)
    return o @ wo


def _ref_forward(x, params, num_segments=5):
    wq_g, wk_g, wv_g, wo_g = params["global"]
    wq_l, wk_l, wv_l, wo_l = params["local"]
    wfc, bfc = params["fc"]
    hg, hl = params["num_head"], params["local_head"]

    def fc(z):
        return jnp.maximum(z @ wfc + bfc, 0.0)

    weighted = fc(_ref_attention(x, x, wq_g, wk_g, wv_g, wo_g, hg))
    T = x.shape[1]
    seg = math.ceil(T / num_segments)
    pieces = []
    for s in range(num_segments):
        left, right = s * seg, min((s + 1) * seg, T)
        if left >= right:
            continue
        lx = x[:, left:right, :]
        wl = fc(_ref_attention(lx, lx, wq_l[s], wk_l[s], wv_l[s], wo_l[s], hl))
        g = weighted[:, left:right, :]
        gn = g / jnp.maximum(jnp.linalg.norm(g, axis=-1, keepdims=True), 1e-12)
        ln = wl / jnp.maximum(jnp.linalg.norm(wl, axis=-1, keepdims=True), 1e-12)
        pieces.append(gn + ln)
    return jnp.concatenate(pieces, axis=1)


# ----------------------------------------------------------------------------
if __name__ == "__main__":
    B, T, NUM_FEATURE = 2, 20, 128       # F=128 -> lane-dense output stores
    NUM_SEGMENTS, NUM_HEAD, LOCAL_HEAD = 5, 8, 4

    key = jax.random.PRNGKey(0)
    k_x, k_p, k_x2 = jax.random.split(key, 3)
    params = init_multi_attention(k_p, NUM_FEATURE, NUM_SEGMENTS, NUM_HEAD,
                                  LOCAL_HEAD)

    # --- primary check: f32 operands, T divisible by num_segments -----------
    x = jax.random.normal(k_x, (B, T, NUM_FEATURE), jnp.float32)
    out = jax.block_until_ready(
        multi_attention_forward(x, params, num_segments=NUM_SEGMENTS))
    ref = _ref_forward(x, params, num_segments=NUM_SEGMENTS)
    assert out.shape == (B, T, NUM_FEATURE)
    # slightly loose rtol: softmax denom uses the EUP approximate reciprocal
    assert jnp.allclose(out, ref, atol=2e-3, rtol=1e-2)

    # --- ragged sequence length (last segment shorter, exercises masking) ---
    T2 = 18
    x2 = jax.random.normal(k_x2, (B, T2, NUM_FEATURE), jnp.float32)
    out2 = jax.block_until_ready(
        multi_attention_forward(x2, params, num_segments=NUM_SEGMENTS))
    ref2 = _ref_forward(x2, params, num_segments=NUM_SEGMENTS)
    assert out2.shape == (B, T2, NUM_FEATURE)
    assert jnp.allclose(out2, ref2, atol=2e-3, rtol=1e-2)

    # --- bf16 MXU operands (v6e/v7x fast path), f32 accumulation ------------
    out_bf16 = jax.block_until_ready(
        multi_attention_forward(x, params, num_segments=NUM_SEGMENTS,
                                compute_dtype=jnp.bfloat16))
    assert jnp.allclose(out_bf16, ref, atol=5e-2, rtol=5e-2)

    print("KERNEL_OK")
</pallas_src>

<mosaic_0001>
module attributes {stable_mosaic.version = 11 : i64} {
  func.func @_multi_attention_kernel(%arg0: i32, %arg1: memref<1x20x128xf32, #tpu.memory_space<vmem>>, %arg2: memref<128x128xf32, #tpu.memory_space<vmem>>, %arg3: memref<128x128xf32, #tpu.memory_space<vmem>>, %arg4: memref<128x128xf32, #tpu.memory_space<vmem>>, %arg5: memref<128x128xf32, #tpu.memory_space<vmem>>, %arg6: memref<5x128x128xf32, #tpu.memory_space<vmem>>, %arg7: memref<5x128x128xf32, #tpu.memory_space<vmem>>, %arg8: memref<5x128x128xf32, #tpu.memory_space<vmem>>, %arg9: memref<5x128x128xf32, #tpu.memory_space<vmem>>, %arg10: memref<128x128xf32, #tpu.memory_space<vmem>>, %arg11: memref<1x128xf32, #tpu.memory_space<vmem>>, %arg12: memref<1x20x128xf32, #tpu.memory_space<vmem>>) attributes {dimension_semantics = [#tpu.dimension_semantics<parallel>], iteration_bounds = array<i64: 2>, scalar_prefetch = 0 : i64, scratch_operands = 0 : i64, tpu.core_type = #tpu.core_type<tc>, window_params = [{transform_indices = @transform_0, window_bounds = array<i64: 1, 20, 128>}, {pipeline_mode = #tpu.pipeline_mode<synchronous>, transform_indices = @transform_1, window_bounds = array<i64: 128, 128>}, {pipeline_mode = #tpu.pipeline_mode<synchronous>, transform_indices = @transform_2, window_bounds = array<i64: 128, 128>}, {pipeline_mode = #tpu.pipeline_mode<synchronous>, transform_indices = @transform_3, window_bounds = array<i64: 128, 128>}, {pipeline_mode = #tpu.pipeline_mode<synchronous>, transform_indices = @transform_4, window_bounds = array<i64: 128, 128>}, {pipeline_mode = #tpu.pipeline_mode<synchronous>, transform_indices = @transform_5, window_bounds = array<i64: 5, 128, 128>}, {pipeline_mode = #tpu.pipeline_mode<synchronous>, transform_indices = @transform_6, window_bounds = array<i64: 5, 128, 128>}, {pipeline_mode = #tpu.pipeline_mode<synchronous>, transform_indices = @transform_7, window_bounds = array<i64: 5, 128, 128>}, {pipeline_mode = #tpu.pipeline_mode<synchronous>, transform_indices = @transform_8, window_bounds = array<i64: 5, 128, 128>}, {pipeline_mode = #tpu.pipeline_mode<synchronous>, transform_indices = @transform_9, window_bounds = array<i64: 128, 128>}, {pipeline_mode = #tpu.pipeline_mode<synchronous>, transform_indices = @transform_10, window_bounds = array<i64: 1, 128>}, {transform_indices = @transform_11, window_bounds = array<i64: 1, 20, 128>}]} {
    %c0 = arith.constant 0 : index
    %c0_0 = arith.constant 0 : index
    %c0_1 = arith.constant 0 : index
    %0 = vector.load %arg1[%c0, %c0_0, %c0_1] : memref<1x20x128xf32, #tpu.memory_space<vmem>>, vector<1x20x128xf32>
    %1 = vector.shape_cast %0 : vector<1x20x128xf32> to vector<20x128xf32>
    %c0_2 = arith.constant 0 : index
    %c0_3 = arith.constant 0 : index
    %2 = vector.load %arg10[%c0_2, %c0_3] : memref<128x128xf32, #tpu.memory_space<vmem>>, vector<128x128xf32>
    %c0_4 = arith.constant 0 : index
    %c0_5 = arith.constant 0 : index
    %3 = vector.load %arg11[%c0_4, %c0_5] : memref<1x128xf32, #tpu.memory_space<vmem>>, vector<1x128xf32>
    %c0_6 = arith.constant 0 : index
    %c0_7 = arith.constant 0 : index
    %4 = vector.load %arg2[%c0_6, %c0_7] : memref<128x128xf32, #tpu.memory_space<vmem>>, vector<128x128xf32>
    %c0_8 = arith.constant 0 : index
    %c0_9 = arith.constant 0 : index
    %5 = vector.load %arg3[%c0_8, %c0_9] : memref<128x128xf32, #tpu.memory_space<vmem>>, vector<128x128xf32>
    %c0_10 = arith.constant 0 : index
    %c0_11 = arith.constant 0 : index
    %6 = vector.load %arg4[%c0_10, %c0_11] : memref<128x128xf32, #tpu.memory_space<vmem>>, vector<128x128xf32>
    %c0_12 = arith.constant 0 : index
    %c0_13 = arith.constant 0 : index
    %7 = vector.load %arg5[%c0_12, %c0_13] : memref<128x128xf32, #tpu.memory_space<vmem>>, vector<128x128xf32>
    %cst = arith.constant dense<0.000000e+00> : vector<20x128xf32>
    %8 = tpu.matmul %1, %4, %cst {dimension_numbers = #tpu.dot_dimension_numbers<[1], [0], [0], [1], [0, 0, 1, 1], [], []>} : vector<20x128xf32>, vector<128x128xf32>, vector<20x128xf32> -> vector<20x128xf32>
    %cst_14 = arith.constant dense<0.000000e+00> : vector<20x128xf32>
    %9 = tpu.matmul %1, %5, %cst_14 {dimension_numbers = #tpu.dot_dimension_numbers<[1], [0], [0], [1], [0, 0, 1, 1], [], []>} : vector<20x128xf32>, vector<128x128xf32>, vector<20x128xf32> -> vector<20x128xf32>
    %cst_15 = arith.constant dense<0.000000e+00> : vector<20x128xf32>
    %10 = tpu.matmul %1, %6, %cst_15 {dimension_numbers = #tpu.dot_dimension_numbers<[1], [0], [0], [1], [0, 0, 1, 1], [], []>} : vector<20x128xf32>, vector<128x128xf32>, vector<20x128xf32> -> vector<20x128xf32>
    %11 = vector.extract_strided_slice %8 {offsets = [0, 0], sizes = [20, 16], strides = [1, 1]} : vector<20x128xf32> to vector<20x16xf32>
    %12 = vector.extract_strided_slice %8 {offsets = [0, 16], sizes = [20, 16], strides = [1, 1]} : vector<20x128xf32> to vector<20x16xf32>
    %13 = vector.extract_strided_slice %8 {offsets = [0, 32], sizes = [20, 16], strides = [1, 1]} : vector<20x128xf32> to vector<20x16xf32>
    %14 = vector.extract_strided_slice %8 {offsets = [0, 48], sizes = [20, 16], strides = [1, 1]} : vector<20x128xf32> to vector<20x16xf32>
    %15 = vector.extract_strided_slice %8 {offsets = [0, 64], sizes = [20, 16], strides = [1, 1]} : vector<20x128xf32> to vector<20x16xf32>
    %16 = vector.extract_strided_slice %8 {offsets = [0, 80], sizes = [20, 16], strides = [1, 1]} : vector<20x128xf32> to vector<20x16xf32>
    %17 = vector.extract_strided_slice %8 {offsets = [0, 96], sizes = [20, 16], strides = [1, 1]} : vector<20x128xf32> to vector<20x16xf32>
    %18 = vector.extract_strided_slice %8 {offsets = [0, 112], sizes = [20, 16], strides = [1, 1]} : vector<20x128xf32> to vector<20x16xf32>
    %19 = vector.shape_cast %11 : vector<20x16xf32> to vector<1x20x16xf32>
    %20 = vector.shape_cast %12 : vector<20x16xf32> to vector<1x20x16xf32>
    %21 = vector.shape_cast %13 : vector<20x16xf32> to vector<1x20x16xf32>
    %22 = vector.shape_cast %14 : vector<20x16xf32> to vector<1x20x16xf32>
    %23 = vector.shape_cast %15 : vector<20x16xf32> to vector<1x20x16xf32>
    %24 = vector.shape_cast %16 : vector<20x16xf32> to vector<1x20x16xf32>
    %25 = vector.shape_cast %17 : vector<20x16xf32> to vector<1x20x16xf32>
    %26 = vector.shape_cast %18 : vector<20x16xf32> to vector<1x20x16xf32>
    %27 = tpu.concatenate %19, %20, %21, %22, %23, %24, %25, %26 in 0 : vector<1x20x16xf32>, vector<1x20x16xf32>, vector<1x20x16xf32>, vector<1x20x16xf32>, vector<1x20x16xf32>, vector<1x20x16xf32>, vector<1x20x16xf32>, vector<1x20x16xf32> -> vector<8x20x16xf32>
    %28 = vector.extract_strided_slice %9 {offsets = [0, 0], sizes = [20, 16], strides = [1, 1]} : vector<20x128xf32> to vector<20x16xf32>
    %29 = vector.extract_strided_slice %9 {offsets = [0, 16], sizes = [20, 16], strides = [1, 1]} : vector<20x128xf32> to vector<20x16xf32>
    %30 = vector.extract_strided_slice %9 {offsets = [0, 32], sizes = [20, 16], strides = [1, 1]} : vector<20x128xf32> to vector<20x16xf32>
    %31 = vector.extract_strided_slice %9 {offsets = [0, 48], sizes = [20, 16], strides = [1, 1]} : vector<20x128xf32> to vector<20x16xf32>
    %32 = vector.extract_strided_slice %9 {offsets = [0, 64], sizes = [20, 16], strides = [1, 1]} : vector<20x128xf32> to vector<20x16xf32>
    %33 = vector.extract_strided_slice %9 {offsets = [0, 80], sizes = [20, 16], strides = [1, 1]} : vector<20x128xf32> to vector<20x16xf32>
    %34 = vector.extract_strided_slice %9 {offsets = [0, 96], sizes = [20, 16], strides = [1, 1]} : vector<20x128xf32> to vector<20x16xf32>
    %35 = vector.extract_strided_slice %9 {offsets = [0, 112], sizes = [20, 16], strides = [1, 1]} : vector<20x128xf32> to vector<20x16xf32>
    %36 = vector.shape_cast %28 : vector<20x16xf32> to vector<1x20x16xf32>
    %37 = vector.shape_cast %29 : vector<20x16xf32> to vector<1x20x16xf32>
    %38 = vector.shape_cast %30 : vector<20x16xf32> to vector<1x20x16xf32>
    %39 = vector.shape_cast %31 : vector<20x16xf32> to vector<1x20x16xf32>
    %40 = vector.shape_cast %32 : vector<20x16xf32> to vector<1x20x16xf32>
    %41 = vector.shape_cast %33 : vector<20x16xf32> to vector<1x20x16xf32>
    %42 = vector.shape_cast %34 : vector<20x16xf32> to vector<1x20x16xf32>
    %43 = vector.shape_cast %35 : vector<20x16xf32> to vector<1x20x16xf32>
    %44 = tpu.concatenate %36, %37, %38, %39, %40, %41, %42, %43 in 0 : vector<1x20x16xf32>, vector<1x20x16xf32>, vector<1x20x16xf32>, vector<1x20x16xf32>, vector<1x20x16xf32>, vector<1x20x16xf32>, vector<1x20x16xf32>, vector<1x20x16xf32> -> vector<8x20x16xf32>
    %45 = vector.extract_strided_slice %10 {offsets = [0, 0], sizes = [20, 16], strides = [1, 1]} : vector<20x128xf32> to vector<20x16xf32>
    %46 = vector.extract_strided_slice %10 {offsets = [0, 16], sizes = [20, 16], strides = [1, 1]} : vector<20x128xf32> to vector<20x16xf32>
    %47 = vector.extract_strided_slice %10 {offsets = [0, 32], sizes = [20, 16], strides = [1, 1]} : vector<20x128xf32> to vector<20x16xf32>
    %48 = vector.extract_strided_slice %10 {offsets = [0, 48], sizes = [20, 16], strides = [1, 1]} : vector<20x128xf32> to vector<20x16xf32>
    %49 = vector.extract_strided_slice %10 {offsets = [0, 64], sizes = [20, 16], strides = [1, 1]} : vector<20x128xf32> to vector<20x16xf32>
    %50 = vector.extract_strided_slice %10 {offsets = [0, 80], sizes = [20, 16], strides = [1, 1]} : vector<20x128xf32> to vector<20x16xf32>
    %51 = vector.extract_strided_slice %10 {offsets = [0, 96], sizes = [20, 16], strides = [1, 1]} : vector<20x128xf32> to vector<20x16xf32>
    %52 = vector.extract_strided_slice %10 {offsets = [0, 112], sizes = [20, 16], strides = [1, 1]} : vector<20x128xf32> to vector<20x16xf32>
    %53 = vector.shape_cast %45 : vector<20x16xf32> to vector<1x20x16xf32>
    %54 = vector.shape_cast %46 : vector<20x16xf32> to vector<1x20x16xf32>
    %55 = vector.shape_cast %47 : vector<20x16xf32> to vector<1x20x16xf32>
    %56 = vector.shape_cast %48 : vector<20x16xf32> to vector<1x20x16xf32>
    %57 = vector.shape_cast %49 : vector<20x16xf32> to vector<1x20x16xf32>
    %58 = vector.shape_cast %50 : vector<20x16xf32> to vector<1x20x16xf32>
    %59 = vector.shape_cast %51 : vector<20x16xf32> to vector<1x20x16xf32>
    %60 = vector.shape_cast %52 : vector<20x16xf32> to vector<1x20x16xf32>
    %61 = tpu.concatenate %53, %54, %55, %56, %57, %58, %59, %60 in 0 : vector<1x20x16xf32>, vector<1x20x16xf32>, vector<1x20x16xf32>, vector<1x20x16xf32>, vector<1x20x16xf32>, vector<1x20x16xf32>, vector<1x20x16xf32>, vector<1x20x16xf32> -> vector<8x20x16xf32>
    "tpu.trace_start"() <{level = 10 : i32, message = "hqd,hkd->hqk"}> : () -> ()
    %cst_16 = arith.constant dense<0.000000e+00> : vector<8x20x20xf32>
    %62 = tpu.matmul %27, %44, %cst_16 {dimension_numbers = #tpu.dot_dimension_numbers<[2], [2], [1], [1], [0, 0, 0, 1, 1, 1], [0], [0]>} : vector<8x20x16xf32>, vector<8x20x16xf32>, vector<8x20x20xf32> -> vector<8x20x20xf32>
    "tpu.trace_stop"() : () -> ()
    %cst_17 = arith.constant 2.500000e-01 : f32
    %63 = vector.broadcast %cst_17 : f32 to vector<8x20x20xf32>
    %64 = arith.mulf %62, %63 : vector<8x20x20xf32>
    %cst_18 = arith.constant dense<0xFF800000> : vector<8x20xf32>
    %65 = vector.multi_reduction <maximumf>, %64, %cst_18 [2] : vector<8x20x20xf32> to vector<8x20xf32>
    %66 = vector.shape_cast %65 : vector<8x20xf32> to vector<8x20x1xf32>
    %67 = vector.broadcast %66 : vector<8x20x1xf32> to vector<8x20x20xf32>
    %68 = arith.subf %64, %67 : vector<8x20x20xf32>
    %69 = math.exp %68 : vector<8x20x20xf32>
    %cst_19 = arith.constant dense<0.000000e+00> : vector<8x20xf32>
    %70 = vector.multi_reduction <add>, %69, %cst_19 [2] : vector<8x20x20xf32> to vector<8x20xf32>
    %71 = vector.shape_cast %70 : vector<8x20xf32> to vector<8x20x1xf32>
    %72 = tpu.reciprocal %71 {approx = true} : vector<8x20x1xf32> -> vector<8x20x1xf32>
    %73 = vector.broadcast %72 : vector<8x20x1xf32> to vector<8x20x20xf32>
    %74 = arith.mulf %69, %73 : vector<8x20x20xf32>
    "tpu.trace_start"() <{level = 10 : i32, message = "hqk,hkd->hqd"}> : () -> ()
    %cst_20 = arith.constant dense<0.000000e+00> : vector<8x20x16xf32>
    %75 = tpu.matmul %74, %61, %cst_20 {dimension_numbers = #tpu.dot_dimension_numbers<[2], [1], [1], [2], [0, 0, 0, 1, 1, 2], [0], [0]>} : vector<8x20x20xf32>, vector<8x20x16xf32>, vector<8x20x16xf32> -> vector<8x20x16xf32>
    "tpu.trace_stop"() : () -> ()
    %76 = vector.extract_strided_slice %75 {offsets = [0, 0, 0], sizes = [1, 20, 16], strides = [1, 1, 1]} : vector<8x20x16xf32> to vector<1x20x16xf32>
    %77 = vector.shape_cast %76 : vector<1x20x16xf32> to vector<20x16xf32>
    %78 = vector.extract_strided_slice %75 {offsets = [1, 0, 0], sizes = [1, 20, 16], strides = [1, 1, 1]} : vector<8x20x16xf32> to vector<1x20x16xf32>
    %79 = vector.shape_cast %78 : vector<1x20x16xf32> to vector<20x16xf32>
    %80 = vector.extract_strided_slice %75 {offsets = [2, 0, 0], sizes = [1, 20, 16], strides = [1, 1, 1]} : vector<8x20x16xf32> to vector<1x20x16xf32>
    %81 = vector.shape_cast %80 : vector<1x20x16xf32> to vector<20x16xf32>
    %82 = vector.extract_strided_slice %75 {offsets = [3, 0, 0], sizes = [1, 20, 16], strides = [1, 1, 1]} : vector<8x20x16xf32> to vector<1x20x16xf32>
    %83 = vector.shape_cast %82 : vector<1x20x16xf32> to vector<20x16xf32>
    %84 = vector.extract_strided_slice %75 {offsets = [4, 0, 0], sizes = [1, 20, 16], strides = [1, 1, 1]} : vector<8x20x16xf32> to vector<1x20x16xf32>
    %85 = vector.shape_cast %84 : vector<1x20x16xf32> to vector<20x16xf32>
    %86 = vector.extract_strided_slice %75 {offsets = [5, 0, 0], sizes = [1, 20, 16], strides = [1, 1, 1]} : vector<8x20x16xf32> to vector<1x20x16xf32>
    %87 = vector.shape_cast %86 : vector<1x20x16xf32> to vector<20x16xf32>
    %88 = vector.extract_strided_slice %75 {offsets = [6, 0, 0], sizes = [1, 20, 16], strides = [1, 1, 1]} : vector<8x20x16xf32> to vector<1x20x16xf32>
    %89 = vector.shape_cast %88 : vector<1x20x16xf32> to vector<20x16xf32>
    %90 = vector.extract_strided_slice %75 {offsets = [7, 0, 0], sizes = [1, 20, 16], strides = [1, 1, 1]} : vector<8x20x16xf32> to vector<1x20x16xf32>
    %91 = vector.shape_cast %90 : vector<1x20x16xf32> to vector<20x16xf32>
    %92 = tpu.concatenate %77, %79, %81, %83, %85, %87, %89, %91 in 1 : vector<20x16xf32>, vector<20x16xf32>, vector<20x16xf32>, vector<20x16xf32>, vector<20x16xf32>, vector<20x16xf32>, vector<20x16xf32>, vector<20x16xf32> -> vector<20x128xf32>
    %cst_21 = arith.constant dense<0.000000e+00> : vector<20x128xf32>
    %93 = tpu.matmul %92, %7, %cst_21 {dimension_numbers = #tpu.dot_dimension_numbers<[1], [0], [0], [1], [0, 0, 1, 1], [], []>} : vector<20x128xf32>, vector<128x128xf32>, vector<20x128xf32> -> vector<20x128xf32>
    %94 = vector.extract_strided_slice %1 {offsets = [0, 0], sizes = [4, 128], strides = [1, 1]} : vector<20x128xf32> to vector<4x128xf32>
    %c0_22 = arith.constant 0 : index
    %c0_23 = arith.constant 0 : index
    %c0_24 = arith.constant 0 : index
    %95 = vector.load %arg6[%c0_22, %c0_23, %c0_24] : memref<5x128x128xf32, #tpu.memory_space<vmem>>, vector<1x128x128xf32>
    %96 = vector.shape_cast %95 : vector<1x128x128xf32> to vector<128x128xf32>
    %c0_25 = arith.constant 0 : index
    %c0_26 = arith.constant 0 : index
    %c0_27 = arith.constant 0 : index
    %97 = vector.load %arg7[%c0_25, %c0_26, %c0_27] : memref<5x128x128xf32, #tpu.memory_space<vmem>>, vector<1x128x128xf32>
    %98 = vector.shape_cast %97 : vector<1x128x128xf32> to vector<128x128xf32>
    %c0_28 = arith.constant 0 : index
    %c0_29 = arith.constant 0 : index
    %c0_30 = arith.constant 0 : index
    %99 = vector.load %arg8[%c0_28, %c0_29, %c0_30] : memref<5x128x128xf32, #tpu.memory_space<vmem>>, vector<1x128x128xf32>
    %100 = vector.shape_cast %99 : vector<1x128x128xf32> to vector<128x128xf32>
    %c0_31 = arith.constant 0 : index
    %c0_32 = arith.constant 0 : index
    %c0_33 = arith.constant 0 : index
    %101 = vector.load %arg9[%c0_31, %c0_32, %c0_33] : memref<5x128x128xf32, #tpu.memory_space<vmem>>, vector<1x128x128xf32>
    %102 = vector.shape_cast %101 : vector<1x128x128xf32> to vector<128x128xf32>
    %cst_34 = arith.constant dense<0.000000e+00> : vector<4x128xf32>
    %103 = tpu.matmul %94, %96, %cst_34 {dimension_numbers = #tpu.dot_dimension_numbers<[1], [0], [0], [1], [0, 0, 1, 1], [], []>} : vector<4x128xf32>, vector<128x128xf32>, vector<4x128xf32> -> vector<4x128xf32>
    %cst_35 = arith.constant dense<0.000000e+00> : vector<4x128xf32>
    %104 = tpu.matmul %94, %98, %cst_35 {dimension_numbers = #tpu.dot_dimension_numbers<[1], [0], [0], [1], [0, 0, 1, 1], [], []>} : vector<4x128xf32>, vector<128x128xf32>, vector<4x128xf32> -> vector<4x128xf32>
    %cst_36 = arith.constant dense<0.000000e+00> : vector<4x128xf32>
    %105 = tpu.matmul %94, %100, %cst_36 {dimension_numbers = #tpu.dot_dimension_numbers<[1], [0], [0], [1], [0, 0, 1, 1], [], []>} : vector<4x128xf32>, vector<128x128xf32>, vector<4x128xf32> -> vector<4x128xf32>
    %106 = vector.extract_strided_slice %103 {offsets = [0, 0], sizes = [4, 32], strides = [1, 1]} : vector<4x128xf32> to vector<4x32xf32>
    %107 = vector.extract_strided_slice %103 {offsets = [0, 32], sizes = [4, 32], strides = [1, 1]} : vector<4x128xf32> to vector<4x32xf32>
    %108 = vector.extract_strided_slice %103 {offsets = [0, 64], sizes = [4, 32], strides = [1, 1]} : vector<4x128xf32> to vector<4x32xf32>
    %109 = vector.extract_strided_slice %103 {offsets = [0, 96], sizes = [4, 32], strides = [1, 1]} : vector<4x128xf32> to vector<4x32xf32>
    %110 = vector.shape_cast %106 : vector<4x32xf32> to vector<1x4x32xf32>
    %111 = vector.shape_cast %107 : vector<4x32xf32> to vector<1x4x32xf32>
    %112 = vector.shape_cast %108 : vector<4x32xf32> to vector<1x4x32xf32>
    %113 = vector.shape_cast %109 : vector<4x32xf32> to vector<1x4x32xf32>
    %114 = tpu.concatenate %110, %111, %112, %113 in 0 : vector<1x4x32xf32>, vector<1x4x32xf32>, vector<1x4x32xf32>, vector<1x4x32xf32> -> vector<4x4x32xf32>
    %115 = vector.extract_strided_slice %104 {offsets = [0, 0], sizes = [4, 32], strides = [1, 1]} : vector<4x128xf32> to vector<4x32xf32>
    %116 = vector.extract_strided_slice %104 {offsets = [0, 32], sizes = [4, 32], strides = [1, 1]} : vector<4x128xf32> to vector<4x32xf32>
    %117 = vector.extract_strided_slice %104 {offsets = [0, 64], sizes = [4, 32], strides = [1, 1]} : vector<4x128xf32> to vector<4x32xf32>
    %118 = vector.extract_strided_slice %104 {offsets = [0, 96], sizes = [4, 32], strides = [1, 1]} : vector<4x128xf32> to vector<4x32xf32>
    %119 = vector.shape_cast %115 : vector<4x32xf32> to vector<1x4x32xf32>
    %120 = vector.shape_cast %116 : vector<4x32xf32> to vector<1x4x32xf32>
    %121 = vector.shape_cast %117 : vector<4x32xf32> to vector<1x4x32xf32>
    %122 = vector.shape_cast %118 : vector<4x32xf32> to vector<1x4x32xf32>
    %123 = tpu.concatenate %119, %120, %121, %122 in 0 : vector<1x4x32xf32>, vector<1x4x32xf32>, vector<1x4x32xf32>, vector<1x4x32xf32> -> vector<4x4x32xf32>
    %124 = vector.extract_strided_slice %105 {offsets = [0, 0], sizes = [4, 32], strides = [1, 1]} : vector<4x128xf32> to vector<4x32xf32>
    %125 = vector.extract_strided_slice %105 {offsets = [0, 32], sizes = [4, 32], strides = [1, 1]} : vector<4x128xf32> to vector<4x32xf32>
    %126 = vector.extract_strided_slice %105 {offsets = [0, 64], sizes = [4, 32], strides = [1, 1]} : vector<4x128xf32> to vector<4x32xf32>
    %127 = vector.extract_strided_slice %105 {offsets = [0, 96], sizes = [4, 32], strides = [1, 1]} : vector<4x128xf32> to vector<4x32xf32>
    %128 = vector.shape_cast %124 : vector<4x32xf32> to vector<1x4x32xf32>
    %129 = vector.shape_cast %125 : vector<4x32xf32> to vector<1x4x32xf32>
    %130 = vector.shape_cast %126 : vector<4x32xf32> to vector<1x4x32xf32>
    %131 = vector.shape_cast %127 : vector<4x32xf32> to vector<1x4x32xf32>
    %132 = tpu.concatenate %128, %129, %130, %131 in 0 : vector<1x4x32xf32>, vector<1x4x32xf32>, vector<1x4x32xf32>, vector<1x4x32xf32> -> vector<4x4x32xf32>
    "tpu.trace_start"() <{level = 10 : i32, message = "hqd,hkd->hqk"}> : () -> ()
    %cst_37 = arith.constant dense<0.000000e+00> : vector<4x4x4xf32>
    %133 = tpu.matmul %114, %123, %cst_37 {dimension_numbers = #tpu.dot_dimension_numbers<[2], [2], [1], [1], [0, 0, 0, 1, 1, 1], [0], [0]>} : vector<4x4x32xf32>, vector<4x4x32xf32>, vector<4x4x4xf32> -> vector<4x4x4xf32>
    "tpu.trace_stop"() : () -> ()
    %cst_38 = arith.constant 0.176776692 : f32
    %134 = vector.broadcast %cst_38 : f32 to vector<4x4x4xf32>
    %135 = arith.mulf %133, %134 : vector<4x4x4xf32>
    %cst_39 = arith.constant dense<0xFF800000> : vector<4x4xf32>
    %136 = vector.multi_reduction <maximumf>, %135, %cst_39 [2] : vector<4x4x4xf32> to vector<4x4xf32>
    %137 = vector.shape_cast %136 : vector<4x4xf32> to vector<4x4x1xf32>
    %138 = vector.broadcast %137 : vector<4x4x1xf32> to vector<4x4x4xf32>
    %139 = arith.subf %135, %138 : vector<4x4x4xf32>
    %140 = math.exp %139 : vector<4x4x4xf32>
    %cst_40 = arith.constant dense<0.000000e+00> : vector<4x4xf32>
    %141 = vector.multi_reduction <add>, %140, %cst_40 [2] : vector<4x4x4xf32> to vector<4x4xf32>
    %142 = vector.shape_cast %141 : vector<4x4xf32> to vector<4x4x1xf32>
    %143 = tpu.reciprocal %142 {approx = true} : vector<4x4x1xf32> -> vector<4x4x1xf32>
    %144 = vector.broadcast %143 : vector<4x4x1xf32> to vector<4x4x4xf32>
    %145 = arith.mulf %140, %144 : vector<4x4x4xf32>
    "tpu.trace_start"() <{level = 10 : i32, message = "hqk,hkd->hqd"}> : () -> ()
    %cst_41 = arith.constant dense<0.000000e+00> : vector<4x4x32xf32>
    %146 = tpu.matmul %145, %132, %cst_41 {dimension_numbers = #tpu.dot_dimension_numbers<[2], [1], [1], [2], [0, 0, 0, 1, 1, 2], [0], [0]>} : vector<4x4x4xf32>, vector<4x4x32xf32>, vector<4x4x32xf32> -> vector<4x4x32xf32>
    "tpu.trace_stop"() : () -> ()
    %147 = vector.extract_strided_slice %146 {offsets = [0, 0, 0], sizes = [1, 4, 32], strides = [1, 1, 1]} : vector<4x4x32xf32> to vector<1x4x32xf32>
    %148 = vector.shape_cast %147 : vector<1x4x32xf32> to vector<4x32xf32>
    %149 = vector.extract_strided_slice %146 {offsets = [1, 0, 0], sizes = [1, 4, 32], strides = [1, 1, 1]} : vector<4x4x32xf32> to vector<1x4x32xf32>
    %150 = vector.shape_cast %149 : vector<1x4x32xf32> to vector<4x32xf32>
    %151 = vector.extract_strided_slice %146 {offsets = [2, 0, 0], sizes = [1, 4, 32], strides = [1, 1, 1]} : vector<4x4x32xf32> to vector<1x4x32xf32>
    %152 = vector.shape_cast %151 : vector<1x4x32xf32> to vector<4x32xf32>
    %153 = vector.extract_strided_slice %146 {offsets = [3, 0, 0], sizes = [1, 4, 32], strides = [1, 1, 1]} : vector<4x4x32xf32> to vector<1x4x32xf32>
    %154 = vector.shape_cast %153 : vector<1x4x32xf32> to vector<4x32xf32>
    %155 = tpu.concatenate %148, %150, %152, %154 in 1 : vector<4x32xf32>, vector<4x32xf32>, vector<4x32xf32>, vector<4x32xf32> -> vector<4x128xf32>
    %cst_42 = arith.constant dense<0.000000e+00> : vector<4x128xf32>
    %156 = tpu.matmul %155, %102, %cst_42 {dimension_numbers = #tpu.dot_dimension_numbers<[1], [0], [0], [1], [0, 0, 1, 1], [], []>} : vector<4x128xf32>, vector<128x128xf32>, vector<4x128xf32> -> vector<4x128xf32>
    %157 = vector.extract_strided_slice %1 {offsets = [4, 0], sizes = [4, 128], strides = [1, 1]} : vector<20x128xf32> to vector<4x128xf32>
    %c1 = arith.constant 1 : index
    %c0_43 = arith.constant 0 : index
    %c0_44 = arith.constant 0 : index
    %158 = vector.load %arg6[%c1, %c0_43, %c0_44] : memref<5x128x128xf32, #tpu.memory_space<vmem>>, vector<1x128x128xf32>
    %159 = vector.shape_cast %158 : vector<1x128x128xf32> to vector<128x128xf32>
    %c1_45 = arith.constant 1 : index
    %c0_46 = arith.constant 0 : index
    %c0_47 = arith.constant 0 : index
    %160 = vector.load %arg7[%c1_45, %c0_46, %c0_47] : memref<5x128x128xf32, #tpu.memory_space<vmem>>, vector<1x128x128xf32>
    %161 = vector.shape_cast %160 : vector<1x128x128xf32> to vector<128x128xf32>
    %c1_48 = arith.constant 1 : index
    %c0_49 = arith.constant 0 : index
    %c0_50 = arith.constant 0 : index
    %162 = vector.load %arg8[%c1_48, %c0_49, %c0_50] : memref<5x128x128xf32, #tpu.memory_space<vmem>>, vector<1x128x128xf32>
    %163 = vector.shape_cast %162 : vector<1x128x128xf32> to vector<128x128xf32>
    %c1_51 = arith.constant 1 : index
    %c0_52 = arith.constant 0 : index
    %c0_53 = arith.constant 0 : index
    %164 = vector.load %arg9[%c1_51, %c0_52, %c0_53] : memref<5x128x128xf32, #tpu.memory_space<vmem>>, vector<1x128x128xf32>
    %165 = vector.shape_cast %164 : vector<1x128x128xf32> to vector<128x128xf32>
    %cst_54 = arith.constant dense<0.000000e+00> : vector<4x128xf32>
    %166 = tpu.matmul %157, %159, %cst_54 {dimension_numbers = #tpu.dot_dimension_numbers<[1], [0], [0], [1], [0, 0, 1, 1], [], []>} : vector<4x128xf32>, vector<128x128xf32>, vector<4x128xf32> -> vector<4x128xf32>
    %cst_55 = arith.constant dense<0.000000e+00> : vector<4x128xf32>
    %167 = tpu.matmul %157, %161, %cst_55 {dimension_numbers = #tpu.dot_dimension_numbers<[1], [0], [0], [1], [0, 0, 1, 1], [], []>} : vector<4x128xf32>, vector<128x128xf32>, vector<4x128xf32> -> vector<4x128xf32>
    %cst_56 = arith.constant dense<0.000000e+00> : vector<4x128xf32>
    %168 = tpu.matmul %157, %163, %cst_56 {dimension_numbers = #tpu.dot_dimension_numbers<[1], [0], [0], [1], [0, 0, 1, 1], [], []>} : vector<4x128xf32>, vector<128x128xf32>, vector<4x128xf32> -> vector<4x128xf32>
    %169 = vector.extract_strided_slice %166 {offsets = [0, 0], sizes = [4, 32], strides = [1, 1]} : vector<4x128xf32> to vector<4x32xf32>
    %170 = vector.extract_strided_slice %166 {offsets = [0, 32], sizes = [4, 32], strides = [1, 1]} : vector<4x128xf32> to vector<4x32xf32>
    %171 = vector.extract_strided_slice %166 {offsets = [0, 64], sizes = [4, 32], strides = [1, 1]} : vector<4x128xf32> to vector<4x32xf32>
    %172 = vector.extract_strided_slice %166 {offsets = [0, 96], sizes = [4, 32], strides = [1, 1]} : vector<4x128xf32> to vector<4x32xf32>
    %173 = vector.shape_cast %169 : vector<4x32xf32> to vector<1x4x32xf32>
    %174 = vector.shape_cast %170 : vector<4x32xf32> to vector<1x4x32xf32>
    %175 = vector.shape_cast %171 : vector<4x32xf32> to vector<1x4x32xf32>
    %176 = vector.shape_cast %172 : vector<4x32xf32> to vector<1x4x32xf32>
    %177 = tpu.concatenate %173, %174, %175, %176 in 0 : vector<1x4x32xf32>, vector<1x4x32xf32>, vector<1x4x32xf32>, vector<1x4x32xf32> -> vector<4x4x32xf32>
    %178 = vector.extract_strided_slice %167 {offsets = [0, 0], sizes = [4, 32], strides = [1, 1]} : vector<4x128xf32> to vector<4x32xf32>
    %179 = vector.extract_strided_slice %167 {offsets = [0, 32], sizes = [4, 32], strides = [1, 1]} : vector<4x128xf32> to vector<4x32xf32>
    %180 = vector.extract_strided_slice %167 {offsets = [0, 64], sizes = [4, 32], strides = [1, 1]} : vector<4x128xf32> to vector<4x32xf32>
    %181 = vector.extract_strided_slice %167 {offsets = [0, 96], sizes = [4, 32], strides = [1, 1]} : vector<4x128xf32> to vector<4x32xf32>
    %182 = vector.shape_cast %178 : vector<4x32xf32> to vector<1x4x32xf32>
    %183 = vector.shape_cast %179 : vector<4x32xf32> to vector<1x4x32xf32>
    %184 = vector.shape_cast %180 : vector<4x32xf32> to vector<1x4x32xf32>
    %185 = vector.shape_cast %181 : vector<4x32xf32> to vector<1x4x32xf32>
    %186 = tpu.concatenate %182, %183, %184, %185 in 0 : vector<1x4x32xf32>, vector<1x4x32xf32>, vector<1x4x32xf32>, vector<1x4x32xf32> -> vector<4x4x32xf32>
    %187 = vector.extract_strided_slice %168 {offsets = [0, 0], sizes = [4, 32], strides = [1, 1]} : vector<4x128xf32> to vector<4x32xf32>
    %188 = vector.extract_strided_slice %168 {offsets = [0, 32], sizes = [4, 32], strides = [1, 1]} : vector<4x128xf32> to vector<4x32xf32>
    %189 = vector.extract_strided_slice %168 {offsets = [0, 64], sizes = [4, 32], strides = [1, 1]} : vector<4x128xf32> to vector<4x32xf32>
    %190 = vector.extract_strided_slice %168 {offsets = [0, 96], sizes = [4, 32], strides = [1, 1]} : vector<4x128xf32> to vector<4x32xf32>
    %191 = vector.shape_cast %187 : vector<4x32xf32> to vector<1x4x32xf32>
    %192 = vector.shape_cast %188 : vector<4x32xf32> to vector<1x4x32xf32>
    %193 = vector.shape_cast %189 : vector<4x32xf32> to vector<1x4x32xf32>
    %194 = vector.shape_cast %190 : vector<4x32xf32> to vector<1x4x32xf32>
    %195 = tpu.concatenate %191, %192, %193, %194 in 0 : vector<1x4x32xf32>, vector<1x4x32xf32>, vector<1x4x32xf32>, vector<1x4x32xf32> -> vector<4x4x32xf32>
    "tpu.trace_start"() <{level = 10 : i32, message = "hqd,hkd->hqk"}> : () -> ()
    %cst_57 = arith.constant dense<0.000000e+00> : vector<4x4x4xf32>
    %196 = tpu.matmul %177, %186, %cst_57 {dimension_numbers = #tpu.dot_dimension_numbers<[2], [2], [1], [1], [0, 0, 0, 1, 1, 1], [0], [0]>} : vector<4x4x32xf32>, vector<4x4x32xf32>, vector<4x4x4xf32> -> vector<4x4x4xf32>
    "tpu.trace_stop"() : () -> ()
    %cst_58 = arith.constant 0.176776692 : f32
    %197 = vector.broadcast %cst_58 : f32 to vector<4x4x4xf32>
    %198 = arith.mulf %196, %197 : vector<4x4x4xf32>
    %cst_59 = arith.constant dense<0xFF800000> : vector<4x4xf32>
    %199 = vector.multi_reduction <maximumf>, %198, %cst_59 [2] : vector<4x4x4xf32> to vector<4x4xf32>
    %200 = vector.shape_cast %199 : vector<4x4xf32> to vector<4x4x1xf32>
    %201 = vector.broadcast %200 : vector<4x4x1xf32> to vector<4x4x4xf32>
    %202 = arith.subf %198, %201 : vector<4x4x4xf32>
    %203 = math.exp %202 : vector<4x4x4xf32>
    %cst_60 = arith.constant dense<0.000000e+00> : vector<4x4xf32>
    %204 = vector.multi_reduction <add>, %203, %cst_60 [2] : vector<4x4x4xf32> to vector<4x4xf32>
    %205 = vector.shape_cast %204 : vector<4x4xf32> to vector<4x4x1xf32>
    %206 = tpu.reciprocal %205 {approx = true} : vector<4x4x1xf32> -> vector<4x4x1xf32>
    %207 = vector.broadcast %206 : vector<4x4x1xf32> to vector<4x4x4xf32>
    %208 = arith.mulf %203, %207 : vector<4x4x4xf32>
    "tpu.trace_start"() <{level = 10 : i32, message = "hqk,hkd->hqd"}> : () -> ()
    %cst_61 = arith.constant dense<0.000000e+00> : vector<4x4x32xf32>
    %209 = tpu.matmul %208, %195, %cst_61 {dimension_numbers = #tpu.dot_dimension_numbers<[2], [1], [1], [2], [0, 0, 0, 1, 1, 2], [0], [0]>} : vector<4x4x4xf32>, vector<4x4x32xf32>, vector<4x4x32xf32> -> vector<4x4x32xf32>
    "tpu.trace_stop"() : () -> ()
    %210 = vector.extract_strided_slice %209 {offsets = [0, 0, 0], sizes = [1, 4, 32], strides = [1, 1, 1]} : vector<4x4x32xf32> to vector<1x4x32xf32>
    %211 = vector.shape_cast %210 : vector<1x4x32xf32> to vector<4x32xf32>
    %212 = vector.extract_strided_slice %209 {offsets = [1, 0, 0], sizes = [1, 4, 32], strides = [1, 1, 1]} : vector<4x4x32xf32> to vector<1x4x32xf32>
    %213 = vector.shape_cast %212 : vector<1x4x32xf32> to vector<4x32xf32>
    %214 = vector.extract_strided_slice %209 {offsets = [2, 0, 0], sizes = [1, 4, 32], strides = [1, 1, 1]} : vector<4x4x32xf32> to vector<1x4x32xf32>
    %215 = vector.shape_cast %214 : vector<1x4x32xf32> to vector<4x32xf32>
    %216 = vector.extract_strided_slice %209 {offsets = [3, 0, 0], sizes = [1, 4, 32], strides = [1, 1, 1]} : vector<4x4x32xf32> to vector<1x4x32xf32>
    %217 = vector.shape_cast %216 : vector<1x4x32xf32> to vector<4x32xf32>
    %218 = tpu.concatenate %211, %213, %215, %217 in 1 : vector<4x32xf32>, vector<4x32xf32>, vector<4x32xf32>, vector<4x32xf32> -> vector<4x128xf32>
    %cst_62 = arith.constant dense<0.000000e+00> : vector<4x128xf32>
    %219 = tpu.matmul %218, %165, %cst_62 {dimension_numbers = #tpu.dot_dimension_numbers<[1], [0], [0], [1], [0, 0, 1, 1], [], []>} : vector<4x128xf32>, vector<128x128xf32>, vector<4x128xf32> -> vector<4x128xf32>
    %220 = vector.extract_strided_slice %1 {offsets = [8, 0], sizes = [4, 128], strides = [1, 1]} : vector<20x128xf32> to vector<4x128xf32>
    %c2 = arith.constant 2 : index
    %c0_63 = arith.constant 0 : index
    %c0_64 = arith.constant 0 : index
    %221 = vector.load %arg6[%c2, %c0_63, %c0_64] : memref<5x128x128xf32, #tpu.memory_space<vmem>>, vector<1x128x128xf32>
    %222 = vector.shape_cast %221 : vector<1x128x128xf32> to vector<128x128xf32>
    %c2_65 = arith.constant 2 : index
    %c0_66 = arith.constant 0 : index
    %c0_67 = arith.constant 0 : index
    %223 = vector.load %arg7[%c2_65, %c0_66, %c0_67] : memref<5x128x128xf32, #tpu.memory_space<vmem>>, vector<1x128x128xf32>
    %224 = vector.shape_cast %223 : vector<1x128x128xf32> to vector<128x128xf32>
    %c2_68 = arith.constant 2 : index
    %c0_69 = arith.constant 0 : index
    %c0_70 = arith.constant 0 : index
    %225 = vector.load %arg8[%c2_68, %c0_69, %c0_70] : memref<5x128x128xf32, #tpu.memory_space<vmem>>, vector<1x128x128xf32>
    %226 = vector.shape_cast %225 : vector<1x128x128xf32> to vector<128x128xf32>
    %c2_71 = arith.constant 2 : index
    %c0_72 = arith.constant 0 : index
    %c0_73 = arith.constant 0 : index
    %227 = vector.load %arg9[%c2_71, %c0_72, %c0_73] : memref<5x128x128xf32, #tpu.memory_space<vmem>>, vector<1x128x128xf32>
    %228 = vector.shape_cast %227 : vector<1x128x128xf32> to vector<128x128xf32>
    %cst_74 = arith.constant dense<0.000000e+00> : vector<4x128xf32>
    %229 = tpu.matmul %220, %222, %cst_74 {dimension_numbers = #tpu.dot_dimension_numbers<[1], [0], [0], [1], [0, 0, 1, 1], [], []>} : vector<4x128xf32>, vector<128x128xf32>, vector<4x128xf32> -> vector<4x128xf32>
    %cst_75 = arith.constant dense<0.000000e+00> : vector<4x128xf32>
    %230 = tpu.matmul %220, %224, %cst_75 {dimension_numbers = #tpu.dot_dimension_numbers<[1], [0], [0], [1], [0, 0, 1, 1], [], []>} : vector<4x128xf32>, vector<128x128xf32>, vector<4x128xf32> -> vector<4x128xf32>
    %cst_76 = arith.constant dense<0.000000e+00> : vector<4x128xf32>
    %231 = tpu.matmul %220, %226, %cst_76 {dimension_numbers = #tpu.dot_dimension_numbers<[1], [0], [0], [1], [0, 0, 1, 1], [], []>} : vector<4x128xf32>, vector<128x128xf32>, vector<4x128xf32> -> vector<4x128xf32>
    %232 = vector.extract_strided_slice %229 {offsets = [0, 0], sizes = [4, 32], strides = [1, 1]} : vector<4x128xf32> to vector<4x32xf32>
    %233 = vector.extract_strided_slice %229 {offsets = [0, 32], sizes = [4, 32], strides = [1, 1]} : vector<4x128xf32> to vector<4x32xf32>
    %234 = vector.extract_strided_slice %229 {offsets = [0, 64], sizes = [4, 32], strides = [1, 1]} : vector<4x128xf32> to vector<4x32xf32>
    %235 = vector.extract_strided_slice %229 {offsets = [0, 96], sizes = [4, 32], strides = [1, 1]} : vector<4x128xf32> to vector<4x32xf32>
    %236 = vector.shape_cast %232 : vector<4x32xf32> to vector<1x4x32xf32>
    %237 = vector.shape_cast %233 : vector<4x32xf32> to vector<1x4x32xf32>
    %238 = vector.shape_cast %234 : vector<4x32xf32> to vector<1x4x32xf32>
    %239 = vector.shape_cast %235 : vector<4x32xf32> to vector<1x4x32xf32>
    %240 = tpu.concatenate %236, %237, %238, %239 in 0 : vector<1x4x32xf32>, vector<1x4x32xf32>, vector<1x4x32xf32>, vector<1x4x32xf32> -> vector<4x4x32xf32>
    %241 = vector.extract_strided_slice %230 {offsets = [0, 0], sizes = [4, 32], strides = [1, 1]} : vector<4x128xf32> to vector<4x32xf32>
    %242 = vector.extract_strided_slice %230 {offsets = [0, 32], sizes = [4, 32], strides = [1, 1]} : vector<4x128xf32> to vector<4x32xf32>
    %243 = vector.extract_strided_slice %230 {offsets = [0, 64], sizes = [4, 32], strides = [1, 1]} : vector<4x128xf32> to vector<4x32xf32>
    %244 = vector.extract_strided_slice %230 {offsets = [0, 96], sizes = [4, 32], strides = [1, 1]} : vector<4x128xf32> to vector<4x32xf32>
    %245 = vector.shape_cast %241 : vector<4x32xf32> to vector<1x4x32xf32>
    %246 = vector.shape_cast %242 : vector<4x32xf32> to vector<1x4x32xf32>
    %247 = vector.shape_cast %243 : vector<4x32xf32> to vector<1x4x32xf32>
    %248 = vector.shape_cast %244 : vector<4x32xf32> to vector<1x4x32xf32>
    %249 = tpu.concatenate %245, %246, %247, %248 in 0 : vector<1x4x32xf32>, vector<1x4x32xf32>, vector<1x4x32xf32>, vector<1x4x32xf32> -> vector<4x4x32xf32>
    %250 = vector.extract_strided_slice %231 {offsets = [0, 0], sizes = [4, 32], strides = [1, 1]} : vector<4x128xf32> to vector<4x32xf32>
    %251 = vector.extract_strided_slice %231 {offsets = [0, 32], sizes = [4, 32], strides = [1, 1]} : vector<4x128xf32> to vector<4x32xf32>
    %252 = vector.extract_strided_slice %231 {offsets = [0, 64], sizes = [4, 32], strides = [1, 1]} : vector<4x128xf32> to vector<4x32xf32>
    %253 = vector.extract_strided_slice %231 {offsets = [0, 96], sizes = [4, 32], strides = [1, 1]} : vector<4x128xf32> to vector<4x32xf32>
    %254 = vector.shape_cast %250 : vector<4x32xf32> to vector<1x4x32xf32>
    %255 = vector.shape_cast %251 : vector<4x32xf32> to vector<1x4x32xf32>
    %256 = vector.shape_cast %252 : vector<4x32xf32> to vector<1x4x32xf32>
    %257 = vector.shape_cast %253 : vector<4x32xf32> to vector<1x4x32xf32>
    %258 = tpu.concatenate %254, %255, %256, %257 in 0 : vector<1x4x32xf32>, vector<1x4x32xf32>, vector<1x4x32xf32>, vector<1x4x32xf32> -> vector<4x4x32xf32>
    "tpu.trace_start"() <{level = 10 : i32, message = "hqd,hkd->hqk"}> : () -> ()
    %cst_77 = arith.constant dense<0.000000e+00> : vector<4x4x4xf32>
    %259 = tpu.matmul %240, %249, %cst_77 {dimension_numbers = #tpu.dot_dimension_numbers<[2], [2], [1], [1], [0, 0, 0, 1, 1, 1], [0], [0]>} : vector<4x4x32xf32>, vector<4x4x32xf32>, vector<4x4x4xf32> -> vector<4x4x4xf32>
    "tpu.trace_stop"() : () -> ()
    %cst_78 = arith.constant 0.176776692 : f32
    %260 = vector.broadcast %cst_78 : f32 to vector<4x4x4xf32>
    %261 = arith.mulf %259, %260 : vector<4x4x4xf32>
    %cst_79 = arith.constant dense<0xFF800000> : vector<4x4xf32>
    %262 = vector.multi_reduction <maximumf>, %261, %cst_79 [2] : vector<4x4x4xf32> to vector<4x4xf32>
    %263 = vector.shape_cast %262 : vector<4x4xf32> to vector<4x4x1xf32>
    %264 = vector.broadcast %263 : vector<4x4x1xf32> to vector<4x4x4xf32>
    %265 = arith.subf %261, %264 : vector<4x4x4xf32>
    %266 = math.exp %265 : vector<4x4x4xf32>
    %cst_80 = arith.constant dense<0.000000e+00> : vector<4x4xf32>
    %267 = vector.multi_reduction <add>, %266, %cst_80 [2] : vector<4x4x4xf32> to vector<4x4xf32>
    %268 = vector.shape_cast %267 : vector<4x4xf32> to vector<4x4x1xf32>
    %269 = tpu.reciprocal %268 {approx = true} : vector<4x4x1xf32> -> vector<4x4x1xf32>
    %270 = vector.broadcast %269 : vector<4x4x1xf32> to vector<4x4x4xf32>
    %271 = arith.mulf %266, %270 : vector<4x4x4xf32>
    "tpu.trace_start"() <{level = 10 : i32, message = "hqk,hkd->hqd"}> : () -> ()
    %cst_81 = arith.constant dense<0.000000e+00> : vector<4x4x32xf32>
    %272 = tpu.matmul %271, %258, %cst_81 {dimension_numbers = #tpu.dot_dimension_numbers<[2], [1], [1], [2], [0, 0, 0, 1, 1, 2], [0], [0]>} : vector<4x4x4xf32>, vector<4x4x32xf32>, vector<4x4x32xf32> -> vector<4x4x32xf32>
    "tpu.trace_stop"() : () -> ()
    %273 = vector.extract_strided_slice %272 {offsets = [0, 0, 0], sizes = [1, 4, 32], strides = [1, 1, 1]} : vector<4x4x32xf32> to vector<1x4x32xf32>
    %274 = vector.shape_cast %273 : vector<1x4x32xf32> to vector<4x32xf32>
    %275 = vector.extract_strided_slice %272 {offsets = [1, 0, 0], sizes = [1, 4, 32], strides = [1, 1, 1]} : vector<4x4x32xf32> to vector<1x4x32xf32>
    %276 = vector.shape_cast %275 : vector<1x4x32xf32> to vector<4x32xf32>
    %277 = vector.extract_strided_slice %272 {offsets = [2, 0, 0], sizes = [1, 4, 32], strides = [1, 1, 1]} : vector<4x4x32xf32> to vector<1x4x32xf32>
    %278 = vector.shape_cast %277 : vector<1x4x32xf32> to vector<4x32xf32>
    %279 = vector.extract_strided_slice %272 {offsets = [3, 0, 0], sizes = [1, 4, 32], strides = [1, 1, 1]} : vector<4x4x32xf32> to vector<1x4x32xf32>
    %280 = vector.shape_cast %279 : vector<1x4x32xf32> to vector<4x32xf32>
    %281 = tpu.concatenate %274, %276, %278, %280 in 1 : vector<4x32xf32>, vector<4x32xf32>, vector<4x32xf32>, vector<4x32xf32> -> vector<4x128xf32>
    %cst_82 = arith.constant dense<0.000000e+00> : vector<4x128xf32>
    %282 = tpu.matmul %281, %228, %cst_82 {dimension_numbers = #tpu.dot_dimension_numbers<[1], [0], [0], [1], [0, 0, 1, 1], [], []>} : vector<4x128xf32>, vector<128x128xf32>, vector<4x128xf32> -> vector<4x128xf32>
    %283 = vector.extract_strided_slice %1 {offsets = [12, 0], sizes = [4, 128], strides = [1, 1]} : vector<20x128xf32> to vector<4x128xf32>
    %c3 = arith.constant 3 : index
    %c0_83 = arith.constant 0 : index
    %c0_84 = arith.constant 0 : index
    %284 = vector.load %arg6[%c3, %c0_83, %c0_84] : memref<5x128x128xf32, #tpu.memory_space<vmem>>, vector<1x128x128xf32>
    %285 = vector.shape_cast %284 : vector<1x128x128xf32> to vector<128x128xf32>
    %c3_85 = arith.constant 3 : index
    %c0_86 = arith.constant 0 : index
    %c0_87 = arith.constant 0 : index
    %286 = vector.load %arg7[%c3_85, %c0_86, %c0_87] : memref<5x128x128xf32, #tpu.memory_space<vmem>>, vector<1x128x128xf32>
    %287 = vector.shape_cast %286 : vector<1x128x128xf32> to vector<128x128xf32>
    %c3_88 = arith.constant 3 : index
    %c0_89 = arith.constant 0 : index
    %c0_90 = arith.constant 0 : index
    %288 = vector.load %arg8[%c3_88, %c0_89, %c0_90] : memref<5x128x128xf32, #tpu.memory_space<vmem>>, vector<1x128x128xf32>
    %289 = vector.shape_cast %288 : vector<1x128x128xf32> to vector<128x128xf32>
    %c3_91 = arith.constant 3 : index
    %c0_92 = arith.constant 0 : index
    %c0_93 = arith.constant 0 : index
    %290 = vector.load %arg9[%c3_91, %c0_92, %c0_93] : memref<5x128x128xf32, #tpu.memory_space<vmem>>, vector<1x128x128xf32>
    %291 = vector.shape_cast %290 : vector<1x128x128xf32> to vector<128x128xf32>
    %cst_94 = arith.constant dense<0.000000e+00> : vector<4x128xf32>
    %292 = tpu.matmul %283, %285, %cst_94 {dimension_numbers = #tpu.dot_dimension_numbers<[1], [0], [0], [1], [0, 0, 1, 1], [], []>} : vector<4x128xf32>, vector<128x128xf32>, vector<4x128xf32> -> vector<4x128xf32>
    %cst_95 = arith.constant dense<0.000000e+00> : vector<4x128xf32>
    %293 = tpu.matmul %283, %287, %cst_95 {dimension_numbers = #tpu.dot_dimension_numbers<[1], [0], [0], [1], [0, 0, 1, 1], [], []>} : vector<4x128xf32>, vector<128x128xf32>, vector<4x128xf32> -> vector<4x128xf32>
    %cst_96 = arith.constant dense<0.000000e+00> : vector<4x128xf32>
    %294 = tpu.matmul %283, %289, %cst_96 {dimension_numbers = #tpu.dot_dimension_numbers<[1], [0], [0], [1], [0, 0, 1, 1], [], []>} : vector<4x128xf32>, vector<128x128xf32>, vector<4x128xf32> -> vector<4x128xf32>
    %295 = vector.extract_strided_slice %292 {offsets = [0, 0], sizes = [4, 32], strides = [1, 1]} : vector<4x128xf32> to vector<4x32xf32>
    %296 = vector.extract_strided_slice %292 {offsets = [0, 32], sizes = [4, 32], strides = [1, 1]} : vector<4x128xf32> to vector<4x32xf32>
    %297 = vector.extract_strided_slice %292 {offsets = [0, 64], sizes = [4, 32], strides = [1, 1]} : vector<4x128xf32> to vector<4x32xf32>
    %298 = vector.extract_strided_slice %292 {offsets = [0, 96], sizes = [4, 32], strides = [1, 1]} : vector<4x128xf32> to vector<4x32xf32>
    %299 = vector.shape_cast %295 : vector<4x32xf32> to vector<1x4x32xf32>
    %300 = vector.shape_cast %296 : vector<4x32xf32> to vector<1x4x32xf32>
    %301 = vector.shape_cast %297 : vector<4x32xf32> to vector<1x4x32xf32>
    %302 = vector.shape_cast %298 : vector<4x32xf32> to vector<1x4x32xf32>
    %303 = tpu.concatenate %299, %300, %301, %302 in 0 : vector<1x4x32xf32>, vector<1x4x32xf32>, vector<1x4x32xf32>, vector<1x4x32xf32> -> vector<4x4x32xf32>
    %304 = vector.extract_strided_slice %293 {offsets = [0, 0], sizes = [4, 32], strides = [1, 1]} : vector<4x128xf32> to vector<4x32xf32>
    %305 = vector.extract_strided_slice %293 {offsets = [0, 32], sizes = [4, 32], strides = [1, 1]} : vector<4x128xf32> to vector<4x32xf32>
    %306 = vector.extract_strided_slice %293 {offsets = [0, 64], sizes = [4, 32], strides = [1, 1]} : vector<4x128xf32> to vector<4x32xf32>
    %307 = vector.extract_strided_slice %293 {offsets = [0, 96], sizes = [4, 32], strides = [1, 1]} : vector<4x128xf32> to vector<4x32xf32>
    %308 = vector.shape_cast %304 : vector<4x32xf32> to vector<1x4x32xf32>
    %309 = vector.shape_cast %305 : vector<4x32xf32> to vector<1x4x32xf32>
    %310 = vector.shape_cast %306 : vector<4x32xf32> to vector<1x4x32xf32>
    %311 = vector.shape_cast %307 : vector<4x32xf32> to vector<1x4x32xf32>
    %312 = tpu.concatenate %308, %309, %310, %311 in 0 : vector<1x4x32xf32>, vector<1x4x32xf32>, vector<1x4x32xf32>, vector<1x4x32xf32> -> vector<4x4x32xf32>
    %313 = vector.extract_strided_slice %294 {offsets = [0, 0], sizes = [4, 32], strides = [1, 1]} : vector<4x128xf32> to vector<4x32xf32>
    %314 = vector.extract_strided_slice %294 {offsets = [0, 32], sizes = [4, 32], strides = [1, 1]} : vector<4x128xf32> to vector<4x32xf32>
    %315 = vector.extract_strided_slice %294 {offsets = [0, 64], sizes = [4, 32], strides = [1, 1]} : vector<4x128xf32> to vector<4x32xf32>
    %316 = vector.extract_strided_slice %294 {offsets = [0, 96], sizes = [4, 32], strides = [1, 1]} : vector<4x128xf32> to vector<4x32xf32>
    %317 = vector.shape_cast %313 : vector<4x32xf32> to vector<1x4x32xf32>
    %318 = vector.shape_cast %314 : vector<4x32xf32> to vector<1x4x32xf32>
    %319 = vector.shape_cast %315 : vector<4x32xf32> to vector<1x4x32xf32>
    %320 = vector.shape_cast %316 : vector<4x32xf32> to vector<1x4x32xf32>
    %321 = tpu.concatenate %317, %318, %319, %320 in 0 : vector<1x4x32xf32>, vector<1x4x32xf32>, vector<1x4x32xf32>, vector<1x4x32xf32> -> vector<4x4x32xf32>
    "tpu.trace_start"() <{level = 10 : i32, message = "hqd,hkd->hqk"}> : () -> ()
    %cst_97 = arith.constant dense<0.000000e+00> : vector<4x4x4xf32>
    %322 = tpu.matmul %303, %312, %cst_97 {dimension_numbers = #tpu.dot_dimension_numbers<[2], [2], [1], [1], [0, 0, 0, 1, 1, 1], [0], [0]>} : vector<4x4x32xf32>, vector<4x4x32xf32>, vector<4x4x4xf32> -> vector<4x4x4xf32>
    "tpu.trace_stop"() : () -> ()
    %cst_98 = arith.constant 0.176776692 : f32
    %323 = vector.broadcast %cst_98 : f32 to vector<4x4x4xf32>
    %324 = arith.mulf %322, %323 : vector<4x4x4xf32>
    %cst_99 = arith.constant dense<0xFF800000> : vector<4x4xf32>
    %325 = vector.multi_reduction <maximumf>, %324, %cst_99 [2] : vector<4x4x4xf32> to vector<4x4xf32>
    %326 = vector.shape_cast %325 : vector<4x4xf32> to vector<4x4x1xf32>
    %327 = vector.broadcast %326 : vector<4x4x1xf32> to vector<4x4x4xf32>
    %328 = arith.subf %324, %327 : vector<4x4x4xf32>
    %329 = math.exp %328 : vector<4x4x4xf32>
    %cst_100 = arith.constant dense<0.000000e+00> : vector<4x4xf32>
    %330 = vector.multi_reduction <add>, %329, %cst_100 [2] : vector<4x4x4xf32> to vector<4x4xf32>
    %331 = vector.shape_cast %330 : vector<4x4xf32> to vector<4x4x1xf32>
    %332 = tpu.reciprocal %331 {approx = true} : vector<4x4x1xf32> -> vector<4x4x1xf32>
    %333 = vector.broadcast %332 : vector<4x4x1xf32> to vector<4x4x4xf32>
    %334 = arith.mulf %329, %333 : vector<4x4x4xf32>
    "tpu.trace_start"() <{level = 10 : i32, message = "hqk,hkd->hqd"}> : () -> ()
    %cst_101 = arith.constant dense<0.000000e+00> : vector<4x4x32xf32>
    %335 = tpu.matmul %334, %321, %cst_101 {dimension_numbers = #tpu.dot_dimension_numbers<[2], [1], [1], [2], [0, 0, 0, 1, 1, 2], [0], [0]>} : vector<4x4x4xf32>, vector<4x4x32xf32>, vector<4x4x32xf32> -> vector<4x4x32xf32>
    "tpu.trace_stop"() : () -> ()
    %336 = vector.extract_strided_slice %335 {offsets = [0, 0, 0], sizes = [1, 4, 32], strides = [1, 1, 1]} : vector<4x4x32xf32> to vector<1x4x32xf32>
    %337 = vector.shape_cast %336 : vector<1x4x32xf32> to vector<4x32xf32>
    %338 = vector.extract_strided_slice %335 {offsets = [1, 0, 0], sizes = [1, 4, 32], strides = [1, 1, 1]} : vector<4x4x32xf32> to vector<1x4x32xf32>
    %339 = vector.shape_cast %338 : vector<1x4x32xf32> to vector<4x32xf32>
    %340 = vector.extract_strided_slice %335 {offsets = [2, 0, 0], sizes = [1, 4, 32], strides = [1, 1, 1]} : vector<4x4x32xf32> to vector<1x4x32xf32>
    %341 = vector.shape_cast %340 : vector<1x4x32xf32> to vector<4x32xf32>
    %342 = vector.extract_strided_slice %335 {offsets = [3, 0, 0], sizes = [1, 4, 32], strides = [1, 1, 1]} : vector<4x4x32xf32> to vector<1x4x32xf32>
    %343 = vector.shape_cast %342 : vector<1x4x32xf32> to vector<4x32xf32>
    %344 = tpu.concatenate %337, %339, %341, %343 in 1 : vector<4x32xf32>, vector<4x32xf32>, vector<4x32xf32>, vector<4x32xf32> -> vector<4x128xf32>
    %cst_102 = arith.constant dense<0.000000e+00> : vector<4x128xf32>
    %345 = tpu.matmul %344, %291, %cst_102 {dimension_numbers = #tpu.dot_dimension_numbers<[1], [0], [0], [1], [0, 0, 1, 1], [], []>} : vector<4x128xf32>, vector<128x128xf32>, vector<4x128xf32> -> vector<4x128xf32>
    %346 = vector.extract_strided_slice %1 {offsets = [16, 0], sizes = [4, 128], strides = [1, 1]} : vector<20x128xf32> to vector<4x128xf32>
    %c4 = arith.constant 4 : index
    %c0_103 = arith.constant 0 : index
    %c0_104 = arith.constant 0 : index
    %347 = vector.load %arg6[%c4, %c0_103, %c0_104] : memref<5x128x128xf32, #tpu.memory_space<vmem>>, vector<1x128x128xf32>
    %348 = vector.shape_cast %347 : vector<1x128x128xf32> to vector<128x128xf32>
    %c4_105 = arith.constant 4 : index
    %c0_106 = arith.constant 0 : index
    %c0_107 = arith.constant 0 : index
    %349 = vector.load %arg7[%c4_105, %c0_106, %c0_107] : memref<5x128x128xf32, #tpu.memory_space<vmem>>, vector<1x128x128xf32>
    %350 = vector.shape_cast %349 : vector<1x128x128xf32> to vector<128x128xf32>
    %c4_108 = arith.constant 4 : index
    %c0_109 = arith.constant 0 : index
    %c0_110 = arith.constant 0 : index
    %351 = vector.load %arg8[%c4_108, %c0_109, %c0_110] : memref<5x128x128xf32, #tpu.memory_space<vmem>>, vector<1x128x128xf32>
    %352 = vector.shape_cast %351 : vector<1x128x128xf32> to vector<128x128xf32>
    %c4_111 = arith.constant 4 : index
    %c0_112 = arith.constant 0 : index
    %c0_113 = arith.constant 0 : index
    %353 = vector.load %arg9[%c4_111, %c0_112, %c0_113] : memref<5x128x128xf32, #tpu.memory_space<vmem>>, vector<1x128x128xf32>
    %354 = vector.shape_cast %353 : vector<1x128x128xf32> to vector<128x128xf32>
    %cst_114 = arith.constant dense<0.000000e+00> : vector<4x128xf32>
    %355 = tpu.matmul %346, %348, %cst_114 {dimension_numbers = #tpu.dot_dimension_numbers<[1], [0], [0], [1], [0, 0, 1, 1], [], []>} : vector<4x128xf32>, vector<128x128xf32>, vector<4x128xf32> -> vector<4x128xf32>
    %cst_115 = arith.constant dense<0.000000e+00> : vector<4x128xf32>
    %356 = tpu.matmul %346, %350, %cst_115 {dimension_numbers = #tpu.dot_dimension_numbers<[1], [0], [0], [1], [0, 0, 1, 1], [], []>} : vector<4x128xf32>, vector<128x128xf32>, vector<4x128xf32> -> vector<4x128xf32>
    %cst_116 = arith.constant dense<0.000000e+00> : vector<4x128xf32>
    %357 = tpu.matmul %346, %352, %cst_116 {dimension_numbers = #tpu.dot_dimension_numbers<[1], [0], [0], [1], [0, 0, 1, 1], [], []>} : vector<4x128xf32>, vector<128x128xf32>, vector<4x128xf32> -> vector<4x128xf32>
    %358 = vector.extract_strided_slice %355 {offsets = [0, 0], sizes = [4, 32], strides = [1, 1]} : vector<4x128xf32> to vector<4x32xf32>
    %359 = vector.extract_strided_slice %355 {offsets = [0, 32], sizes = [4, 32], strides = [1, 1]} : vector<4x128xf32> to vector<4x32xf32>
    %360 = vector.extract_strided_slice %355 {offsets = [0, 64], sizes = [4, 32], strides = [1, 1]} : vector<4x128xf32> to vector<4x32xf32>
    %361 = vector.extract_strided_slice %355 {offsets = [0, 96], sizes = [4, 32], strides = [1, 1]} : vector<4x128xf32> to vector<4x32xf32>
    %362 = vector.shape_cast %358 : vector<4x32xf32> to vector<1x4x32xf32>
    %363 = vector.shape_cast %359 : vector<4x32xf32> to vector<1x4x32xf32>
    %364 = vector.shape_cast %360 : vector<4x32xf32> to vector<1x4x32xf32>
    %365 = vector.shape_cast %361 : vector<4x32xf32> to vector<1x4x32xf32>
    %366 = tpu.concatenate %362, %363, %364, %365 in 0 : vector<1x4x32xf32>, vector<1x4x32xf32>, vector<1x4x32xf32>, vector<1x4x32xf32> -> vector<4x4x32xf32>
    %367 = vector.extract_strided_slice %356 {offsets = [0, 0], sizes = [4, 32], strides = [1, 1]} : vector<4x128xf32> to vector<4x32xf32>
    %368 = vector.extract_strided_slice %356 {offsets = [0, 32], sizes = [4, 32], strides = [1, 1]} : vector<4x128xf32> to vector<4x32xf32>
    %369 = vector.extract_strided_slice %356 {offsets = [0, 64], sizes = [4, 32], strides = [1, 1]} : vector<4x128xf32> to vector<4x32xf32>
    %370 = vector.extract_strided_slice %356 {offsets = [0, 96], sizes = [4, 32], strides = [1, 1]} : vector<4x128xf32> to vector<4x32xf32>
    %371 = vector.shape_cast %367 : vector<4x32xf32> to vector<1x4x32xf32>
    %372 = vector.shape_cast %368 : vector<4x32xf32> to vector<1x4x32xf32>
    %373 = vector.shape_cast %369 : vector<4x32xf32> to vector<1x4x32xf32>
    %374 = vector.shape_cast %370 : vector<4x32xf32> to vector<1x4x32xf32>
    %375 = tpu.concatenate %371, %372, %373, %374 in 0 : vector<1x4x32xf32>, vector<1x4x32xf32>, vector<1x4x32xf32>, vector<1x4x32xf32> -> vector<4x4x32xf32>
    %376 = vector.extract_strided_slice %357 {offsets = [0, 0], sizes = [4, 32], strides = [1, 1]} : vector<4x128xf32> to vector<4x32xf32>
    %377 = vector.extract_strided_slice %357 {offsets = [0, 32], sizes = [4, 32], strides = [1, 1]} : vector<4x128xf32> to vector<4x32xf32>
    %378 = vector.extract_strided_slice %357 {offsets = [0, 64], sizes = [4, 32], strides = [1, 1]} : vector<4x128xf32> to vector<4x32xf32>
    %379 = vector.extract_strided_slice %357 {offsets = [0, 96], sizes = [4, 32], strides = [1, 1]} : vector<4x128xf32> to vector<4x32xf32>
    %380 = vector.shape_cast %376 : vector<4x32xf32> to vector<1x4x32xf32>
    %381 = vector.shape_cast %377 : vector<4x32xf32> to vector<1x4x32xf32>
    %382 = vector.shape_cast %378 : vector<4x32xf32> to vector<1x4x32xf32>
    %383 = vector.shape_cast %379 : vector<4x32xf32> to vector<1x4x32xf32>
    %384 = tpu.concatenate %380, %381, %382, %383 in 0 : vector<1x4x32xf32>, vector<1x4x32xf32>, vector<1x4x32xf32>, vector<1x4x32xf32> -> vector<4x4x32xf32>
    "tpu.trace_start"() <{level = 10 : i32, message = "hqd,hkd->hqk"}> : () -> ()
    %cst_117 = arith.constant dense<0.000000e+00> : vector<4x4x4xf32>
    %385 = tpu.matmul %366, %375, %cst_117 {dimension_numbers = #tpu.dot_dimension_numbers<[2], [2], [1], [1], [0, 0, 0, 1, 1, 1], [0], [0]>} : vector<4x4x32xf32>, vector<4x4x32xf32>, vector<4x4x4xf32> -> vector<4x4x4xf32>
    "tpu.trace_stop"() : () -> ()
    %cst_118 = arith.constant 0.176776692 : f32
    %386 = vector.broadcast %cst_118 : f32 to vector<4x4x4xf32>
    %387 = arith.mulf %385, %386 : vector<4x4x4xf32>
    %cst_119 = arith.constant dense<0xFF800000> : vector<4x4xf32>
    %388 = vector.multi_reduction <maximumf>, %387, %cst_119 [2] : vector<4x4x4xf32> to vector<4x4xf32>
    %389 = vector.shape_cast %388 : vector<4x4xf32> to vector<4x4x1xf32>
    %390 = vector.broadcast %389 : vector<4x4x1xf32> to vector<4x4x4xf32>
    %391 = arith.subf %387, %390 : vector<4x4x4xf32>
    %392 = math.exp %391 : vector<4x4x4xf32>
    %cst_120 = arith.constant dense<0.000000e+00> : vector<4x4xf32>
    %393 = vector.multi_reduction <add>, %392, %cst_120 [2] : vector<4x4x4xf32> to vector<4x4xf32>
    %394 = vector.shape_cast %393 : vector<4x4xf32> to vector<4x4x1xf32>
    %395 = tpu.reciprocal %394 {approx = true} : vector<4x4x1xf32> -> vector<4x4x1xf32>
    %396 = vector.broadcast %395 : vector<4x4x1xf32> to vector<4x4x4xf32>
    %397 = arith.mulf %392, %396 : vector<4x4x4xf32>
    "tpu.trace_start"() <{level = 10 : i32, message = "hqk,hkd->hqd"}> : () -> ()
    %cst_121 = arith.constant dense<0.000000e+00> : vector<4x4x32xf32>
    %398 = tpu.matmul %397, %384, %cst_121 {dimension_numbers = #tpu.dot_dimension_numbers<[2], [1], [1], [2], [0, 0, 0, 1, 1, 2], [0], [0]>} : vector<4x4x4xf32>, vector<4x4x32xf32>, vector<4x4x32xf32> -> vector<4x4x32xf32>
    "tpu.trace_stop"() : () -> ()
    %399 = vector.extract_strided_slice %398 {offsets = [0, 0, 0], sizes = [1, 4, 32], strides = [1, 1, 1]} : vector<4x4x32xf32> to vector<1x4x32xf32>
    %400 = vector.shape_cast %399 : vector<1x4x32xf32> to vector<4x32xf32>
    %401 = vector.extract_strided_slice %398 {offsets = [1, 0, 0], sizes = [1, 4, 32], strides = [1, 1, 1]} : vector<4x4x32xf32> to vector<1x4x32xf32>
    %402 = vector.shape_cast %401 : vector<1x4x32xf32> to vector<4x32xf32>
    %403 = vector.extract_strided_slice %398 {offsets = [2, 0, 0], sizes = [1, 4, 32], strides = [1, 1, 1]} : vector<4x4x32xf32> to vector<1x4x32xf32>
    %404 = vector.shape_cast %403 : vector<1x4x32xf32> to vector<4x32xf32>
    %405 = vector.extract_strided_slice %398 {offsets = [3, 0, 0], sizes = [1, 4, 32], strides = [1, 1, 1]} : vector<4x4x32xf32> to vector<1x4x32xf32>
    %406 = vector.shape_cast %405 : vector<1x4x32xf32> to vector<4x32xf32>
    %407 = tpu.concatenate %400, %402, %404, %406 in 1 : vector<4x32xf32>, vector<4x32xf32>, vector<4x32xf32>, vector<4x32xf32> -> vector<4x128xf32>
    %cst_122 = arith.constant dense<0.000000e+00> : vector<4x128xf32>
    %408 = tpu.matmul %407, %354, %cst_122 {dimension_numbers = #tpu.dot_dimension_numbers<[1], [0], [0], [1], [0, 0, 1, 1], [], []>} : vector<4x128xf32>, vector<128x128xf32>, vector<4x128xf32> -> vector<4x128xf32>
    %409 = tpu.concatenate %156, %219, %282, %345, %408 in 0 : vector<4x128xf32>, vector<4x128xf32>, vector<4x128xf32>, vector<4x128xf32>, vector<4x128xf32> -> vector<20x128xf32>
    %cst_123 = arith.constant dense<0.000000e+00> : vector<20x128xf32>
    %410 = tpu.matmul %93, %2, %cst_123 {dimension_numbers = #tpu.dot_dimension_numbers<[1], [0], [0], [1], [0, 0, 1, 1], [], []>} : vector<20x128xf32>, vector<128x128xf32>, vector<20x128xf32> -> vector<20x128xf32>
    %411 = vector.broadcast %3 : vector<1x128xf32> to vector<20x128xf32>
    %412 = arith.addf %410, %411 : vector<20x128xf32>
    %cst_124 = arith.constant 0.000000e+00 : f32
    %413 = vector.broadcast %cst_124 : f32 to vector<20x128xf32>
    %414 = arith.maximumf %412, %413 : vector<20x128xf32>
    %cst_125 = arith.constant dense<0.000000e+00> : vector<20x128xf32>
    %415 = tpu.matmul %409, %2, %cst_125 {dimension_numbers = #tpu.dot_dimension_numbers<[1], [0], [0], [1], [0, 0, 1, 1], [], []>} : vector<20x128xf32>, vector<128x128xf32>, vector<20x128xf32> -> vector<20x128xf32>
    %416 = vector.broadcast %3 : vector<1x128xf32> to vector<20x128xf32>
    %417 = arith.addf %415, %416 : vector<20x128xf32>
    %cst_126 = arith.constant 0.000000e+00 : f32
    %418 = vector.broadcast %cst_126 : f32 to vector<20x128xf32>
    %419 = arith.maximumf %417, %418 : vector<20x128xf32>
    %420 = arith.mulf %414, %414 : vector<20x128xf32>
    %cst_127 = arith.constant dense<0.000000e+00> : vector<20xf32>
    %421 = vector.multi_reduction <add>, %420, %cst_127 [1] : vector<20x128xf32> to vector<20xf32>
    %422 = vector.shape_cast %421 : vector<20xf32> to vector<20x1xf32>
    %cst_128 = arith.constant 1.000000e-24 : f32
    %423 = vector.broadcast %cst_128 : f32 to vector<20x1xf32>
    %424 = arith.maximumf %422, %423 : vector<20x1xf32>
    %425 = math.rsqrt %424 : vector<20x1xf32>
    %426 = vector.broadcast %425 : vector<20x1xf32> to vector<20x128xf32>
    %427 = arith.mulf %414, %426 : vector<20x128xf32>
    %428 = arith.mulf %419, %419 : vector<20x128xf32>
    %cst_129 = arith.constant dense<0.000000e+00> : vector<20xf32>
    %429 = vector.multi_reduction <add>, %428, %cst_129 [1] : vector<20x128xf32> to vector<20xf32>
    %430 = vector.shape_cast %429 : vector<20xf32> to vector<20x1xf32>
    %cst_130 = arith.constant 1.000000e-24 : f32
    %431 = vector.broadcast %cst_130 : f32 to vector<20x1xf32>
    %432 = arith.maximumf %430, %431 : vector<20x1xf32>
    %433 = math.rsqrt %432 : vector<20x1xf32>
    %434 = vector.broadcast %433 : vector<20x1xf32> to vector<20x128xf32>
    %435 = arith.mulf %419, %434 : vector<20x128xf32>
    %436 = arith.addf %427, %435 : vector<20x128xf32>
    %c0_131 = arith.constant 0 : index
    %c0_132 = arith.constant 0 : index
    %c0_133 = arith.constant 0 : index
    %437 = vector.load %arg12[%c0_131, %c0_132, %c0_133] : memref<1x20x128xf32, #tpu.memory_space<vmem>>, vector<1x20x128xf32>
    %438 = vector.shape_cast %437 : vector<1x20x128xf32> to vector<20x128xf32>
    %439 = vector.shape_cast %436 : vector<20x128xf32> to vector<1x20x128xf32>
    tpu.vector_store %arg12[%c0_131, %c0_132, %c0_133], %439 {strides = array<i32>} : memref<1x20x128xf32, #tpu.memory_space<vmem>>, vector<1x20x128xf32>,
    return
  }
  func.func @transform_0(%arg0: i32) -> (i32, i32, i32) {
    %c0_i32 = arith.constant 0 : i32
    %c0_i32_0 = arith.constant 0 : i32
    %c0_i32_1 = arith.constant 0 : i32
    return %arg0, %c0_i32, %c0_i32_0 : i32, i32, i32
  }
  func.func @transform_1(%arg0: i32) -> (i32, i32) {
    %c0_i32 = arith.constant 0 : i32
    %c0_i32_0 = arith.constant 0 : i32
    %c0_i32_1 = arith.constant 0 : i32
    return %c0_i32, %c0_i32_0 : i32, i32
  }
  func.func @transform_2(%arg0: i32) -> (i32, i32) {
    %c0_i32 = arith.constant 0 : i32
    %c0_i32_0 = arith.constant 0 : i32
    %c0_i32_1 = arith.constant 0 : i32
    return %c0_i32, %c0_i32_0 : i32, i32
  }
  func.func @transform_3(%arg0: i32) -> (i32, i32) {
    %c0_i32 = arith.constant 0 : i32
    %c0_i32_0 = arith.constant 0 : i32
    %c0_i32_1 = arith.constant 0 : i32
    return %c0_i32, %c0_i32_0 : i32, i32
  }
  func.func @transform_4(%arg0: i32) -> (i32, i32) {
    %c0_i32 = arith.constant 0 : i32
    %c0_i32_0 = arith.constant 0 : i32
    %c0_i32_1 = arith.constant 0 : i32
    return %c0_i32, %c0_i32_0 : i32, i32
  }
  func.func @transform_5(%arg0: i32) -> (i32, i32, i32) {
    %c0_i32 = arith.constant 0 : i32
    %c0_i32_0 = arith.constant 0 : i32
    %c0_i32_1 = arith.constant 0 : i32
    %c0_i32_2 = arith.constant 0 : i32
    return %c0_i32, %c0_i32_0, %c0_i32_1 : i32, i32, i32
  }
  func.func @transform_6(%arg0: i32) -> (i32, i32, i32) {
    %c0_i32 = arith.constant 0 : i32
    %c0_i32_0 = arith.constant 0 : i32
    %c0_i32_1 = arith.constant 0 : i32
    %c0_i32_2 = arith.constant 0 : i32
    return %c0_i32, %c0_i32_0, %c0_i32_1 : i32, i32, i32
  }
  func.func @transform_7(%arg0: i32) -> (i32, i32, i32) {
    %c0_i32 = arith.constant 0 : i32
    %c0_i32_0 = arith.constant 0 : i32
    %c0_i32_1 = arith.constant 0 : i32
    %c0_i32_2 = arith.constant 0 : i32
    return %c0_i32, %c0_i32_0, %c0_i32_1 : i32, i32, i32
  }
  func.func @transform_8(%arg0: i32) -> (i32, i32, i32) {
    %c0_i32 = arith.constant 0 : i32
    %c0_i32_0 = arith.constant 0 : i32
    %c0_i32_1 = arith.constant 0 : i32
    %c0_i32_2 = arith.constant 0 : i32
    return %c0_i32, %c0_i32_0, %c0_i32_1 : i32, i32, i32
  }
  func.func @transform_9(%arg0: i32) -> (i32, i32) {
    %c0_i32 = arith.constant 0 : i32
    %c0_i32_0 = arith.constant 0 : i32
    %c0_i32_1 = arith.constant 0 : i32
    return %c0_i32, %c0_i32_0 : i32, i32
  }
  func.func @transform_10(%arg0: i32) -> (i32, i32) {
    %c0_i32 = arith.constant 0 : i32
    %c0_i32_0 = arith.constant 0 : i32
    %c0_i32_1 = arith.constant 0 : i32
    return %c0_i32, %c0_i32_0 : i32, i32
  }
  func.func @transform_11(%arg0: i32) -> (i32, i32, i32) {
    %c0_i32 = arith.constant 0 : i32
    %c0_i32_0 = arith.constant 0 : i32
    %c0_i32_1 = arith.constant 0 : i32
    return %arg0, %c0_i32, %c0_i32_0 : i32, i32, i32
  }
}

</mosaic_0001>

<llo_original>
// kernel: tpu_custom_call.1
$region0: #{tpu_custom_call.1}
  #allocation0 [shape = 'u32[]', space=smem, size = 0x4, offset = 0x4, fixed_abs, tag = 'smem constant byte address 0x4 - core index']
  #allocation1 [shape = 'u32[144,128]{1,0:T(1,128)}', space=vmem, size = 0x12000, scoped, tag = 'internal scratch']
  %s0 = inlined_call_operand.hbm [shape: f32[2,20,128], index: 0, kind: input, shape index: {}]
  %s1 = inlined_call_operand.hbm [shape: f32[128,128], index: 1, kind: input, shape index: {}]
  %s2 = inlined_call_operand.hbm [shape: f32[128,128], index: 2, kind: input, shape index: {}]
  %s3 = inlined_call_operand.hbm [shape: f32[128,128], index: 3, kind: input, shape index: {}]
  %s4 = inlined_call_operand.hbm [shape: f32[128,128], index: 4, kind: input, shape index: {}]
  %s5 = inlined_call_operand.hbm [shape: f32[5,128,128], index: 5, kind: input, shape index: {}]
  %s6 = inlined_call_operand.hbm [shape: f32[5,128,128], index: 6, kind: input, shape index: {}]
  %s7 = inlined_call_operand.hbm [shape: f32[5,128,128], index: 7, kind: input, shape index: {}]
  %s8 = inlined_call_operand.hbm [shape: f32[5,128,128], index: 8, kind: input, shape index: {}]
  %s9 = inlined_call_operand.hbm [shape: f32[128,128], index: 9, kind: input, shape index: {}]
  %s10 = inlined_call_operand.hbm [shape: f32[1,128], index: 10, kind: input, shape index: {}]
  %s11 = inlined_call_operand.hbm [shape: f32[2,20,128], index: 11, kind: output, shape index: {}]
  %s12 = sld [smem:[#allocation0]]
  $region121: #{tpu_custom_call.1} parent=0
    _
  %s14 = ssub.s32 1, %s12
  %s15 = scalar_select 0, %s14, %s12
  $region1: #{tpu_custom_call.1} parent=0
    #allocation2 [shape = 'u8[24576]{0}', space=vmem, size = 0x6000, scoped, tag = 'input window, operand 0']
    #allocation3 [shape = 's32[2]{0}', space=sflag, size = 0x8, scoped, tag = 'scoped memory for tpu_custom_call.1']
    #allocation4 [shape = 's32[2]{0}', space=sflag, size = 0x8, scoped, tag = 'scoped memory for tpu_custom_call.1']
    #allocation5 [shape = 'u8[65536]{0}', space=vmem, size = 0x10000, scoped, tag = 'input window, operand 1, single buffered']
    #allocation6 [shape = 's32[1]{0}', space=sflag, size = 0x4, scoped, tag = 'scoped memory for tpu_custom_call.1']
    #allocation7 [shape = 'u8[65536]{0}', space=vmem, size = 0x10000, scoped, tag = 'input window, operand 2, single buffered']
    #allocation8 [shape = 'u8[65536]{0}', space=vmem, size = 0x10000, scoped, tag = 'input window, operand 3, single buffered']
    #allocation9 [shape = 's32[1]{0}', space=sflag, size = 0x4, scoped, tag = 'scoped memory for tpu_custom_call.1']
    #allocation10 [shape = 'u8[65536]{0}', space=vmem, size = 0x10000, scoped, tag = 'input window, operand 4, single buffered']
    #allocation11 [shape = 'u8[327680]{0}', space=vmem, size = 0x50000, scoped, tag = 'input window, operand 5, single buffered']
    #allocation12 [shape = 's32[1]{0}', space=sflag, size = 0x4, scoped, tag = 'scoped memory for tpu_custom_call.1']
    #allocation13 [shape = 'u8[327680]{0}', space=vmem, size = 0x50000, scoped, tag = 'input window, operand 6, single buffered']
    #allocation14 [shape = 'u8[327680]{0}', space=vmem, size = 0x50000, scoped, tag = 'input window, operand 7, single buffered']
    #allocation15 [shape = 's32[1]{0}', space=sflag, size = 0x4, scoped, tag = 'scoped memory for tpu_custom_call.1']
    #allocation16 [shape = 'u8[327680]{0}', space=vmem, size = 0x50000, scoped, tag = 'input window, operand 8, single buffered']
    #allocation17 [shape = 'u8[65536]{0}', space=vmem, size = 0x10000, scoped, tag = 'input window, operand 9, single buffered']
    #allocation18 [shape = 's32[1]{0}', space=sflag, size = 0x4, scoped, tag = 'scoped memory for tpu_custom_call.1']
    #allocation19 [shape = 'u8[512]{0}', space=vmem, size = 0x400, scoped, tag = 'input window, operand 10, single buffered']
    #allocation20 [shape = 'u8[24576]{0}', space=vmem, size = 0x6000, scoped, tag = 'output window, operand 0']
    %16 = vsyncpa [#allocation3], 0
    %s17 = scalar_lea.sflag [#allocation3], 1
    %18 = vsyncpa %s17, 0
    %19 = vsyncpa [#allocation6], 0
    %20 = vsyncpa [#allocation9], 0
    %21 = vsyncpa [#allocation12], 0
    %22 = vsyncpa [#allocation15], 0
    %23 = vsyncpa [#allocation18], 0
    %24 = vsyncpa [#allocation4], 0
    %s25 = scalar_lea.sflag [#allocation4], 1
    %26 = vsyncpa %s25, 0
    loop: start=0, step=1, limit=4
    $region2: #{tpu_custom_call.1} parent=1 // loop_pre_header
      _
    $region3: #{tpu_custom_call.1} parent=1 // loop_header
      %s28 = sphi 0, %s32
      %p29 = scmp.ge.s32.totalorder %s28, 4
      %s38 = sphi 0, %s40
      %s41 = sphi 0, %s38
      %s42 = sphi 0, %s41
      %s58 = sphi 0, %s42
      %s62 = sphi 0, %s62
      %s64 = sphi 0, %s62
      %s65 = sphi 0, %s64
      %s79 = sphi 0, %s65
      %s83 = sphi 0, %s83
      %s85 = sphi 0, %s83
      %s86 = sphi 0, %s85
      %s100 = sphi 0, %s86
      %s104 = sphi 0, %s104
      %s106 = sphi 0, %s104
      %s107 = sphi 0, %s106
      %s121 = sphi 0, %s107
      %s125 = sphi 0, %s125
      %s127 = sphi 0, %s125
      %s128 = sphi 0, %s127
      %s142 = sphi 0, %s128
      %s146 = sphi 0, %s146
      %s148 = sphi 0, %s146
      %s149 = sphi 0, %s148
      %s163 = sphi 0, %s149
      %s167 = sphi 0, %s167
      %s169 = sphi 0, %s167
      %s170 = sphi 0, %s169
      %s184 = sphi 0, %s170
      %s188 = sphi 0, %s188
      %s190 = sphi 0, %s188
      %s191 = sphi 0, %s190
      %s205 = sphi 0, %s191
      %s209 = sphi 0, %s209
      %s211 = sphi 0, %s209
      %s212 = sphi 0, %s211
      %s226 = sphi 0, %s212
      %s230 = sphi 0, %s230
      %s232 = sphi 0, %s230
      %s233 = sphi 0, %s232
      %s247 = sphi 0, %s233
      %s251 = sphi 0, %s251
      %s253 = sphi 0, %s251
      %s254 = sphi 0, %s253
      %s268 = sphi 0, %s254
      %s274 = sphi 0, %s276
      %s277 = sphi 0, %s274
      %s278 = sphi 0, %s277
      %s294 = sphi 0, %s278
    $region4: #{tpu_custom_call.1} parent=1 // loop_header_branch
      %31 = sbr.rel (%p29) target = $region8
    $region5: #{tpu_custom_call.1} parent=1 // loop_body
      %s33 = ssub.s32 %s28, 1
      %s34 = ssub.s32 %s28, 2
      %s35 = sadd.s32 %s28, 1
      %s36 = ssub.s32 %s28, %s35
      %p37 = scmp.eq.s32.totalorder %s36, 0
      %s39 = sadd.s32 %s38, 1
      %s40 = scalar_select %p37, %s38, %s39
      %p43 = pneg %p37
      %p44 = scmp.eq.s32.totalorder %s28, 1
      %p45 = por %p43, %p44
      %p46 = scmp.ne.s32.totalorder %s38, %s41
      %p47 = scmp.eq.s32.totalorder %s28, 0
      %p48 = por %p46, %p47
      %p49 = scmp.ne.s32.totalorder %s38, %s41
      %p50 = scmp.eq.s32.totalorder %s33, 1
      %p51 = por %p49, %p50
      %p52 = scmp.ne.s32.totalorder %s41, %s42
      %p53 = scmp.eq.s32.totalorder %s33, 0
      %p54 = por %p52, %p53
      %p55 = scmp.ne.s32.totalorder %s41, %s42
      %p56 = scmp.eq.s32.totalorder %s34, 1
      %p57 = por %p55, %p56
      %p59 = scmp.ne.s32.totalorder %s42, %s58
      %p60 = scmp.eq.s32.totalorder %s34, 0
      %p61 = por %p59, %p60
      %s63 = sadd.s32 %s62, 1
      %p66 = scmp.eq.s32.totalorder %s28, 1
      %p67 = scmp.ne.s32.totalorder %s62, %s64
      %p68 = scmp.eq.s32.totalorder %s28, 0
      %p69 = por %p67, %p68
      %p70 = scmp.ne.s32.totalorder %s62, %s64
      %p71 = scmp.eq.s32.totalorder %s33, 1
      %p72 = por %p70, %p71
      %p73 = scmp.ne.s32.totalorder %s64, %s65
      %p74 = scmp.eq.s32.totalorder %s33, 0
      %p75 = por %p73, %p74
      %p76 = scmp.ne.s32.totalorder %s64, %s65
      %p77 = scmp.eq.s32.totalorder %s34, 1
      %p78 = por %p76, %p77
      %p80 = scmp.ne.s32.totalorder %s65, %s79
      %p81 = scmp.eq.s32.totalorder %s34, 0
      %p82 = por %p80, %p81
      %s84 = sadd.s32 %s83, 1
      %p87 = scmp.eq.s32.totalorder %s28, 1
      %p88 = scmp.ne.s32.totalorder %s83, %s85
      %p89 = scmp.eq.s32.totalorder %s28, 0
      %p90 = por %p88, %p89
      %p91 = scmp.ne.s32.totalorder %s83, %s85
      %p92 = scmp.eq.s32.totalorder %s33, 1
      %p93 = por %p91, %p92
      %p94 = scmp.ne.s32.totalorder %s85, %s86
      %p95 = scmp.eq.s32.totalorder %s33, 0
      %p96 = por %p94, %p95
      %p97 = scmp.ne.s32.totalorder %s85, %s86
      %p98 = scmp.eq.s32.totalorder %s34, 1
      %p99 = por %p97, %p98
      %p101 = scmp.ne.s32.totalorder %s86, %s100
      %p102 = scmp.eq.s32.totalorder %s34, 0
      %p103 = por %p101, %p102
      %s105 = sadd.s32 %s104, 1
      %p108 = scmp.eq.s32.totalorder %s28, 1
      %p109 = scmp.ne.s32.totalorder %s104, %s106
      %p110 = scmp.eq.s32.totalorder %s28, 0
      %p111 = por %p109, %p110
      %p112 = scmp.ne.s32.totalorder %s104, %s106
      %p113 = scmp.eq.s32.totalorder %s33, 1
      %p114 = por %p112, %p113
      %p115 = scmp.ne.s32.totalorder %s106, %s107
      %p116 = scmp.eq.s32.totalorder %s33, 0
      %p117 = por %p115, %p116
      %p118 = scmp.ne.s32.totalorder %s106, %s107
      %p119 = scmp.eq.s32.totalorder %s34, 1
      %p120 = por %p118, %p119
      %p122 = scmp.ne.s32.totalorder %s107, %s121
      %p123 = scmp.eq.s32.totalorder %s34, 0
      %p124 = por %p122, %p123
      %s126 = sadd.s32 %s125, 1
      %p129 = scmp.eq.s32.totalorder %s28, 1
      %p130 = scmp.ne.s32.totalorder %s125, %s127
      %p131 = scmp.eq.s32.totalorder %s28, 0
      %p132 = por %p130, %p131
      %p133 = scmp.ne.s32.totalorder %s125, %s127
      %p134 = scmp.eq.s32.totalorder %s33, 1
      %p135 = por %p133, %p134
      %p136 = scmp.ne.s32.totalorder %s127, %s128
      %p137 = scmp.eq.s32.totalorder %s33, 0
      %p138 = por %p136, %p137
      %p139 = scmp.ne.s32.totalorder %s127, %s128
      %p140 = scmp.eq.s32.totalorder %s34, 1
      %p141 = por %p139, %p140
      %p143 = scmp.ne.s32.totalorder %s128, %s142
      %p144 = scmp.eq.s32.totalorder %s34, 0
      %p145 = por %p143, %p144
      %s147 = sadd.s32 %s146, 1
      %p150 = scmp.eq.s32.totalorder %s28, 1
      %p151 = scmp.ne.s32.totalorder %s146, %s148
      %p152 = scmp.eq.s32.totalorder %s28, 0
      %p153 = por %p151, %p152
      %p154 = scmp.ne.s32.totalorder %s146, %s148
      %p155 = scmp.eq.s32.totalorder %s33, 1
      %p156 = por %p154, %p155
      %p157 = scmp.ne.s32.totalorder %s148, %s149
      %p158 = scmp.eq.s32.totalorder %s33, 0
      %p159 = por %p157, %p158
      %p160 = scmp.ne.s32.totalorder %s148, %s149
      %p161 = scmp.eq.s32.totalorder %s34, 1
      %p162 = por %p160, %p161
      %p164 = scmp.ne.s32.totalorder %s149, %s163
      %p165 = scmp.eq.s32.totalorder %s34, 0
      %p166 = por %p164, %p165
      %s168 = sadd.s32 %s167, 1
      %p171 = scmp.eq.s32.totalorder %s28, 1
      %p172 = scmp.ne.s32.totalorder %s167, %s169
      %p173 = scmp.eq.s32.totalorder %s28, 0
      %p174 = por %p172, %p173
      %p175 = scmp.ne.s32.totalorder %s167, %s169
      %p176 = scmp.eq.s32.totalorder %s33, 1
      %p177 = por %p175, %p176
      %p178 = scmp.ne.s32.totalorder %s169, %s170
      %p179 = scmp.eq.s32.totalorder %s33, 0
      %p180 = por %p178, %p179
      %p181 = scmp.ne.s32.totalorder %s169, %s170
      %p182 = scmp.eq.s32.totalorder %s34, 1
      %p183 = por %p181, %p182
      %p185 = scmp.ne.s32.totalorder %s170, %s184
      %p186 = scmp.eq.s32.totalorder %s34, 0
      %p187 = por %p185, %p186
      %s189 = sadd.s32 %s188, 1
      %p192 = scmp.eq.s32.totalorder %s28, 1
      %p193 = scmp.ne.s32.totalorder %s188, %s190
      %p194 = scmp.eq.s32.totalorder %s28, 0
      %p195 = por %p193, %p194
      %p196 = scmp.ne.s32.totalorder %s188, %s190
      %p197 = scmp.eq.s32.totalorder %s33, 1
      %p198 = por %p196, %p197
      %p199 = scmp.ne.s32.totalorder %s190, %s191
      %p200 = scmp.eq.s32.totalorder %s33, 0
      %p201 = por %p199, %p200
      %p202 = scmp.ne.s32.totalorder %s190, %s191
      %p203 = scmp.eq.s32.totalorder %s34, 1
      %p204 = por %p202, %p203
      %p206 = scmp.ne.s32.totalorder %s191, %s205
      %p207 = scmp.eq.s32.totalorder %s34, 0
      %p208 = por %p206, %p207
      %s210 = sadd.s32 %s209, 1
      %p213 = scmp.eq.s32.totalorder %s28, 1
      %p214 = scmp.ne.s32.totalorder %s209, %s211
      %p215 = scmp.eq.s32.totalorder %s28, 0
      %p216 = por %p214, %p215
      %p217 = scmp.ne.s32.totalorder %s209, %s211
      %p218 = scmp.eq.s32.totalorder %s33, 1
      %p219 = por %p217, %p218
      %p220 = scmp.ne.s32.totalorder %s211, %s212
      %p221 = scmp.eq.s32.totalorder %s33, 0
      %p222 = por %p220, %p221
      %p223 = scmp.ne.s32.totalorder %s211, %s212
      %p224 = scmp.eq.s32.totalorder %s34, 1
      %p225 = por %p223, %p224
      %p227 = scmp.ne.s32.totalorder %s212, %s226
      %p228 = scmp.eq.s32.totalorder %s34, 0
      %p229 = por %p227, %p228
      %s231 = sadd.s32 %s230, 1
      %p234 = scmp.eq.s32.totalorder %s28, 1
      %p235 = scmp.ne.s32.totalorder %s230, %s232
      %p236 = scmp.eq.s32.totalorder %s28, 0
      %p237 = por %p235, %p236
      %p238 = scmp.ne.s32.totalorder %s230, %s232
      %p239 = scmp.eq.s32.totalorder %s33, 1
      %p240 = por %p238, %p239
      %p241 = scmp.ne.s32.totalorder %s232, %s233
      %p242 = scmp.eq.s32.totalorder %s33, 0
      %p243 = por %p241, %p242
      %p244 = scmp.ne.s32.totalorder %s232, %s233
      %p245 = scmp.eq.s32.totalorder %s34, 1
      %p246 = por %p244, %p245
      %p248 = scmp.ne.s32.totalorder %s233, %s247
      %p249 = scmp.eq.s32.totalorder %s34, 0
      %p250 = por %p248, %p249
      %s252 = sadd.s32 %s251, 1
      %p255 = scmp.eq.s32.totalorder %s28, 1
      %p256 = scmp.ne.s32.totalorder %s251, %s253
      %p257 = scmp.eq.s32.totalorder %s28, 0
      %p258 = por %p256, %p257
      %p259 = scmp.ne.s32.totalorder %s251, %s253
      %p260 = scmp.eq.s32.totalorder %s33, 1
      %p261 = por %p259, %p260
      %p262 = scmp.ne.s32.totalorder %s253, %s254
      %p263 = scmp.eq.s32.totalorder %s33, 0
      %p264 = por %p262, %p263
      %p265 = scmp.ne.s32.totalorder %s253, %s254
      %p266 = scmp.eq.s32.totalorder %s34, 1
      %p267 = por %p265, %p266
      %p269 = scmp.ne.s32.totalorder %s254, %s268
      %p270 = scmp.eq.s32.totalorder %s34, 0
      %p271 = por %p269, %p270
      %s272 = ssub.s32 %s28, %s35
      %p273 = scmp.eq.s32.totalorder %s272, 0
      %s275 = sadd.s32 %s274, 1
      %s276 = scalar_select %p273, %s274, %s275
      %p279 = pneg %p273
      %p280 = scmp.eq.s32.totalorder %s28, 1
      %p281 = por %p279, %p280
      %p282 = scmp.ne.s32.totalorder %s274, %s277
      %p283 = scmp.eq.s32.totalorder %s28, 0
      %p284 = por %p282, %p283
      %p285 = scmp.ne.s32.totalorder %s274, %s277
      %p286 = scmp.eq.s32.totalorder %s33, 1
      %p287 = por %p285, %p286
      %p288 = scmp.ne.s32.totalorder %s277, %s278
      %p289 = scmp.eq.s32.totalorder %s33, 0
      %p290 = por %p288, %p289
      %p291 = scmp.ne.s32.totalorder %s277, %s278
      %p292 = scmp.eq.s32.totalorder %s34, 1
      %p293 = por %p291, %p292
      %p295 = scmp.ne.s32.totalorder %s278, %s294
      %p296 = scmp.eq.s32.totalorder %s34, 0
      %p297 = por %p295, %p296
      %p298 = scmp.le.s32.totalorder 1, %s28
      %p299 = scmp.lt.s32.totalorder %s28, 3
      %p300 = pnand %p298, %p299
      %p301 = pneg %p300
      // Predicated region
      $region9: #{tpu_custom_call.1} parent=5 // pred_check
        _
      $region10: #{tpu_custom_call.1} parent=5 // pred_check_branch
        %303 = sbr.rel (%p300) target = $region12
      $region11: #{tpu_custom_call.1} parent=5 // pred_region
        %s304 = ssub.s32 %s28, 1
        // Predicated region
        $region13: #{tpu_custom_call.1} parent=11 // pred_check
          %p305 = pneg %p75
        $region14: #{tpu_custom_call.1} parent=11 // pred_check_branch
          %307 = sbr.rel (%p305) target = $region16
        $region15: #{tpu_custom_call.1} parent=11 // pred_region
          %s309 = ssub.s32 2048, 2048
          %310 = vsyncadd [#allocation6], %s309
          %s311 = sshll.u32 [#allocation5], 4
          %s312 = int_to_ptr.vmem [resolvable:$true] %s311
          %317 = dma.hbm_to_vmem [thread:$0]  %s1, 2048, %s312, [#allocation6], 128, 128, 8
        $region16: #{tpu_custom_call.1} parent=11 // pred_fallthru
          _
        // Predicated region
        $region17: #{tpu_custom_call.1} parent=11 // pred_check
          %p318 = pneg %p96
        $region18: #{tpu_custom_call.1} parent=11 // pred_check_branch
          %320 = sbr.rel (%p318) target = $region20
        $region19: #{tpu_custom_call.1} parent=11 // pred_region
          %s322 = ssub.s32 2048, 2048
          %323 = vsyncadd [#allocation6], %s322
          %s324 = sshll.u32 [#allocation7], 4
          %s325 = int_to_ptr.vmem [resolvable:$true] %s324
          %330 = dma.hbm_to_vmem [thread:$0]  %s2, 2048, %s325, [#allocation6], 128, 128, 8
        $region20: #{tpu_custom_call.1} parent=11 // pred_fallthru
          _
        // Predicated region
        $region21: #{tpu_custom_call.1} parent=11 // pred_check
          %p331 = pneg %p117
        $region22: #{tpu_custom_call.1} parent=11 // pred_check_branch
          %333 = sbr.rel (%p331) target = $region24
        $region23: #{tpu_custom_call.1} parent=11 // pred_region
          %s335 = ssub.s32 2048, 2048
          %336 = vsyncadd [#allocation9], %s335
          %s337 = sshll.u32 [#allocation8], 4
          %s338 = int_to_ptr.vmem [resolvable:$true] %s337
          %343 = dma.hbm_to_vmem [thread:$0]  %s3, 2048, %s338, [#allocation9], 128, 128, 8
        $region24: #{tpu_custom_call.1} parent=11 // pred_fallthru
          _
        // Predicated region
        $region25: #{tpu_custom_call.1} parent=11 // pred_check
          %p344 = pneg %p138
        $region26: #{tpu_custom_call.1} parent=11 // pred_check_branch
          %346 = sbr.rel (%p344) target = $region28
        $region27: #{tpu_custom_call.1} parent=11 // pred_region
          %s348 = ssub.s32 2048, 2048
          %349 = vsyncadd [#allocation9], %s348
          %s350 = sshll.u32 [#allocation10], 4
          %s351 = int_to_ptr.vmem [resolvable:$true] %s350
          %356 = dma.hbm_to_vmem [thread:$0]  %s4, 2048, %s351, [#allocation9], 128, 128, 8
        $region28: #{tpu_custom_call.1} parent=11 // pred_fallthru
          _
        // Predicated region
        $region29: #{tpu_custom_call.1} parent=11 // pred_check
          %p357 = pneg %p159
        $region30: #{tpu_custom_call.1} parent=11 // pred_check_branch
          %359 = sbr.rel (%p357) target = $region32
        $region31: #{tpu_custom_call.1} parent=11 // pred_region
          %s361 = ssub.s32 10240, 10240
          %362 = vsyncadd [#allocation12], %s361
          %s363 = sshll.u32 [#allocation11], 4
          %s364 = int_to_ptr.vmem [resolvable:$true] %s363
          %369 = dma.hbm_to_vmem [thread:$0]  %s5, 10240, %s364, [#allocation12], 128, 128, 8
        $region32: #{tpu_custom_call.1} parent=11 // pred_fallthru
          _
        // Predicated region
        $region33: #{tpu_custom_call.1} parent=11 // pred_check
          %p370 = pneg %p180
        $region34: #{tpu_custom_call.1} parent=11 // pred_check_branch
          %372 = sbr.rel (%p370) target = $region36
        $region35: #{tpu_custom_call.1} parent=11 // pred_region
          %s374 = ssub.s32 10240, 10240
          %375 = vsyncadd [#allocation12], %s374
          %s376 = sshll.u32 [#allocation13], 4
          %s377 = int_to_ptr.vmem [resolvable:$true] %s376
          %382 = dma.hbm_to_vmem [thread:$0]  %s6, 10240, %s377, [#allocation12], 128, 128, 8
        $region36: #{tpu_custom_call.1} parent=11 // pred_fallthru
          _
        // Predicated region
        $region37: #{tpu_custom_call.1} parent=11 // pred_check
          %p383 = pneg %p201
        $region38: #{tpu_custom_call.1} parent=11 // pred_check_branch
          %385 = sbr.rel (%p383) target = $region40
        $region39: #{tpu_custom_call.1} parent=11 // pred_region
          %s387 = ssub.s32 10240, 10240
          %388 = vsyncadd [#allocation15], %s387
          %s389 = sshll.u32 [#allocation14], 4
          %s390 = int_to_ptr.vmem [resolvable:$true] %s389
          %395 = dma.hbm_to_vmem [thread:$0]  %s7, 10240, %s390, [#allocation15], 128, 128, 8
        $region40: #{tpu_custom_call.1} parent=11 // pred_fallthru
          _
        // Predicated region
        $region41: #{tpu_custom_call.1} parent=11 // pred_check
          %p396 = pneg %p222
        $region42: #{tpu_custom_call.1} parent=11 // pred_check_branch
          %398 = sbr.rel (%p396) target = $region44
        $region43: #{tpu_custom_call.1} parent=11 // pred_region
          %s400 = ssub.s32 10240, 10240
          %401 = vsyncadd [#allocation15], %s400
          %s402 = sshll.u32 [#allocation16], 4
          %s403 = int_to_ptr.vmem [resolvable:$true] %s402
          %408 = dma.hbm_to_vmem [thread:$0]  %s8, 10240, %s403, [#allocation15], 128, 128, 8
        $region44: #{tpu_custom_call.1} parent=11 // pred_fallthru
          _
        // Predicated region
        $region45: #{tpu_custom_call.1} parent=11 // pred_check
          %p409 = pneg %p243
        $region46: #{tpu_custom_call.1} parent=11 // pred_check_branch
          %411 = sbr.rel (%p409) target = $region48
        $region47: #{tpu_custom_call.1} parent=11 // pred_region
          %s413 = ssub.s32 2048, 2048
          %414 = vsyncadd [#allocation18], %s413
          %s415 = sshll.u32 [#allocation17], 4
          %s416 = int_to_ptr.vmem [resolvable:$true] %s415
          %421 = dma.hbm_to_vmem [thread:$0]  %s9, 2048, %s416, [#allocation18], 128, 128, 8
        $region48: #{tpu_custom_call.1} parent=11 // pred_fallthru
          _
        // Predicated region
        $region49: #{tpu_custom_call.1} parent=11 // pred_check
          %p422 = pneg %p264
        $region50: #{tpu_custom_call.1} parent=11 // pred_check_branch
          %424 = sbr.rel (%p422) target = $region52
        $region51: #{tpu_custom_call.1} parent=11 // pred_region
          %s426 = ssub.s32 16, 16
          %427 = vsyncadd [#allocation18], %s426
          %s429 = sshll.u32 [#allocation19], 4
          %s430 = int_to_ptr.vmem [resolvable:$true] %s429
          %432 = dma.hbm_to_vmem [thread:$0]  %s10, 16, %s430, [#allocation18]
        $region52: #{tpu_custom_call.1} parent=11 // pred_fallthru
          _
      $region12: #{tpu_custom_call.1} parent=5 // pred_fallthru
        _
      %p433 = scmp.lt.s32.totalorder %s28, 2
      // Predicated region
      $region53: #{tpu_custom_call.1} parent=5 // pred_check
        %p434 = pneg %p433
      $region54: #{tpu_custom_call.1} parent=5 // pred_check_branch
        %436 = sbr.rel (%p434) target = $region56
      $region55: #{tpu_custom_call.1} parent=5 // pred_region
        // Predicated region
        $region57: #{tpu_custom_call.1} parent=55 // pred_check
          %p437 = pneg %p48
        $region58: #{tpu_custom_call.1} parent=55 // pred_check_branch
          %439 = sbr.rel (%p437) target = $region60
        $region59: #{tpu_custom_call.1} parent=55 // pred_region
          %s440 = sand.u32 %s38, 1
          %s441 = scalar_lea.sflag [#allocation3], %s440
          %s442 = sand.u32 %s38, 1
          %s443 = smul.addr %s442, 24
          %s444 = scalar_lea.vmem [#allocation2], %s443
          %s446 = ssub.s32 384, 384
          %447 = vsyncadd %s441, %s446
          %s448 = smul.addr %s28, 3
          %s449 = smul.addr %s448, 128
          %s450 = scalar_lea.hbm %s0, %s449
          %s451 = sshll.u32 %s444, 4
          %s452 = int_to_ptr.vmem [resolvable:$true] %s451
          %457 = dma.hbm_to_vmem [thread:$0]  %s450, 384, %s452, %s441, 128, 128, 8
        $region60: #{tpu_custom_call.1} parent=55 // pred_fallthru
          _
      $region56: #{tpu_custom_call.1} parent=5 // pred_fallthru
        _
      %p458 = scmp.le.s32.totalorder 1, %s28
      %p459 = scmp.lt.s32.totalorder %s28, 3
      %p460 = pnand %p458, %p459
      %p461 = pneg %p460
      // Predicated region
      $region61: #{tpu_custom_call.1} parent=5 // pred_check
        _
      $region62: #{tpu_custom_call.1} parent=5 // pred_check_branch
        %463 = sbr.rel (%p460) target = $region64
      $region63: #{tpu_custom_call.1} parent=5 // pred_region
        %s464 = ssub.s32 %s28, 1
        %s465 = sand.u32 %s41, 1
        %s466 = scalar_lea.sflag [#allocation3], %s465
        %s467 = sand.u32 %s41, 1
        %s468 = smul.addr %s467, 24
        %s469 = scalar_lea.vmem [#allocation2], %s468
        // Predicated region
        $region65: #{tpu_custom_call.1} parent=63 // pred_check
          %p470 = pneg %p54
        $region66: #{tpu_custom_call.1} parent=63 // pred_check_branch
          %472 = sbr.rel (%p470) target = $region68
        $region67: #{tpu_custom_call.1} parent=63 // pred_region
          %473 = dma.done %s466, 384
        $region68: #{tpu_custom_call.1} parent=63 // pred_fallthru
          _
        // Predicated region
        $region69: #{tpu_custom_call.1} parent=63 // pred_check
          %p474 = pneg %p75
        $region70: #{tpu_custom_call.1} parent=63 // pred_check_branch
          %476 = sbr.rel (%p474) target = $region72
        $region71: #{tpu_custom_call.1} parent=63 // pred_region
          %477 = dma.done [#allocation6], 2048
        $region72: #{tpu_custom_call.1} parent=63 // pred_fallthru
          _
        // Predicated region
        $region73: #{tpu_custom_call.1} parent=63 // pred_check
          %p478 = pneg %p96
        $region74: #{tpu_custom_call.1} parent=63 // pred_check_branch
          %480 = sbr.rel (%p478) target = $region76
        $region75: #{tpu_custom_call.1} parent=63 // pred_region
          %481 = dma.done [#allocation6], 2048
        $region76: #{tpu_custom_call.1} parent=63 // pred_fallthru
          _
        // Predicated region
        $region77: #{tpu_custom_call.1} parent=63 // pred_check
          %p482 = pneg %p117
        $region78: #{tpu_custom_call.1} parent=63 // pred_check_branch
          %484 = sbr.rel (%p482) target = $region80
        $region79: #{tpu_custom_call.1} parent=63 // pred_region
          %485 = dma.done [#allocation9], 2048
        $region80: #{tpu_custom_call.1} parent=63 // pred_fallthru
          _
        // Predicated region
        $region81: #{tpu_custom_call.1} parent=63 // pred_check
          %p486 = pneg %p138
        $region82: #{tpu_custom_call.1} parent=63 // pred_check_branch
          %488 = sbr.rel (%p486) target = $region84
        $region83: #{tpu_custom_call.1} parent=63 // pred_region
          %489 = dma.done [#allocation9], 2048
        $region84: #{tpu_custom_call.1} parent=63 // pred_fallthru
          _
        // Predicated region
        $region85: #{tpu_custom_call.1} parent=63 // pred_check
          %p490 = pneg %p159
        $region86: #{tpu_custom_call.1} parent=63 // pred_check_branch
          %492 = sbr.rel (%p490) target = $region88
        $region87: #{tpu_custom_call.1} parent=63 // pred_region
          %493 = dma.done [#allocation12], 10240
        $region88: #{tpu_custom_call.1} parent=63 // pred_fallthru
          _
        // Predicated region
        $region89: #{tpu_custom_call.1} parent=63 // pred_check
          %p494 = pneg %p180
        $region90: #{tpu_custom_call.1} parent=63 // pred_check_branch
          %496 = sbr.rel (%p494) target = $region92
        $region91: #{tpu_custom_call.1} parent=63 // pred_region
          %497 = dma.done [#allocation12], 10240
        $region92: #{tpu_custom_call.1} parent=63 // pred_fallthru
          _
        // Predicated region
        $region93: #{tpu_custom_call.1} parent=63 // pred_check
          %p498 = pneg %p201
        $region94: #{tpu_custom_call.1} parent=63 // pred_check_branch
          %500 = sbr.rel (%p498) target = $region96
        $region95: #{tpu_custom_call.1} parent=63 // pred_region
          %501 = dma.done [#allocation15], 10240
        $region96: #{tpu_custom_call.1} parent=63 // pred_fallthru
          _
        // Predicated region
        $region97: #{tpu_custom_call.1} parent=63 // pred_check
          %p502 = pneg %p222
        $region98: #{tpu_custom_call.1} parent=63 // pred_check_branch
          %504 = sbr.rel (%p502) target = $region100
        $region99: #{tpu_custom_call.1} parent=63 // pred_region
          %505 = dma.done [#allocation15], 10240
        $region100: #{tpu_custom_call.1} parent=63 // pred_fallthru
          _
        // Predicated region
        $region101: #{tpu_custom_call.1} parent=63 // pred_check
          %p506 = pneg %p243
        $region102: #{tpu_custom_call.1} parent=63 // pred_check_branch
          %508 = sbr.rel (%p506) target = $region104
        $region103: #{tpu_custom_call.1} parent=63 // pred_region
          %509 = dma.done [#allocation18], 2048
        $region104: #{tpu_custom_call.1} parent=63 // pred_fallthru
          _
        // Predicated region
        $region105: #{tpu_custom_call.1} parent=63 // pred_check
          %p510 = pneg %p264
        $region106: #{tpu_custom_call.1} parent=63 // pred_check_branch
          %512 = sbr.rel (%p510) target = $region108
        $region107: #{tpu_custom_call.1} parent=63 // pred_region
          %513 = dma.done [#allocation18], 16
        $region108: #{tpu_custom_call.1} parent=63 // pred_fallthru
          _
        %s514 = sand.u32 %s41, 1
        %s515 = scalar_lea.sflag [#allocation3], %s514
        %s516 = sand.u32 %s41, 1
        %s517 = smul.addr %s516, 24
        %s518 = scalar_lea.vmem [#allocation2], %s517
        %p519 = pneg %p54
        %p520 = pneg %p51
        %p521 = pneg %p75
        %p522 = pneg %p72
        %p523 = pneg %p96
        %p524 = pneg %p93
        %p525 = pneg %p117
        %p526 = pneg %p114
        %p527 = pneg %p138
        %p528 = pneg %p135
        %p529 = pneg %p159
        %p530 = pneg %p156
        %p531 = pneg %p180
        %p532 = pneg %p177
        %p533 = pneg %p201
        %p534 = pneg %p198
        %p535 = pneg %p222
        %p536 = pneg %p219
        %p537 = pneg %p243
        %p538 = pneg %p240
        %p539 = pneg %p264
        %p540 = pneg %p261
        %p541 = pneg %p290
        %p542 = pneg %p287
        %s543 = sand.u32 %s277, 1
        %s544 = scalar_lea.sflag [#allocation4], %s543
        %s545 = sand.u32 %s277, 1
        %s546 = smul.addr %s545, 24
        %s547 = scalar_lea.vmem [#allocation20], %s546
        %v548 = vld [vmem:[%s469] sm:$0xff]
        %v549 = vld [vmem:[%s469 + $0x8] sm:$0xff]
        %v550 = vld [vmem:[%s469 + $0x10] sm:$0xf]
        %v551 = vld [vmem:[#allocation17] sm:$0xff]
        %v552 = vld [vmem:[#allocation17 + $0x8] sm:$0xff]
        %v553 = vld [vmem:[#allocation17 + $0x10] sm:$0xff]
        %v554 = vld [vmem:[#allocation17 + $0x18] sm:$0xff]
        %v555 = vld [vmem:[#allocation17 + $0x20] sm:$0xff]
        %v556 = vld [vmem:[#allocation17 + $0x28] sm:$0xff]
        %v557 = vld [vmem:[#allocation17 + $0x30] sm:$0xff]
        %v558 = vld [vmem:[#allocation17 + $0x38] sm:$0xff]
        %v559 = vld [vmem:[#allocation17 + $0x40] sm:$0xff]
        %v560 = vld [vmem:[#allocation17 + $0x48] sm:$0xff]
        %v561 = vld [vmem:[#allocation17 + $0x50] sm:$0xff]
        %v562 = vld [vmem:[#allocation17 + $0x58] sm:$0xff]
        %v563 = vld [vmem:[#allocation17 + $0x60] sm:$0xff]
        %v564 = vld [vmem:[#allocation17 + $0x68] sm:$0xff]
        %v565 = vld [vmem:[#allocation17 + $0x70] sm:$0xff]
        %v566 = vld [vmem:[#allocation17 + $0x78] sm:$0xff]
        %v567 = vld [vmem:[#allocation19] sm:$0x1]
        %v568 = vld [vmem:[#allocation5] sm:$0xff]
        %v569 = vld [vmem:[#allocation5 + $0x8] sm:$0xff]
        %v570 = vld [vmem:[#allocation5 + $0x10] sm:$0xff]
        %v571 = vld [vmem:[#allocation5 + $0x18] sm:$0xff]
        %v572 = vld [vmem:[#allocation5 + $0x20] sm:$0xff]
        %v573 = vld [vmem:[#allocation5 + $0x28] sm:$0xff]
        %v574 = vld [vmem:[#allocation5 + $0x30] sm:$0xff]
        %v575 = vld [vmem:[#allocation5 + $0x38] sm:$0xff]
        %v576 = vld [vmem:[#allocation5 + $0x40] sm:$0xff]
        %v577 = vld [vmem:[#allocation5 + $0x48] sm:$0xff]
        %v578 = vld [vmem:[#allocation5 + $0x50] sm:$0xff]
        %v579 = vld [vmem:[#allocation5 + $0x58] sm:$0xff]
        %v580 = vld [vmem:[#allocation5 + $0x60] sm:$0xff]
        %v581 = vld [vmem:[#allocation5 + $0x68] sm:$0xff]
        %v582 = vld [vmem:[#allocation5 + $0x70] sm:$0xff]
        %v583 = vld [vmem:[#allocation5 + $0x78] sm:$0xff]
        %v584 = vld [vmem:[#allocation7] sm:$0xff]
        %v585 = vld [vmem:[#allocation7 + $0x8] sm:$0xff]
        %v586 = vld [vmem:[#allocation7 + $0x10] sm:$0xff]
        %v587 = vld [vmem:[#allocation7 + $0x18] sm:$0xff]
        %v588 = vld [vmem:[#allocation7 + $0x20] sm:$0xff]
        %v589 = vld [vmem:[#allocation7 + $0x28] sm:$0xff]
        %v590 = vld [vmem:[#allocation7 + $0x30] sm:$0xff]
        %v591 = vld [vmem:[#allocation7 + $0x38] sm:$0xff]
        %v592 = vld [vmem:[#allocation7 + $0x40] sm:$0xff]
        %v593 = vld [vmem:[#allocation7 + $0x48] sm:$0xff]
        %v594 = vld [vmem:[#allocation7 + $0x50] sm:$0xff]
        %v595 = vld [vmem:[#allocation7 + $0x58] sm:$0xff]
        %v596 = vld [vmem:[#allocation7 + $0x60] sm:$0xff]
        %v597 = vld [vmem:[#allocation7 + $0x68] sm:$0xff]
        %v598 = vld [vmem:[#allocation7 + $0x70] sm:$0xff]
        %v599 = vld [vmem:[#allocation7 + $0x78] sm:$0xff]
        %v600 = vld [vmem:[#allocation8] sm:$0xff]
        %v601 = vld [vmem:[#allocation8 + $0x8] sm:$0xff]
        %v602 = vld [vmem:[#allocation8 + $0x10] sm:$0xff]
        %v603 = vld [vmem:[#allocation8 + $0x18] sm:$0xff]
        %v604 = vld [vmem:[#allocation8 + $0x20] sm:$0xff]
        %v605 = vld [vmem:[#allocation8 + $0x28] sm:$0xff]
        %v606 = vld [vmem:[#allocation8 + $0x30] sm:$0xff]
        %v607 = vld [vmem:[#allocation8 + $0x38] sm:$0xff]
        %v608 = vld [vmem:[#allocation8 + $0x40] sm:$0xff]
        %v609 = vld [vmem:[#allocation8 + $0x48] sm:$0xff]
        %v610 = vld [vmem:[#allocation8 + $0x50] sm:$0xff]
        %v611 = vld [vmem:[#allocation8 + $0x58] sm:$0xff]
        %v612 = vld [vmem:[#allocation8 + $0x60] sm:$0xff]
        %v613 = vld [vmem:[#allocation8 + $0x68] sm:$0xff]
        %v614 = vld [vmem:[#allocation8 + $0x70] sm:$0xff]
        %v615 = vld [vmem:[#allocation8 + $0x78] sm:$0xff]
        %v616 = vld [vmem:[#allocation10] sm:$0xff]
        %v617 = vld [vmem:[#allocation10 + $0x8] sm:$0xff]
        %v618 = vld [vmem:[#allocation10 + $0x10] sm:$0xff]
        %v619 = vld [vmem:[#allocation10 + $0x18] sm:$0xff]
        %v620 = vld [vmem:[#allocation10 + $0x20] sm:$0xff]
        %v621 = vld [vmem:[#allocation10 + $0x28] sm:$0xff]
        %v622 = vld [vmem:[#allocation10 + $0x30] sm:$0xff]
        %v623 = vld [vmem:[#allocation10 + $0x38] sm:$0xff]
        %v624 = vld [vmem:[#allocation10 + $0x40] sm:$0xff]
        %v625 = vld [vmem:[#allocation10 + $0x48] sm:$0xff]
        %v626 = vld [vmem:[#allocation10 + $0x50] sm:$0xff]
        %v627 = vld [vmem:[#allocation10 + $0x58] sm:$0xff]
        %v628 = vld [vmem:[#allocation10 + $0x60] sm:$0xff]
        %v629 = vld [vmem:[#allocation10 + $0x68] sm:$0xff]
        %v630 = vld [vmem:[#allocation10 + $0x70] sm:$0xff]
        %v631 = vld [vmem:[#allocation10 + $0x78] sm:$0xff]
        %632 = vmatprep.subr.mxu0 0.0
        %633 = vmatpush1.msra.mxu0 %v568
        %634 = vmatprep.subr.mxu0 0.0
        %635 = vmatpush1.msra.mxu0 %v569
        %636 = vmatprep.subr.mxu0 0.0
        %637 = vmatpush1.msra.mxu0 %v570
        %638 = vmatprep.subr.mxu0 0.0
        %639 = vmatpush1.msra.mxu0 %v571
        %640 = vmatprep.subr.mxu0 0.0
        %641 = vmatpush1.msra.mxu0 %v572
        %642 = vmatprep.subr.mxu0 0.0
        %643 = vmatpush1.msra.mxu0 %v573
        %644 = vmatprep.subr.mxu0 0.0
        %645 = vmatpush1.msra.mxu0 %v574
        %646 = vmatprep.subr.mxu0 0.0
        %647 = vmatpush1.msra.mxu0 %v575
        %648 = vmatprep.subr.mxu0 0.0
        %649 = vmatpush1.msra.mxu0 %v576
        %650 = vmatprep.subr.mxu0 0.0
        %651 = vmatpush1.msra.mxu0 %v577
        %652 = vmatprep.subr.mxu0 0.0
        %653 = vmatpush1.msra.mxu0 %v578
        %654 = vmatprep.subr.mxu0 0.0
        %655 = vmatpush1.msra.mxu0 %v579
        %656 = vmatprep.subr.mxu0 0.0
        %657 = vmatpush1.msra.mxu0 %v580
        %658 = vmatprep.subr.mxu0 0.0
        %659 = vmatpush1.msra.mxu0 %v581
        %660 = vmatprep.subr.mxu0 0.0
        %661 = vmatpush1.msra.mxu0 %v582
        %662 = vmatprep.subr.mxu0 0.0
        %663 = vmatpush1.msra.mxu0 %v583
        %664 = vmatprep.subr.mxu0 0.0
        %665 = vmatpush1.msra.mxu0 0.0
        %666 = vmatprep.subr.mxu0 0.0
        %667 = vmatpush1.msra.mxu0 0.0
        %668 = vmatprep.subr.mxu0 0.0
        %669 = vmatpush1.msra.mxu0 0.0
        %670 = vmatprep.subr.mxu0 0.0
        %671 = vmatpush1.msra.mxu0 0.0
        %672 = vmatprep.subr.mxu0 0.0
        %673 = vmatpush1.msra.mxu0 0.0
        %674 = vmatprep.subr.mxu0 0.0
        %675 = vmatpush1.msra.mxu0 0.0
        %676 = vmatprep.subr.mxu0 0.0
        %677 = vmatpush1.msra.mxu0 0.0
        %678 = vmatprep.subr.mxu0 0.0
        %679 = vmatpush1.msra.mxu0 0.0
        %680 = vmatprep.subr.mxu0 0.0
        %681 = vmatpush1.msra.mxu0 0.0
        %682 = vmatprep.subr.mxu0 0.0
        %683 = vmatpush1.msra.mxu0 0.0
        %684 = vmatprep.subr.mxu0 0.0
        %685 = vmatpush1.msra.mxu0 0.0
        %686 = vmatprep.subr.mxu0 0.0
        %687 = vmatpush1.msra.mxu0 0.0
        %688 = vmatprep.subr.mxu0 0.0
        %689 = vmatpush1.msra.mxu0 0.0
        %690 = vmatprep.subr.mxu0 0.0
        %691 = vmatpush1.msra.mxu0 0.0
        %692 = vmatprep.subr.mxu0 0.0
        %693 = vmatpush1.msra.mxu0 0.0
        %694 = vmatprep.subr.mxu0 0.0
        %695 = vmatpush1.msra.mxu0 0.0
        %696 = vmatprep.mubr.f32.mxu0 0.0
        %697 = vmatmul.mubr.f32.gmra.mrb[0].mxu0 %v548
        %v698 = vpop.f32.mrb[0].mxu0
        %v699 = vadd.f32 0.0, %v698
        %v700 = vpop.f32.mrb[0].mxu0
        %701 = vmatprep.mubr.f32.mxu0 0.0
        %702 = vmatmul.mubr.f32.gmra.mrb[0].mxu0 %v549
        %v703 = vpop.f32.mrb[0].mxu0
        %v704 = vadd.f32 0.0, %v703
        %v705 = vpop.f32.mrb[0].mxu0
        %706 = vmatprep.mubr.f32.mxu0 0.0
        %707 = vmatmul.mubr.f32.gmra.mrb[0].mxu0 %v550
        %v708 = vpop.f32.mrb[0].mxu0
        %v709 = vadd.f32 0.0, %v708
        %v710 = vpop.f32.mrb[0].mxu0
        %711 = vdwg.mxu0
        %712 = vmatprep.subr.mxu0 0.0
        %713 = vmatpush1.msra.mxu0 %v584
        %714 = vmatprep.subr.mxu0 0.0
        %715 = vmatpush1.msra.mxu0 %v585
        %716 = vmatprep.subr.mxu0 0.0
        %717 = vmatpush1.msra.mxu0 %v586
        %718 = vmatprep.subr.mxu0 0.0
        %719 = vmatpush1.msra.mxu0 %v587
        %720 = vmatprep.subr.mxu0 0.0
        %721 = vmatpush1.msra.mxu0 %v588
        %722 = vmatprep.subr.mxu0 0.0
        %723 = vmatpush1.msra.mxu0 %v589
        %724 = vmatprep.subr.mxu0 0.0
        %725 = vmatpush1.msra.mxu0 %v590
        %726 = vmatprep.subr.mxu0 0.0
        %727 = vmatpush1.msra.mxu0 %v591
        %728 = vmatprep.subr.mxu0 0.0
        %729 = vmatpush1.msra.mxu0 %v592
        %730 = vmatprep.subr.mxu0 0.0
        %731 = vmatpush1.msra.mxu0 %v593
        %732 = vmatprep.subr.mxu0 0.0
        %733 = vmatpush1.msra.mxu0 %v594
        %734 = vmatprep.subr.mxu0 0.0
        %735 = vmatpush1.msra.mxu0 %v595
        %736 = vmatprep.subr.mxu0 0.0
        %737 = vmatpush1.msra.mxu0 %v596
        %738 = vmatprep.subr.mxu0 0.0
        %739 = vmatpush1.msra.mxu0 %v597
        %740 = vmatprep.subr.mxu0 0.0
        %741 = vmatpush1.msra.mxu0 %v598
        %742 = vmatprep.subr.mxu0 0.0
        %743 = vmatpush1.msra.mxu0 %v599
        %744 = vmatprep.subr.mxu0 0.0
        %745 = vmatpush1.msra.mxu0 0.0
        %746 = vmatprep.subr.mxu0 0.0
        %747 = vmatpush1.msra.mxu0 0.0
        %748 = vmatprep.subr.mxu0 0.0
        %749 = vmatpush1.msra.mxu0 0.0
        %750 = vmatprep.subr.mxu0 0.0
        %751 = vmatpush1.msra.mxu0 0.0
        %752 = vmatprep.subr.mxu0 0.0
        %753 = vmatpush1.msra.mxu0 0.0
        %754 = vmatprep.subr.mxu0 0.0
        %755 = vmatpush1.msra.mxu0 0.0
        %756 = vmatprep.subr.mxu0 0.0
        %757 = vmatpush1.msra.mxu0 0.0
        %758 = vmatprep.subr.mxu0 0.0
        %759 = vmatpush1.msra.mxu0 0.0
        %760 = vmatprep.subr.mxu0 0.0
        %761 = vmatpush1.msra.mxu0 0.0
        %762 = vmatprep.subr.mxu0 0.0
        %763 = vmatpush1.msra.mxu0 0.0
        %764 = vmatprep.subr.mxu0 0.0
        %765 = vmatpush1.msra.mxu0 0.0
        %766 = vmatprep.subr.mxu0 0.0
        %767 = vmatpush1.msra.mxu0 0.0
        %768 = vmatprep.subr.mxu0 0.0
        %769 = vmatpush1.msra.mxu0 0.0
        %770 = vmatprep.subr.mxu0 0.0
        %771 = vmatpush1.msra.mxu0 0.0
        %772 = vmatprep.subr.mxu0 0.0
        %773 = vmatpush1.msra.mxu0 0.0
        %774 = vmatprep.subr.mxu0 0.0
        %775 = vmatpush1.msra.mxu0 0.0
        %776 = vmatprep.mubr.f32.mxu0 0.0
        %777 = vmatmul.mubr.f32.gmra.mrb[0].mxu0 %v548
        %v778 = vpop.f32.mrb[0].mxu0
        %v779 = vadd.f32 0.0, %v778
        %v780 = vpop.f32.mrb[0].mxu0
        %781 = vmatprep.mubr.f32.mxu0 0.0
        %782 = vmatmul.mubr.f32.gmra.mrb[0].mxu0 %v549
        %v783 = vpop.f32.mrb[0].mxu0
        %v784 = vadd.f32 0.0, %v783
        %v785 = vpop.f32.mrb[0].mxu0
        %786 = vmatprep.mubr.f32.mxu0 0.0
        %787 = vmatmul.mubr.f32.gmra.mrb[0].mxu0 %v550
        %v788 = vpop.f32.mrb[0].mxu0
        %v789 = vadd.f32 0.0, %v788
        %v790 = vpop.f32.mrb[0].mxu0
        %791 = vdwg.mxu0
        %792 = vmatprep.subr.mxu0 0.0
        %793 = vmatpush1.msra.mxu0 %v600
        %794 = vmatprep.subr.mxu0 0.0
        %795 = vmatpush1.msra.mxu0 %v601
        %796 = vmatprep.subr.mxu0 0.0
        %797 = vmatpush1.msra.mxu0 %v602
        %798 = vmatprep.subr.mxu0 0.0
        %799 = vmatpush1.msra.mxu0 %v603
        %800 = vmatprep.subr.mxu0 0.0
        %801 = vmatpush1.msra.mxu0 %v604
        %802 = vmatprep.subr.mxu0 0.0
        %803 = vmatpush1.msra.mxu0 %v605
        %804 = vmatprep.subr.mxu0 0.0
        %805 = vmatpush1.msra.mxu0 %v606
        %806 = vmatprep.subr.mxu0 0.0
        %807 = vmatpush1.msra.mxu0 %v607
        %808 = vmatprep.subr.mxu0 0.0
        %809 = vmatpush1.msra.mxu0 %v608
        %810 = vmatprep.subr.mxu0 0.0
        %811 = vmatpush1.msra.mxu0 %v609
        %812 = vmatprep.subr.mxu0 0.0
        %813 = vmatpush1.msra.mxu0 %v610
        %814 = vmatprep.subr.mxu0 0.0
        %815 = vmatpush1.msra.mxu0 %v611
        %816 = vmatprep.subr.mxu0 0.0
        %817 = vmatpush1.msra.mxu0 %v612
        %818 = vmatprep.subr.mxu0 0.0
        %819 = vmatpush1.msra.mxu0 %v613
        %820 = vmatprep.subr.mxu0 0.0
        %821 = vmatpush1.msra.mxu0 %v614
        %822 = vmatprep.subr.mxu0 0.0
        %823 = vmatpush1.msra.mxu0 %v615
        %824 = vmatprep.subr.mxu0 0.0
        %825 = vmatpush1.msra.mxu0 0.0
        %826 = vmatprep.subr.mxu0 0.0
        %827 = vmatpush1.msra.mxu0 0.0
        %828 = vmatprep.subr.mxu0 0.0
        %829 = vmatpush1.msra.mxu0 0.0
        %830 = vmatprep.subr.mxu0 0.0
        %831 = vmatpush1.msra.mxu0 0.0
        %832 = vmatprep.subr.mxu0 0.0
        %833 = vmatpush1.msra.mxu0 0.0
        %834 = vmatprep.subr.mxu0 0.0
        %835 = vmatpush1.msra.mxu0 0.0
        %836 = vmatprep.subr.mxu0 0.0
        %837 = vmatpush1.msra.mxu0 0.0
        %838 = vmatprep.subr.mxu0 0.0
        %839 = vmatpush1.msra.mxu0 0.0
        %840 = vmatprep.subr.mxu0 0.0
        %841 = vmatpush1.msra.mxu0 0.0
        %842 = vmatprep.subr.mxu0 0.0
        %843 = vmatpush1.msra.mxu0 0.0
        %844 = vmatprep.subr.mxu0 0.0
        %845 = vmatpush1.msra.mxu0 0.0
        %846 = vmatprep.subr.mxu0 0.0
        %847 = vmatpush1.msra.mxu0 0.0
        %848 = vmatprep.subr.mxu0 0.0
        %849 = vmatpush1.msra.mxu0 0.0
        %850 = vmatprep.subr.mxu0 0.0
        %851 = vmatpush1.msra.mxu0 0.0
        %852 = vmatprep.subr.mxu0 0.0
        %853 = vmatpush1.msra.mxu0 0.0
        %854 = vmatprep.subr.mxu0 0.0
        %855 = vmatpush1.msra.mxu0 0.0
        %856 = vmatprep.mubr.f32.mxu0 0.0
        %857 = vmatmul.mubr.f32.gmra.mrb[0].mxu0 %v548
        %v858 = vpop.f32.mrb[0].mxu0
        %v859 = vadd.f32 0.0, %v858
        %v860 = vpop.f32.mrb[0].mxu0
        %861 = vmatprep.mubr.f32.mxu0 0.0
        %862 = vmatmul.mubr.f32.gmra.mrb[0].mxu0 %v549
        %v863 = vpop.f32.mrb[0].mxu0
        %v864 = vadd.f32 0.0, %v863
        %v865 = vpop.f32.mrb[0].mxu0
        %866 = vmatprep.mubr.f32.mxu0 0.0
        %867 = vmatmul.mubr.f32.gmra.mrb[0].mxu0 %v550
        %v868 = vpop.f32.mrb[0].mxu0
        %v869 = vadd.f32 0.0, %v868
        %v870 = vpop.f32.mrb[0].mxu0
        %871 = vdwg.mxu0
        %875 = vrot.lane.b32.xlu0 %v699, 112
        %v876 = vpop.permute.xlu0 %875
        %877 = vrot.lane.b32.xlu0 %v704, 112
        %v878 = vpop.permute.xlu0 %877
        %879 = vrot.lane.b32.xlu0 %v709, 112
        %v880 = vpop.permute.xlu0 %879
        %881 = vrot.lane.b32.xlu0 %v699, 96
        %v882 = vpop.permute.xlu0 %881
        %883 = vrot.lane.b32.xlu0 %v704, 96
        %v884 = vpop.permute.xlu0 %883
        %885 = vrot.lane.b32.xlu0 %v709, 96
        %v886 = vpop.permute.xlu0 %885
        %887 = vrot.lane.b32.xlu0 %v699, 80
        %v888 = vpop.permute.xlu0 %887
        %889 = vrot.lane.b32.xlu0 %v704, 80
        %v890 = vpop.permute.xlu0 %889
        %891 = vrot.lane.b32.xlu0 %v709, 80
        %v892 = vpop.permute.xlu0 %891
        %893 = vrot.lane.b32.xlu0 %v699, 64
        %v894 = vpop.permute.xlu0 %893
        %895 = vrot.lane.b32.xlu0 %v704, 64
        %v896 = vpop.permute.xlu0 %895
        %897 = vrot.lane.b32.xlu0 %v709, 64
        %v898 = vpop.permute.xlu0 %897
        %899 = vrot.lane.b32.xlu0 %v699, 48
        %v900 = vpop.permute.xlu0 %899
        %901 = vrot.lane.b32.xlu0 %v704, 48
        %v902 = vpop.permute.xlu0 %901
        %903 = vrot.lane.b32.xlu0 %v709, 48
        %v904 = vpop.permute.xlu0 %903
        %905 = vrot.lane.b32.xlu0 %v699, 32
        %v906 = vpop.permute.xlu0 %905
        %907 = vrot.lane.b32.xlu0 %v704, 32
        %v908 = vpop.permute.xlu0 %907
        %909 = vrot.lane.b32.xlu0 %v709, 32
        %v910 = vpop.permute.xlu0 %909
        %911 = vrot.lane.b32.xlu0 %v699, 16
        %v912 = vpop.permute.xlu0 %911
        %913 = vrot.lane.b32.xlu0 %v704, 16
        %v914 = vpop.permute.xlu0 %913
        %915 = vrot.lane.b32.xlu0 %v709, 16
        %v916 = vpop.permute.xlu0 %915
        %920 = vrot.lane.b32.xlu0 %v779, 112
        %v921 = vpop.permute.xlu0 %920
        %922 = vrot.lane.b32.xlu0 %v784, 112
        %v923 = vpop.permute.xlu0 %922
        %924 = vrot.lane.b32.xlu0 %v789, 112
        %v925 = vpop.permute.xlu0 %924
        %926 = vrot.lane.b32.xlu0 %v779, 96
        %v927 = vpop.permute.xlu0 %926
        %928 = vrot.lane.b32.xlu0 %v784, 96
        %v929 = vpop.permute.xlu0 %928
        %930 = vrot.lane.b32.xlu0 %v789, 96
        %v931 = vpop.permute.xlu0 %930
        %932 = vrot.lane.b32.xlu0 %v779, 80
        %v933 = vpop.permute.xlu0 %932
        %934 = vrot.lane.b32.xlu0 %v784, 80
        %v935 = vpop.permute.xlu0 %934
        %936 = vrot.lane.b32.xlu0 %v789, 80
        %v937 = vpop.permute.xlu0 %936
        %938 = vrot.lane.b32.xlu0 %v779, 64
        %v939 = vpop.permute.xlu0 %938
        %940 = vrot.lane.b32.xlu0 %v784, 64
        %v941 = vpop.permute.xlu0 %940
        %942 = vrot.lane.b32.xlu0 %v789, 64
        %v943 = vpop.permute.xlu0 %942
        %944 = vrot.lane.b32.xlu0 %v779, 48
        %v945 = vpop.permute.xlu0 %944
        %946 = vrot.lane.b32.xlu0 %v784, 48
        %v947 = vpop.permute.xlu0 %946
        %948 = vrot.lane.b32.xlu0 %v789, 48
        %v949 = vpop.permute.xlu0 %948
        %950 = vrot.lane.b32.xlu0 %v779, 32
        %v951 = vpop.permute.xlu0 %950
        %952 = vrot.lane.b32.xlu0 %v784, 32
        %v953 = vpop.permute.xlu0 %952
        %954 = vrot.lane.b32.xlu0 %v789, 32
        %v955 = vpop.permute.xlu0 %954
        %956 = vrot.lane.b32.xlu0 %v779, 16
        %v957 = vpop.permute.xlu0 %956
        %958 = vrot.lane.b32.xlu0 %v784, 16
        %v959 = vpop.permute.xlu0 %958
        %960 = vrot.lane.b32.xlu0 %v789, 16
        %v961 = vpop.permute.xlu0 %960
        %965 = vrot.lane.b32.xlu0 %v859, 112
        %v966 = vpop.permute.xlu0 %965
        %967 = vrot.lane.b32.xlu0 %v864, 112
        %v968 = vpop.permute.xlu0 %967
        %969 = vrot.lane.b32.xlu0 %v869, 112
        %v970 = vpop.permute.xlu0 %969
        %973 = vrot.lane.b32.xlu0 %v859, 96
        %v974 = vpop.permute.xlu0 %973
        %975 = vrot.lane.b32.xlu0 %v864, 96
        %v976 = vpop.permute.xlu0 %975
        %977 = vrot.lane.b32.xlu0 %v869, 96
        %v978 = vpop.permute.xlu0 %977
        %981 = vrot.lane.b32.xlu0 %v859, 80
        %v982 = vpop.permute.xlu0 %981
        %983 = vrot.lane.b32.xlu0 %v864, 80
        %v984 = vpop.permute.xlu0 %983
        %985 = vrot.lane.b32.xlu0 %v869, 80
        %v986 = vpop.permute.xlu0 %985
        %989 = vrot.lane.b32.xlu0 %v859, 64
        %v990 = vpop.permute.xlu0 %989
        %991 = vrot.lane.b32.xlu0 %v864, 64
        %v992 = vpop.permute.xlu0 %991
        %993 = vrot.lane.b32.xlu0 %v869, 64
        %v994 = vpop.permute.xlu0 %993
        %997 = vrot.lane.b32.xlu0 %v859, 48
        %v998 = vpop.permute.xlu0 %997
        %999 = vrot.lane.b32.xlu0 %v864, 48
        %v1000 = vpop.permute.xlu0 %999
        %1001 = vrot.lane.b32.xlu0 %v869, 48
        %v1002 = vpop.permute.xlu0 %1001
        %1005 = vrot.lane.b32.xlu0 %v859, 32
        %v1006 = vpop.permute.xlu0 %1005
        %1007 = vrot.lane.b32.xlu0 %v864, 32
        %v1008 = vpop.permute.xlu0 %1007
        %1009 = vrot.lane.b32.xlu0 %v869, 32
        %v1010 = vpop.permute.xlu0 %1009
        %1013 = vrot.lane.b32.xlu0 %v859, 16
        %v1014 = vpop.permute.xlu0 %1013
        %1015 = vrot.lane.b32.xlu0 %v864, 16
        %v1016 = vpop.permute.xlu0 %1015
        %1017 = vrot.lane.b32.xlu0 %v869, 16
        %v1018 = vpop.permute.xlu0 %1017
        %vm1021 = vcmask 130048
        %v1022 = vsel %vm1021, %v699, 0
        %v1024 = vsel %vm1021, %v704, 0
        %v1026 = vsel %vm1021, %v709, 0
        %v1028 = vsel %vm1021, %v779, 0
        %v1030 = vsel %vm1021, %v784, 0
        %v1032 = vsel %vm1021, %v789, 0
        %1034 = vmatprep.subr.mxu0 0.0
        %1035 = vmatpush1.xpose.msra.mxu0 %v1028
        %1036 = vmatprep.subr.mxu0 0.0
        %1037 = vmatpush1.xpose.msra.mxu0 %v1030
        %1038 = vmatprep.subr.mxu0 0.0
        %1039 = vmatpush1.xpose.msra.mxu0 %v1032
        %1040 = vmatprep.subr.mxu0 0.0
        %1041 = vmatpush1.xpose.msra.mxu0 0.0
        %1042 = vmatprep.subr.mxu0 0.0
        %1043 = vmatpush1.xpose.msra.mxu0 0.0
        %1044 = vmatprep.subr.mxu0 0.0
        %1045 = vmatpush1.xpose.msra.mxu0 0.0
        %1046 = vmatprep.subr.mxu0 0.0
        %1047 = vmatpush1.xpose.msra.mxu0 0.0
        %1048 = vmatprep.subr.mxu0 0.0
        %1049 = vmatpush1.xpose.msra.mxu0 0.0
        %1050 = vmatprep.subr.mxu0 0.0
        %1051 = vmatpush1.xpose.msra.mxu0 0.0
        %1052 = vmatprep.subr.mxu0 0.0
        %1053 = vmatpush1.xpose.msra.mxu0 0.0
        %1054 = vmatprep.subr.mxu0 0.0
        %1055 = vmatpush1.xpose.msra.mxu0 0.0
        %1056 = vmatprep.subr.mxu0 0.0
        %1057 = vmatpush1.xpose.msra.mxu0 0.0
        %1058 = vmatprep.subr.mxu0 0.0
        %1059 = vmatpush1.xpose.msra.mxu0 0.0
        %1060 = vmatprep.subr.mxu0 0.0
        %1061 = vmatpush1.xpose.msra.mxu0 0.0
        %1062 = vmatprep.subr.mxu0 0.0
        %1063 = vmatpush1.xpose.msra.mxu0 0.0
        %1064 = vmatprep.subr.mxu0 0.0
        %1065 = vmatpush1.xpose.msra.mxu0 0.0
        %1066 = vmatprep.subr.mxu0 0.0
        %1067 = vmatpush1.xpose.msra.mxu0 0.0
        %1068 = vmatprep.subr.mxu0 0.0
        %1069 = vmatpush1.xpose.msra.mxu0 0.0
        %1070 = vmatprep.subr.mxu0 0.0
        %1071 = vmatpush1.xpose.msra.mxu0 0.0
        %1072 = vmatprep.subr.mxu0 0.0
        %1073 = vmatpush1.xpose.msra.mxu0 0.0
        %1074 = vmatprep.subr.mxu0 0.0
        %1075 = vmatpush1.xpose.msra.mxu0 0.0
        %1076 = vmatprep.subr.mxu0 0.0
        %1077 = vmatpush1.xpose.msra.mxu0 0.0
        %1078 = vmatprep.subr.mxu0 0.0
        %1079 = vmatpush1.xpose.msra.mxu0 0.0
        %1080 = vmatprep.subr.mxu0 0.0
        %1081 = vmatpush1.xpose.msra.mxu0 0.0
        %1082 = vmatprep.subr.mxu0 0.0
        %1083 = vmatpush1.xpose.msra.mxu0 0.0
        %1084 = vmatprep.subr.mxu0 0.0
        %1085 = vmatpush1.xpose.msra.mxu0 0.0
        %1086 = vmatprep.subr.mxu0 0.0
        %1087 = vmatpush1.xpose.msra.mxu0 0.0
        %1088 = vmatprep.subr.mxu0 0.0
        %1089 = vmatpush1.xpose.msra.mxu0 0.0
        %1090 = vmatprep.subr.mxu0 0.0
        %1091 = vmatpush1.xpose.msra.mxu0 0.0
        %1092 = vmatprep.subr.mxu0 0.0
        %1093 = vmatpush1.xpose.msra.mxu0 0.0
        %1094 = vmatprep.subr.mxu0 0.0
        %1095 = vmatpush1.xpose.msra.mxu0 0.0
        %1096 = vmatprep.subr.mxu0 0.0
        %1097 = vmatpush1.xpose.msra.mxu0 0.0
        %1098 = vmatprep.mubr.f32.mxu0 0.0
        %1099 = vmatmul.mubr.f32.gmra.mrb[0].mxu0 %v1022
        %v1100 = vpop.f32.mrb[0].mxu0
        %v1101 = vadd.f32 0.0, %v1100
        %v1102 = vpop.f32.mrb[0].mxu0
        %1103 = vmatprep.mubr.f32.mxu0 0.0
        %1104 = vmatmul.mubr.f32.gmra.mrb[0].mxu0 %v1024
        %v1105 = vpop.f32.mrb[0].mxu0
        %v1106 = vadd.f32 0.0, %v1105
        %v1107 = vpop.f32.mrb[0].mxu0
        %1108 = vmatprep.mubr.f32.mxu0 0.0
        %1109 = vmatmul.mubr.f32.gmra.mrb[0].mxu0 %v1026
        %v1110 = vpop.f32.mrb[0].mxu0
        %v1111 = vadd.f32 0.0, %v1110
        %v1112 = vpop.f32.mrb[0].mxu0
        %1113 = vdwg.mxu0
        %v1114 = vsel %vm1021, %v876, 0
        %v1116 = vsel %vm1021, %v878, 0
        %v1118 = vsel %vm1021, %v880, 0
        %v1120 = vsel %vm1021, %v921, 0
        %v1122 = vsel %vm1021, %v923, 0
        %v1124 = vsel %vm1021, %v925, 0
        %1126 = vmatprep.subr.mxu0 0.0
        %1127 = vmatpush1.xpose.msra.mxu0 %v1120
        %1128 = vmatprep.subr.mxu0 0.0
        %1129 = vmatpush1.xpose.msra.mxu0 %v1122
        %1130 = vmatprep.subr.mxu0 0.0
        %1131 = vmatpush1.xpose.msra.mxu0 %v1124
        %1132 = vmatprep.subr.mxu0 0.0
        %1133 = vmatpush1.xpose.msra.mxu0 0.0
        %1134 = vmatprep.subr.mxu0 0.0
        %1135 = vmatpush1.xpose.msra.mxu0 0.0
        %1136 = vmatprep.subr.mxu0 0.0
        %1137 = vmatpush1.xpose.msra.mxu0 0.0
        %1138 = vmatprep.subr.mxu0 0.0
        %1139 = vmatpush1.xpose.msra.mxu0 0.0
        %1140 = vmatprep.subr.mxu0 0.0
        %1141 = vmatpush1.xpose.msra.mxu0 0.0
        %1142 = vmatprep.subr.mxu0 0.0
        %1143 = vmatpush1.xpose.msra.mxu0 0.0
        %1144 = vmatprep.subr.mxu0 0.0
        %1145 = vmatpush1.xpose.msra.mxu0 0.0
        %1146 = vmatprep.subr.mxu0 0.0
        %1147 = vmatpush1.xpose.msra.mxu0 0.0
        %1148 = vmatprep.subr.mxu0 0.0
        %1149 = vmatpush1.xpose.msra.mxu0 0.0
        %1150 = vmatprep.subr.mxu0 0.0
        %1151 = vmatpush1.xpose.msra.mxu0 0.0
        %1152 = vmatprep.subr.mxu0 0.0
        %1153 = vmatpush1.xpose.msra.mxu0 0.0
        %1154 = vmatprep.subr.mxu0 0.0
        %1155 = vmatpush1.xpose.msra.mxu0 0.0
        %1156 = vmatprep.subr.mxu0 0.0
        %1157 = vmatpush1.xpose.msra.mxu0 0.0
        %1158 = vmatprep.subr.mxu0 0.0
        %1159 = vmatpush1.xpose.msra.mxu0 0.0
        %1160 = vmatprep.subr.mxu0 0.0
        %1161 = vmatpush1.xpose.msra.mxu0 0.0
        %1162 = vmatprep.subr.mxu0 0.0
        %1163 = vmatpush1.xpose.msra.mxu0 0.0
        %1164 = vmatprep.subr.mxu0 0.0
        %1165 = vmatpush1.xpose.msra.mxu0 0.0
        %1166 = vmatprep.subr.mxu0 0.0
        %1167 = vmatpush1.xpose.msra.mxu0 0.0
        %1168 = vmatprep.subr.mxu0 0.0
        %1169 = vmatpush1.xpose.msra.mxu0 0.0
        %1170 = vmatprep.subr.mxu0 0.0
        %1171 = vmatpush1.xpose.msra.mxu0 0.0
        %1172 = vmatprep.subr.mxu0 0.0
        %1173 = vmatpush1.xpose.msra.mxu0 0.0
        %1174 = vmatprep.subr.mxu0 0.0
        %1175 = vmatpush1.xpose.msra.mxu0 0.0
        %1176 = vmatprep.subr.mxu0 0.0
        %1177 = vmatpush1.xpose.msra.mxu0 0.0
        %1178 = vmatprep.subr.mxu0 0.0
        %1179 = vmatpush1.xpose.msra.mxu0 0.0
        %1180 = vmatprep.subr.mxu0 0.0
        %1181 = vmatpush1.xpose.msra.mxu0 0.0
        %1182 = vmatprep.subr.mxu0 0.0
        %1183 = vmatpush1.xpose.msra.mxu0 0.0
        %1184 = vmatprep.subr.mxu0 0.0
        %1185 = vmatpush1.xpose.msra.mxu0 0.0
        %1186 = vmatprep.subr.mxu0 0.0
        %1187 = vmatpush1.xpose.msra.mxu0 0.0
        %1188 = vmatprep.subr.mxu0 0.0
        %1189 = vmatpush1.xpose.msra.mxu0 0.0
        %1190 = vmatprep.mubr.f32.mxu0 0.0
        %1191 = vmatmul.mubr.f32.gmra.mrb[0].mxu0 %v1114
        %v1192 = vpop.f32.mrb[0].mxu0
        %v1193 = vadd.f32 0.0, %v1192
        %v1194 = vpop.f32.mrb[0].mxu0
        %1195 = vmatprep.mubr.f32.mxu0 0.0
        %1196 = vmatmul.mubr.f32.gmra.mrb[0].mxu0 %v1116
        %v1197 = vpop.f32.mrb[0].mxu0
        %v1198 = vadd.f32 0.0, %v1197
        %v1199 = vpop.f32.mrb[0].mxu0
        %1200 = vmatprep.mubr.f32.mxu0 0.0
        %1201 = vmatmul.mubr.f32.gmra.mrb[0].mxu0 %v1118
        %v1202 = vpop.f32.mrb[0].mxu0
        %v1203 = vadd.f32 0.0, %v1202
        %v1204 = vpop.f32.mrb[0].mxu0
        %1205 = vdwg.mxu0
        %v1206 = vsel %vm1021, %v882, 0
        %v1208 = vsel %vm1021, %v884, 0
        %v1210 = vsel %vm1021, %v886, 0
        %v1212 = vsel %vm1021, %v927, 0
        %v1214 = vsel %vm1021, %v929, 0
        %v1216 = vsel %vm1021, %v931, 0
        %1218 = vmatprep.subr.mxu0 0.0
        %1219 = vmatpush1.xpose.msra.mxu0 %v1212
        %1220 = vmatprep.subr.mxu0 0.0
        %1221 = vmatpush1.xpose.msra.mxu0 %v1214
        %1222 = vmatprep.subr.mxu0 0.0
        %1223 = vmatpush1.xpose.msra.mxu0 %v1216
        %1224 = vmatprep.subr.mxu0 0.0
        %1225 = vmatpush1.xpose.msra.mxu0 0.0
        %1226 = vmatprep.subr.mxu0 0.0
        %1227 = vmatpush1.xpose.msra.mxu0 0.0
        %1228 = vmatprep.subr.mxu0 0.0
        %1229 = vmatpush1.xpose.msra.mxu0 0.0
        %1230 = vmatprep.subr.mxu0 0.0
        %1231 = vmatpush1.xpose.msra.mxu0 0.0
        %1232 = vmatprep.subr.mxu0 0.0
        %1233 = vmatpush1.xpose.msra.mxu0 0.0
        %1234 = vmatprep.subr.mxu0 0.0
        %1235 = vmatpush1.xpose.msra.mxu0 0.0
        %1236 = vmatprep.subr.mxu0 0.0
        %1237 = vmatpush1.xpose.msra.mxu0 0.0
        %1238 = vmatprep.subr.mxu0 0.0
        %1239 = vmatpush1.xpose.msra.mxu0 0.0
        %1240 = vmatprep.subr.mxu0 0.0
        %1241 = vmatpush1.xpose.msra.mxu0 0.0
        %1242 = vmatprep.subr.mxu0 0.0
        %1243 = vmatpush1.xpose.msra.mxu0 0.0
        %1244 = vmatprep.subr.mxu0 0.0
        %1245 = vmatpush1.xpose.msra.mxu0 0.0
        %1246 = vmatprep.subr.mxu0 0.0
        %1247 = vmatpush1.xpose.msra.mxu0 0.0
        %1248 = vmatprep.subr.mxu0 0.0
        %1249 = vmatpush1.xpose.msra.mxu0 0.0
        %1250 = vmatprep.subr.mxu0 0.0
        %1251 = vmatpush1.xpose.msra.mxu0 0.0
        %1252 = vmatprep.subr.mxu0 0.0
        %1253 = vmatpush1.xpose.msra.mxu0 0.0
        %1254 = vmatprep.subr.mxu0 0.0
        %1255 = vmatpush1.xpose.msra.mxu0 0.0
        %1256 = vmatprep.subr.mxu0 0.0
        %1257 = vmatpush1.xpose.msra.mxu0 0.0
        %1258 = vmatprep.subr.mxu0 0.0
        %1259 = vmatpush1.xpose.msra.mxu0 0.0
        %1260 = vmatprep.subr.mxu0 0.0
        %1261 = vmatpush1.xpose.msra.mxu0 0.0
        %1262 = vmatprep.subr.mxu0 0.0
        %1263 = vmatpush1.xpose.msra.mxu0 0.0
        %1264 = vmatprep.subr.mxu0 0.0
        %1265 = vmatpush1.xpose.msra.mxu0 0.0
        %1266 = vmatprep.subr.mxu0 0.0
        %1267 = vmatpush1.xpose.msra.mxu0 0.0
        %1268 = vmatprep.subr.mxu0 0.0
        %1269 = vmatpush1.xpose.msra.mxu0 0.0
        %1270 = vmatprep.subr.mxu0 0.0
        %1271 = vmatpush1.xpose.msra.mxu0 0.0
        %1272 = vmatprep.subr.mxu0 0.0
        %1273 = vmatpush1.xpose.msra.mxu0 0.0
        %1274 = vmatprep.subr.mxu0 0.0
        %1275 = vmatpush1.xpose.msra.mxu0 0.0
        %1276 = vmatprep.subr.mxu0 0.0
        %1277 = vmatpush1.xpose.msra.mxu0 0.0
        %1278 = vmatprep.subr.mxu0 0.0
        %1279 = vmatpush1.xpose.msra.mxu0 0.0
        %1280 = vmatprep.subr.mxu0 0.0
        %1281 = vmatpush1.xpose.msra.mxu0 0.0
        %1282 = vmatprep.mubr.f32.mxu0 0.0
        %1283 = vmatmul.mubr.f32.gmra.mrb[0].mxu0 %v1206
        %v1284 = vpop.f32.mrb[0].mxu0
        %v1285 = vadd.f32 0.0, %v1284
        %v1286 = vpop.f32.mrb[0].mxu0
        %1287 = vmatprep.mubr.f32.mxu0 0.0
        %1288 = vmatmul.mubr.f32.gmra.mrb[0].mxu0 %v1208
        %v1289 = vpop.f32.mrb[0].mxu0
        %v1290 = vadd.f32 0.0, %v1289
        %v1291 = vpop.f32.mrb[0].mxu0
        %1292 = vmatprep.mubr.f32.mxu0 0.0
        %1293 = vmatmul.mubr.f32.gmra.mrb[0].mxu0 %v1210
        %v1294 = vpop.f32.mrb[0].mxu0
        %v1295 = vadd.f32 0.0, %v1294
        %v1296 = vpop.f32.mrb[0].mxu0
        %1297 = vdwg.mxu0
        %v1298 = vsel %vm1021, %v888, 0
        %v1300 = vsel %vm1021, %v890, 0
        %v1302 = vsel %vm1021, %v892, 0
        %v1304 = vsel %vm1021, %v933, 0
        %v1306 = vsel %vm1021, %v935, 0
        %v1308 = vsel %vm1021, %v937, 0
        %1310 = vmatprep.subr.mxu0 0.0
        %1311 = vmatpush1.xpose.msra.mxu0 %v1304
        %1312 = vmatprep.subr.mxu0 0.0
        %1313 = vmatpush1.xpose.msra.mxu0 %v1306
        %1314 = vmatprep.subr.mxu0 0.0
        %1315 = vmatpush1.xpose.msra.mxu0 %v1308
        %1316 = vmatprep.subr.mxu0 0.0
        %1317 = vmatpush1.xpose.msra.mxu0 0.0
        %1318 = vmatprep.subr.mxu0 0.0
        %1319 = vmatpush1.xpose.msra.mxu0 0.0
        %1320 = vmatprep.subr.mxu0 0.0
        %1321 = vmatpush1.xpose.msra.mxu0 0.0
        %1322 = vmatprep.subr.mxu0 0.0
        %1323 = vmatpush1.xpose.msra.mxu0 0.0
        %1324 = vmatprep.subr.mxu0 0.0
        %1325 = vmatpush1.xpose.msra.mxu0 0.0
        %1326 = vmatprep.subr.mxu0 0.0
        %1327 = vmatpush1.xpose.msra.mxu0 0.0
        %1328 = vmatprep.subr.mxu0 0.0
        %1329 = vmatpush1.xpose.msra.mxu0 0.0
        %1330 = vmatprep.subr.mxu0 0.0
        %1331 = vmatpush1.xpose.msra.mxu0 0.0
        %1332 = vmatprep.subr.mxu0 0.0
        %1333 = vmatpush1.xpose.msra.mxu0 0.0
        %1334 = vmatprep.subr.mxu0 0.0
        %1335 = vmatpush1.xpose.msra.mxu0 0.0
        %1336 = vmatprep.subr.mxu0 0.0
        %1337 = vmatpush1.xpose.msra.mxu0 0.0
        %1338 = vmatprep.subr.mxu0 0.0
        %1339 = vmatpush1.xpose.msra.mxu0 0.0
        %1340 = vmatprep.subr.mxu0 0.0
        %1341 = vmatpush1.xpose.msra.mxu0 0.0
        %1342 = vmatprep.subr.mxu0 0.0
        %1343 = vmatpush1.xpose.msra.mxu0 0.0
        %1344 = vmatprep.subr.mxu0 0.0
        %1345 = vmatpush1.xpose.msra.mxu0 0.0
        %1346 = vmatprep.subr.mxu0 0.0
        %1347 = vmatpush1.xpose.msra.mxu0 0.0
        %1348 = vmatprep.subr.mxu0 0.0
        %1349 = vmatpush1.xpose.msra.mxu0 0.0
        %1350 = vmatprep.subr.mxu0 0.0
        %1351 = vmatpush1.xpose.msra.mxu0 0.0
        %1352 = vmatprep.subr.mxu0 0.0
        %1353 = vmatpush1.xpose.msra.mxu0 0.0
        %1354 = vmatprep.subr.mxu0 0.0
        %1355 = vmatpush1.xpose.msra.mxu0 0.0
        %1356 = vmatprep.subr.mxu0 0.0
        %1357 = vmatpush1.xpose.msra.mxu0 0.0
        %1358 = vmatprep.subr.mxu0 0.0
        %1359 = vmatpush1.xpose.msra.mxu0 0.0
        %1360 = vmatprep.subr.mxu0 0.0
        %1361 = vmatpush1.xpose.msra.mxu0 0.0
        %1362 = vmatprep.subr.mxu0 0.0
        %1363 = vmatpush1.xpose.msra.mxu0 0.0
        %1364 = vmatprep.subr.mxu0 0.0
        %1365 = vmatpush1.xpose.msra.mxu0 0.0
        %1366 = vmatprep.subr.mxu0 0.0
        %1367 = vmatpush1.xpose.msra.mxu0 0.0
        %1368 = vmatprep.subr.mxu0 0.0
        %1369 = vmatpush1.xpose.msra.mxu0 0.0
        %1370 = vmatprep.subr.mxu0 0.0
        %1371 = vmatpush1.xpose.msra.mxu0 0.0
        %1372 = vmatprep.subr.mxu0 0.0
        %1373 = vmatpush1.xpose.msra.mxu0 0.0
        %1374 = vmatprep.mubr.f32.mxu0 0.0
        %1375 = vmatmul.mubr.f32.gmra.mrb[0].mxu0 %v1298
        %v1376 = vpop.f32.mrb[0].mxu0
        %v1377 = vadd.f32 0.0, %v1376
        %v1378 = vpop.f32.mrb[0].mxu0
        %1379 = vmatprep.mubr.f32.mxu0 0.0
        %1380 = vmatmul.mubr.f32.gmra.mrb[0].mxu0 %v1300
        %v1381 = vpop.f32.mrb[0].mxu0
        %v1382 = vadd.f32 0.0, %v1381
        %v1383 = vpop.f32.mrb[0].mxu0
        %1384 = vmatprep.mubr.f32.mxu0 0.0
        %1385 = vmatmul.mubr.f32.gmra.mrb[0].mxu0 %v1302
        %v1386 = vpop.f32.mrb[0].mxu0
        %v1387 = vadd.f32 0.0, %v1386
        %v1388 = vpop.f32.mrb[0].mxu0
        %1389 = vdwg.mxu0
        %v1390 = vsel %vm1021, %v894, 0
        %v1392 = vsel %vm1021, %v896, 0
        %v1394 = vsel %vm1021, %v898, 0
        %v1396 = vsel %vm1021, %v939, 0
        %v1398 = vsel %vm1021, %v941, 0
        %v1400 = vsel %vm1021, %v943, 0
        %1402 = vmatprep.subr.mxu0 0.0
        %1403 = vmatpush1.xpose.msra.mxu0 %v1396
        %1404 = vmatprep.subr.mxu0 0.0
        %1405 = vmatpush1.xpose.msra.mxu0 %v1398
        %1406 = vmatprep.subr.mxu0 0.0
        %1407 = vmatpush1.xpose.msra.mxu0 %v1400
        %1408 = vmatprep.subr.mxu0 0.0
        %1409 = vmatpush1.xpose.msra.mxu0 0.0
        %1410 = vmatprep.subr.mxu0 0.0
        %1411 = vmatpush1.xpose.msra.mxu0 0.0
        %1412 = vmatprep.subr.mxu0 0.0
        %1413 = vmatpush1.xpose.msra.mxu0 0.0
        %1414 = vmatprep.subr.mxu0 0.0
        %1415 = vmatpush1.xpose.msra.mxu0 0.0
        %1416 = vmatprep.subr.mxu0 0.0
        %1417 = vmatpush1.xpose.msra.mxu0 0.0
        %1418 = vmatprep.subr.mxu0 0.0
        %1419 = vmatpush1.xpose.msra.mxu0 0.0
        %1420 = vmatprep.subr.mxu0 0.0
        %1421 = vmatpush1.xpose.msra.mxu0 0.0
        %1422 = vmatprep.subr.mxu0 0.0
        %1423 = vmatpush1.xpose.msra.mxu0 0.0
        %1424 = vmatprep.subr.mxu0 0.0
        %1425 = vmatpush1.xpose.msra.mxu0 0.0
        %1426 = vmatprep.subr.mxu0 0.0
        %1427 = vmatpush1.xpose.msra.mxu0 0.0
        %1428 = vmatprep.subr.mxu0 0.0
        %1429 = vmatpush1.xpose.msra.mxu0 0.0
        %1430 = vmatprep.subr.mxu0 0.0
        %1431 = vmatpush1.xpose.msra.mxu0 0.0
        %1432 = vmatprep.subr.mxu0 0.0
        %1433 = vmatpush1.xpose.msra.mxu0 0.0
        %1434 = vmatprep.subr.mxu0 0.0
        %1435 = vmatpush1.xpose.msra.mxu0 0.0
        %1436 = vmatprep.subr.mxu0 0.0
        %1437 = vmatpush1.xpose.msra.mxu0 0.0
        %1438 = vmatprep.subr.mxu0 0.0
        %1439 = vmatpush1.xpose.msra.mxu0 0.0
        %1440 = vmatprep.subr.mxu0 0.0
        %1441 = vmatpush1.xpose.msra.mxu0 0.0
        %1442 = vmatprep.subr.mxu0 0.0
        %1443 = vmatpush1.xpose.msra.mxu0 0.0
        %1444 = vmatprep.subr.mxu0 0.0
        %1445 = vmatpush1.xpose.msra.mxu0 0.0
        %1446 = vmatprep.subr.mxu0 0.0
        %1447 = vmatpush1.xpose.msra.mxu0 0.0
        %1448 = vmatprep.subr.mxu0 0.0
        %1449 = vmatpush1.xpose.msra.mxu0 0.0
        %1450 = vmatprep.subr.mxu0 0.0
        %1451 = vmatpush1.xpose.msra.mxu0 0.0
        %1452 = vmatprep.subr.mxu0 0.0
        %1453 = vmatpush1.xpose.msra.mxu0 0.0
        %1454 = vmatprep.subr.mxu0 0.0
        %1455 = vmatpush1.xpose.msra.mxu0 0.0
        %1456 = vmatprep.subr.mxu0 0.0
        %1457 = vmatpush1.xpose.msra.mxu0 0.0
        %1458 = vmatprep.subr.mxu0 0.0
        %1459 = vmatpush1.xpose.msra.mxu0 0.0
        %1460 = vmatprep.subr.mxu0 0.0
        %1461 = vmatpush1.xpose.msra.mxu0 0.0
        %1462 = vmatprep.subr.mxu0 0.0
        %1463 = vmatpush1.xpose.msra.mxu0 0.0
        %1464 = vmatprep.subr.mxu0 0.0
        %1465 = vmatpush1.xpose.msra.mxu0 0.0
        %1466 = vmatprep.mubr.f32.mxu0 0.0
        %1467 = vmatmul.mubr.f32.gmra.mrb[0].mxu0 %v1390
        %v1468 = vpop.f32.mrb[0].mxu0
        %v1469 = vadd.f32 0.0, %v1468
        %v1470 = vpop.f32.mrb[0].mxu0
        %1471 = vmatprep.mubr.f32.mxu0 0.0
        %1472 = vmatmul.mubr.f32.gmra.mrb[0].mxu0 %v1392
        %v1473 = vpop.f32.mrb[0].mxu0
        %v1474 = vadd.f32 0.0, %v1473
        %v1475 = vpop.f32.mrb[0].mxu0
        %1476 = vmatprep.mubr.f32.mxu0 0.0
        %1477 = vmatmul.mubr.f32.gmra.mrb[0].mxu0 %v1394
        %v1478 = vpop.f32.mrb[0].mxu0
        %v1479 = vadd.f32 0.0, %v1478
        %v1480 = vpop.f32.mrb[0].mxu0
        %1481 = vdwg.mxu0
        %v1482 = vsel %vm1021, %v900, 0
        %v1484 = vsel %vm1021, %v902, 0
        %v1486 = vsel %vm1021, %v904, 0
        %v1488 = vsel %vm1021, %v945, 0
        %v1490 = vsel %vm1021, %v947, 0
        %v1492 = vsel %vm1021, %v949, 0
        %1494 = vmatprep.subr.mxu0 0.0
        %1495 = vmatpush1.xpose.msra.mxu0 %v1488
        %1496 = vmatprep.subr.mxu0 0.0
        %1497 = vmatpush1.xpose.msra.mxu0 %v1490
        %1498 = vmatprep.subr.mxu0 0.0
        %1499 = vmatpush1.xpose.msra.mxu0 %v1492
        %1500 = vmatprep.subr.mxu0 0.0
        %1501 = vmatpush1.xpose.msra.mxu0 0.0
        %1502 = vmatprep.subr.mxu0 0.0
        %1503 = vmatpush1.xpose.msra.mxu0 0.0
        %1504 = vmatprep.subr.mxu0 0.0
        %1505 = vmatpush1.xpose.msra.mxu0 0.0
        %1506 = vmatprep.subr.mxu0 0.0
        %1507 = vmatpush1.xpose.msra.mxu0 0.0
        %1508 = vmatprep.subr.mxu0 0.0
        %1509 = vmatpush1.xpose.msra.mxu0 0.0
        %1510 = vmatprep.subr.mxu0 0.0
        %1511 = vmatpush1.xpose.msra.mxu0 0.0
        %1512 = vmatprep.subr.mxu0 0.0
        %1513 = vmatpush1.xpose.msra.mxu0 0.0
        %1514 = vmatprep.subr.mxu0 0.0
        %1515 = vmatpush1.xpose.msra.mxu0 0.0
        %1516 = vmatprep.subr.mxu0 0.0
        %1517 = vmatpush1.xpose.msra.mxu0 0.0
        %1518 = vmatprep.subr.mxu0 0.0
        %1519 = vmatpush1.xpose.msra.mxu0 0.0
        %1520 = vmatprep.subr.mxu0 0.0
        %1521 = vmatpush1.xpose.msra.mxu0 0.0
        %1522 = vmatprep.subr.mxu0 0.0
        %1523 = vmatpush1.xpose.msra.mxu0 0.0
        %1524 = vmatprep.subr.mxu0 0.0
        %1525 = vmatpush1.xpose.msra.mxu0 0.0
        %1526 = vmatprep.subr.mxu0 0.0
        %1527 = vmatpush1.xpose.msra.mxu0 0.0
        %1528 = vmatprep.subr.mxu0 0.0
        %1529 = vmatpush1.xpose.msra.mxu0 0.0
        %1530 = vmatprep.subr.mxu0 0.0
        %1531 = vmatpush1.xpose.msra.mxu0 0.0
        %1532 = vmatprep.subr.mxu0 0.0
        %1533 = vmatpush1.xpose.msra.mxu0 0.0
        %1534 = vmatprep.subr.mxu0 0.0
        %1535 = vmatpush1.xpose.msra.mxu0 0.0
        %1536 = vmatprep.subr.mxu0 0.0
        %1537 = vmatpush1.xpose.msra.mxu0 0.0
        %1538 = vmatprep.subr.mxu0 0.0
        %1539 = vmatpush1.xpose.msra.mxu0 0.0
        %1540 = vmatprep.subr.mxu0 0.0
        %1541 = vmatpush1.xpose.msra.mxu0 0.0
        %1542 = vmatprep.subr.mxu0 0.0
        %1543 = vmatpush1.xpose.msra.mxu0 0.0
        %1544 = vmatprep.subr.mxu0 0.0
        %1545 = vmatpush1.xpose.msra.mxu0 0.0
        %1546 = vmatprep.subr.mxu0 0.0
        %1547 = vmatpush1.xpose.msra.mxu0 0.0
        %1548 = vmatprep.subr.mxu0 0.0
        %1549 = vmatpush1.xpose.msra.mxu0 0.0
        %1550 = vmatprep.subr.mxu0 0.0
        %1551 = vmatpush1.xpose.msra.mxu0 0.0
        %1552 = vmatprep.subr.mxu0 0.0
        %1553 = vmatpush1.xpose.msra.mxu0 0.0
        %1554 = vmatprep.subr.mxu0 0.0
        %1555 = vmatpush1.xpose.msra.mxu0 0.0
        %1556 = vmatprep.subr.mxu0 0.0
        %1557 = vmatpush1.xpose.msra.mxu0 0.0
        %1558 = vmatprep.mubr.f32.mxu0 0.0
        %1559 = vmatmul.mubr.f32.gmra.mrb[0].mxu0 %v1482
        %v1560 = vpop.f32.mrb[0].mxu0
        %v1561 = vadd.f32 0.0, %v1560
        %v1562 = vpop.f32.mrb[0].mxu0
        %1563 = vmatprep.mubr.f32.mxu0 0.0
        %1564 = vmatmul.mubr.f32.gmra.mrb[0].mxu0 %v1484
        %v1565 = vpop.f32.mrb[0].mxu0
        %v1566 = vadd.f32 0.0, %v1565
        %v1567 = vpop.f32.mrb[0].mxu0
        %1568 = vmatprep.mubr.f32.mxu0 0.0
        %1569 = vmatmul.mubr.f32.gmra.mrb[0].mxu0 %v1486
        %v1570 = vpop.f32.mrb[0].mxu0
        %v1571 = vadd.f32 0.0, %v1570
        %v1572 = vpop.f32.mrb[0].mxu0
        %1573 = vdwg.mxu0
        %v1574 = vsel %vm1021, %v906, 0
        %v1576 = vsel %vm1021, %v908, 0
        %v1578 = vsel %vm1021, %v910, 0
        %v1580 = vsel %vm1021, %v951, 0
        %v1582 = vsel %vm1021, %v953, 0
        %v1584 = vsel %vm1021, %v955, 0
        %1586 = vmatprep.subr.mxu0 0.0
        %1587 = vmatpush1.xpose.msra.mxu0 %v1580
        %1588 = vmatprep.subr.mxu0 0.0
        %1589 = vmatpush1.xpose.msra.mxu0 %v1582
        %1590 = vmatprep.subr.mxu0 0.0
        %1591 = vmatpush1.xpose.msra.mxu0 %v1584
        %1592 = vmatprep.subr.mxu0 0.0
        %1593 = vmatpush1.xpose.msra.mxu0 0.0
        %1594 = vmatprep.subr.mxu0 0.0
        %1595 = vmatpush1.xpose.msra.mxu0 0.0
        %1596 = vmatprep.subr.mxu0 0.0
        %1597 = vmatpush1.xpose.msra.mxu0 0.0
        %1598 = vmatprep.subr.mxu0 0.0
        %1599 = vmatpush1.xpose.msra.mxu0 0.0
        %1600 = vmatprep.subr.mxu0 0.0
        %1601 = vmatpush1.xpose.msra.mxu0 0.0
        %1602 = vmatprep.subr.mxu0 0.0
        %1603 = vmatpush1.xpose.msra.mxu0 0.0
        %1604 = vmatprep.subr.mxu0 0.0
        %1605 = vmatpush1.xpose.msra.mxu0 0.0
        %1606 = vmatprep.subr.mxu0 0.0
        %1607 = vmatpush1.xpose.msra.mxu0 0.0
        %1608 = vmatprep.subr.mxu0 0.0
        %1609 = vmatpush1.xpose.msra.mxu0 0.0
        %1610 = vmatprep.subr.mxu0 0.0
        %1611 = vmatpush1.xpose.msra.mxu0 0.0
        %1612 = vmatprep.subr.mxu0 0.0
        %1613 = vmatpush1.xpose.msra.mxu0 0.0
        %1614 = vmatprep.subr.mxu0 0.0
        %1615 = vmatpush1.xpose.msra.mxu0 0.0
        %1616 = vmatprep.subr.mxu0 0.0
        %1617 = vmatpush1.xpose.msra.mxu0 0.0
        %1618 = vmatprep.subr.mxu0 0.0
        %1619 = vmatpush1.xpose.msra.mxu0 0.0
        %1620 = vmatprep.subr.mxu0 0.0
        %1621 = vmatpush1.xpose.msra.mxu0 0.0
        %1622 = vmatprep.subr.mxu0 0.0
        %1623 = vmatpush1.xpose.msra.mxu0 0.0
        %1624 = vmatprep.subr.mxu0 0.0
        %1625 = vmatpush1.xpose.msra.mxu0 0.0
        %1626 = vmatprep.subr.mxu0 0.0
        %1627 = vmatpush1.xpose.msra.mxu0 0.0
        %1628 = vmatprep.subr.mxu0 0.0
        %1629 = vmatpush1.xpose.msra.mxu0 0.0
        %1630 = vmatprep.subr.mxu0 0.0
        %1631 = vmatpush1.xpose.msra.mxu0 0.0
        %1632 = vmatprep.subr.mxu0 0.0
        %1633 = vmatpush1.xpose.msra.mxu0 0.0
        %1634 = vmatprep.subr.mxu0 0.0
        %1635 = vmatpush1.xpose.msra.mxu0 0.0
        %1636 = vmatprep.subr.mxu0 0.0
        %1637 = vmatpush1.xpose.msra.mxu0 0.0
        %1638 = vmatprep.subr.mxu0 0.0
        %1639 = vmatpush1.xpose.msra.mxu0 0.0
        %1640 = vmatprep.subr.mxu0 0.0
        %1641 = vmatpush1.xpose.msra.mxu0 0.0
        %1642 = vmatprep.subr.mxu0 0.0
        %1643 = vmatpush1.xpose.msra.mxu0 0.0
        %1644 = vmatprep.subr.mxu0 0.0
        %1645 = vmatpush1.xpose.msra.mxu0 0.0
        %1646 = vmatprep.subr.mxu0 0.0
        %1647 = vmatpush1.xpose.msra.mxu0 0.0
        %1648 = vmatprep.subr.mxu0 0.0
        %1649 = vmatpush1.xpose.msra.mxu0 0.0
        %1650 = vmatprep.mubr.f32.mxu0 0.0
        %1651 = vmatmul.mubr.f32.gmra.mrb[0].mxu0 %v1574
        %v1652 = vpop.f32.mrb[0].mxu0
        %v1653 = vadd.f32 0.0, %v1652
        %v1654 = vpop.f32.mrb[0].mxu0
        %1655 = vmatprep.mubr.f32.mxu0 0.0
        %1656 = vmatmul.mubr.f32.gmra.mrb[0].mxu0 %v1576
        %v1657 = vpop.f32.mrb[0].mxu0
        %v1658 = vadd.f32 0.0, %v1657
        %v1659 = vpop.f32.mrb[0].mxu0
        %1660 = vmatprep.mubr.f32.mxu0 0.0
        %1661 = vmatmul.mubr.f32.gmra.mrb[0].mxu0 %v1578
        %v1662 = vpop.f32.mrb[0].mxu0
        %v1663 = vadd.f32 0.0, %v1662
        %v1664 = vpop.f32.mrb[0].mxu0
        %1665 = vdwg.mxu0
        %v1666 = vsel %vm1021, %v912, 0
        %v1668 = vsel %vm1021, %v914, 0
        %v1670 = vsel %vm1021, %v916, 0
        %v1672 = vsel %vm1021, %v957, 0
        %v1674 = vsel %vm1021, %v959, 0
        %v1676 = vsel %vm1021, %v961, 0
        %1678 = vmatprep.subr.mxu0 0.0
        %1679 = vmatpush1.xpose.msra.mxu0 %v1672
        %1680 = vmatprep.subr.mxu0 0.0
        %1681 = vmatpush1.xpose.msra.mxu0 %v1674
        %1682 = vmatprep.subr.mxu0 0.0
        %1683 = vmatpush1.xpose.msra.mxu0 %v1676
        %1684 = vmatprep.subr.mxu0 0.0
        %1685 = vmatpush1.xpose.msra.mxu0 0.0
        %1686 = vmatprep.subr.mxu0 0.0
        %1687 = vmatpush1.xpose.msra.mxu0 0.0
        %1688 = vmatprep.subr.mxu0 0.0
        %1689 = vmatpush1.xpose.msra.mxu0 0.0
        %1690 = vmatprep.subr.mxu0 0.0
        %1691 = vmatpush1.xpose.msra.mxu0 0.0
        %1692 = vmatprep.subr.mxu0 0.0
        %1693 = vmatpush1.xpose.msra.mxu0 0.0
        %1694 = vmatprep.subr.mxu0 0.0
        %1695 = vmatpush1.xpose.msra.mxu0 0.0
        %1696 = vmatprep.subr.mxu0 0.0
        %1697 = vmatpush1.xpose.msra.mxu0 0.0
        %1698 = vmatprep.subr.mxu0 0.0
        %1699 = vmatpush1.xpose.msra.mxu0 0.0
        %1700 = vmatprep.subr.mxu0 0.0
        %1701 = vmatpush1.xpose.msra.mxu0 0.0
        %1702 = vmatprep.subr.mxu0 0.0
        %1703 = vmatpush1.xpose.msra.mxu0 0.0
        %1704 = vmatprep.subr.mxu0 0.0
        %1705 = vmatpush1.xpose.msra.mxu0 0.0
        %1706 = vmatprep.subr.mxu0 0.0
        %1707 = vmatpush1.xpose.msra.mxu0 0.0
        %1708 = vmatprep.subr.mxu0 0.0
        %1709 = vmatpush1.xpose.msra.mxu0 0.0
        %1710 = vmatprep.subr.mxu0 0.0
        %1711 = vmatpush1.xpose.msra.mxu0 0.0
        %1712 = vmatprep.subr.mxu0 0.0
        %1713 = vmatpush1.xpose.msra.mxu0 0.0
        %1714 = vmatprep.subr.mxu0 0.0
        %1715 = vmatpush1.xpose.msra.mxu0 0.0
        %1716 = vmatprep.subr.mxu0 0.0
        %1717 = vmatpush1.xpose.msra.mxu0 0.0
        %1718 = vmatprep.subr.mxu0 0.0
        %1719 = vmatpush1.xpose.msra.mxu0 0.0
        %1720 = vmatprep.subr.mxu0 0.0
        %1721 = vmatpush1.xpose.msra.mxu0 0.0
        %1722 = vmatprep.subr.mxu0 0.0
        %1723 = vmatpush1.xpose.msra.mxu0 0.0
        %1724 = vmatprep.subr.mxu0 0.0
        %1725 = vmatpush1.xpose.msra.mxu0 0.0
        %1726 = vmatprep.subr.mxu0 0.0
        %1727 = vmatpush1.xpose.msra.mxu0 0.0
        %1728 = vmatprep.subr.mxu0 0.0
        %1729 = vmatpush1.xpose.msra.mxu0 0.0
        %1730 = vmatprep.subr.mxu0 0.0
        %1731 = vmatpush1.xpose.msra.mxu0 0.0
        %1732 = vmatprep.subr.mxu0 0.0
        %1733 = vmatpush1.xpose.msra.mxu0 0.0
        %1734 = vmatprep.subr.mxu0 0.0
        %1735 = vmatpush1.xpose.msra.mxu0 0.0
        %1736 = vmatprep.subr.mxu0 0.0
        %1737 = vmatpush1.xpose.msra.mxu0 0.0
        %1738 = vmatprep.subr.mxu0 0.0
        %1739 = vmatpush1.xpose.msra.mxu0 0.0
        %1740 = vmatprep.subr.mxu0 0.0
        %1741 = vmatpush1.xpose.msra.mxu0 0.0
        %1742 = vmatprep.mubr.f32.mxu0 0.0
        %1743 = vmatmul.mubr.f32.gmra.mrb[0].mxu0 %v1666
        %v1744 = vpop.f32.mrb[0].mxu0
        %v1745 = vadd.f32 0.0, %v1744
        %v1746 = vpop.f32.mrb[0].mxu0
        %1747 = vmatprep.mubr.f32.mxu0 0.0
        %1748 = vmatmul.mubr.f32.gmra.mrb[0].mxu0 %v1668
        %v1749 = vpop.f32.mrb[0].mxu0
        %v1750 = vadd.f32 0.0, %v1749
        %v1751 = vpop.f32.mrb[0].mxu0
        %1752 = vmatprep.mubr.f32.mxu0 0.0
        %1753 = vmatmul.mubr.f32.gmra.mrb[0].mxu0 %v1670
        %v1754 = vpop.f32.mrb[0].mxu0
        %v1755 = vadd.f32 0.0, %v1754
        %v1756 = vpop.f32.mrb[0].mxu0
        %1757 = vdwg.mxu0
        %v1758 = vmul.f32 %v1101, 0.25
        %v1759 = vmul.f32 %v1106, 0.25
        %v1760 = vmul.f32 %v1111, 0.25
        %v1761 = vmul.f32 %v1193, 0.25
        %v1762 = vmul.f32 %v1198, 0.25
        %v1763 = vmul.f32 %v1203, 0.25
        %v1764 = vmul.f32 %v1285, 0.25
        %v1765 = vmul.f32 %v1290, 0.25
        %v1766 = vmul.f32 %v1295, 0.25
        %v1767 = vmul.f32 %v1377, 0.25
        %v1768 = vmul.f32 %v1382, 0.25
        %v1769 = vmul.f32 %v1387, 0.25
        %v1770 = vmul.f32 %v1469, 0.25
        %v1771 = vmul.f32 %v1474, 0.25
        %v1772 = vmul.f32 %v1479, 0.25
        %v1773 = vmul.f32 %v1561, 0.25
        %v1774 = vmul.f32 %v1566, 0.25
        %v1775 = vmul.f32 %v1571, 0.25
        %v1776 = vmul.f32 %v1653, 0.25
        %v1777 = vmul.f32 %v1658, 0.25
        %v1778 = vmul.f32 %v1663, 0.25
        %v1779 = vmul.f32 %v1745, 0.25
        %v1780 = vmul.f32 %v1750, 0.25
        %v1781 = vmul.f32 %v1755, 0.25
        %vm1782 = vcmask 162816
        %v1783 = vsel %vm1782, %v1758, -inf
        %1784 = vmax.xlane.f32.xlu0 %v1783
        %v1785 = vpop.xlane.xlu0 %1784
        %v1786 = vsel %vm1782, %v1759, -inf
        %1787 = vmax.xlane.f32.xlu0 %v1786
        %v1788 = vpop.xlane.xlu0 %1787
        %vm1789 = vcmask 158720
        %v1790 = vsel %vm1789, %v1760, -inf
        %1791 = vmax.xlane.f32.xlu0 %v1790
        %v1792 = vpop.xlane.xlu0 %1791
        %v1793 = vsel %vm1782, %v1761, -inf
        %1794 = vmax.xlane.f32.xlu0 %v1793
        %v1795 = vpop.xlane.xlu0 %1794
        %v1796 = vsel %vm1782, %v1762, -inf
        %1797 = vmax.xlane.f32.xlu0 %v1796
        %v1798 = vpop.xlane.xlu0 %1797
        %v1799 = vsel %vm1789, %v1763, -inf
        %1800 = vmax.xlane.f32.xlu0 %v1799
        %v1801 = vpop.xlane.xlu0 %1800
        %v1802 = vsel %vm1782, %v1764, -inf
        %1803 = vmax.xlane.f32.xlu0 %v1802
        %v1804 = vpop.xlane.xlu0 %1803
        %v1805 = vsel %vm1782, %v1765, -inf
        %1806 = vmax.xlane.f32.xlu0 %v1805
        %v1807 = vpop.xlane.xlu0 %1806
        %v1808 = vsel %vm1789, %v1766, -inf
        %1809 = vmax.xlane.f32.xlu0 %v1808
        %v1810 = vpop.xlane.xlu0 %1809
        %v1811 = vsel %vm1782, %v1767, -inf
        %1812 = vmax.xlane.f32.xlu0 %v1811
        %v1813 = vpop.xlane.xlu0 %1812
        %v1814 = vsel %vm1782, %v1768, -inf
        %1815 = vmax.xlane.f32.xlu0 %v1814
        %v1816 = vpop.xlane.xlu0 %1815
        %v1817 = vsel %vm1789, %v1769, -inf
        %1818 = vmax.xlane.f32.xlu0 %v1817
        %v1819 = vpop.xlane.xlu0 %1818
        %v1820 = vsel %vm1782, %v1770, -inf
        %1821 = vmax.xlane.f32.xlu0 %v1820
        %v1822 = vpop.xlane.xlu0 %1821
        %v1823 = vsel %vm1782, %v1771, -inf
        %1824 = vmax.xlane.f32.xlu0 %v1823
        %v1825 = vpop.xlane.xlu0 %1824
        %v1826 = vsel %vm1789, %v1772, -inf
        %1827 = vmax.xlane.f32.xlu0 %v1826
        %v1828 = vpop.xlane.xlu0 %1827
        %v1829 = vsel %vm1782, %v1773, -inf
        %1830 = vmax.xlane.f32.xlu0 %v1829
        %v1831 = vpop.xlane.xlu0 %1830
        %v1832 = vsel %vm1782, %v1774, -inf
        %1833 = vmax.xlane.f32.xlu0 %v1832
        %v1834 = vpop.xlane.xlu0 %1833
        %v1835 = vsel %vm1789, %v1775, -inf
        %1836 = vmax.xlane.f32.xlu0 %v1835
        %v1837 = vpop.xlane.xlu0 %1836
        %v1838 = vsel %vm1782, %v1776, -inf
        %1839 = vmax.xlane.f32.xlu0 %v1838
        %v1840 = vpop.xlane.xlu0 %1839
        %v1841 = vsel %vm1782, %v1777, -inf
        %1842 = vmax.xlane.f32.xlu0 %v1841
        %v1843 = vpop.xlane.xlu0 %1842
        %v1844 = vsel %vm1789, %v1778, -inf
        %1845 = vmax.xlane.f32.xlu0 %v1844
        %v1846 = vpop.xlane.xlu0 %1845
        %v1847 = vsel %vm1782, %v1779, -inf
        %1848 = vmax.xlane.f32.xlu0 %v1847
        %v1849 = vpop.xlane.xlu0 %1848
        %v1850 = vsel %vm1782, %v1780, -inf
        %1851 = vmax.xlane.f32.xlu0 %v1850
        %v1852 = vpop.xlane.xlu0 %1851
        %v1853 = vsel %vm1789, %v1781, -inf
        %1854 = vmax.xlane.f32.xlu0 %v1853
        %v1855 = vpop.xlane.xlu0 %1854
        %v1856 = vsub.f32 %v1758, %v1785
        %v1857 = vsub.f32 %v1759, %v1788
        %v1858 = vsub.f32 %v1760, %v1792
        %v1859 = vsub.f32 %v1761, %v1795
        %v1860 = vsub.f32 %v1762, %v1798
        %v1861 = vsub.f32 %v1763, %v1801
        %v1862 = vsub.f32 %v1764, %v1804
        %v1863 = vsub.f32 %v1765, %v1807
        %v1864 = vsub.f32 %v1766, %v1810
        %v1865 = vsub.f32 %v1767, %v1813
        %v1866 = vsub.f32 %v1768, %v1816
        %v1867 = vsub.f32 %v1769, %v1819
        %v1868 = vsub.f32 %v1770, %v1822
        %v1869 = vsub.f32 %v1771, %v1825
        %v1870 = vsub.f32 %v1772, %v1828
        %v1871 = vsub.f32 %v1773, %v1831
        %v1872 = vsub.f32 %v1774, %v1834
        %v1873 = vsub.f32 %v1775, %v1837
        %v1874 = vsub.f32 %v1776, %v1840
        %v1875 = vsub.f32 %v1777, %v1843
        %v1876 = vsub.f32 %v1778, %v1846
        %v1877 = vsub.f32 %v1779, %v1849
        %v1878 = vsub.f32 %v1780, %v1852
        %v1879 = vsub.f32 %v1781, %v1855
        %v1880 = vmul.f32 %v1856, 1.442695
        %v1881 = vpow.pop %v1880
        %v1882 = vmul.f32 %v1857, 1.442695
        %v1883 = vpow.pop %v1882
        %v1884 = vmul.f32 %v1858, 1.442695
        %v1885 = vpow.pop %v1884
        %v1886 = vmul.f32 %v1859, 1.442695
        %v1887 = vpow.pop %v1886
        %v1888 = vmul.f32 %v1860, 1.442695
        %v1889 = vpow.pop %v1888
        %v1890 = vmul.f32 %v1861, 1.442695
        %v1891 = vpow.pop %v1890
        %v1892 = vmul.f32 %v1862, 1.442695
        %v1893 = vpow.pop %v1892
        %v1894 = vmul.f32 %v1863, 1.442695
        %v1895 = vpow.pop %v1894
        %v1896 = vmul.f32 %v1864, 1.442695
        %v1897 = vpow.pop %v1896
        %v1898 = vmul.f32 %v1865, 1.442695
        %v1899 = vpow.pop %v1898
        %v1900 = vmul.f32 %v1866, 1.442695
        %v1901 = vpow.pop %v1900
        %v1902 = vmul.f32 %v1867, 1.442695
        %v1903 = vpow.pop %v1902
        %v1904 = vmul.f32 %v1868, 1.442695
        %v1905 = vpow.pop %v1904
        %v1906 = vmul.f32 %v1869, 1.442695
        %v1907 = vpow.pop %v1906
        %v1908 = vmul.f32 %v1870, 1.442695
        %v1909 = vpow.pop %v1908
        %v1910 = vmul.f32 %v1871, 1.442695
        %v1911 = vpow.pop %v1910
        %v1912 = vmul.f32 %v1872, 1.442695
        %v1913 = vpow.pop %v1912
        %v1914 = vmul.f32 %v1873, 1.442695
        %v1915 = vpow.pop %v1914
        %v1916 = vmul.f32 %v1874, 1.442695
        %v1917 = vpow.pop %v1916
        %v1918 = vmul.f32 %v1875, 1.442695
        %v1919 = vpow.pop %v1918
        %v1920 = vmul.f32 %v1876, 1.442695
        %v1921 = vpow.pop %v1920
        %v1922 = vmul.f32 %v1877, 1.442695
        %v1923 = vpow.pop %v1922
        %v1924 = vmul.f32 %v1878, 1.442695
        %v1925 = vpow.pop %v1924
        %v1926 = vmul.f32 %v1879, 1.442695
        %v1927 = vpow.pop %v1926
        %v1928 = vsel %vm1782, %v1881, 0.0
        %1929 = vadd.xlane.f32.xlu0 %v1928
        %v1930 = vpop.xlane.xlu0 %1929
        %v1931 = vsel %vm1782, %v1883, 0.0
        %1932 = vadd.xlane.f32.xlu0 %v1931
        %v1933 = vpop.xlane.xlu0 %1932
        %v1934 = vsel %vm1789, %v1885, 0.0
        %1935 = vadd.xlane.f32.xlu0 %v1934
        %v1936 = vpop.xlane.xlu0 %1935
        %v1937 = vsel %vm1782, %v1887, 0.0
        %1938 = vadd.xlane.f32.xlu0 %v1937
        %v1939 = vpop.xlane.xlu0 %1938
        %v1940 = vsel %vm1782, %v1889, 0.0
        %1941 = vadd.xlane.f32.xlu0 %v1940
        %v1942 = vpop.xlane.xlu0 %1941
        %v1943 = vsel %vm1789, %v1891, 0.0
        %1944 = vadd.xlane.f32.xlu0 %v1943
        %v1945 = vpop.xlane.xlu0 %1944
        %v1946 = vsel %vm1782, %v1893, 0.0
        %1947 = vadd.xlane.f32.xlu0 %v1946
        %v1948 = vpop.xlane.xlu0 %1947
        %v1949 = vsel %vm1782, %v1895, 0.0
        %1950 = vadd.xlane.f32.xlu0 %v1949
        %v1951 = vpop.xlane.xlu0 %1950
        %v1952 = vsel %vm1789, %v1897, 0.0
        %1953 = vadd.xlane.f32.xlu0 %v1952
        %v1954 = vpop.xlane.xlu0 %1953
        %v1955 = vsel %vm1782, %v1899, 0.0
        %1956 = vadd.xlane.f32.xlu0 %v1955
        %v1957 = vpop.xlane.xlu0 %1956
        %v1958 = vsel %vm1782, %v1901, 0.0
        %1959 = vadd.xlane.f32.xlu0 %v1958
        %v1960 = vpop.xlane.xlu0 %1959
        %v1961 = vsel %vm1789, %v1903, 0.0
        %1962 = vadd.xlane.f32.xlu0 %v1961
        %v1963 = vpop.xlane.xlu0 %1962
        %v1964 = vsel %vm1782, %v1905, 0.0
        %1965 = vadd.xlane.f32.xlu0 %v1964
        %v1966 = vpop.xlane.xlu0 %1965
        %v1967 = vsel %vm1782, %v1907, 0.0
        %1968 = vadd.xlane.f32.xlu0 %v1967
        %v1969 = vpop.xlane.xlu0 %1968
        %v1970 = vsel %vm1789, %v1909, 0.0
        %1971 = vadd.xlane.f32.xlu0 %v1970
        %v1972 = vpop.xlane.xlu0 %1971
        %v1973 = vsel %vm1782, %v1911, 0.0
        %1974 = vadd.xlane.f32.xlu0 %v1973
        %v1975 = vpop.xlane.xlu0 %1974
        %v1976 = vsel %vm1782, %v1913, 0.0
        %1977 = vadd.xlane.f32.xlu0 %v1976
        %v1978 = vpop.xlane.xlu0 %1977
        %v1979 = vsel %vm1789, %v1915, 0.0
        %1980 = vadd.xlane.f32.xlu0 %v1979
        %v1981 = vpop.xlane.xlu0 %1980
        %v1982 = vsel %vm1782, %v1917, 0.0
        %1983 = vadd.xlane.f32.xlu0 %v1982
        %v1984 = vpop.xlane.xlu0 %1983
        %v1985 = vsel %vm1782, %v1919, 0.0
        %1986 = vadd.xlane.f32.xlu0 %v1985
        %v1987 = vpop.xlane.xlu0 %1986
        %v1988 = vsel %vm1789, %v1921, 0.0
        %1989 = vadd.xlane.f32.xlu0 %v1988
        %v1990 = vpop.xlane.xlu0 %1989
        %v1991 = vsel %vm1782, %v1923, 0.0
        %1992 = vadd.xlane.f32.xlu0 %v1991
        %v1993 = vpop.xlane.xlu0 %1992
        %v1994 = vsel %vm1782, %v1925, 0.0
        %1995 = vadd.xlane.f32.xlu0 %v1994
        %v1996 = vpop.xlane.xlu0 %1995
        %v1997 = vsel %vm1789, %v1927, 0.0
        %1998 = vadd.xlane.f32.xlu0 %v1997
        %v1999 = vpop.xlane.xlu0 %1998
        %v2000 = vrcp.pop %v1930
        %v2001 = vrcp.pop %v1933
        %v2002 = vrcp.pop %v1936
        %v2003 = vrcp.pop %v1939
        %v2004 = vrcp.pop %v1942
        %v2005 = vrcp.pop %v1945
        %v2006 = vrcp.pop %v1948
        %v2007 = vrcp.pop %v1951
        %v2008 = vrcp.pop %v1954
        %v2009 = vrcp.pop %v1957
        %v2010 = vrcp.pop %v1960
        %v2011 = vrcp.pop %v1963
        %v2012 = vrcp.pop %v1966
        %v2013 = vrcp.pop %v1969
        %v2014 = vrcp.pop %v1972
        %v2015 = vrcp.pop %v1975
        %v2016 = vrcp.pop %v1978
        %v2017 = vrcp.pop %v1981
        %v2018 = vrcp.pop %v1984
        %v2019 = vrcp.pop %v1987
        %v2020 = vrcp.pop %v1990
        %v2021 = vrcp.pop %v1993
        %v2022 = vrcp.pop %v1996
        %v2023 = vrcp.pop %v1999
        %v2024 = vmul.f32 %v1881, %v2000
        %v2025 = vmul.f32 %v1883, %v2001
        %v2026 = vmul.f32 %v1885, %v2002
        %v2027 = vmul.f32 %v1887, %v2003
        %v2028 = vmul.f32 %v1889, %v2004
        %v2029 = vmul.f32 %v1891, %v2005
        %v2030 = vmul.f32 %v1893, %v2006
        %v2031 = vmul.f32 %v1895, %v2007
        %v2032 = vmul.f32 %v1897, %v2008
        %v2033 = vmul.f32 %v1899, %v2009
        %v2034 = vmul.f32 %v1901, %v2010
        %v2035 = vmul.f32 %v1903, %v2011
        %v2036 = vmul.f32 %v1905, %v2012
        %v2037 = vmul.f32 %v1907, %v2013
        %v2038 = vmul.f32 %v1909, %v2014
        %v2039 = vmul.f32 %v1911, %v2015
        %v2040 = vmul.f32 %v1913, %v2016
        %v2041 = vmul.f32 %v1915, %v2017
        %v2042 = vmul.f32 %v1917, %v2018
        %v2043 = vmul.f32 %v1919, %v2019
        %v2044 = vmul.f32 %v1921, %v2020
        %v2045 = vmul.f32 %v1923, %v2021
        %v2046 = vmul.f32 %v1925, %v2022
        %v2047 = vmul.f32 %v1927, %v2023
        %v2049 = vsel %vm1782, %v2024, 0
        %v2052 = vsel %vm1782, %v2025, 0
        %v2055 = vsel %vm1782, %v2026, 0
        %vm2057 = vcmask 1043456
        %v2058 = vsel %vm2057, %v869, 0
        %2060 = vmatprep.subr.mxu0 0.0
        %2061 = vmatpush1.msra.mxu0 %v859
        %2062 = vmatprep.subr.mxu0 0.0
        %2063 = vmatpush1.msra.mxu0 %v864
        %2064 = vmatprep.subr.mxu0 0.0
        %2065 = vmatpush1.msra.mxu0 %v2058
        %2066 = vmatprep.subr.mxu0 0.0
        %2067 = vmatpush1.msra.mxu0 0.0
        %2068 = vmatprep.subr.mxu0 0.0
        %2069 = vmatpush1.msra.mxu0 0.0
        %2070 = vmatprep.subr.mxu0 0.0
        %2071 = vmatpush1.msra.mxu0 0.0
        %2072 = vmatprep.subr.mxu0 0.0
        %2073 = vmatpush1.msra.mxu0 0.0
        %2074 = vmatprep.subr.mxu0 0.0
        %2075 = vmatpush1.msra.mxu0 0.0
        %2076 = vmatprep.subr.mxu0 0.0
        %2077 = vmatpush1.msra.mxu0 0.0
        %2078 = vmatprep.subr.mxu0 0.0
        %2079 = vmatpush1.msra.mxu0 0.0
        %2080 = vmatprep.subr.mxu0 0.0
        %2081 = vmatpush1.msra.mxu0 0.0
        %2082 = vmatprep.subr.mxu0 0.0
        %2083 = vmatpush1.msra.mxu0 0.0
        %2084 = vmatprep.subr.mxu0 0.0
        %2085 = vmatpush1.msra.mxu0 0.0
        %2086 = vmatprep.subr.mxu0 0.0
        %2087 = vmatpush1.msra.mxu0 0.0
        %2088 = vmatprep.subr.mxu0 0.0
        %2089 = vmatpush1.msra.mxu0 0.0
        %2090 = vmatprep.subr.mxu0 0.0
        %2091 = vmatpush1.msra.mxu0 0.0
        %2092 = vmatprep.subr.mxu0 0.0
        %2093 = vmatpush1.msra.mxu0 0.0
        %2094 = vmatprep.subr.mxu0 0.0
        %2095 = vmatpush1.msra.mxu0 0.0
        %2096 = vmatprep.subr.mxu0 0.0
        %2097 = vmatpush1.msra.mxu0 0.0
        %2098 = vmatprep.subr.mxu0 0.0
        %2099 = vmatpush1.msra.mxu0 0.0
        %2100 = vmatprep.subr.mxu0 0.0
        %2101 = vmatpush1.msra.mxu0 0.0
        %2102 = vmatprep.subr.mxu0 0.0
        %2103 = vmatpush1.msra.mxu0 0.0
        %2104 = vmatprep.subr.mxu0 0.0
        %2105 = vmatpush1.msra.mxu0 0.0
        %2106 = vmatprep.subr.mxu0 0.0
        %2107 = vmatpush1.msra.mxu0 0.0
        %2108 = vmatprep.subr.mxu0 0.0
        %2109 = vmatpush1.msra.mxu0 0.0
        %2110 = vmatprep.subr.mxu0 0.0
        %2111 = vmatpush1.msra.mxu0 0.0
        %2112 = vmatprep.subr.mxu0 0.0
        %2113 = vmatpush1.msra.mxu0 0.0
        %2114 = vmatprep.subr.mxu0 0.0
        %2115 = vmatpush1.msra.mxu0 0.0
        %2116 = vmatprep.subr.mxu0 0.0
        %2117 = vmatpush1.msra.mxu0 0.0
        %2118 = vmatprep.subr.mxu0 0.0
        %2119 = vmatpush1.msra.mxu0 0.0
        %2120 = vmatprep.subr.mxu0 0.0
        %2121 = vmatpush1.msra.mxu0 0.0
        %2122 = vmatprep.subr.mxu0 0.0
        %2123 = vmatpush1.msra.mxu0 0.0
        %2124 = vmatprep.mubr.f32.mxu0 0.0
        %2125 = vmatmul.mubr.f32.gmra.mrb[0].mxu0 %v2049
        %v2126 = vpop.f32.mrb[0].mxu0
        %v2127 = vadd.f32 0.0, %v2126
        %v2128 = vpop.f32.mrb[0].mxu0
        %2129 = vmatprep.mubr.f32.mxu0 0.0
        %2130 = vmatmul.mubr.f32.gmra.mrb[0].mxu0 %v2052
        %v2131 = vpop.f32.mrb[0].mxu0
        %v2132 = vadd.f32 0.0, %v2131
        %v2133 = vpop.f32.mrb[0].mxu0
        %2134 = vmatprep.mubr.f32.mxu0 0.0
        %2135 = vmatmul.mubr.f32.gmra.mrb[0].mxu0 %v2055
        %v2136 = vpop.f32.mrb[0].mxu0
        %v2137 = vadd.f32 0.0, %v2136
        %v2138 = vpop.f32.mrb[0].mxu0
        %2139 = vdwg.mxu0
        %v2141 = vsel %vm1782, %v2027, 0
        %v2144 = vsel %vm1782, %v2028, 0
        %v2147 = vsel %vm1782, %v2029, 0
        %v2149 = vsel %vm2057, %v970, 0
        %2151 = vmatprep.subr.mxu0 0.0
        %2152 = vmatpush1.msra.mxu0 %v966
        %2153 = vmatprep.subr.mxu0 0.0
        %2154 = vmatpush1.msra.mxu0 %v968
        %2155 = vmatprep.subr.mxu0 0.0
        %2156 = vmatpush1.msra.mxu0 %v2149
        %2157 = vmatprep.subr.mxu0 0.0
        %2158 = vmatpush1.msra.mxu0 0.0
        %2159 = vmatprep.subr.mxu0 0.0
        %2160 = vmatpush1.msra.mxu0 0.0
        %2161 = vmatprep.subr.mxu0 0.0
        %2162 = vmatpush1.msra.mxu0 0.0
        %2163 = vmatprep.subr.mxu0 0.0
        %2164 = vmatpush1.msra.mxu0 0.0
        %2165 = vmatprep.subr.mxu0 0.0
        %2166 = vmatpush1.msra.mxu0 0.0
        %2167 = vmatprep.subr.mxu0 0.0
        %2168 = vmatpush1.msra.mxu0 0.0
        %2169 = vmatprep.subr.mxu0 0.0
        %2170 = vmatpush1.msra.mxu0 0.0
        %2171 = vmatprep.subr.mxu0 0.0
        %2172 = vmatpush1.msra.mxu0 0.0
        %2173 = vmatprep.subr.mxu0 0.0
        %2174 = vmatpush1.msra.mxu0 0.0
        %2175 = vmatprep.subr.mxu0 0.0
        %2176 = vmatpush1.msra.mxu0 0.0
        %2177 = vmatprep.subr.mxu0 0.0
        %2178 = vmatpush1.msra.mxu0 0.0
        %2179 = vmatprep.subr.mxu0 0.0
        %2180 = vmatpush1.msra.mxu0 0.0
        %2181 = vmatprep.subr.mxu0 0.0
        %2182 = vmatpush1.msra.mxu0 0.0
        %2183 = vmatprep.subr.mxu0 0.0
        %2184 = vmatpush1.msra.mxu0 0.0
        %2185 = vmatprep.subr.mxu0 0.0
        %2186 = vmatpush1.msra.mxu0 0.0
        %2187 = vmatprep.subr.mxu0 0.0
        %2188 = vmatpush1.msra.mxu0 0.0
        %2189 = vmatprep.subr.mxu0 0.0
        %2190 = vmatpush1.msra.mxu0 0.0
        %2191 = vmatprep.subr.mxu0 0.0
        %2192 = vmatpush1.msra.mxu0 0.0
        %2193 = vmatprep.subr.mxu0 0.0
        %2194 = vmatpush1.msra.mxu0 0.0
        %2195 = vmatprep.subr.mxu0 0.0
        %2196 = vmatpush1.msra.mxu0 0.0
        %2197 = vmatprep.subr.mxu0 0.0
        %2198 = vmatpush1.msra.mxu0 0.0
        %2199 = vmatprep.subr.mxu0 0.0
        %2200 = vmatpush1.msra.mxu0 0.0
        %2201 = vmatprep.subr.mxu0 0.0
        %2202 = vmatpush1.msra.mxu0 0.0
        %2203 = vmatprep.subr.mxu0 0.0
        %2204 = vmatpush1.msra.mxu0 0.0
        %2205 = vmatprep.subr.mxu0 0.0
        %2206 = vmatpush1.msra.mxu0 0.0
        %2207 = vmatprep.subr.mxu0 0.0
        %2208 = vmatpush1.msra.mxu0 0.0
        %2209 = vmatprep.subr.mxu0 0.0
        %2210 = vmatpush1.msra.mxu0 0.0
        %2211 = vmatprep.subr.mxu0 0.0
        %2212 = vmatpush1.msra.mxu0 0.0
        %2213 = vmatprep.subr.mxu0 0.0
        %2214 = vmatpush1.msra.mxu0 0.0
        %2215 = vmatprep.mubr.f32.mxu0 0.0
        %2216 = vmatmul.mubr.f32.gmra.mrb[0].mxu0 %v2141
        %v2217 = vpop.f32.mrb[0].mxu0
        %v2218 = vadd.f32 0.0, %v2217
        %v2219 = vpop.f32.mrb[0].mxu0
        %2220 = vmatprep.mubr.f32.mxu0 0.0
        %2221 = vmatmul.mubr.f32.gmra.mrb[0].mxu0 %v2144
        %v2222 = vpop.f32.mrb[0].mxu0
        %v2223 = vadd.f32 0.0, %v2222
        %v2224 = vpop.f32.mrb[0].mxu0
        %2225 = vmatprep.mubr.f32.mxu0 0.0
        %2226 = vmatmul.mubr.f32.gmra.mrb[0].mxu0 %v2147
        %v2227 = vpop.f32.mrb[0].mxu0
        %v2228 = vadd.f32 0.0, %v2227
        %v2229 = vpop.f32.mrb[0].mxu0
        %2230 = vdwg.mxu0
        %v2232 = vsel %vm1782, %v2030, 0
        %v2235 = vsel %vm1782, %v2031, 0
        %v2238 = vsel %vm1782, %v2032, 0
        %v2240 = vsel %vm2057, %v978, 0
        %2242 = vmatprep.subr.mxu0 0.0
        %2243 = vmatpush1.msra.mxu0 %v974
        %2244 = vmatprep.subr.mxu0 0.0
        %2245 = vmatpush1.msra.mxu0 %v976
        %2246 = vmatprep.subr.mxu0 0.0
        %2247 = vmatpush1.msra.mxu0 %v2240
        %2248 = vmatprep.subr.mxu0 0.0
        %2249 = vmatpush1.msra.mxu0 0.0
        %2250 = vmatprep.subr.mxu0 0.0
        %2251 = vmatpush1.msra.mxu0 0.0
        %2252 = vmatprep.subr.mxu0 0.0
        %2253 = vmatpush1.msra.mxu0 0.0
        %2254 = vmatprep.subr.mxu0 0.0
        %2255 = vmatpush1.msra.mxu0 0.0
        %2256 = vmatprep.subr.mxu0 0.0
        %2257 = vmatpush1.msra.mxu0 0.0
        %2258 = vmatprep.subr.mxu0 0.0
        %2259 = vmatpush1.msra.mxu0 0.0
        %2260 = vmatprep.subr.mxu0 0.0
        %2261 = vmatpush1.msra.mxu0 0.0
        %2262 = vmatprep.subr.mxu0 0.0
        %2263 = vmatpush1.msra.mxu0 0.0
        %2264 = vmatprep.subr.mxu0 0.0
        %2265 = vmatpush1.msra.mxu0 0.0
        %2266 = vmatprep.subr.mxu0 0.0
        %2267 = vmatpush1.msra.mxu0 0.0
        %2268 = vmatprep.subr.mxu0 0.0
        %2269 = vmatpush1.msra.mxu0 0.0
        %2270 = vmatprep.subr.mxu0 0.0
        %2271 = vmatpush1.msra.mxu0 0.0
        %2272 = vmatprep.subr.mxu0 0.0
        %2273 = vmatpush1.msra.mxu0 0.0
        %2274 = vmatprep.subr.mxu0 0.0
        %2275 = vmatpush1.msra.mxu0 0.0
        %2276 = vmatprep.subr.mxu0 0.0
        %2277 = vmatpush1.msra.mxu0 0.0
        %2278 = vmatprep.subr.mxu0 0.0
        %2279 = vmatpush1.msra.mxu0 0.0
        %2280 = vmatprep.subr.mxu0 0.0
        %2281 = vmatpush1.msra.mxu0 0.0
        %2282 = vmatprep.subr.mxu0 0.0
        %2283 = vmatpush1.msra.mxu0 0.0
        %2284 = vmatprep.subr.mxu0 0.0
        %2285 = vmatpush1.msra.mxu0 0.0
        %2286 = vmatprep.subr.mxu0 0.0
        %2287 = vmatpush1.msra.mxu0 0.0
        %2288 = vmatprep.subr.mxu0 0.0
        %2289 = vmatpush1.msra.mxu0 0.0
        %2290 = vmatprep.subr.mxu0 0.0
        %2291 = vmatpush1.msra.mxu0 0.0
        %2292 = vmatprep.subr.mxu0 0.0
        %2293 = vmatpush1.msra.mxu0 0.0
        %2294 = vmatprep.subr.mxu0 0.0
        %2295 = vmatpush1.msra.mxu0 0.0
        %2296 = vmatprep.subr.mxu0 0.0
        %2297 = vmatpush1.msra.mxu0 0.0
        %2298 = vmatprep.subr.mxu0 0.0
        %2299 = vmatpush1.msra.mxu0 0.0
        %2300 = vmatprep.subr.mxu0 0.0
        %2301 = vmatpush1.msra.mxu0 0.0
        %2302 = vmatprep.subr.mxu0 0.0
        %2303 = vmatpush1.msra.mxu0 0.0
        %2304 = vmatprep.subr.mxu0 0.0
        %2305 = vmatpush1.msra.mxu0 0.0
        %2306 = vmatprep.mubr.f32.mxu0 0.0
        %2307 = vmatmul.mubr.f32.gmra.mrb[0].mxu0 %v2232
        %v2308 = vpop.f32.mrb[0].mxu0
        %v2309 = vadd.f32 0.0, %v2308
        %v2310 = vpop.f32.mrb[0].mxu0
        %2311 = vmatprep.mubr.f32.mxu0 0.0
        %2312 = vmatmul.mubr.f32.gmra.mrb[0].mxu0 %v2235
        %v2313 = vpop.f32.mrb[0].mxu0
        %v2314 = vadd.f32 0.0, %v2313
        %v2315 = vpop.f32.mrb[0].mxu0
        %2316 = vmatprep.mubr.f32.mxu0 0.0
        %2317 = vmatmul.mubr.f32.gmra.mrb[0].mxu0 %v2238
        %v2318 = vpop.f32.mrb[0].mxu0
        %v2319 = vadd.f32 0.0, %v2318
        %v2320 = vpop.f32.mrb[0].mxu0
        %2321 = vdwg.mxu0
        %v2323 = vsel %vm1782, %v2033, 0
        %v2326 = vsel %vm1782, %v2034, 0
        %v2329 = vsel %vm1782, %v2035, 0
        %v2331 = vsel %vm2057, %v986, 0
        %2333 = vmatprep.subr.mxu0 0.0
        %2334 = vmatpush1.msra.mxu0 %v982
        %2335 = vmatprep.subr.mxu0 0.0
        %2336 = vmatpush1.msra.mxu0 %v984
        %2337 = vmatprep.subr.mxu0 0.0
        %2338 = vmatpush1.msra.mxu0 %v2331
        %2339 = vmatprep.subr.mxu0 0.0
        %2340 = vmatpush1.msra.mxu0 0.0
        %2341 = vmatprep.subr.mxu0 0.0
        %2342 = vmatpush1.msra.mxu0 0.0
        %2343 = vmatprep.subr.mxu0 0.0
        %2344 = vmatpush1.msra.mxu0 0.0
        %2345 = vmatprep.subr.mxu0 0.0
        %2346 = vmatpush1.msra.mxu0 0.0
        %2347 = vmatprep.subr.mxu0 0.0
        %2348 = vmatpush1.msra.mxu0 0.0
        %2349 = vmatprep.subr.mxu0 0.0
        %2350 = vmatpush1.msra.mxu0 0.0
        %2351 = vmatprep.subr.mxu0 0.0
        %2352 = vmatpush1.msra.mxu0 0.0
        %2353 = vmatprep.subr.mxu0 0.0
        %2354 = vmatpush1.msra.mxu0 0.0
        %2355 = vmatprep.subr.mxu0 0.0
        %2356 = vmatpush1.msra.mxu0 0.0
        %2357 = vmatprep.subr.mxu0 0.0
        %2358 = vmatpush1.msra.mxu0 0.0
        %2359 = vmatprep.subr.mxu0 0.0
        %2360 = vmatpush1.msra.mxu0 0.0
        %2361 = vmatprep.subr.mxu0 0.0
        %2362 = vmatpush1.msra.mxu0 0.0
        %2363 = vmatprep.subr.mxu0 0.0
        %2364 = vmatpush1.msra.mxu0 0.0
        %2365 = vmatprep.subr.mxu0 0.0
        %2366 = vmatpush1.msra.mxu0 0.0
        %2367 = vmatprep.subr.mxu0 0.0
        %2368 = vmatpush1.msra.mxu0 0.0
        %2369 = vmatprep.subr.mxu0 0.0
        %2370 = vmatpush1.msra.mxu0 0.0
        %2371 = vmatprep.subr.mxu0 0.0
        %2372 = vmatpush1.msra.mxu0 0.0
        %2373 = vmatprep.subr.mxu0 0.0
        %2374 = vmatpush1.msra.mxu0 0.0
        %2375 = vmatprep.subr.mxu0 0.0
        %2376 = vmatpush1.msra.mxu0 0.0
        %2377 = vmatprep.subr.mxu0 0.0
        %2378 = vmatpush1.msra.mxu0 0.0
        %2379 = vmatprep.subr.mxu0 0.0
        %2380 = vmatpush1.msra.mxu0 0.0
        %2381 = vmatprep.subr.mxu0 0.0
        %2382 = vmatpush1.msra.mxu0 0.0
        %2383 = vmatprep.subr.mxu0 0.0
        %2384 = vmatpush1.msra.mxu0 0.0
        %2385 = vmatprep.subr.mxu0 0.0
        %2386 = vmatpush1.msra.mxu0 0.0
        %2387 = vmatprep.subr.mxu0 0.0
        %2388 = vmatpush1.msra.mxu0 0.0
        %2389 = vmatprep.subr.mxu0 0.0
        %2390 = vmatpush1.msra.mxu0 0.0
        %2391 = vmatprep.subr.mxu0 0.0
        %2392 = vmatpush1.msra.mxu0 0.0
        %2393 = vmatprep.subr.mxu0 0.0
        %2394 = vmatpush1.msra.mxu0 0.0
        %2395 = vmatprep.subr.mxu0 0.0
        %2396 = vmatpush1.msra.mxu0 0.0
        %2397 = vmatprep.mubr.f32.mxu0 0.0
        %2398 = vmatmul.mubr.f32.gmra.mrb[0].mxu0 %v2323
        %v2399 = vpop.f32.mrb[0].mxu0
        %v2400 = vadd.f32 0.0, %v2399
        %v2401 = vpop.f32.mrb[0].mxu0
        %2402 = vmatprep.mubr.f32.mxu0 0.0
        %2403 = vmatmul.mubr.f32.gmra.mrb[0].mxu0 %v2326
        %v2404 = vpop.f32.mrb[0].mxu0
        %v2405 = vadd.f32 0.0, %v2404
        %v2406 = vpop.f32.mrb[0].mxu0
        %2407 = vmatprep.mubr.f32.mxu0 0.0
        %2408 = vmatmul.mubr.f32.gmra.mrb[0].mxu0 %v2329
        %v2409 = vpop.f32.mrb[0].mxu0
        %v2410 = vadd.f32 0.0, %v2409
        %v2411 = vpop.f32.mrb[0].mxu0
        %2412 = vdwg.mxu0
        %v2414 = vsel %vm1782, %v2036, 0
        %v2417 = vsel %vm1782, %v2037, 0
        %v2420 = vsel %vm1782, %v2038, 0
        %v2422 = vsel %vm2057, %v994, 0
        %2424 = vmatprep.subr.mxu0 0.0
        %2425 = vmatpush1.msra.mxu0 %v990
        %2426 = vmatprep.subr.mxu0 0.0
        %2427 = vmatpush1.msra.mxu0 %v992
        %2428 = vmatprep.subr.mxu0 0.0
        %2429 = vmatpush1.msra.mxu0 %v2422
        %2430 = vmatprep.subr.mxu0 0.0
        %2431 = vmatpush1.msra.mxu0 0.0
        %2432 = vmatprep.subr.mxu0 0.0
        %2433 = vmatpush1.msra.mxu0 0.0
        %2434 = vmatprep.subr.mxu0 0.0
        %2435 = vmatpush1.msra.mxu0 0.0
        %2436 = vmatprep.subr.mxu0 0.0
        %2437 = vmatpush1.msra.mxu0 0.0
        %2438 = vmatprep.subr.mxu0 0.0
        %2439 = vmatpush1.msra.mxu0 0.0
        %2440 = vmatprep.subr.mxu0 0.0
        %2441 = vmatpush1.msra.mxu0 0.0
        %2442 = vmatprep.subr.mxu0 0.0
        %2443 = vmatpush1.msra.mxu0 0.0
        %2444 = vmatprep.subr.mxu0 0.0
        %2445 = vmatpush1.msra.mxu0 0.0
        %2446 = vmatprep.subr.mxu0 0.0
        %2447 = vmatpush1.msra.mxu0 0.0
        %2448 = vmatprep.subr.mxu0 0.0
        %2449 = vmatpush1.msra.mxu0 0.0
        %2450 = vmatprep.subr.mxu0 0.0
        %2451 = vmatpush1.msra.mxu0 0.0
        %2452 = vmatprep.subr.mxu0 0.0
        %2453 = vmatpush1.msra.mxu0 0.0
        %2454 = vmatprep.subr.mxu0 0.0
        %2455 = vmatpush1.msra.mxu0 0.0
        %2456 = vmatprep.subr.mxu0 0.0
        %2457 = vmatpush1.msra.mxu0 0.0
        %2458 = vmatprep.subr.mxu0 0.0
        %2459 = vmatpush1.msra.mxu0 0.0
        %2460 = vmatprep.subr.mxu0 0.0
        %2461 = vmatpush1.msra.mxu0 0.0
        %2462 = vmatprep.subr.mxu0 0.0
        %2463 = vmatpush1.msra.mxu0 0.0
        %2464 = vmatprep.subr.mxu0 0.0
        %2465 = vmatpush1.msra.mxu0 0.0
        %2466 = vmatprep.subr.mxu0 0.0
        %2467 = vmatpush1.msra.mxu0 0.0
        %2468 = vmatprep.subr.mxu0 0.0
        %2469 = vmatpush1.msra.mxu0 0.0
        %2470 = vmatprep.subr.mxu0 0.0
        %2471 = vmatpush1.msra.mxu0 0.0
        %2472 = vmatprep.subr.mxu0 0.0
        %2473 = vmatpush1.msra.mxu0 0.0
        %2474 = vmatprep.subr.mxu0 0.0
        %2475 = vmatpush1.msra.mxu0 0.0
        %2476 = vmatprep.subr.mxu0 0.0
        %2477 = vmatpush1.msra.mxu0 0.0
        %2478 = vmatprep.subr.mxu0 0.0
        %2479 = vmatpush1.msra.mxu0 0.0
        %2480 = vmatprep.subr.mxu0 0.0
        %2481 = vmatpush1.msra.mxu0 0.0
        %2482 = vmatprep.subr.mxu0 0.0
        %2483 = vmatpush1.msra.mxu0 0.0
        %2484 = vmatprep.subr.mxu0 0.0
        %2485 = vmatpush1.msra.mxu0 0.0
        %2486 = vmatprep.subr.mxu0 0.0
        %2487 = vmatpush1.msra.mxu0 0.0
        %2488 = vmatprep.mubr.f32.mxu0 0.0
        %2489 = vmatmul.mubr.f32.gmra.mrb[0].mxu0 %v2414
        %v2490 = vpop.f32.mrb[0].mxu0
        %v2491 = vadd.f32 0.0, %v2490
        %v2492 = vpop.f32.mrb[0].mxu0
        %2493 = vmatprep.mubr.f32.mxu0 0.0
        %2494 = vmatmul.mubr.f32.gmra.mrb[0].mxu0 %v2417
        %v2495 = vpop.f32.mrb[0].mxu0
        %v2496 = vadd.f32 0.0, %v2495
        %v2497 = vpop.f32.mrb[0].mxu0
        %2498 = vmatprep.mubr.f32.mxu0 0.0
        %2499 = vmatmul.mubr.f32.gmra.mrb[0].mxu0 %v2420
        %v2500 = vpop.f32.mrb[0].mxu0
        %v2501 = vadd.f32 0.0, %v2500
        %v2502 = vpop.f32.mrb[0].mxu0
        %2503 = vdwg.mxu0
        %v2505 = vsel %vm1782, %v2039, 0
        %v2508 = vsel %vm1782, %v2040, 0
        %v2511 = vsel %vm1782, %v2041, 0
        %v2513 = vsel %vm2057, %v1002, 0
        %2515 = vmatprep.subr.mxu0 0.0
        %2516 = vmatpush1.msra.mxu0 %v998
        %2517 = vmatprep.subr.mxu0 0.0
        %2518 = vmatpush1.msra.mxu0 %v1000
        %2519 = vmatprep.subr.mxu0 0.0
        %2520 = vmatpush1.msra.mxu0 %v2513
        %2521 = vmatprep.subr.mxu0 0.0
        %2522 = vmatpush1.msra.mxu0 0.0
        %2523 = vmatprep.subr.mxu0 0.0
        %2524 = vmatpush1.msra.mxu0 0.0
        %2525 = vmatprep.subr.mxu0 0.0
        %2526 = vmatpush1.msra.mxu0 0.0
        %2527 = vmatprep.subr.mxu0 0.0
        %2528 = vmatpush1.msra.mxu0 0.0
        %2529 = vmatprep.subr.mxu0 0.0
        %2530 = vmatpush1.msra.mxu0 0.0
        %2531 = vmatprep.subr.mxu0 0.0
        %2532 = vmatpush1.msra.mxu0 0.0
        %2533 = vmatprep.subr.mxu0 0.0
        %2534 = vmatpush1.msra.mxu0 0.0
        %2535 = vmatprep.subr.mxu0 0.0
        %2536 = vmatpush1.msra.mxu0 0.0
        %2537 = vmatprep.subr.mxu0 0.0
        %2538 = vmatpush1.msra.mxu0 0.0
        %2539 = vmatprep.subr.mxu0 0.0
        %2540 = vmatpush1.msra.mxu0 0.0
        %2541 = vmatprep.subr.mxu0 0.0
        %2542 = vmatpush1.msra.mxu0 0.0
        %2543 = vmatprep.subr.mxu0 0.0
        %2544 = vmatpush1.msra.mxu0 0.0
        %2545 = vmatprep.subr.mxu0 0.0
        %2546 = vmatpush1.msra.mxu0 0.0
        %2547 = vmatprep.subr.mxu0 0.0
        %2548 = vmatpush1.msra.mxu0 0.0
        %2549 = vmatprep.subr.mxu0 0.0
        %2550 = vmatpush1.msra.mxu0 0.0
        %2551 = vmatprep.subr.mxu0 0.0
        %2552 = vmatpush1.msra.mxu0 0.0
        %2553 = vmatprep.subr.mxu0 0.0
        %2554 = vmatpush1.msra.mxu0 0.0
        %2555 = vmatprep.subr.mxu0 0.0
        %2556 = vmatpush1.msra.mxu0 0.0
        %2557 = vmatprep.subr.mxu0 0.0
        %2558 = vmatpush1.msra.mxu0 0.0
        %2559 = vmatprep.subr.mxu0 0.0
        %2560 = vmatpush1.msra.mxu0 0.0
        %2561 = vmatprep.subr.mxu0 0.0
        %2562 = vmatpush1.msra.mxu0 0.0
        %2563 = vmatprep.subr.mxu0 0.0
        %2564 = vmatpush1.msra.mxu0 0.0
        %2565 = vmatprep.subr.mxu0 0.0
        %2566 = vmatpush1.msra.mxu0 0.0
        %2567 = vmatprep.subr.mxu0 0.0
        %2568 = vmatpush1.msra.mxu0 0.0
        %2569 = vmatprep.subr.mxu0 0.0
        %2570 = vmatpush1.msra.mxu0 0.0
        %2571 = vmatprep.subr.mxu0 0.0
        %2572 = vmatpush1.msra.mxu0 0.0
        %2573 = vmatprep.subr.mxu0 0.0
        %2574 = vmatpush1.msra.mxu0 0.0
        %2575 = vmatprep.subr.mxu0 0.0
        %2576 = vmatpush1.msra.mxu0 0.0
        %2577 = vmatprep.subr.mxu0 0.0
        %2578 = vmatpush1.msra.mxu0 0.0
        %2579 = vmatprep.mubr.f32.mxu0 0.0
        %2580 = vmatmul.mubr.f32.gmra.mrb[0].mxu0 %v2505
        %v2581 = vpop.f32.mrb[0].mxu0
        %v2582 = vadd.f32 0.0, %v2581
        %v2583 = vpop.f32.mrb[0].mxu0
        %2584 = vmatprep.mubr.f32.mxu0 0.0
        %2585 = vmatmul.mubr.f32.gmra.mrb[0].mxu0 %v2508
        %v2586 = vpop.f32.mrb[0].mxu0
        %v2587 = vadd.f32 0.0, %v2586
        %v2588 = vpop.f32.mrb[0].mxu0
        %2589 = vmatprep.mubr.f32.mxu0 0.0
        %2590 = vmatmul.mubr.f32.gmra.mrb[0].mxu0 %v2511
        %v2591 = vpop.f32.mrb[0].mxu0
        %v2592 = vadd.f32 0.0, %v2591
        %v2593 = vpop.f32.mrb[0].mxu0
        %2594 = vdwg.mxu0
        %v2596 = vsel %vm1782, %v2042, 0
        %v2599 = vsel %vm1782, %v2043, 0
        %v2602 = vsel %vm1782, %v2044, 0
        %v2604 = vsel %vm2057, %v1010, 0
        %2606 = vmatprep.subr.mxu0 0.0
        %2607 = vmatpush1.msra.mxu0 %v1006
        %2608 = vmatprep.subr.mxu0 0.0
        %2609 = vmatpush1.msra.mxu0 %v1008
        %2610 = vmatprep.subr.mxu0 0.0
        %2611 = vmatpush1.msra.mxu0 %v2604
        %2612 = vmatprep.subr.mxu0 0.0
        %2613 = vmatpush1.msra.mxu0 0.0
        %2614 = vmatprep.subr.mxu0 0.0
        %2615 = vmatpush1.msra.mxu0 0.0
        %2616 = vmatprep.subr.mxu0 0.0
        %2617 = vmatpush1.msra.mxu0 0.0
        %2618 = vmatprep.subr.mxu0 0.0
        %2619 = vmatpush1.msra.mxu0 0.0
        %2620 = vmatprep.subr.mxu0 0.0
        %2621 = vmatpush1.msra.mxu0 0.0
        %2622 = vmatprep.subr.mxu0 0.0
        %2623 = vmatpush1.msra.mxu0 0.0
        %2624 = vmatprep.subr.mxu0 0.0
        %2625 = vmatpush1.msra.mxu0 0.0
        %2626 = vmatprep.subr.mxu0 0.0
        %2627 = vmatpush1.msra.mxu0 0.0
        %2628 = vmatprep.subr.mxu0 0.0
        %2629 = vmatpush1.msra.mxu0 0.0
        %2630 = vmatprep.subr.mxu0 0.0
        %2631 = vmatpush1.msra.mxu0 0.0
        %2632 = vmatprep.subr.mxu0 0.0
        %2633 = vmatpush1.msra.mxu0 0.0
        %2634 = vmatprep.subr.mxu0 0.0
        %2635 = vmatpush1.msra.mxu0 0.0
        %2636 = vmatprep.subr.mxu0 0.0
        %2637 = vmatpush1.msra.mxu0 0.0
        %2638 = vmatprep.subr.mxu0 0.0
        %2639 = vmatpush1.msra.mxu0 0.0
        %2640 = vmatprep.subr.mxu0 0.0
        %2641 = vmatpush1.msra.mxu0 0.0
        %2642 = vmatprep.subr.mxu0 0.0
        %2643 = vmatpush1.msra.mxu0 0.0
        %2644 = vmatprep.subr.mxu0 0.0
        %2645 = vmatpush1.msra.mxu0 0.0
        %2646 = vmatprep.subr.mxu0 0.0
        %2647 = vmatpush1.msra.mxu0 0.0
        %2648 = vmatprep.subr.mxu0 0.0
        %2649 = vmatpush1.msra.mxu0 0.0
        %2650 = vmatprep.subr.mxu0 0.0
        %2651 = vmatpush1.msra.mxu0 0.0
        %2652 = vmatprep.subr.mxu0 0.0
        %2653 = vmatpush1.msra.mxu0 0.0
        %2654 = vmatprep.subr.mxu0 0.0
        %2655 = vmatpush1.msra.mxu0 0.0
        %2656 = vmatprep.subr.mxu0 0.0
        %2657 = vmatpush1.msra.mxu0 0.0
        %2658 = vmatprep.subr.mxu0 0.0
        %2659 = vmatpush1.msra.mxu0 0.0
        %2660 = vmatprep.subr.mxu0 0.0
        %2661 = vmatpush1.msra.mxu0 0.0
        %2662 = vmatprep.subr.mxu0 0.0
        %2663 = vmatpush1.msra.mxu0 0.0
        %2664 = vmatprep.subr.mxu0 0.0
        %2665 = vmatpush1.msra.mxu0 0.0
        %2666 = vmatprep.subr.mxu0 0.0
        %2667 = vmatpush1.msra.mxu0 0.0
        %2668 = vmatprep.subr.mxu0 0.0
        %2669 = vmatpush1.msra.mxu0 0.0
        %2670 = vmatprep.mubr.f32.mxu0 0.0
        %2671 = vmatmul.mubr.f32.gmra.mrb[0].mxu0 %v2596
        %v2672 = vpop.f32.mrb[0].mxu0
        %v2673 = vadd.f32 0.0, %v2672
        %v2674 = vpop.f32.mrb[0].mxu0
        %2675 = vmatprep.mubr.f32.mxu0 0.0
        %2676 = vmatmul.mubr.f32.gmra.mrb[0].mxu0 %v2599
        %v2677 = vpop.f32.mrb[0].mxu0
        %v2678 = vadd.f32 0.0, %v2677
        %v2679 = vpop.f32.mrb[0].mxu0
        %2680 = vmatprep.mubr.f32.mxu0 0.0
        %2681 = vmatmul.mubr.f32.gmra.mrb[0].mxu0 %v2602
        %v2682 = vpop.f32.mrb[0].mxu0
        %v2683 = vadd.f32 0.0, %v2682
        %v2684 = vpop.f32.mrb[0].mxu0
        %2685 = vdwg.mxu0
        %v2687 = vsel %vm1782, %v2045, 0
        %v2690 = vsel %vm1782, %v2046, 0
        %v2693 = vsel %vm1782, %v2047, 0
        %v2695 = vsel %vm2057, %v1018, 0
        %2697 = vmatprep.subr.mxu0 0.0
        %2698 = vmatpush1.msra.mxu0 %v1014
        %2699 = vmatprep.subr.mxu0 0.0
        %2700 = vmatpush1.msra.mxu0 %v1016
        %2701 = vmatprep.subr.mxu0 0.0
        %2702 = vmatpush1.msra.mxu0 %v2695
        %2703 = vmatprep.subr.mxu0 0.0
        %2704 = vmatpush1.msra.mxu0 0.0
        %2705 = vmatprep.subr.mxu0 0.0
        %2706 = vmatpush1.msra.mxu0 0.0
        %2707 = vmatprep.subr.mxu0 0.0
        %2708 = vmatpush1.msra.mxu0 0.0
        %2709 = vmatprep.subr.mxu0 0.0
        %2710 = vmatpush1.msra.mxu0 0.0
        %2711 = vmatprep.subr.mxu0 0.0
        %2712 = vmatpush1.msra.mxu0 0.0
        %2713 = vmatprep.subr.mxu0 0.0
        %2714 = vmatpush1.msra.mxu0 0.0
        %2715 = vmatprep.subr.mxu0 0.0
        %2716 = vmatpush1.msra.mxu0 0.0
        %2717 = vmatprep.subr.mxu0 0.0
        %2718 = vmatpush1.msra.mxu0 0.0
        %2719 = vmatprep.subr.mxu0 0.0
        %2720 = vmatpush1.msra.mxu0 0.0
        %2721 = vmatprep.subr.mxu0 0.0
        %2722 = vmatpush1.msra.mxu0 0.0
        %2723 = vmatprep.subr.mxu0 0.0
        %2724 = vmatpush1.msra.mxu0 0.0
        %2725 = vmatprep.subr.mxu0 0.0
        %2726 = vmatpush1.msra.mxu0 0.0
        %2727 = vmatprep.subr.mxu0 0.0
        %2728 = vmatpush1.msra.mxu0 0.0
        %2729 = vmatprep.subr.mxu0 0.0
        %2730 = vmatpush1.msra.mxu0 0.0
        %2731 = vmatprep.subr.mxu0 0.0
        %2732 = vmatpush1.msra.mxu0 0.0
        %2733 = vmatprep.subr.mxu0 0.0
        %2734 = vmatpush1.msra.mxu0 0.0
        %2735 = vmatprep.subr.mxu0 0.0
        %2736 = vmatpush1.msra.mxu0 0.0
        %2737 = vmatprep.subr.mxu0 0.0
        %2738 = vmatpush1.msra.mxu0 0.0
        %2739 = vmatprep.subr.mxu0 0.0
        %2740 = vmatpush1.msra.mxu0 0.0
        %2741 = vmatprep.subr.mxu0 0.0
        %2742 = vmatpush1.msra.mxu0 0.0
        %2743 = vmatprep.subr.mxu0 0.0
        %2744 = vmatpush1.msra.mxu0 0.0
        %2745 = vmatprep.subr.mxu0 0.0
        %2746 = vmatpush1.msra.mxu0 0.0
        %2747 = vmatprep.subr.mxu0 0.0
        %2748 = vmatpush1.msra.mxu0 0.0
        %2749 = vmatprep.subr.mxu0 0.0
        %2750 = vmatpush1.msra.mxu0 0.0
        %2751 = vmatprep.subr.mxu0 0.0
        %2752 = vmatpush1.msra.mxu0 0.0
        %2753 = vmatprep.subr.mxu0 0.0
        %2754 = vmatpush1.msra.mxu0 0.0
        %2755 = vmatprep.subr.mxu0 0.0
        %2756 = vmatpush1.msra.mxu0 0.0
        %2757 = vmatprep.subr.mxu0 0.0
        %2758 = vmatpush1.msra.mxu0 0.0
        %2759 = vmatprep.subr.mxu0 0.0
        %2760 = vmatpush1.msra.mxu0 0.0
        %2761 = vmatprep.mubr.f32.mxu0 0.0
        %2762 = vmatmul.mubr.f32.gmra.mrb[0].mxu0 %v2687
        %v2763 = vpop.f32.mrb[0].mxu0
        %v2764 = vadd.f32 0.0, %v2763
        %v2765 = vpop.f32.mrb[0].mxu0
        %2766 = vmatprep.mubr.f32.mxu0 0.0
        %2767 = vmatmul.mubr.f32.gmra.mrb[0].mxu0 %v2690
        %v2768 = vpop.f32.mrb[0].mxu0
        %v2769 = vadd.f32 0.0, %v2768
        %v2770 = vpop.f32.mrb[0].mxu0
        %2771 = vmatprep.mubr.f32.mxu0 0.0
        %2772 = vmatmul.mubr.f32.gmra.mrb[0].mxu0 %v2693
        %v2773 = vpop.f32.mrb[0].mxu0
        %v2774 = vadd.f32 0.0, %v2773
        %v2775 = vpop.f32.mrb[0].mxu0
        %2776 = vdwg.mxu0
        %2780 = vrot.lane.b32.xlu0 %v2218, 16
        %v2781 = vpop.permute.xlu0 %2780
        %2782 = vrot.lane.b32.xlu0 %v2223, 16
        %v2783 = vpop.permute.xlu0 %2782
        %2784 = vrot.lane.b32.xlu0 %v2228, 16
        %v2785 = vpop.permute.xlu0 %2784
        %2792 = vrot.lane.b32.xlu0 %v2309, 32
        %v2793 = vpop.permute.xlu0 %2792
        %2794 = vrot.lane.b32.xlu0 %v2314, 32
        %v2795 = vpop.permute.xlu0 %2794
        %2796 = vrot.lane.b32.xlu0 %v2319, 32
        %v2797 = vpop.permute.xlu0 %2796
        %2804 = vrot.lane.b32.xlu0 %v2400, 48
        %v2805 = vpop.permute.xlu0 %2804
        %2806 = vrot.lane.b32.xlu0 %v2405, 48
        %v2807 = vpop.permute.xlu0 %2806
        %2808 = vrot.lane.b32.xlu0 %v2410, 48
        %v2809 = vpop.permute.xlu0 %2808
        %2816 = vrot.lane.b32.xlu0 %v2491, 64
        %v2817 = vpop.permute.xlu0 %2816
        %2818 = vrot.lane.b32.xlu0 %v2496, 64
        %v2819 = vpop.permute.xlu0 %2818
        %2820 = vrot.lane.b32.xlu0 %v2501, 64
        %v2821 = vpop.permute.xlu0 %2820
        %2828 = vrot.lane.b32.xlu0 %v2582, 80
        %v2829 = vpop.permute.xlu0 %2828
        %2830 = vrot.lane.b32.xlu0 %v2587, 80
        %v2831 = vpop.permute.xlu0 %2830
        %2832 = vrot.lane.b32.xlu0 %v2592, 80
        %v2833 = vpop.permute.xlu0 %2832
        %2840 = vrot.lane.b32.xlu0 %v2673, 96
        %v2841 = vpop.permute.xlu0 %2840
        %2842 = vrot.lane.b32.xlu0 %v2678, 96
        %v2843 = vpop.permute.xlu0 %2842
        %2844 = vrot.lane.b32.xlu0 %v2683, 96
        %v2845 = vpop.permute.xlu0 %2844
        %2852 = vrot.lane.b32.xlu0 %v2764, 112
        %v2853 = vpop.permute.xlu0 %2852
        %2854 = vrot.lane.b32.xlu0 %v2769, 112
        %v2855 = vpop.permute.xlu0 %2854
        %2856 = vrot.lane.b32.xlu0 %v2774, 112
        %v2857 = vpop.permute.xlu0 %2856
        %v2861 = vsel %vm1021, %v2127, %v2781
        %v2862 = vsel %vm1021, %v2132, %v2783
        %v2863 = vsel %vm1021, %v2137, %v2785
        %vm2864 = vcmask 261120
        %v2865 = vsel %vm2864, %v2861, %v2793
        %v2866 = vsel %vm2864, %v2862, %v2795
        %v2867 = vsel %vm2864, %v2863, %v2797
        %vm2868 = vcmask 392192
        %v2869 = vsel %vm2868, %v2865, %v2805
        %v2870 = vsel %vm2868, %v2866, %v2807
        %v2871 = vsel %vm2868, %v2867, %v2809
        %vm2872 = vcmask 523264
        %v2873 = vsel %vm2872, %v2869, %v2817
        %v2874 = vsel %vm2872, %v2870, %v2819
        %v2875 = vsel %vm2872, %v2871, %v2821
        %vm2876 = vcmask 654336
        %v2877 = vsel %vm2876, %v2873, %v2829
        %v2878 = vsel %vm2876, %v2874, %v2831
        %v2879 = vsel %vm2876, %v2875, %v2833
        %vm2880 = vcmask 785408
        %v2881 = vsel %vm2880, %v2877, %v2841
        %v2882 = vsel %vm2880, %v2878, %v2843
        %v2883 = vsel %vm2880, %v2879, %v2845
        %vm2884 = vcmask 916480
        %v2885 = vsel %vm2884, %v2881, %v2853
        %v2886 = vsel %vm2884, %v2882, %v2855
        %v2887 = vsel %vm2884, %v2883, %v2857
        %2888 = vmatprep.subr.mxu0 0.0
        %2889 = vmatpush1.msra.mxu0 %v616
        %2890 = vmatprep.subr.mxu0 0.0
        %2891 = vmatpush1.msra.mxu0 %v617
        %2892 = vmatprep.subr.mxu0 0.0
        %2893 = vmatpush1.msra.mxu0 %v618
        %2894 = vmatprep.subr.mxu0 0.0
        %2895 = vmatpush1.msra.mxu0 %v619
        %2896 = vmatprep.subr.mxu0 0.0
        %2897 = vmatpush1.msra.mxu0 %v620
        %2898 = vmatprep.subr.mxu0 0.0
        %2899 = vmatpush1.msra.mxu0 %v621
        %2900 = vmatprep.subr.mxu0 0.0
        %2901 = vmatpush1.msra.mxu0 %v622
        %2902 = vmatprep.subr.mxu0 0.0
        %2903 = vmatpush1.msra.mxu0 %v623
        %2904 = vmatprep.subr.mxu0 0.0
        %2905 = vmatpush1.msra.mxu0 %v624
        %2906 = vmatprep.subr.mxu0 0.0
        %2907 = vmatpush1.msra.mxu0 %v625
        %2908 = vmatprep.subr.mxu0 0.0
        %2909 = vmatpush1.msra.mxu0 %v626
        %2910 = vmatprep.subr.mxu0 0.0
        %2911 = vmatpush1.msra.mxu0 %v627
        %2912 = vmatprep.subr.mxu0 0.0
        %2913 = vmatpush1.msra.mxu0 %v628
        %2914 = vmatprep.subr.mxu0 0.0
        %2915 = vmatpush1.msra.mxu0 %v629
        %2916 = vmatprep.subr.mxu0 0.0
        %2917 = vmatpush1.msra.mxu0 %v630
        %2918 = vmatprep.subr.mxu0 0.0
        %2919 = vmatpush1.msra.mxu0 %v631
        %2920 = vmatprep.subr.mxu0 0.0
        %2921 = vmatpush1.msra.mxu0 0.0
        %2922 = vmatprep.subr.mxu0 0.0
        %2923 = vmatpush1.msra.mxu0 0.0
        %2924 = vmatprep.subr.mxu0 0.0
        %2925 = vmatpush1.msra.mxu0 0.0
        %2926 = vmatprep.subr.mxu0 0.0
        %2927 = vmatpush1.msra.mxu0 0.0
        %2928 = vmatprep.subr.mxu0 0.0
        %2929 = vmatpush1.msra.mxu0 0.0
        %2930 = vmatprep.subr.mxu0 0.0
        %2931 = vmatpush1.msra.mxu0 0.0
        %2932 = vmatprep.subr.mxu0 0.0
        %2933 = vmatpush1.msra.mxu0 0.0
        %2934 = vmatprep.subr.mxu0 0.0
        %2935 = vmatpush1.msra.mxu0 0.0
        %2936 = vmatprep.subr.mxu0 0.0
        %2937 = vmatpush1.msra.mxu0 0.0
        %2938 = vmatprep.subr.mxu0 0.0
        %2939 = vmatpush1.msra.mxu0 0.0
        %2940 = vmatprep.subr.mxu0 0.0
        %2941 = vmatpush1.msra.mxu0 0.0
        %2942 = vmatprep.subr.mxu0 0.0
        %2943 = vmatpush1.msra.mxu0 0.0
        %2944 = vmatprep.subr.mxu0 0.0
        %2945 = vmatpush1.msra.mxu0 0.0
        %2946 = vmatprep.subr.mxu0 0.0
        %2947 = vmatpush1.msra.mxu0 0.0
        %2948 = vmatprep.subr.mxu0 0.0
        %2949 = vmatpush1.msra.mxu0 0.0
        %2950 = vmatprep.subr.mxu0 0.0
        %2951 = vmatpush1.msra.mxu0 0.0
        %2952 = vmatprep.mubr.f32.mxu0 0.0
        %2953 = vmatmul.mubr.f32.gmra.mrb[0].mxu0 %v2885
        %v2954 = vpop.f32.mrb[0].mxu0
        %v2955 = vadd.f32 0.0, %v2954
        %v2956 = vpop.f32.mrb[0].mxu0
        %2957 = vmatprep.mubr.f32.mxu0 0.0
        %2958 = vmatmul.mubr.f32.gmra.mrb[0].mxu0 %v2886
        %v2959 = vpop.f32.mrb[0].mxu0
        %v2960 = vadd.f32 0.0, %v2959
        %v2961 = vpop.f32.mrb[0].mxu0
        %2962 = vmatprep.mubr.f32.mxu0 0.0
        %2963 = vmatmul.mubr.f32.gmra.mrb[0].mxu0 %v2887
        %v2964 = vpop.f32.mrb[0].mxu0
        %v2965 = vadd.f32 0.0, %v2964
        %v2966 = vpop.f32.mrb[0].mxu0
        %2967 = vdwg.mxu0
        %v2968 = vld [vmem:[#allocation11] sm:$0xff]
        %v2969 = vld [vmem:[#allocation11 + $0x8] sm:$0xff]
        %v2970 = vld [vmem:[#allocation11 + $0x10] sm:$0xff]
        %v2971 = vld [vmem:[#allocation11 + $0x18] sm:$0xff]
        %v2972 = vld [vmem:[#allocation11 + $0x20] sm:$0xff]
        %v2973 = vld [vmem:[#allocation11 + $0x28] sm:$0xff]
        %v2974 = vld [vmem:[#allocation11 + $0x30] sm:$0xff]
        %v2975 = vld [vmem:[#allocation11 + $0x38] sm:$0xff]
        %v2976 = vld [vmem:[#allocation11 + $0x40] sm:$0xff]
        %v2977 = vld [vmem:[#allocation11 + $0x48] sm:$0xff]
        %v2978 = vld [vmem:[#allocation11 + $0x50] sm:$0xff]
        %v2979 = vld [vmem:[#allocation11 + $0x58] sm:$0xff]
        %v2980 = vld [vmem:[#allocation11 + $0x60] sm:$0xff]
        %v2981 = vld [vmem:[#allocation11 + $0x68] sm:$0xff]
        %v2982 = vld [vmem:[#allocation11 + $0x70] sm:$0xff]
        %v2983 = vld [vmem:[#allocation11 + $0x78] sm:$0xff]
        %v2984 = vld [vmem:[#allocation13] sm:$0xff]
        %v2985 = vld [vmem:[#allocation13 + $0x8] sm:$0xff]
        %v2986 = vld [vmem:[#allocation13 + $0x10] sm:$0xff]
        %v2987 = vld [vmem:[#allocation13 + $0x18] sm:$0xff]
        %v2988 = vld [vmem:[#allocation13 + $0x20] sm:$0xff]
        %v2989 = vld [vmem:[#allocation13 + $0x28] sm:$0xff]
        %v2990 = vld [vmem:[#allocation13 + $0x30] sm:$0xff]
        %v2991 = vld [vmem:[#allocation13 + $0x38] sm:$0xff]
        %v2992 = vld [vmem:[#allocation13 + $0x40] sm:$0xff]
        %v2993 = vld [vmem:[#allocation13 + $0x48] sm:$0xff]
        %v2994 = vld [vmem:[#allocation13 + $0x50] sm:$0xff]
        %v2995 = vld [vmem:[#allocation13 + $0x58] sm:$0xff]
        %v2996 = vld [vmem:[#allocation13 + $0x60] sm:$0xff]
        %v2997 = vld [vmem:[#allocation13 + $0x68] sm:$0xff]
        %v2998 = vld [vmem:[#allocation13 + $0x70] sm:$0xff]
        %v2999 = vld [vmem:[#allocation13 + $0x78] sm:$0xff]
        %v3000 = vld [vmem:[#allocation14] sm:$0xff]
        %v3001 = vld [vmem:[#allocation14 + $0x8] sm:$0xff]
        %v3002 = vld [vmem:[#allocation14 + $0x10] sm:$0xff]
        %v3003 = vld [vmem:[#allocation14 + $0x18] sm:$0xff]
        %v3004 = vld [vmem:[#allocation14 + $0x20] sm:$0xff]
        %v3005 = vld [vmem:[#allocation14 + $0x28] sm:$0xff]
        %v3006 = vld [vmem:[#allocation14 + $0x30] sm:$0xff]
        %v3007 = vld [vmem:[#allocation14 + $0x38] sm:$0xff]
        %v3008 = vld [vmem:[#allocation14 + $0x40] sm:$0xff]
        %v3009 = vld [vmem:[#allocation14 + $0x48] sm:$0xff]
        %v3010 = vld [vmem:[#allocation14 + $0x50] sm:$0xff]
        %v3011 = vld [vmem:[#allocation14 + $0x58] sm:$0xff]
        %v3012 = vld [vmem:[#allocation14 + $0x60] sm:$0xff]
        %v3013 = vld [vmem:[#allocation14 + $0x68] sm:$0xff]
        %v3014 = vld [vmem:[#allocation14 + $0x70] sm:$0xff]
        %v3015 = vld [vmem:[#allocation14 + $0x78] sm:$0xff]
        %v3016 = vld [vmem:[#allocation16] sm:$0xff]
        %v3017 = vld [vmem:[#allocation16 + $0x8] sm:$0xff]
        %v3018 = vld [vmem:[#allocation16 + $0x10] sm:$0xff]
        %v3019 = vld [vmem:[#allocation16 + $0x18] sm:$0xff]
        %v3020 = vld [vmem:[#allocation16 + $0x20] sm:$0xff]
        %v3021 = vld [vmem:[#allocation16 + $0x28] sm:$0xff]
        %v3022 = vld [vmem:[#allocation16 + $0x30] sm:$0xff]
        %v3023 = vld [vmem:[#allocation16 + $0x38] sm:$0xff]
        %v3024 = vld [vmem:[#allocation16 + $0x40] sm:$0xff]
        %v3025 = vld [vmem:[#allocation16 + $0x48] sm:$0xff]
        %v3026 = vld [vmem:[#allocation16 + $0x50] sm:$0xff]
        %v3027 = vld [vmem:[#allocation16 + $0x58] sm:$0xff]
        %v3028 = vld [vmem:[#allocation16 + $0x60] sm:$0xff]
        %v3029 = vld [vmem:[#allocation16 + $0x68] sm:$0xff]
        %v3030 = vld [vmem:[#allocation16 + $0x70] sm:$0xff]
        %v3031 = vld [vmem:[#allocation16 + $0x78] sm:$0xff]
        %3032 = vmatprep.subr.mxu0 0.0
        %3033 = vmatpush1.msra.mxu0 %v2968
        %3034 = vmatprep.subr.mxu0 0.0
        %3035 = vmatpush1.msra.mxu0 %v2969
        %3036 = vmatprep.subr.mxu0 0.0
        %3037 = vmatpush1.msra.mxu0 %v2970
        %3038 = vmatprep.subr.mxu0 0.0
        %3039 = vmatpush1.msra.mxu0 %v2971
        %3040 = vmatprep.subr.mxu0 0.0
        %3041 = vmatpush1.msra.mxu0 %v2972
        %3042 = vmatprep.subr.mxu0 0.0
        %3043 = vmatpush1.msra.mxu0 %v2973
        %3044 = vmatprep.subr.mxu0 0.0
        %3045 = vmatpush1.msra.mxu0 %v2974
        %3046 = vmatprep.subr.mxu0 0.0
        %3047 = vmatpush1.msra.mxu0 %v2975
        %3048 = vmatprep.subr.mxu0 0.0
        %3049 = vmatpush1.msra.mxu0 %v2976
        %3050 = vmatprep.subr.mxu0 0.0
        %3051 = vmatpush1.msra.mxu0 %v2977
        %3052 = vmatprep.subr.mxu0 0.0
        %3053 = vmatpush1.msra.mxu0 %v2978
        %3054 = vmatprep.subr.mxu0 0.0
        %3055 = vmatpush1.msra.mxu0 %v2979
        %3056 = vmatprep.subr.mxu0 0.0
        %3057 = vmatpush1.msra.mxu0 %v2980
        %3058 = vmatprep.subr.mxu0 0.0
        %3059 = vmatpush1.msra.mxu0 %v2981
        %3060 = vmatprep.subr.mxu0 0.0
        %3061 = vmatpush1.msra.mxu0 %v2982
        %3062 = vmatprep.subr.mxu0 0.0
        %3063 = vmatpush1.msra.mxu0 %v2983
        %3064 = vmatprep.subr.mxu0 0.0
        %3065 = vmatpush1.msra.mxu0 0.0
        %3066 = vmatprep.subr.mxu0 0.0
        %3067 = vmatpush1.msra.mxu0 0.0
        %3068 = vmatprep.subr.mxu0 0.0
        %3069 = vmatpush1.msra.mxu0 0.0
        %3070 = vmatprep.subr.mxu0 0.0
        %3071 = vmatpush1.msra.mxu0 0.0
        %3072 = vmatprep.subr.mxu0 0.0
        %3073 = vmatpush1.msra.mxu0 0.0
        %3074 = vmatprep.subr.mxu0 0.0
        %3075 = vmatpush1.msra.mxu0 0.0
        %3076 = vmatprep.subr.mxu0 0.0
        %3077 = vmatpush1.msra.mxu0 0.0
        %3078 = vmatprep.subr.mxu0 0.0
        %3079 = vmatpush1.msra.mxu0 0.0
        %3080 = vmatprep.subr.mxu0 0.0
        %3081 = vmatpush1.msra.mxu0 0.0
        %3082 = vmatprep.subr.mxu0 0.0
        %3083 = vmatpush1.msra.mxu0 0.0
        %3084 = vmatprep.subr.mxu0 0.0
        %3085 = vmatpush1.msra.mxu0 0.0
        %3086 = vmatprep.subr.mxu0 0.0
        %3087 = vmatpush1.msra.mxu0 0.0
        %3088 = vmatprep.subr.mxu0 0.0
        %3089 = vmatpush1.msra.mxu0 0.0
        %3090 = vmatprep.subr.mxu0 0.0
        %3091 = vmatpush1.msra.mxu0 0.0
        %3092 = vmatprep.subr.mxu0 0.0
        %3093 = vmatpush1.msra.mxu0 0.0
        %3094 = vmatprep.subr.mxu0 0.0
        %3095 = vmatpush1.msra.mxu0 0.0
        %3096 = vmatprep.mubr.f32.mxu0 0.0
        %3097 = vmatmul.mubr.f32.gmra.mrb[0].mxu0 %v548
        %v3098 = vpop.f32.mrb[0].mxu0
        %v3099 = vadd.f32 0.0, %v3098
        %v3100 = vpop.f32.mrb[0].mxu0
        %3101 = vdwg.mxu0
        %3102 = vmatprep.subr.mxu0 0.0
        %3103 = vmatpush1.msra.mxu0 %v2984
        %3104 = vmatprep.subr.mxu0 0.0
        %3105 = vmatpush1.msra.mxu0 %v2985
        %3106 = vmatprep.subr.mxu0 0.0
        %3107 = vmatpush1.msra.mxu0 %v2986
        %3108 = vmatprep.subr.mxu0 0.0
        %3109 = vmatpush1.msra.mxu0 %v2987
        %3110 = vmatprep.subr.mxu0 0.0
        %3111 = vmatpush1.msra.mxu0 %v2988
        %3112 = vmatprep.subr.mxu0 0.0
        %3113 = vmatpush1.msra.mxu0 %v2989
        %3114 = vmatprep.subr.mxu0 0.0
        %3115 = vmatpush1.msra.mxu0 %v2990
        %3116 = vmatprep.subr.mxu0 0.0
        %3117 = vmatpush1.msra.mxu0 %v2991
        %3118 = vmatprep.subr.mxu0 0.0
        %3119 = vmatpush1.msra.mxu0 %v2992
        %3120 = vmatprep.subr.mxu0 0.0
        %3121 = vmatpush1.msra.mxu0 %v2993
        %3122 = vmatprep.subr.mxu0 0.0
        %3123 = vmatpush1.msra.mxu0 %v2994
        %3124 = vmatprep.subr.mxu0 0.0
        %3125 = vmatpush1.msra.mxu0 %v2995
        %3126 = vmatprep.subr.mxu0 0.0
        %3127 = vmatpush1.msra.mxu0 %v2996
        %3128 = vmatprep.subr.mxu0 0.0
        %3129 = vmatpush1.msra.mxu0 %v2997
        %3130 = vmatprep.subr.mxu0 0.0
        %3131 = vmatpush1.msra.mxu0 %v2998
        %3132 = vmatprep.subr.mxu0 0.0
        %3133 = vmatpush1.msra.mxu0 %v2999
        %3134 = vmatprep.subr.mxu0 0.0
        %3135 = vmatpush1.msra.mxu0 0.0
        %3136 = vmatprep.subr.mxu0 0.0
        %3137 = vmatpush1.msra.mxu0 0.0
        %3138 = vmatprep.subr.mxu0 0.0
        %3139 = vmatpush1.msra.mxu0 0.0
        %3140 = vmatprep.subr.mxu0 0.0
        %3141 = vmatpush1.msra.mxu0 0.0
        %3142 = vmatprep.subr.mxu0 0.0
        %3143 = vmatpush1.msra.mxu0 0.0
        %3144 = vmatprep.subr.mxu0 0.0
        %3145 = vmatpush1.msra.mxu0 0.0
        %3146 = vmatprep.subr.mxu0 0.0
        %3147 = vmatpush1.msra.mxu0 0.0
        %3148 = vmatprep.subr.mxu0 0.0
        %3149 = vmatpush1.msra.mxu0 0.0
        %3150 = vmatprep.subr.mxu0 0.0
        %3151 = vmatpush1.msra.mxu0 0.0
        %3152 = vmatprep.subr.mxu0 0.0
        %3153 = vmatpush1.msra.mxu0 0.0
        %3154 = vmatprep.subr.mxu0 0.0
        %3155 = vmatpush1.msra.mxu0 0.0
        %3156 = vmatprep.subr.mxu0 0.0
        %3157 = vmatpush1.msra.mxu0 0.0
        %3158 = vmatprep.subr.mxu0 0.0
        %3159 = vmatpush1.msra.mxu0 0.0
        %3160 = vmatprep.subr.mxu0 0.0
        %3161 = vmatpush1.msra.mxu0 0.0
        %3162 = vmatprep.subr.mxu0 0.0
        %3163 = vmatpush1.msra.mxu0 0.0
        %3164 = vmatprep.subr.mxu0 0.0
        %3165 = vmatpush1.msra.mxu0 0.0
        %3166 = vmatprep.mubr.f32.mxu0 0.0
        %3167 = vmatmul.mubr.f32.gmra.mrb[0].mxu0 %v548
        %v3168 = vpop.f32.mrb[0].mxu0
        %v3169 = vadd.f32 0.0, %v3168
        %v3170 = vpop.f32.mrb[0].mxu0
        %3171 = vdwg.mxu0
        %3172 = vmatprep.subr.mxu0 0.0
        %3173 = vmatpush1.msra.mxu0 %v3000
        %3174 = vmatprep.subr.mxu0 0.0
        %3175 = vmatpush1.msra.mxu0 %v3001
        %3176 = vmatprep.subr.mxu0 0.0
        %3177 = vmatpush1.msra.mxu0 %v3002
        %3178 = vmatprep.subr.mxu0 0.0
        %3179 = vmatpush1.msra.mxu0 %v3003
        %3180 = vmatprep.subr.mxu0 0.0
        %3181 = vmatpush1.msra.mxu0 %v3004
        %3182 = vmatprep.subr.mxu0 0.0
        %3183 = vmatpush1.msra.mxu0 %v3005
        %3184 = vmatprep.subr.mxu0 0.0
        %3185 = vmatpush1.msra.mxu0 %v3006
        %3186 = vmatprep.subr.mxu0 0.0
        %3187 = vmatpush1.msra.mxu0 %v3007
        %3188 = vmatprep.subr.mxu0 0.0
        %3189 = vmatpush1.msra.mxu0 %v3008
        %3190 = vmatprep.subr.mxu0 0.0
        %3191 = vmatpush1.msra.mxu0 %v3009
        %3192 = vmatprep.subr.mxu0 0.0
        %3193 = vmatpush1.msra.mxu0 %v3010
        %3194 = vmatprep.subr.mxu0 0.0
        %3195 = vmatpush1.msra.mxu0 %v3011
        %3196 = vmatprep.subr.mxu0 0.0
        %3197 = vmatpush1.msra.mxu0 %v3012
        %3198 = vmatprep.subr.mxu0 0.0
        %3199 = vmatpush1.msra.mxu0 %v3013
        %3200 = vmatprep.subr.mxu0 0.0
        %3201 = vmatpush1.msra.mxu0 %v3014
        %3202 = vmatprep.subr.mxu0 0.0
        %3203 = vmatpush1.msra.mxu0 %v3015
        %3204 = vmatprep.subr.mxu0 0.0
        %3205 = vmatpush1.msra.mxu0 0.0
        %3206 = vmatprep.subr.mxu0 0.0
        %3207 = vmatpush1.msra.mxu0 0.0
        %3208 = vmatprep.subr.mxu0 0.0
        %3209 = vmatpush1.msra.mxu0 0.0
        %3210 = vmatprep.subr.mxu0 0.0
        %3211 = vmatpush1.msra.mxu0 0.0
        %3212 = vmatprep.subr.mxu0 0.0
        %3213 = vmatpush1.msra.mxu0 0.0
        %3214 = vmatprep.subr.mxu0 0.0
        %3215 = vmatpush1.msra.mxu0 0.0
        %3216 = vmatprep.subr.mxu0 0.0
        %3217 = vmatpush1.msra.mxu0 0.0
        %3218 = vmatprep.subr.mxu0 0.0
        %3219 = vmatpush1.msra.mxu0 0.0
        %3220 = vmatprep.subr.mxu0 0.0
        %3221 = vmatpush1.msra.mxu0 0.0
        %3222 = vmatprep.subr.mxu0 0.0
        %3223 = vmatpush1.msra.mxu0 0.0
        %3224 = vmatprep.subr.mxu0 0.0
        %3225 = vmatpush1.msra.mxu0 0.0
        %3226 = vmatprep.subr.mxu0 0.0
        %3227 = vmatpush1.msra.mxu0 0.0
        %3228 = vmatprep.subr.mxu0 0.0
        %3229 = vmatpush1.msra.mxu0 0.0
        %3230 = vmatprep.subr.mxu0 0.0
        %3231 = vmatpush1.msra.mxu0 0.0
        %3232 = vmatprep.subr.mxu0 0.0
        %3233 = vmatpush1.msra.mxu0 0.0
        %3234 = vmatprep.subr.mxu0 0.0
        %3235 = vmatpush1.msra.mxu0 0.0
        %3236 = vmatprep.mubr.f32.mxu0 0.0
        %3237 = vmatmul.mubr.f32.gmra.mrb[0].mxu0 %v548
        %v3238 = vpop.f32.mrb[0].mxu0
        %v3239 = vadd.f32 0.0, %v3238
        %v3240 = vpop.f32.mrb[0].mxu0
        %3241 = vdwg.mxu0
        %3243 = vrot.lane.b32.xlu0 %v3099, 96
        %v3244 = vpop.permute.xlu0 %3243
        %3245 = vrot.lane.b32.xlu0 %v3099, 64
        %v3246 = vpop.permute.xlu0 %3245
        %3247 = vrot.lane.b32.xlu0 %v3099, 32
        %v3248 = vpop.permute.xlu0 %3247
        %3250 = vrot.lane.b32.xlu0 %v3169, 96
        %v3251 = vpop.permute.xlu0 %3250
        %3252 = vrot.lane.b32.xlu0 %v3169, 64
        %v3253 = vpop.permute.xlu0 %3252
        %3254 = vrot.lane.b32.xlu0 %v3169, 32
        %v3255 = vpop.permute.xlu0 %3254
        %3257 = vrot.lane.b32.xlu0 %v3239, 96
        %v3258 = vpop.permute.xlu0 %3257
        %3259 = vrot.lane.b32.xlu0 %v3239, 64
        %v3260 = vpop.permute.xlu0 %3259
        %3261 = vrot.lane.b32.xlu0 %v3239, 32
        %v3262 = vpop.permute.xlu0 %3261
        %v3263 = vsel %vm2864, %v3099, 0
        %v3265 = vsel %vm2864, %v3169, 0
        %3267 = vmatprep.subr.mxu0 0.0
        %3268 = vmatpush1.xpose.msra.mxu0 %v3265
        %3269 = vmatprep.subr.mxu0 0.0
        %3270 = vmatpush1.xpose.msra.mxu0 0.0
        %3271 = vmatprep.subr.mxu0 0.0
        %3272 = vmatpush1.xpose.msra.mxu0 0.0
        %3273 = vmatprep.subr.mxu0 0.0
        %3274 = vmatpush1.xpose.msra.mxu0 0.0
        %3275 = vmatprep.subr.mxu0 0.0
        %3276 = vmatpush1.xpose.msra.mxu0 0.0
        %3277 = vmatprep.subr.mxu0 0.0
        %3278 = vmatpush1.xpose.msra.mxu0 0.0
        %3279 = vmatprep.subr.mxu0 0.0
        %3280 = vmatpush1.xpose.msra.mxu0 0.0
        %3281 = vmatprep.subr.mxu0 0.0
        %3282 = vmatpush1.xpose.msra.mxu0 0.0
        %3283 = vmatprep.subr.mxu0 0.0
        %3284 = vmatpush1.xpose.msra.mxu0 0.0
        %3285 = vmatprep.subr.mxu0 0.0
        %3286 = vmatpush1.xpose.msra.mxu0 0.0
        %3287 = vmatprep.subr.mxu0 0.0
        %3288 = vmatpush1.xpose.msra.mxu0 0.0
        %3289 = vmatprep.subr.mxu0 0.0
        %3290 = vmatpush1.xpose.msra.mxu0 0.0
        %3291 = vmatprep.subr.mxu0 0.0
        %3292 = vmatpush1.xpose.msra.mxu0 0.0
        %3293 = vmatprep.subr.mxu0 0.0
        %3294 = vmatpush1.xpose.msra.mxu0 0.0
        %3295 = vmatprep.subr.mxu0 0.0
        %3296 = vmatpush1.xpose.msra.mxu0 0.0
        %3297 = vmatprep.subr.mxu0 0.0
        %3298 = vmatpush1.xpose.msra.mxu0 0.0
        %3299 = vmatprep.subr.mxu0 0.0
        %3300 = vmatpush1.xpose.msra.mxu0 0.0
        %3301 = vmatprep.subr.mxu0 0.0
        %3302 = vmatpush1.xpose.msra.mxu0 0.0
        %3303 = vmatprep.subr.mxu0 0.0
        %3304 = vmatpush1.xpose.msra.mxu0 0.0
        %3305 = vmatprep.subr.mxu0 0.0
        %3306 = vmatpush1.xpose.msra.mxu0 0.0
        %3307 = vmatprep.subr.mxu0 0.0
        %3308 = vmatpush1.xpose.msra.mxu0 0.0
        %3309 = vmatprep.subr.mxu0 0.0
        %3310 = vmatpush1.xpose.msra.mxu0 0.0
        %3311 = vmatprep.subr.mxu0 0.0
        %3312 = vmatpush1.xpose.msra.mxu0 0.0
        %3313 = vmatprep.subr.mxu0 0.0
        %3314 = vmatpush1.xpose.msra.mxu0 0.0
        %3315 = vmatprep.subr.mxu0 0.0
        %3316 = vmatpush1.xpose.msra.mxu0 0.0
        %3317 = vmatprep.subr.mxu0 0.0
        %3318 = vmatpush1.xpose.msra.mxu0 0.0
        %3319 = vmatprep.subr.mxu0 0.0
        %3320 = vmatpush1.xpose.msra.mxu0 0.0
        %3321 = vmatprep.subr.mxu0 0.0
        %3322 = vmatpush1.xpose.msra.mxu0 0.0
        %3323 = vmatprep.subr.mxu0 0.0
        %3324 = vmatpush1.xpose.msra.mxu0 0.0
        %3325 = vmatprep.subr.mxu0 0.0
        %3326 = vmatpush1.xpose.msra.mxu0 0.0
        %3327 = vmatprep.subr.mxu0 0.0
        %3328 = vmatpush1.xpose.msra.mxu0 0.0
        %3329 = vmatprep.subr.mxu0 0.0
        %3330 = vmatpush1.xpose.msra.mxu0 0.0
        %3331 = vmatprep.mubr.f32.mxu0 0.0
        %3332 = vmatmul.mubr.f32.gmra.mrb[0].mxu0 %v3263
        %v3333 = vpop.f32.mrb[0].mxu0
        %v3334 = vadd.f32 0.0, %v3333
        %v3335 = vpop.f32.mrb[0].mxu0
        %3336 = vdwg.mxu0
        %v3337 = vsel %vm2864, %v3244, 0
        %v3339 = vsel %vm2864, %v3251, 0
        %3341 = vmatprep.subr.mxu0 0.0
        %3342 = vmatpush1.xpose.msra.mxu0 %v3339
        %3343 = vmatprep.subr.mxu0 0.0
        %3344 = vmatpush1.xpose.msra.mxu0 0.0
        %3345 = vmatprep.subr.mxu0 0.0
        %3346 = vmatpush1.xpose.msra.mxu0 0.0
        %3347 = vmatprep.subr.mxu0 0.0
        %3348 = vmatpush1.xpose.msra.mxu0 0.0
        %3349 = vmatprep.subr.mxu0 0.0
        %3350 = vmatpush1.xpose.msra.mxu0 0.0
        %3351 = vmatprep.subr.mxu0 0.0
        %3352 = vmatpush1.xpose.msra.mxu0 0.0
        %3353 = vmatprep.subr.mxu0 0.0
        %3354 = vmatpush1.xpose.msra.mxu0 0.0
        %3355 = vmatprep.subr.mxu0 0.0
        %3356 = vmatpush1.xpose.msra.mxu0 0.0
        %3357 = vmatprep.subr.mxu0 0.0
        %3358 = vmatpush1.xpose.msra.mxu0 0.0
        %3359 = vmatprep.subr.mxu0 0.0
        %3360 = vmatpush1.xpose.msra.mxu0 0.0
        %3361 = vmatprep.subr.mxu0 0.0
        %3362 = vmatpush1.xpose.msra.mxu0 0.0
        %3363 = vmatprep.subr.mxu0 0.0
        %3364 = vmatpush1.xpose.msra.mxu0 0.0
        %3365 = vmatprep.subr.mxu0 0.0
        %3366 = vmatpush1.xpose.msra.mxu0 0.0
        %3367 = vmatprep.subr.mxu0 0.0
        %3368 = vmatpush1.xpose.msra.mxu0 0.0
        %3369 = vmatprep.subr.mxu0 0.0
        %3370 = vmatpush1.xpose.msra.mxu0 0.0
        %3371 = vmatprep.subr.mxu0 0.0
        %3372 = vmatpush1.xpose.msra.mxu0 0.0
        %3373 = vmatprep.subr.mxu0 0.0
        %3374 = vmatpush1.xpose.msra.mxu0 0.0
        %3375 = vmatprep.subr.mxu0 0.0
        %3376 = vmatpush1.xpose.msra.mxu0 0.0
        %3377 = vmatprep.subr.mxu0 0.0
        %3378 = vmatpush1.xpose.msra.mxu0 0.0
        %3379 = vmatprep.subr.mxu0 0.0
        %3380 = vmatpush1.xpose.msra.mxu0 0.0
        %3381 = vmatprep.subr.mxu0 0.0
        %3382 = vmatpush1.xpose.msra.mxu0 0.0
        %3383 = vmatprep.subr.mxu0 0.0
        %3384 = vmatpush1.xpose.msra.mxu0 0.0
        %3385 = vmatprep.subr.mxu0 0.0
        %3386 = vmatpush1.xpose.msra.mxu0 0.0
        %3387 = vmatprep.subr.mxu0 0.0
        %3388 = vmatpush1.xpose.msra.mxu0 0.0
        %3389 = vmatprep.subr.mxu0 0.0
        %3390 = vmatpush1.xpose.msra.mxu0 0.0
        %3391 = vmatprep.subr.mxu0 0.0
        %3392 = vmatpush1.xpose.msra.mxu0 0.0
        %3393 = vmatprep.subr.mxu0 0.0
        %3394 = vmatpush1.xpose.msra.mxu0 0.0
        %3395 = vmatprep.subr.mxu0 0.0
        %3396 = vmatpush1.xpose.msra.mxu0 0.0
        %3397 = vmatprep.subr.mxu0 0.0
        %3398 = vmatpush1.xpose.msra.mxu0 0.0
        %3399 = vmatprep.subr.mxu0 0.0
        %3400 = vmatpush1.xpose.msra.mxu0 0.0
        %3401 = vmatprep.subr.mxu0 0.0
        %3402 = vmatpush1.xpose.msra.mxu0 0.0
        %3403 = vmatprep.subr.mxu0 0.0
        %3404 = vmatpush1.xpose.msra.mxu0 0.0
        %3405 = vmatprep.mubr.f32.mxu0 0.0
        %3406 = vmatmul.mubr.f32.gmra.mrb[0].mxu0 %v3337
        %v3407 = vpop.f32.mrb[0].mxu0
        %v3408 = vadd.f32 0.0, %v3407
        %v3409 = vpop.f32.mrb[0].mxu0
        %3410 = vdwg.mxu0
        %v3411 = vsel %vm2864, %v3246, 0
        %v3413 = vsel %vm2864, %v3253, 0
        %3415 = vmatprep.subr.mxu0 0.0
        %3416 = vmatpush1.xpose.msra.mxu0 %v3413
        %3417 = vmatprep.subr.mxu0 0.0
        %3418 = vmatpush1.xpose.msra.mxu0 0.0
        %3419 = vmatprep.subr.mxu0 0.0
        %3420 = vmatpush1.xpose.msra.mxu0 0.0
        %3421 = vmatprep.subr.mxu0 0.0
        %3422 = vmatpush1.xpose.msra.mxu0 0.0
        %3423 = vmatprep.subr.mxu0 0.0
        %3424 = vmatpush1.xpose.msra.mxu0 0.0
        %3425 = vmatprep.subr.mxu0 0.0
        %3426 = vmatpush1.xpose.msra.mxu0 0.0
        %3427 = vmatprep.subr.mxu0 0.0
        %3428 = vmatpush1.xpose.msra.mxu0 0.0
        %3429 = vmatprep.subr.mxu0 0.0
        %3430 = vmatpush1.xpose.msra.mxu0 0.0
        %3431 = vmatprep.subr.mxu0 0.0
        %3432 = vmatpush1.xpose.msra.mxu0 0.0
        %3433 = vmatprep.subr.mxu0 0.0
        %3434 = vmatpush1.xpose.msra.mxu0 0.0
        %3435 = vmatprep.subr.mxu0 0.0
        %3436 = vmatpush1.xpose.msra.mxu0 0.0
        %3437 = vmatprep.subr.mxu0 0.0
        %3438 = vmatpush1.xpose.msra.mxu0 0.0
        %3439 = vmatprep.subr.mxu0 0.0
        %3440 = vmatpush1.xpose.msra.mxu0 0.0
        %3441 = vmatprep.subr.mxu0 0.0
        %3442 = vmatpush1.xpose.msra.mxu0 0.0
        %3443 = vmatprep.subr.mxu0 0.0
        %3444 = vmatpush1.xpose.msra.mxu0 0.0
        %3445 = vmatprep.subr.mxu0 0.0
        %3446 = vmatpush1.xpose.msra.mxu0 0.0
        %3447 = vmatprep.subr.mxu0 0.0
        %3448 = vmatpush1.xpose.msra.mxu0 0.0
        %3449 = vmatprep.subr.mxu0 0.0
        %3450 = vmatpush1.xpose.msra.mxu0 0.0
        %3451 = vmatprep.subr.mxu0 0.0
        %3452 = vmatpush1.xpose.msra.mxu0 0.0
        %3453 = vmatprep.subr.mxu0 0.0
        %3454 = vmatpush1.xpose.msra.mxu0 0.0
        %3455 = vmatprep.subr.mxu0 0.0
        %3456 = vmatpush1.xpose.msra.mxu0 0.0
        %3457 = vmatprep.subr.mxu0 0.0
        %3458 = vmatpush1.xpose.msra.mxu0 0.0
        %3459 = vmatprep.subr.mxu0 0.0
        %3460 = vmatpush1.xpose.msra.mxu0 0.0
        %3461 = vmatprep.subr.mxu0 0.0
        %3462 = vmatpush1.xpose.msra.mxu0 0.0
        %3463 = vmatprep.subr.mxu0 0.0
        %3464 = vmatpush1.xpose.msra.mxu0 0.0
        %3465 = vmatprep.subr.mxu0 0.0
        %3466 = vmatpush1.xpose.msra.mxu0 0.0
        %3467 = vmatprep.subr.mxu0 0.0
        %3468 = vmatpush1.xpose.msra.mxu0 0.0
        %3469 = vmatprep.subr.mxu0 0.0
        %3470 = vmatpush1.xpose.msra.mxu0 0.0
        %3471 = vmatprep.subr.mxu0 0.0
        %3472 = vmatpush1.xpose.msra.mxu0 0.0
        %3473 = vmatprep.subr.mxu0 0.0
        %3474 = vmatpush1.xpose.msra.mxu0 0.0
        %3475 = vmatprep.subr.mxu0 0.0
        %3476 = vmatpush1.xpose.msra.mxu0 0.0
        %3477 = vmatprep.subr.mxu0 0.0
        %3478 = vmatpush1.xpose.msra.mxu0 0.0
        %3479 = vmatprep.mubr.f32.mxu0 0.0
        %3480 = vmatmul.mubr.f32.gmra.mrb[0].mxu0 %v3411
        %v3481 = vpop.f32.mrb[0].mxu0
        %v3482 = vadd.f32 0.0, %v3481
        %v3483 = vpop.f32.mrb[0].mxu0
        %3484 = vdwg.mxu0
        %v3485 = vsel %vm2864, %v3248, 0
        %v3487 = vsel %vm2864, %v3255, 0
        %3489 = vmatprep.subr.mxu0 0.0
        %3490 = vmatpush1.xpose.msra.mxu0 %v3487
        %3491 = vmatprep.subr.mxu0 0.0
        %3492 = vmatpush1.xpose.msra.mxu0 0.0
        %3493 = vmatprep.subr.mxu0 0.0
        %3494 = vmatpush1.xpose.msra.mxu0 0.0
        %3495 = vmatprep.subr.mxu0 0.0
        %3496 = vmatpush1.xpose.msra.mxu0 0.0
        %3497 = vmatprep.subr.mxu0 0.0
        %3498 = vmatpush1.xpose.msra.mxu0 0.0
        %3499 = vmatprep.subr.mxu0 0.0
        %3500 = vmatpush1.xpose.msra.mxu0 0.0
        %3501 = vmatprep.subr.mxu0 0.0
        %3502 = vmatpush1.xpose.msra.mxu0 0.0
        %3503 = vmatprep.subr.mxu0 0.0
        %3504 = vmatpush1.xpose.msra.mxu0 0.0
        %3505 = vmatprep.subr.mxu0 0.0
        %3506 = vmatpush1.xpose.msra.mxu0 0.0
        %3507 = vmatprep.subr.mxu0 0.0
        %3508 = vmatpush1.xpose.msra.mxu0 0.0
        %3509 = vmatprep.subr.mxu0 0.0
        %3510 = vmatpush1.xpose.msra.mxu0 0.0
        %3511 = vmatprep.subr.mxu0 0.0
        %3512 = vmatpush1.xpose.msra.mxu0 0.0
        %3513 = vmatprep.subr.mxu0 0.0
        %3514 = vmatpush1.xpose.msra.mxu0 0.0
        %3515 = vmatprep.subr.mxu0 0.0
        %3516 = vmatpush1.xpose.msra.mxu0 0.0
        %3517 = vmatprep.subr.mxu0 0.0
        %3518 = vmatpush1.xpose.msra.mxu0 0.0
        %3519 = vmatprep.subr.mxu0 0.0
        %3520 = vmatpush1.xpose.msra.mxu0 0.0
        %3521 = vmatprep.subr.mxu0 0.0
        %3522 = vmatpush1.xpose.msra.mxu0 0.0
        %3523 = vmatprep.subr.mxu0 0.0
        %3524 = vmatpush1.xpose.msra.mxu0 0.0
        %3525 = vmatprep.subr.mxu0 0.0
        %3526 = vmatpush1.xpose.msra.mxu0 0.0
        %3527 = vmatprep.subr.mxu0 0.0
        %3528 = vmatpush1.xpose.msra.mxu0 0.0
        %3529 = vmatprep.subr.mxu0 0.0
        %3530 = vmatpush1.xpose.msra.mxu0 0.0
        %3531 = vmatprep.subr.mxu0 0.0
        %3532 = vmatpush1.xpose.msra.mxu0 0.0
        %3533 = vmatprep.subr.mxu0 0.0
        %3534 = vmatpush1.xpose.msra.mxu0 0.0
        %3535 = vmatprep.subr.mxu0 0.0
        %3536 = vmatpush1.xpose.msra.mxu0 0.0
        %3537 = vmatprep.subr.mxu0 0.0
        %3538 = vmatpush1.xpose.msra.mxu0 0.0
        %3539 = vmatprep.subr.mxu0 0.0
        %3540 = vmatpush1.xpose.msra.mxu0 0.0
        %3541 = vmatprep.subr.mxu0 0.0
        %3542 = vmatpush1.xpose.msra.mxu0 0.0
        %3543 = vmatprep.subr.mxu0 0.0
        %3544 = vmatpush1.xpose.msra.mxu0 0.0
        %3545 = vmatprep.subr.mxu0 0.0
        %3546 = vmatpush1.xpose.msra.mxu0 0.0
        %3547 = vmatprep.subr.mxu0 0.0
        %3548 = vmatpush1.xpose.msra.mxu0 0.0
        %3549 = vmatprep.subr.mxu0 0.0
        %3550 = vmatpush1.xpose.msra.mxu0 0.0
        %3551 = vmatprep.subr.mxu0 0.0
        %3552 = vmatpush1.xpose.msra.mxu0 0.0
        %3553 = vmatprep.mubr.f32.mxu0 0.0
        %3554 = vmatmul.mubr.f32.gmra.mrb[0].mxu0 %v3485
        %v3555 = vpop.f32.mrb[0].mxu0
        %v3556 = vadd.f32 0.0, %v3555
        %v3557 = vpop.f32.mrb[0].mxu0
        %3558 = vdwg.mxu0
        %v3559 = vmul.f32 %v3334, 0.17677669
        %v3560 = vmul.f32 %v3408, 0.17677669
        %v3561 = vmul.f32 %v3482, 0.17677669
        %v3562 = vmul.f32 %v3556, 0.17677669
        %vm3563 = vcmask 27648
        %v3564 = vsel %vm3563, %v3559, -inf
        %3565 = vmax.xlane.f32.xlu0 %v3564
        %v3566 = vpop.xlane.xlu0 %3565
        %v3567 = vsel %vm3563, %v3560, -inf
        %3568 = vmax.xlane.f32.xlu0 %v3567
        %v3569 = vpop.xlane.xlu0 %3568
        %v3570 = vsel %vm3563, %v3561, -inf
        %3571 = vmax.xlane.f32.xlu0 %v3570
        %v3572 = vpop.xlane.xlu0 %3571
        %v3573 = vsel %vm3563, %v3562, -inf
        %3574 = vmax.xlane.f32.xlu0 %v3573
        %v3575 = vpop.xlane.xlu0 %3574
        %v3576 = vsub.f32 %v3559, %v3566
        %v3577 = vsub.f32 %v3560, %v3569
        %v3578 = vsub.f32 %v3561, %v3572
        %v3579 = vsub.f32 %v3562, %v3575
        %v3580 = vmul.f32 %v3576, 1.442695
        %v3581 = vpow.pop %v3580
        %v3582 = vmul.f32 %v3577, 1.442695
        %v3583 = vpow.pop %v3582
        %v3584 = vmul.f32 %v3578, 1.442695
        %v3585 = vpow.pop %v3584
        %v3586 = vmul.f32 %v3579, 1.442695
        %v3587 = vpow.pop %v3586
        %v3588 = vsel %vm3563, %v3581, 0.0
        %3589 = vadd.xlane.f32.xlu0 %v3588
        %v3590 = vpop.xlane.xlu0 %3589
        %v3591 = vsel %vm3563, %v3583, 0.0
        %3592 = vadd.xlane.f32.xlu0 %v3591
        %v3593 = vpop.xlane.xlu0 %3592
        %v3594 = vsel %vm3563, %v3585, 0.0
        %3595 = vadd.xlane.f32.xlu0 %v3594
        %v3596 = vpop.xlane.xlu0 %3595
        %v3597 = vsel %vm3563, %v3587, 0.0
        %3598 = vadd.xlane.f32.xlu0 %v3597
        %v3599 = vpop.xlane.xlu0 %3598
        %v3600 = vrcp.pop %v3590
        %v3601 = vrcp.pop %v3593
        %v3602 = vrcp.pop %v3596
        %v3603 = vrcp.pop %v3599
        %v3604 = vmul.f32 %v3581, %v3600
        %v3605 = vmul.f32 %v3583, %v3601
        %v3606 = vmul.f32 %v3585, %v3602
        %v3607 = vmul.f32 %v3587, %v3603
        %vm3608 = vcmask 31744
        %v3610 = vsel %vm3608, %v3604, 0
        %v3612 = vsel %vm2057, %v3239, 0
        %3614 = vmatprep.subr.mxu0 0.0
        %3615 = vmatpush1.msra.mxu0 %v3612
        %3616 = vmatprep.subr.mxu0 0.0
        %3617 = vmatpush1.msra.mxu0 0.0
        %3618 = vmatprep.subr.mxu0 0.0
        %3619 = vmatpush1.msra.mxu0 0.0
        %3620 = vmatprep.subr.mxu0 0.0
        %3621 = vmatpush1.msra.mxu0 0.0
        %3622 = vmatprep.subr.mxu0 0.0
        %3623 = vmatpush1.msra.mxu0 0.0
        %3624 = vmatprep.subr.mxu0 0.0
        %3625 = vmatpush1.msra.mxu0 0.0
        %3626 = vmatprep.subr.mxu0 0.0
        %3627 = vmatpush1.msra.mxu0 0.0
        %3628 = vmatprep.subr.mxu0 0.0
        %3629 = vmatpush1.msra.mxu0 0.0
        %3630 = vmatprep.subr.mxu0 0.0
        %3631 = vmatpush1.msra.mxu0 0.0
        %3632 = vmatprep.subr.mxu0 0.0
        %3633 = vmatpush1.msra.mxu0 0.0
        %3634 = vmatprep.subr.mxu0 0.0
        %3635 = vmatpush1.msra.mxu0 0.0
        %3636 = vmatprep.subr.mxu0 0.0
        %3637 = vmatpush1.msra.mxu0 0.0
        %3638 = vmatprep.subr.mxu0 0.0
        %3639 = vmatpush1.msra.mxu0 0.0
        %3640 = vmatprep.subr.mxu0 0.0
        %3641 = vmatpush1.msra.mxu0 0.0
        %3642 = vmatprep.subr.mxu0 0.0
        %3643 = vmatpush1.msra.mxu0 0.0
        %3644 = vmatprep.subr.mxu0 0.0
        %3645 = vmatpush1.msra.mxu0 0.0
        %3646 = vmatprep.subr.mxu0 0.0
        %3647 = vmatpush1.msra.mxu0 0.0
        %3648 = vmatprep.subr.mxu0 0.0
        %3649 = vmatpush1.msra.mxu0 0.0
        %3650 = vmatprep.subr.mxu0 0.0
        %3651 = vmatpush1.msra.mxu0 0.0
        %3652 = vmatprep.subr.mxu0 0.0
        %3653 = vmatpush1.msra.mxu0 0.0
        %3654 = vmatprep.subr.mxu0 0.0
        %3655 = vmatpush1.msra.mxu0 0.0
        %3656 = vmatprep.subr.mxu0 0.0
        %3657 = vmatpush1.msra.mxu0 0.0
        %3658 = vmatprep.subr.mxu0 0.0
        %3659 = vmatpush1.msra.mxu0 0.0
        %3660 = vmatprep.subr.mxu0 0.0
        %3661 = vmatpush1.msra.mxu0 0.0
        %3662 = vmatprep.subr.mxu0 0.0
        %3663 = vmatpush1.msra.mxu0 0.0
        %3664 = vmatprep.subr.mxu0 0.0
        %3665 = vmatpush1.msra.mxu0 0.0
        %3666 = vmatprep.subr.mxu0 0.0
        %3667 = vmatpush1.msra.mxu0 0.0
        %3668 = vmatprep.subr.mxu0 0.0
        %3669 = vmatpush1.msra.mxu0 0.0
        %3670 = vmatprep.subr.mxu0 0.0
        %3671 = vmatpush1.msra.mxu0 0.0
        %3672 = vmatprep.subr.mxu0 0.0
        %3673 = vmatpush1.msra.mxu0 0.0
        %3674 = vmatprep.subr.mxu0 0.0
        %3675 = vmatpush1.msra.mxu0 0.0
        %3676 = vmatprep.subr.mxu0 0.0
        %3677 = vmatpush1.msra.mxu0 0.0
        %3678 = vmatprep.mubr.f32.mxu0 0.0
        %3679 = vmatmul.mubr.f32.gmra.mrb[0].mxu0 %v3610
        %v3680 = vpop.f32.mrb[0].mxu0
        %v3681 = vadd.f32 0.0, %v3680
        %v3682 = vpop.f32.mrb[0].mxu0
        %3683 = vdwg.mxu0
        %v3685 = vsel %vm3608, %v3605, 0
        %v3687 = vsel %vm2057, %v3258, 0
        %3689 = vmatprep.subr.mxu0 0.0
        %3690 = vmatpush1.msra.mxu0 %v3687
        %3691 = vmatprep.subr.mxu0 0.0
        %3692 = vmatpush1.msra.mxu0 0.0
        %3693 = vmatprep.subr.mxu0 0.0
        %3694 = vmatpush1.msra.mxu0 0.0
        %3695 = vmatprep.subr.mxu0 0.0
        %3696 = vmatpush1.msra.mxu0 0.0
        %3697 = vmatprep.subr.mxu0 0.0
        %3698 = vmatpush1.msra.mxu0 0.0
        %3699 = vmatprep.subr.mxu0 0.0
        %3700 = vmatpush1.msra.mxu0 0.0
        %3701 = vmatprep.subr.mxu0 0.0
        %3702 = vmatpush1.msra.mxu0 0.0
        %3703 = vmatprep.subr.mxu0 0.0
        %3704 = vmatpush1.msra.mxu0 0.0
        %3705 = vmatprep.subr.mxu0 0.0
        %3706 = vmatpush1.msra.mxu0 0.0
        %3707 = vmatprep.subr.mxu0 0.0
        %3708 = vmatpush1.msra.mxu0 0.0
        %3709 = vmatprep.subr.mxu0 0.0
        %3710 = vmatpush1.msra.mxu0 0.0
        %3711 = vmatprep.subr.mxu0 0.0
        %3712 = vmatpush1.msra.mxu0 0.0
        %3713 = vmatprep.subr.mxu0 0.0
        %3714 = vmatpush1.msra.mxu0 0.0
        %3715 = vmatprep.subr.mxu0 0.0
        %3716 = vmatpush1.msra.mxu0 0.0
        %3717 = vmatprep.subr.mxu0 0.0
        %3718 = vmatpush1.msra.mxu0 0.0
        %3719 = vmatprep.subr.mxu0 0.0
        %3720 = vmatpush1.msra.mxu0 0.0
        %3721 = vmatprep.subr.mxu0 0.0
        %3722 = vmatpush1.msra.mxu0 0.0
        %3723 = vmatprep.subr.mxu0 0.0
        %3724 = vmatpush1.msra.mxu0 0.0
        %3725 = vmatprep.subr.mxu0 0.0
        %3726 = vmatpush1.msra.mxu0 0.0
        %3727 = vmatprep.subr.mxu0 0.0
        %3728 = vmatpush1.msra.mxu0 0.0
        %3729 = vmatprep.subr.mxu0 0.0
        %3730 = vmatpush1.msra.mxu0 0.0
        %3731 = vmatprep.subr.mxu0 0.0
        %3732 = vmatpush1.msra.mxu0 0.0
        %3733 = vmatprep.subr.mxu0 0.0
        %3734 = vmatpush1.msra.mxu0 0.0
        %3735 = vmatprep.subr.mxu0 0.0
        %3736 = vmatpush1.msra.mxu0 0.0
        %3737 = vmatprep.subr.mxu0 0.0
        %3738 = vmatpush1.msra.mxu0 0.0
        %3739 = vmatprep.subr.mxu0 0.0
        %3740 = vmatpush1.msra.mxu0 0.0
        %3741 = vmatprep.subr.mxu0 0.0
        %3742 = vmatpush1.msra.mxu0 0.0
        %3743 = vmatprep.subr.mxu0 0.0
        %3744 = vmatpush1.msra.mxu0 0.0
        %3745 = vmatprep.subr.mxu0 0.0
        %3746 = vmatpush1.msra.mxu0 0.0
        %3747 = vmatprep.subr.mxu0 0.0
        %3748 = vmatpush1.msra.mxu0 0.0
        %3749 = vmatprep.subr.mxu0 0.0
        %3750 = vmatpush1.msra.mxu0 0.0
        %3751 = vmatprep.subr.mxu0 0.0
        %3752 = vmatpush1.msra.mxu0 0.0
        %3753 = vmatprep.mubr.f32.mxu0 0.0
        %3754 = vmatmul.mubr.f32.gmra.mrb[0].mxu0 %v3685
        %v3755 = vpop.f32.mrb[0].mxu0
        %v3756 = vadd.f32 0.0, %v3755
        %v3757 = vpop.f32.mrb[0].mxu0
        %3758 = vdwg.mxu0
        %v3760 = vsel %vm3608, %v3606, 0
        %v3762 = vsel %vm2057, %v3260, 0
        %3764 = vmatprep.subr.mxu0 0.0
        %3765 = vmatpush1.msra.mxu0 %v3762
        %3766 = vmatprep.subr.mxu0 0.0
        %3767 = vmatpush1.msra.mxu0 0.0
        %3768 = vmatprep.subr.mxu0 0.0
        %3769 = vmatpush1.msra.mxu0 0.0
        %3770 = vmatprep.subr.mxu0 0.0
        %3771 = vmatpush1.msra.mxu0 0.0
        %3772 = vmatprep.subr.mxu0 0.0
        %3773 = vmatpush1.msra.mxu0 0.0
        %3774 = vmatprep.subr.mxu0 0.0
        %3775 = vmatpush1.msra.mxu0 0.0
        %3776 = vmatprep.subr.mxu0 0.0
        %3777 = vmatpush1.msra.mxu0 0.0
        %3778 = vmatprep.subr.mxu0 0.0
        %3779 = vmatpush1.msra.mxu0 0.0
        %3780 = vmatprep.subr.mxu0 0.0
        %3781 = vmatpush1.msra.mxu0 0.0
        %3782 = vmatprep.subr.mxu0 0.0
        %3783 = vmatpush1.msra.mxu0 0.0
        %3784 = vmatprep.subr.mxu0 0.0
        %3785 = vmatpush1.msra.mxu0 0.0
        %3786 = vmatprep.subr.mxu0 0.0
        %3787 = vmatpush1.msra.mxu0 0.0
        %3788 = vmatprep.subr.mxu0 0.0
        %3789 = vmatpush1.msra.mxu0 0.0
        %3790 = vmatprep.subr.mxu0 0.0
        %3791 = vmatpush1.msra.mxu0 0.0
        %3792 = vmatprep.subr.mxu0 0.0
        %3793 = vmatpush1.msra.mxu0 0.0
        %3794 = vmatprep.subr.mxu0 0.0
        %3795 = vmatpush1.msra.mxu0 0.0
        %3796 = vmatprep.subr.mxu0 0.0
        %3797 = vmatpush1.msra.mxu0 0.0
        %3798 = vmatprep.subr.mxu0 0.0
        %3799 = vmatpush1.msra.mxu0 0.0
        %3800 = vmatprep.subr.mxu0 0.0
        %3801 = vmatpush1.msra.mxu0 0.0
        %3802 = vmatprep.subr.mxu0 0.0
        %3803 = vmatpush1.msra.mxu0 0.0
        %3804 = vmatprep.subr.mxu0 0.0
        %3805 = vmatpush1.msra.mxu0 0.0
        %3806 = vmatprep.subr.mxu0 0.0
        %3807 = vmatpush1.msra.mxu0 0.0
        %3808 = vmatprep.subr.mxu0 0.0
        %3809 = vmatpush1.msra.mxu0 0.0
        %3810 = vmatprep.subr.mxu0 0.0
        %3811 = vmatpush1.msra.mxu0 0.0
        %3812 = vmatprep.subr.mxu0 0.0
        %3813 = vmatpush1.msra.mxu0 0.0
        %3814 = vmatprep.subr.mxu0 0.0
        %3815 = vmatpush1.msra.mxu0 0.0
        %3816 = vmatprep.subr.mxu0 0.0
        %3817 = vmatpush1.msra.mxu0 0.0
        %3818 = vmatprep.subr.mxu0 0.0
        %3819 = vmatpush1.msra.mxu0 0.0
        %3820 = vmatprep.subr.mxu0 0.0
        %3821 = vmatpush1.msra.mxu0 0.0
        %3822 = vmatprep.subr.mxu0 0.0
        %3823 = vmatpush1.msra.mxu0 0.0
        %3824 = vmatprep.subr.mxu0 0.0
        %3825 = vmatpush1.msra.mxu0 0.0
        %3826 = vmatprep.subr.mxu0 0.0
        %3827 = vmatpush1.msra.mxu0 0.0
        %3828 = vmatprep.mubr.f32.mxu0 0.0
        %3829 = vmatmul.mubr.f32.gmra.mrb[0].mxu0 %v3760
        %v3830 = vpop.f32.mrb[0].mxu0
        %v3831 = vadd.f32 0.0, %v3830
        %v3832 = vpop.f32.mrb[0].mxu0
        %3833 = vdwg.mxu0
        %v3835 = vsel %vm3608, %v3607, 0
        %v3837 = vsel %vm2057, %v3262, 0
        %3839 = vmatprep.subr.mxu0 0.0
        %3840 = vmatpush1.msra.mxu0 %v3837
        %3841 = vmatprep.subr.mxu0 0.0
        %3842 = vmatpush1.msra.mxu0 0.0
        %3843 = vmatprep.subr.mxu0 0.0
        %3844 = vmatpush1.msra.mxu0 0.0
        %3845 = vmatprep.subr.mxu0 0.0
        %3846 = vmatpush1.msra.mxu0 0.0
        %3847 = vmatprep.subr.mxu0 0.0
        %3848 = vmatpush1.msra.mxu0 0.0
        %3849 = vmatprep.subr.mxu0 0.0
        %3850 = vmatpush1.msra.mxu0 0.0
        %3851 = vmatprep.subr.mxu0 0.0
        %3852 = vmatpush1.msra.mxu0 0.0
        %3853 = vmatprep.subr.mxu0 0.0
        %3854 = vmatpush1.msra.mxu0 0.0
        %3855 = vmatprep.subr.mxu0 0.0
        %3856 = vmatpush1.msra.mxu0 0.0
        %3857 = vmatprep.subr.mxu0 0.0
        %3858 = vmatpush1.msra.mxu0 0.0
        %3859 = vmatprep.subr.mxu0 0.0
        %3860 = vmatpush1.msra.mxu0 0.0
        %3861 = vmatprep.subr.mxu0 0.0
        %3862 = vmatpush1.msra.mxu0 0.0
        %3863 = vmatprep.subr.mxu0 0.0
        %3864 = vmatpush1.msra.mxu0 0.0
        %3865 = vmatprep.subr.mxu0 0.0
        %3866 = vmatpush1.msra.mxu0 0.0
        %3867 = vmatprep.subr.mxu0 0.0
        %3868 = vmatpush1.msra.mxu0 0.0
        %3869 = vmatprep.subr.mxu0 0.0
        %3870 = vmatpush1.msra.mxu0 0.0
        %3871 = vmatprep.subr.mxu0 0.0
        %3872 = vmatpush1.msra.mxu0 0.0
        %3873 = vmatprep.subr.mxu0 0.0
        %3874 = vmatpush1.msra.mxu0 0.0
        %3875 = vmatprep.subr.mxu0 0.0
        %3876 = vmatpush1.msra.mxu0 0.0
        %3877 = vmatprep.subr.mxu0 0.0
        %3878 = vmatpush1.msra.mxu0 0.0
        %3879 = vmatprep.subr.mxu0 0.0
        %3880 = vmatpush1.msra.mxu0 0.0
        %3881 = vmatprep.subr.mxu0 0.0
        %3882 = vmatpush1.msra.mxu0 0.0
        %3883 = vmatprep.subr.mxu0 0.0
        %3884 = vmatpush1.msra.mxu0 0.0
        %3885 = vmatprep.subr.mxu0 0.0
        %3886 = vmatpush1.msra.mxu0 0.0
        %3887 = vmatprep.subr.mxu0 0.0
        %3888 = vmatpush1.msra.mxu0 0.0
        %3889 = vmatprep.subr.mxu0 0.0
        %3890 = vmatpush1.msra.mxu0 0.0
        %3891 = vmatprep.subr.mxu0 0.0
        %3892 = vmatpush1.msra.mxu0 0.0
        %3893 = vmatprep.subr.mxu0 0.0
        %3894 = vmatpush1.msra.mxu0 0.0
        %3895 = vmatprep.subr.mxu0 0.0
        %3896 = vmatpush1.msra.mxu0 0.0
        %3897 = vmatprep.subr.mxu0 0.0
        %3898 = vmatpush1.msra.mxu0 0.0
        %3899 = vmatprep.subr.mxu0 0.0
        %3900 = vmatpush1.msra.mxu0 0.0
        %3901 = vmatprep.subr.mxu0 0.0
        %3902 = vmatpush1.msra.mxu0 0.0
        %3903 = vmatprep.mubr.f32.mxu0 0.0
        %3904 = vmatmul.mubr.f32.gmra.mrb[0].mxu0 %v3835
        %v3905 = vpop.f32.mrb[0].mxu0
        %v3906 = vadd.f32 0.0, %v3905
        %v3907 = vpop.f32.mrb[0].mxu0
        %3908 = vdwg.mxu0
        %3910 = vrot.lane.b32.xlu0 %v3756, 32
        %v3911 = vpop.permute.xlu0 %3910
        %3914 = vrot.lane.b32.xlu0 %v3831, 64
        %v3915 = vpop.permute.xlu0 %3914
        %3918 = vrot.lane.b32.xlu0 %v3906, 96
        %v3919 = vpop.permute.xlu0 %3918
        %v3921 = vsel %vm2864, %v3681, %v3911
        %v3922 = vsel %vm2872, %v3921, %v3915
        %v3923 = vsel %vm2880, %v3922, %v3919
        %3924 = vmatprep.subr.mxu0 0.0
        %3925 = vmatpush1.msra.mxu0 %v3016
        %3926 = vmatprep.subr.mxu0 0.0
        %3927 = vmatpush1.msra.mxu0 %v3017
        %3928 = vmatprep.subr.mxu0 0.0
        %3929 = vmatpush1.msra.mxu0 %v3018
        %3930 = vmatprep.subr.mxu0 0.0
        %3931 = vmatpush1.msra.mxu0 %v3019
        %3932 = vmatprep.subr.mxu0 0.0
        %3933 = vmatpush1.msra.mxu0 %v3020
        %3934 = vmatprep.subr.mxu0 0.0
        %3935 = vmatpush1.msra.mxu0 %v3021
        %3936 = vmatprep.subr.mxu0 0.0
        %3937 = vmatpush1.msra.mxu0 %v3022
        %3938 = vmatprep.subr.mxu0 0.0
        %3939 = vmatpush1.msra.mxu0 %v3023
        %3940 = vmatprep.subr.mxu0 0.0
        %3941 = vmatpush1.msra.mxu0 %v3024
        %3942 = vmatprep.subr.mxu0 0.0
        %3943 = vmatpush1.msra.mxu0 %v3025
        %3944 = vmatprep.subr.mxu0 0.0
        %3945 = vmatpush1.msra.mxu0 %v3026
        %3946 = vmatprep.subr.mxu0 0.0
        %3947 = vmatpush1.msra.mxu0 %v3027
        %3948 = vmatprep.subr.mxu0 0.0
        %3949 = vmatpush1.msra.mxu0 %v3028
        %3950 = vmatprep.subr.mxu0 0.0
        %3951 = vmatpush1.msra.mxu0 %v3029
        %3952 = vmatprep.subr.mxu0 0.0
        %3953 = vmatpush1.msra.mxu0 %v3030
        %3954 = vmatprep.subr.mxu0 0.0
        %3955 = vmatpush1.msra.mxu0 %v3031
        %3956 = vmatprep.subr.mxu0 0.0
        %3957 = vmatpush1.msra.mxu0 0.0
        %3958 = vmatprep.subr.mxu0 0.0
        %3959 = vmatpush1.msra.mxu0 0.0
        %3960 = vmatprep.subr.mxu0 0.0
        %3961 = vmatpush1.msra.mxu0 0.0
        %3962 = vmatprep.subr.mxu0 0.0
        %3963 = vmatpush1.msra.mxu0 0.0
        %3964 = vmatprep.subr.mxu0 0.0
        %3965 = vmatpush1.msra.mxu0 0.0
        %3966 = vmatprep.subr.mxu0 0.0
        %3967 = vmatpush1.msra.mxu0 0.0
        %3968 = vmatprep.subr.mxu0 0.0
        %3969 = vmatpush1.msra.mxu0 0.0
        %3970 = vmatprep.subr.mxu0 0.0
        %3971 = vmatpush1.msra.mxu0 0.0
        %3972 = vmatprep.subr.mxu0 0.0
        %3973 = vmatpush1.msra.mxu0 0.0
        %3974 = vmatprep.subr.mxu0 0.0
        %3975 = vmatpush1.msra.mxu0 0.0
        %3976 = vmatprep.subr.mxu0 0.0
        %3977 = vmatpush1.msra.mxu0 0.0
        %3978 = vmatprep.subr.mxu0 0.0
        %3979 = vmatpush1.msra.mxu0 0.0
        %3980 = vmatprep.subr.mxu0 0.0
        %3981 = vmatpush1.msra.mxu0 0.0
        %3982 = vmatprep.subr.mxu0 0.0
        %3983 = vmatpush1.msra.mxu0 0.0
        %3984 = vmatprep.subr.mxu0 0.0
        %3985 = vmatpush1.msra.mxu0 0.0
        %3986 = vmatprep.subr.mxu0 0.0
        %3987 = vmatpush1.msra.mxu0 0.0
        %3988 = vmatprep.mubr.f32.mxu0 0.0
        %3989 = vmatmul.mubr.f32.gmra.mrb[0].mxu0 %v3923
        %v3990 = vpop.f32.mrb[0].mxu0
        %v3991 = vadd.f32 0.0, %v3990
        %v3992 = vpop.f32.mrb[0].mxu0
        %3993 = vdwg.mxu0
        %s3994 = scalar_lea.vmem [#allocation11], 128
        %v3995 = vld [vmem:[%s3994] sm:$0xff]
        %v3996 = vld [vmem:[%s3994 + $0x8] sm:$0xff]
        %v3997 = vld [vmem:[%s3994 + $0x10] sm:$0xff]
        %v3998 = vld [vmem:[%s3994 + $0x18] sm:$0xff]
        %v3999 = vld [vmem:[%s3994 + $0x20] sm:$0xff]
        %v4000 = vld [vmem:[%s3994 + $0x28] sm:$0xff]
        %v4001 = vld [vmem:[%s3994 + $0x30] sm:$0xff]
        %v4002 = vld [vmem:[%s3994 + $0x38] sm:$0xff]
        %v4003 = vld [vmem:[%s3994 + $0x40] sm:$0xff]
        %v4004 = vld [vmem:[%s3994 + $0x48] sm:$0xff]
        %v4005 = vld [vmem:[%s3994 + $0x50] sm:$0xff]
        %v4006 = vld [vmem:[%s3994 + $0x58] sm:$0xff]
        %v4007 = vld [vmem:[%s3994 + $0x60] sm:$0xff]
        %v4008 = vld [vmem:[%s3994 + $0x68] sm:$0xff]
        %v4009 = vld [vmem:[%s3994 + $0x70] sm:$0xff]
        %v4010 = vld [vmem:[%s3994 + $0x78] sm:$0xff]
        %s4011 = scalar_lea.vmem [#allocation13], 128
        %v4012 = vld [vmem:[%s4011] sm:$0xff]
        %v4013 = vld [vmem:[%s4011 + $0x8] sm:$0xff]
        %v4014 = vld [vmem:[%s4011 + $0x10] sm:$0xff]
        %v4015 = vld [vmem:[%s4011 + $0x18] sm:$0xff]
        %v4016 = vld [vmem:[%s4011 + $0x20] sm:$0xff]
        %v4017 = vld [vmem:[%s4011 + $0x28] sm:$0xff]
        %v4018 = vld [vmem:[%s4011 + $0x30] sm:$0xff]
        %v4019 = vld [vmem:[%s4011 + $0x38] sm:$0xff]
        %v4020 = vld [vmem:[%s4011 + $0x40] sm:$0xff]
        %v4021 = vld [vmem:[%s4011 + $0x48] sm:$0xff]
        %v4022 = vld [vmem:[%s4011 + $0x50] sm:$0xff]
        %v4023 = vld [vmem:[%s4011 + $0x58] sm:$0xff]
        %v4024 = vld [vmem:[%s4011 + $0x60] sm:$0xff]
        %v4025 = vld [vmem:[%s4011 + $0x68] sm:$0xff]
        %v4026 = vld [vmem:[%s4011 + $0x70] sm:$0xff]
        %v4027 = vld [vmem:[%s4011 + $0x78] sm:$0xff]
        %s4028 = scalar_lea.vmem [#allocation14], 128
        %v4029 = vld [vmem:[%s4028] sm:$0xff]
        %v4030 = vld [vmem:[%s4028 + $0x8] sm:$0xff]
        %v4031 = vld [vmem:[%s4028 + $0x10] sm:$0xff]
        %v4032 = vld [vmem:[%s4028 + $0x18] sm:$0xff]
        %v4033 = vld [vmem:[%s4028 + $0x20] sm:$0xff]
        %v4034 = vld [vmem:[%s4028 + $0x28] sm:$0xff]
        %v4035 = vld [vmem:[%s4028 + $0x30] sm:$0xff]
        %v4036 = vld [vmem:[%s4028 + $0x38] sm:$0xff]
        %v4037 = vld [vmem:[%s4028 + $0x40] sm:$0xff]
        %v4038 = vld [vmem:[%s4028 + $0x48] sm:$0xff]
        %v4039 = vld [vmem:[%s4028 + $0x50] sm:$0xff]
        %v4040 = vld [vmem:[%s4028 + $0x58] sm:$0xff]
        %v4041 = vld [vmem:[%s4028 + $0x60] sm:$0xff]
        %v4042 = vld [vmem:[%s4028 + $0x68] sm:$0xff]
        %v4043 = vld [vmem:[%s4028 + $0x70] sm:$0xff]
        %v4044 = vld [vmem:[%s4028 + $0x78] sm:$0xff]
        %s4045 = scalar_lea.vmem [#allocation16], 128
        %v4046 = vld [vmem:[%s4045] sm:$0xff]
        %v4047 = vld [vmem:[%s4045 + $0x8] sm:$0xff]
        %v4048 = vld [vmem:[%s4045 + $0x10] sm:$0xff]
        %v4049 = vld [vmem:[%s4045 + $0x18] sm:$0xff]
        %v4050 = vld [vmem:[%s4045 + $0x20] sm:$0xff]
        %v4051 = vld [vmem:[%s4045 + $0x28] sm:$0xff]
        %v4052 = vld [vmem:[%s4045 + $0x30] sm:$0xff]
        %v4053 = vld [vmem:[%s4045 + $0x38] sm:$0xff]
        %v4054 = vld [vmem:[%s4045 + $0x40] sm:$0xff]
        %v4055 = vld [vmem:[%s4045 + $0x48] sm:$0xff]
        %v4056 = vld [vmem:[%s4045 + $0x50] sm:$0xff]
        %v4057 = vld [vmem:[%s4045 + $0x58] sm:$0xff]
        %v4058 = vld [vmem:[%s4045 + $0x60] sm:$0xff]
        %v4059 = vld [vmem:[%s4045 + $0x68] sm:$0xff]
        %v4060 = vld [vmem:[%s4045 + $0x70] sm:$0xff]
        %v4061 = vld [vmem:[%s4045 + $0x78] sm:$0xff]
        %v4063 = vrot.slane %v548, 4
        %4065 = vmatprep.subr.mxu0 0.0
        %4066 = vmatpush1.msra.mxu0 %v3995
        %4067 = vmatprep.subr.mxu0 0.0
        %4068 = vmatpush1.msra.mxu0 %v3996
        %4069 = vmatprep.subr.mxu0 0.0
        %4070 = vmatpush1.msra.mxu0 %v3997
        %4071 = vmatprep.subr.mxu0 0.0
        %4072 = vmatpush1.msra.mxu0 %v3998
        %4073 = vmatprep.subr.mxu0 0.0
        %4074 = vmatpush1.msra.mxu0 %v3999
        %4075 = vmatprep.subr.mxu0 0.0
        %4076 = vmatpush1.msra.mxu0 %v4000
        %4077 = vmatprep.subr.mxu0 0.0
        %4078 = vmatpush1.msra.mxu0 %v4001
        %4079 = vmatprep.subr.mxu0 0.0
        %4080 = vmatpush1.msra.mxu0 %v4002
        %4081 = vmatprep.subr.mxu0 0.0
        %4082 = vmatpush1.msra.mxu0 %v4003
        %4083 = vmatprep.subr.mxu0 0.0
        %4084 = vmatpush1.msra.mxu0 %v4004
        %4085 = vmatprep.subr.mxu0 0.0
        %4086 = vmatpush1.msra.mxu0 %v4005
        %4087 = vmatprep.subr.mxu0 0.0
        %4088 = vmatpush1.msra.mxu0 %v4006
        %4089 = vmatprep.subr.mxu0 0.0
        %4090 = vmatpush1.msra.mxu0 %v4007
        %4091 = vmatprep.subr.mxu0 0.0
        %4092 = vmatpush1.msra.mxu0 %v4008
        %4093 = vmatprep.subr.mxu0 0.0
        %4094 = vmatpush1.msra.mxu0 %v4009
        %4095 = vmatprep.subr.mxu0 0.0
        %4096 = vmatpush1.msra.mxu0 %v4010
        %4097 = vmatprep.subr.mxu0 0.0
        %4098 = vmatpush1.msra.mxu0 0.0
        %4099 = vmatprep.subr.mxu0 0.0
        %4100 = vmatpush1.msra.mxu0 0.0
        %4101 = vmatprep.subr.mxu0 0.0
        %4102 = vmatpush1.msra.mxu0 0.0
        %4103 = vmatprep.subr.mxu0 0.0
        %4104 = vmatpush1.msra.mxu0 0.0
        %4105 = vmatprep.subr.mxu0 0.0
        %4106 = vmatpush1.msra.mxu0 0.0
        %4107 = vmatprep.subr.mxu0 0.0
        %4108 = vmatpush1.msra.mxu0 0.0
        %4109 = vmatprep.subr.mxu0 0.0
        %4110 = vmatpush1.msra.mxu0 0.0
        %4111 = vmatprep.subr.mxu0 0.0
        %4112 = vmatpush1.msra.mxu0 0.0
        %4113 = vmatprep.subr.mxu0 0.0
        %4114 = vmatpush1.msra.mxu0 0.0
        %4115 = vmatprep.subr.mxu0 0.0
        %4116 = vmatpush1.msra.mxu0 0.0
        %4117 = vmatprep.subr.mxu0 0.0
        %4118 = vmatpush1.msra.mxu0 0.0
        %4119 = vmatprep.subr.mxu0 0.0
        %4120 = vmatpush1.msra.mxu0 0.0
        %4121 = vmatprep.subr.mxu0 0.0
        %4122 = vmatpush1.msra.mxu0 0.0
        %4123 = vmatprep.subr.mxu0 0.0
        %4124 = vmatpush1.msra.mxu0 0.0
        %4125 = vmatprep.subr.mxu0 0.0
        %4126 = vmatpush1.msra.mxu0 0.0
        %4127 = vmatprep.subr.mxu0 0.0
        %4128 = vmatpush1.msra.mxu0 0.0
        %4129 = vmatprep.mubr.f32.mxu0 0.0
        %4130 = vmatmul.mubr.f32.gmra.mrb[0].mxu0 %v4063
        %v4131 = vpop.f32.mrb[0].mxu0
        %v4132 = vadd.f32 0.0, %v4131
        %v4133 = vpop.f32.mrb[0].mxu0
        %4134 = vdwg.mxu0
        %4135 = vmatprep.subr.mxu0 0.0
        %4136 = vmatpush1.msra.mxu0 %v4012
        %4137 = vmatprep.subr.mxu0 0.0
        %4138 = vmatpush1.msra.mxu0 %v4013
        %4139 = vmatprep.subr.mxu0 0.0
        %4140 = vmatpush1.msra.mxu0 %v4014
        %4141 = vmatprep.subr.mxu0 0.0
        %4142 = vmatpush1.msra.mxu0 %v4015
        %4143 = vmatprep.subr.mxu0 0.0
        %4144 = vmatpush1.msra.mxu0 %v4016
        %4145 = vmatprep.subr.mxu0 0.0
        %4146 = vmatpush1.msra.mxu0 %v4017
        %4147 = vmatprep.subr.mxu0 0.0
        %4148 = vmatpush1.msra.mxu0 %v4018
        %4149 = vmatprep.subr.mxu0 0.0
        %4150 = vmatpush1.msra.mxu0 %v4019
        %4151 = vmatprep.subr.mxu0 0.0
        %4152 = vmatpush1.msra.mxu0 %v4020
        %4153 = vmatprep.subr.mxu0 0.0
        %4154 = vmatpush1.msra.mxu0 %v4021
        %4155 = vmatprep.subr.mxu0 0.0
        %4156 = vmatpush1.msra.mxu0 %v4022
        %4157 = vmatprep.subr.mxu0 0.0
        %4158 = vmatpush1.msra.mxu0 %v4023
        %4159 = vmatprep.subr.mxu0 0.0
        %4160 = vmatpush1.msra.mxu0 %v4024
        %4161 = vmatprep.subr.mxu0 0.0
        %4162 = vmatpush1.msra.mxu0 %v4025
        %4163 = vmatprep.subr.mxu0 0.0
        %4164 = vmatpush1.msra.mxu0 %v4026
        %4165 = vmatprep.subr.mxu0 0.0
        %4166 = vmatpush1.msra.mxu0 %v4027
        %4167 = vmatprep.subr.mxu0 0.0
        %4168 = vmatpush1.msra.mxu0 0.0
        %4169 = vmatprep.subr.mxu0 0.0
        %4170 = vmatpush1.msra.mxu0 0.0
        %4171 = vmatprep.subr.mxu0 0.0
        %4172 = vmatpush1.msra.mxu0 0.0
        %4173 = vmatprep.subr.mxu0 0.0
        %4174 = vmatpush1.msra.mxu0 0.0
        %4175 = vmatprep.subr.mxu0 0.0
        %4176 = vmatpush1.msra.mxu0 0.0
        %4177 = vmatprep.subr.mxu0 0.0
        %4178 = vmatpush1.msra.mxu0 0.0
        %4179 = vmatprep.subr.mxu0 0.0
        %4180 = vmatpush1.msra.mxu0 0.0
        %4181 = vmatprep.subr.mxu0 0.0
        %4182 = vmatpush1.msra.mxu0 0.0
        %4183 = vmatprep.subr.mxu0 0.0
        %4184 = vmatpush1.msra.mxu0 0.0
        %4185 = vmatprep.subr.mxu0 0.0
        %4186 = vmatpush1.msra.mxu0 0.0
        %4187 = vmatprep.subr.mxu0 0.0
        %4188 = vmatpush1.msra.mxu0 0.0
        %4189 = vmatprep.subr.mxu0 0.0
        %4190 = vmatpush1.msra.mxu0 0.0
        %4191 = vmatprep.subr.mxu0 0.0
        %4192 = vmatpush1.msra.mxu0 0.0
        %4193 = vmatprep.subr.mxu0 0.0
        %4194 = vmatpush1.msra.mxu0 0.0
        %4195 = vmatprep.subr.mxu0 0.0
        %4196 = vmatpush1.msra.mxu0 0.0
        %4197 = vmatprep.subr.mxu0 0.0
        %4198 = vmatpush1.msra.mxu0 0.0
        %4199 = vmatprep.mubr.f32.mxu0 0.0
        %4200 = vmatmul.mubr.f32.gmra.mrb[0].mxu0 %v4063
        %v4201 = vpop.f32.mrb[0].mxu0
        %v4202 = vadd.f32 0.0, %v4201
        %v4203 = vpop.f32.mrb[0].mxu0
        %4204 = vdwg.mxu0
        %4205 = vmatprep.subr.mxu0 0.0
        %4206 = vmatpush1.msra.mxu0 %v4029
        %4207 = vmatprep.subr.mxu0 0.0
        %4208 = vmatpush1.msra.mxu0 %v4030
        %4209 = vmatprep.subr.mxu0 0.0
        %4210 = vmatpush1.msra.mxu0 %v4031
        %4211 = vmatprep.subr.mxu0 0.0
        %4212 = vmatpush1.msra.mxu0 %v4032
        %4213 = vmatprep.subr.mxu0 0.0
        %4214 = vmatpush1.msra.mxu0 %v4033
        %4215 = vmatprep.subr.mxu0 0.0
        %4216 = vmatpush1.msra.mxu0 %v4034
        %4217 = vmatprep.subr.mxu0 0.0
        %4218 = vmatpush1.msra.mxu0 %v4035
        %4219 = vmatprep.subr.mxu0 0.0
        %4220 = vmatpush1.msra.mxu0 %v4036
        %4221 = vmatprep.subr.mxu0 0.0
        %4222 = vmatpush1.msra.mxu0 %v4037
        %4223 = vmatprep.subr.mxu0 0.0
        %4224 = vmatpush1.msra.mxu0 %v4038
        %4225 = vmatprep.subr.mxu0 0.0
        %4226 = vmatpush1.msra.mxu0 %v4039
        %4227 = vmatprep.subr.mxu0 0.0
        %4228 = vmatpush1.msra.mxu0 %v4040
        %4229 = vmatprep.subr.mxu0 0.0
        %4230 = vmatpush1.msra.mxu0 %v4041
        %4231 = vmatprep.subr.mxu0 0.0
        %4232 = vmatpush1.msra.mxu0 %v4042
        %4233 = vmatprep.subr.mxu0 0.0
        %4234 = vmatpush1.msra.mxu0 %v4043
        %4235 = vmatprep.subr.mxu0 0.0
        %4236 = vmatpush1.msra.mxu0 %v4044
        %4237 = vmatprep.subr.mxu0 0.0
        %4238 = vmatpush1.msra.mxu0 0.0
        %4239 = vmatprep.subr.mxu0 0.0
        %4240 = vmatpush1.msra.mxu0 0.0
        %4241 = vmatprep.subr.mxu0 0.0
        %4242 = vmatpush1.msra.mxu0 0.0
        %4243 = vmatprep.subr.mxu0 0.0
        %4244 = vmatpush1.msra.mxu0 0.0
        %4245 = vmatprep.subr.mxu0 0.0
        %4246 = vmatpush1.msra.mxu0 0.0
        %4247 = vmatprep.subr.mxu0 0.0
        %4248 = vmatpush1.msra.mxu0 0.0
        %4249 = vmatprep.subr.mxu0 0.0
        %4250 = vmatpush1.msra.mxu0 0.0
        %4251 = vmatprep.subr.mxu0 0.0
        %4252 = vmatpush1.msra.mxu0 0.0
        %4253 = vmatprep.subr.mxu0 0.0
        %4254 = vmatpush1.msra.mxu0 0.0
        %4255 = vmatprep.subr.mxu0 0.0
        %4256 = vmatpush1.msra.mxu0 0.0
        %4257 = vmatprep.subr.mxu0 0.0
        %4258 = vmatpush1.msra.mxu0 0.0
        %4259 = vmatprep.subr.mxu0 0.0
        %4260 = vmatpush1.msra.mxu0 0.0
        %4261 = vmatprep.subr.mxu0 0.0
        %4262 = vmatpush1.msra.mxu0 0.0
        %4263 = vmatprep.subr.mxu0 0.0
        %4264 = vmatpush1.msra.mxu0 0.0
        %4265 = vmatprep.subr.mxu0 0.0
        %4266 = vmatpush1.msra.mxu0 0.0
        %4267 = vmatprep.subr.mxu0 0.0
        %4268 = vmatpush1.msra.mxu0 0.0
        %4269 = vmatprep.mubr.f32.mxu0 0.0
        %4270 = vmatmul.mubr.f32.gmra.mrb[0].mxu0 %v4063
        %v4271 = vpop.f32.mrb[0].mxu0
        %v4272 = vadd.f32 0.0, %v4271
        %v4273 = vpop.f32.mrb[0].mxu0
        %4274 = vdwg.mxu0
        %4276 = vrot.lane.b32.xlu0 %v4132, 96
        %v4277 = vpop.permute.xlu0 %4276
        %4278 = vrot.lane.b32.xlu0 %v4132, 64
        %v4279 = vpop.permute.xlu0 %4278
        %4280 = vrot.lane.b32.xlu0 %v4132, 32
        %v4281 = vpop.permute.xlu0 %4280
        %4283 = vrot.lane.b32.xlu0 %v4202, 96
        %v4284 = vpop.permute.xlu0 %4283
        %4285 = vrot.lane.b32.xlu0 %v4202, 64
        %v4286 = vpop.permute.xlu0 %4285
        %4287 = vrot.lane.b32.xlu0 %v4202, 32
        %v4288 = vpop.permute.xlu0 %4287
        %4290 = vrot.lane.b32.xlu0 %v4272, 96
        %v4291 = vpop.permute.xlu0 %4290
        %4292 = vrot.lane.b32.xlu0 %v4272, 64
        %v4293 = vpop.permute.xlu0 %4292
        %4294 = vrot.lane.b32.xlu0 %v4272, 32
        %v4295 = vpop.permute.xlu0 %4294
        %v4296 = vsel %vm2864, %v4132, 0
        %v4298 = vsel %vm2864, %v4202, 0
        %4300 = vmatprep.subr.mxu0 0.0
        %4301 = vmatpush1.xpose.msra.mxu0 %v4298
        %4302 = vmatprep.subr.mxu0 0.0
        %4303 = vmatpush1.xpose.msra.mxu0 0.0
        %4304 = vmatprep.subr.mxu0 0.0
        %4305 = vmatpush1.xpose.msra.mxu0 0.0
        %4306 = vmatprep.subr.mxu0 0.0
        %4307 = vmatpush1.xpose.msra.mxu0 0.0
        %4308 = vmatprep.subr.mxu0 0.0
        %4309 = vmatpush1.xpose.msra.mxu0 0.0
        %4310 = vmatprep.subr.mxu0 0.0
        %4311 = vmatpush1.xpose.msra.mxu0 0.0
        %4312 = vmatprep.subr.mxu0 0.0
        %4313 = vmatpush1.xpose.msra.mxu0 0.0
        %4314 = vmatprep.subr.mxu0 0.0
        %4315 = vmatpush1.xpose.msra.mxu0 0.0
        %4316 = vmatprep.subr.mxu0 0.0
        %4317 = vmatpush1.xpose.msra.mxu0 0.0
        %4318 = vmatprep.subr.mxu0 0.0
        %4319 = vmatpush1.xpose.msra.mxu0 0.0
        %4320 = vmatprep.subr.mxu0 0.0
        %4321 = vmatpush1.xpose.msra.mxu0 0.0
        %4322 = vmatprep.subr.mxu0 0.0
        %4323 = vmatpush1.xpose.msra.mxu0 0.0
        %4324 = vmatprep.subr.mxu0 0.0
        %4325 = vmatpush1.xpose.msra.mxu0 0.0
        %4326 = vmatprep.subr.mxu0 0.0
        %4327 = vmatpush1.xpose.msra.mxu0 0.0
        %4328 = vmatprep.subr.mxu0 0.0
        %4329 = vmatpush1.xpose.msra.mxu0 0.0
        %4330 = vmatprep.subr.mxu0 0.0
        %4331 = vmatpush1.xpose.msra.mxu0 0.0
        %4332 = vmatprep.subr.mxu0 0.0
        %4333 = vmatpush1.xpose.msra.mxu0 0.0
        %4334 = vmatprep.subr.mxu0 0.0
        %4335 = vmatpush1.xpose.msra.mxu0 0.0
        %4336 = vmatprep.subr.mxu0 0.0
        %4337 = vmatpush1.xpose.msra.mxu0 0.0
        %4338 = vmatprep.subr.mxu0 0.0
        %4339 = vmatpush1.xpose.msra.mxu0 0.0
        %4340 = vmatprep.subr.mxu0 0.0
        %4341 = vmatpush1.xpose.msra.mxu0 0.0
        %4342 = vmatprep.subr.mxu0 0.0
        %4343 = vmatpush1.xpose.msra.mxu0 0.0
        %4344 = vmatprep.subr.mxu0 0.0
        %4345 = vmatpush1.xpose.msra.mxu0 0.0
        %4346 = vmatprep.subr.mxu0 0.0
        %4347 = vmatpush1.xpose.msra.mxu0 0.0
        %4348 = vmatprep.subr.mxu0 0.0
        %4349 = vmatpush1.xpose.msra.mxu0 0.0
        %4350 = vmatprep.subr.mxu0 0.0
        %4351 = vmatpush1.xpose.msra.mxu0 0.0
        %4352 = vmatprep.subr.mxu0 0.0
        %4353 = vmatpush1.xpose.msra.mxu0 0.0
        %4354 = vmatprep.subr.mxu0 0.0
        %4355 = vmatpush1.xpose.msra.mxu0 0.0
        %4356 = vmatprep.subr.mxu0 0.0
        %4357 = vmatpush1.xpose.msra.mxu0 0.0
        %4358 = vmatprep.subr.mxu0 0.0
        %4359 = vmatpush1.xpose.msra.mxu0 0.0
        %4360 = vmatprep.subr.mxu0 0.0
        %4361 = vmatpush1.xpose.msra.mxu0 0.0
        %4362 = vmatprep.subr.mxu0 0.0
        %4363 = vmatpush1.xpose.msra.mxu0 0.0
        %4364 = vmatprep.mubr.f32.mxu0 0.0
        %4365 = vmatmul.mubr.f32.gmra.mrb[0].mxu0 %v4296
        %v4366 = vpop.f32.mrb[0].mxu0
        %v4367 = vadd.f32 0.0, %v4366
        %v4368 = vpop.f32.mrb[0].mxu0
        %4369 = vdwg.mxu0
        %v4370 = vsel %vm2864, %v4277, 0
        %v4372 = vsel %vm2864, %v4284, 0
        %4374 = vmatprep.subr.mxu0 0.0
        %4375 = vmatpush1.xpose.msra.mxu0 %v4372
        %4376 = vmatprep.subr.mxu0 0.0
        %4377 = vmatpush1.xpose.msra.mxu0 0.0
        %4378 = vmatprep.subr.mxu0 0.0
        %4379 = vmatpush1.xpose.msra.mxu0 0.0
        %4380 = vmatprep.subr.mxu0 0.0
        %4381 = vmatpush1.xpose.msra.mxu0 0.0
        %4382 = vmatprep.subr.mxu0 0.0
        %4383 = vmatpush1.xpose.msra.mxu0 0.0
        %4384 = vmatprep.subr.mxu0 0.0
        %4385 = vmatpush1.xpose.msra.mxu0 0.0
        %4386 = vmatprep.subr.mxu0 0.0
        %4387 = vmatpush1.xpose.msra.mxu0 0.0
        %4388 = vmatprep.subr.mxu0 0.0
        %4389 = vmatpush1.xpose.msra.mxu0 0.0
        %4390 = vmatprep.subr.mxu0 0.0
        %4391 = vmatpush1.xpose.msra.mxu0 0.0
        %4392 = vmatprep.subr.mxu0 0.0
        %4393 = vmatpush1.xpose.msra.mxu0 0.0
        %4394 = vmatprep.subr.mxu0 0.0
        %4395 = vmatpush1.xpose.msra.mxu0 0.0
        %4396 = vmatprep.subr.mxu0 0.0
        %4397 = vmatpush1.xpose.msra.mxu0 0.0
        %4398 = vmatprep.subr.mxu0 0.0
        %4399 = vmatpush1.xpose.msra.mxu0 0.0
        %4400 = vmatprep.subr.mxu0 0.0
        %4401 = vmatpush1.xpose.msra.mxu0 0.0
        %4402 = vmatprep.subr.mxu0 0.0
        %4403 = vmatpush1.xpose.msra.mxu0 0.0
        %4404 = vmatprep.subr.mxu0 0.0
        %4405 = vmatpush1.xpose.msra.mxu0 0.0
        %4406 = vmatprep.subr.mxu0 0.0
        %4407 = vmatpush1.xpose.msra.mxu0 0.0
        %4408 = vmatprep.subr.mxu0 0.0
        %4409 = vmatpush1.xpose.msra.mxu0 0.0
        %4410 = vmatprep.subr.mxu0 0.0
        %4411 = vmatpush1.xpose.msra.mxu0 0.0
        %4412 = vmatprep.subr.mxu0 0.0
        %4413 = vmatpush1.xpose.msra.mxu0 0.0
        %4414 = vmatprep.subr.mxu0 0.0
        %4415 = vmatpush1.xpose.msra.mxu0 0.0
        %4416 = vmatprep.subr.mxu0 0.0
        %4417 = vmatpush1.xpose.msra.mxu0 0.0
        %4418 = vmatprep.subr.mxu0 0.0
        %4419 = vmatpush1.xpose.msra.mxu0 0.0
        %4420 = vmatprep.subr.mxu0 0.0
        %4421 = vmatpush1.xpose.msra.mxu0 0.0
        %4422 = vmatprep.subr.mxu0 0.0
        %4423 = vmatpush1.xpose.msra.mxu0 0.0
        %4424 = vmatprep.subr.mxu0 0.0
        %4425 = vmatpush1.xpose.msra.mxu0 0.0
        %4426 = vmatprep.subr.mxu0 0.0
        %4427 = vmatpush1.xpose.msra.mxu0 0.0
        %4428 = vmatprep.subr.mxu0 0.0
        %4429 = vmatpush1.xpose.msra.mxu0 0.0
        %4430 = vmatprep.subr.mxu0 0.0
        %4431 = vmatpush1.xpose.msra.mxu0 0.0
        %4432 = vmatprep.subr.mxu0 0.0
        %4433 = vmatpush1.xpose.msra.mxu0 0.0
        %4434 = vmatprep.subr.mxu0 0.0
        %4435 = vmatpush1.xpose.msra.mxu0 0.0
        %4436 = vmatprep.subr.mxu0 0.0
        %4437 = vmatpush1.xpose.msra.mxu0 0.0
        %4438 = vmatprep.mubr.f32.mxu0 0.0
        %4439 = vmatmul.mubr.f32.gmra.mrb[0].mxu0 %v4370
        %v4440 = vpop.f32.mrb[0].mxu0
        %v4441 = vadd.f32 0.0, %v4440
        %v4442 = vpop.f32.mrb[0].mxu0
        %4443 = vdwg.mxu0
        %v4444 = vsel %vm2864, %v4279, 0
        %v4446 = vsel %vm2864, %v4286, 0
        %4448 = vmatprep.subr.mxu0 0.0
        %4449 = vmatpush1.xpose.msra.mxu0 %v4446
        %4450 = vmatprep.subr.mxu0 0.0
        %4451 = vmatpush1.xpose.msra.mxu0 0.0
        %4452 = vmatprep.subr.mxu0 0.0
        %4453 = vmatpush1.xpose.msra.mxu0 0.0
        %4454 = vmatprep.subr.mxu0 0.0
        %4455 = vmatpush1.xpose.msra.mxu0 0.0
        %4456 = vmatprep.subr.mxu0 0.0
        %4457 = vmatpush1.xpose.msra.mxu0 0.0
        %4458 = vmatprep.subr.mxu0 0.0
        %4459 = vmatpush1.xpose.msra.mxu0 0.0
        %4460 = vmatprep.subr.mxu0 0.0
        %4461 = vmatpush1.xpose.msra.mxu0 0.0
        %4462 = vmatprep.subr.mxu0 0.0
        %4463 = vmatpush1.xpose.msra.mxu0 0.0
        %4464 = vmatprep.subr.mxu0 0.0
        %4465 = vmatpush1.xpose.msra.mxu0 0.0
        %4466 = vmatprep.subr.mxu0 0.0
        %4467 = vmatpush1.xpose.msra.mxu0 0.0
        %4468 = vmatprep.subr.mxu0 0.0
        %4469 = vmatpush1.xpose.msra.mxu0 0.0
        %4470 = vmatprep.subr.mxu0 0.0
        %4471 = vmatpush1.xpose.msra.mxu0 0.0
        %4472 = vmatprep.subr.mxu0 0.0
        %4473 = vmatpush1.xpose.msra.mxu0 0.0
        %4474 = vmatprep.subr.mxu0 0.0
        %4475 = vmatpush1.xpose.msra.mxu0 0.0
        %4476 = vmatprep.subr.mxu0 0.0
        %4477 = vmatpush1.xpose.msra.mxu0 0.0
        %4478 = vmatprep.subr.mxu0 0.0
        %4479 = vmatpush1.xpose.msra.mxu0 0.0
        %4480 = vmatprep.subr.mxu0 0.0
        %4481 = vmatpush1.xpose.msra.mxu0 0.0
        %4482 = vmatprep.subr.mxu0 0.0
        %4483 = vmatpush1.xpose.msra.mxu0 0.0
        %4484 = vmatprep.subr.mxu0 0.0
        %4485 = vmatpush1.xpose.msra.mxu0 0.0
        %4486 = vmatprep.subr.mxu0 0.0
        %4487 = vmatpush1.xpose.msra.mxu0 0.0
        %4488 = vmatprep.subr.mxu0 0.0
        %4489 = vmatpush1.xpose.msra.mxu0 0.0
        %4490 = vmatprep.subr.mxu0 0.0
        %4491 = vmatpush1.xpose.msra.mxu0 0.0
        %4492 = vmatprep.subr.mxu0 0.0
        %4493 = vmatpush1.xpose.msra.mxu0 0.0
        %4494 = vmatprep.subr.mxu0 0.0
        %4495 = vmatpush1.xpose.msra.mxu0 0.0
        %4496 = vmatprep.subr.mxu0 0.0
        %4497 = vmatpush1.xpose.msra.mxu0 0.0
        %4498 = vmatprep.subr.mxu0 0.0
        %4499 = vmatpush1.xpose.msra.mxu0 0.0
        %4500 = vmatprep.subr.mxu0 0.0
        %4501 = vmatpush1.xpose.msra.mxu0 0.0
        %4502 = vmatprep.subr.mxu0 0.0
        %4503 = vmatpush1.xpose.msra.mxu0 0.0
        %4504 = vmatprep.subr.mxu0 0.0
        %4505 = vmatpush1.xpose.msra.mxu0 0.0
        %4506 = vmatprep.subr.mxu0 0.0
        %4507 = vmatpush1.xpose.msra.mxu0 0.0
        %4508 = vmatprep.subr.mxu0 0.0
        %4509 = vmatpush1.xpose.msra.mxu0 0.0
        %4510 = vmatprep.subr.mxu0 0.0
        %4511 = vmatpush1.xpose.msra.mxu0 0.0
        %4512 = vmatprep.mubr.f32.mxu0 0.0
        %4513 = vmatmul.mubr.f32.gmra.mrb[0].mxu0 %v4444
        %v4514 = vpop.f32.mrb[0].mxu0
        %v4515 = vadd.f32 0.0, %v4514
        %v4516 = vpop.f32.mrb[0].mxu0
        %4517 = vdwg.mxu0
        %v4518 = vsel %vm2864, %v4281, 0
        %v4520 = vsel %vm2864, %v4288, 0
        %4522 = vmatprep.subr.mxu0 0.0
        %4523 = vmatpush1.xpose.msra.mxu0 %v4520
        %4524 = vmatprep.subr.mxu0 0.0
        %4525 = vmatpush1.xpose.msra.mxu0 0.0
        %4526 = vmatprep.subr.mxu0 0.0
        %4527 = vmatpush1.xpose.msra.mxu0 0.0
        %4528 = vmatprep.subr.mxu0 0.0
        %4529 = vmatpush1.xpose.msra.mxu0 0.0
        %4530 = vmatprep.subr.mxu0 0.0
        %4531 = vmatpush1.xpose.msra.mxu0 0.0
        %4532 = vmatprep.subr.mxu0 0.0
        %4533 = vmatpush1.xpose.msra.mxu0 0.0
        %4534 = vmatprep.subr.mxu0 0.0
        %4535 = vmatpush1.xpose.msra.mxu0 0.0
        %4536 = vmatprep.subr.mxu0 0.0
        %4537 = vmatpush1.xpose.msra.mxu0 0.0
        %4538 = vmatprep.subr.mxu0 0.0
        %4539 = vmatpush1.xpose.msra.mxu0 0.0
        %4540 = vmatprep.subr.mxu0 0.0
        %4541 = vmatpush1.xpose.msra.mxu0 0.0
        %4542 = vmatprep.subr.mxu0 0.0
        %4543 = vmatpush1.xpose.msra.mxu0 0.0
        %4544 = vmatprep.subr.mxu0 0.0
        %4545 = vmatpush1.xpose.msra.mxu0 0.0
        %4546 = vmatprep.subr.mxu0 0.0
        %4547 = vmatpush1.xpose.msra.mxu0 0.0
        %4548 = vmatprep.subr.mxu0 0.0
        %4549 = vmatpush1.xpose.msra.mxu0 0.0
        %4550 = vmatprep.subr.mxu0 0.0
        %4551 = vmatpush1.xpose.msra.mxu0 0.0
        %4552 = vmatprep.subr.mxu0 0.0
        %4553 = vmatpush1.xpose.msra.mxu0 0.0
        %4554 = vmatprep.subr.mxu0 0.0
        %4555 = vmatpush1.xpose.msra.mxu0 0.0
        %4556 = vmatprep.subr.mxu0 0.0
        %4557 = vmatpush1.xpose.msra.mxu0 0.0
        %4558 = vmatprep.subr.mxu0 0.0
        %4559 = vmatpush1.xpose.msra.mxu0 0.0
        %4560 = vmatprep.subr.mxu0 0.0
        %4561 = vmatpush1.xpose.msra.mxu0 0.0
        %4562 = vmatprep.subr.mxu0 0.0
        %4563 = vmatpush1.xpose.msra.mxu0 0.0
        %4564 = vmatprep.subr.mxu0 0.0
        %4565 = vmatpush1.xpose.msra.mxu0 0.0
        %4566 = vmatprep.subr.mxu0 0.0
        %4567 = vmatpush1.xpose.msra.mxu0 0.0
        %4568 = vmatprep.subr.mxu0 0.0
        %4569 = vmatpush1.xpose.msra.mxu0 0.0
        %4570 = vmatprep.subr.mxu0 0.0
        %4571 = vmatpush1.xpose.msra.mxu0 0.0
        %4572 = vmatprep.subr.mxu0 0.0
        %4573 = vmatpush1.xpose.msra.mxu0 0.0
        %4574 = vmatprep.subr.mxu0 0.0
        %4575 = vmatpush1.xpose.msra.mxu0 0.0
        %4576 = vmatprep.subr.mxu0 0.0
        %4577 = vmatpush1.xpose.msra.mxu0 0.0
        %4578 = vmatprep.subr.mxu0 0.0
        %4579 = vmatpush1.xpose.msra.mxu0 0.0
        %4580 = vmatprep.subr.mxu0 0.0
        %4581 = vmatpush1.xpose.msra.mxu0 0.0
        %4582 = vmatprep.subr.mxu0 0.0
        %4583 = vmatpush1.xpose.msra.mxu0 0.0
        %4584 = vmatprep.subr.mxu0 0.0
        %4585 = vmatpush1.xpose.msra.mxu0 0.0
        %4586 = vmatprep.mubr.f32.mxu0 0.0
        %4587 = vmatmul.mubr.f32.gmra.mrb[0].mxu0 %v4518
        %v4588 = vpop.f32.mrb[0].mxu0
        %v4589 = vadd.f32 0.0, %v4588
        %v4590 = vpop.f32.mrb[0].mxu0
        %4591 = vdwg.mxu0
        %v4592 = vmul.f32 %v4367, 0.17677669
        %v4593 = vmul.f32 %v4441, 0.17677669
        %v4594 = vmul.f32 %v4515, 0.17677669
        %v4595 = vmul.f32 %v4589, 0.17677669
        %v4596 = vsel %vm3563, %v4592, -inf
        %4597 = vmax.xlane.f32.xlu0 %v4596
        %v4598 = vpop.xlane.xlu0 %4597
        %v4599 = vsel %vm3563, %v4593, -inf
        %4600 = vmax.xlane.f32.xlu0 %v4599
        %v4601 = vpop.xlane.xlu0 %4600
        %v4602 = vsel %vm3563, %v4594, -inf
        %4603 = vmax.xlane.f32.xlu0 %v4602
        %v4604 = vpop.xlane.xlu0 %4603
        %v4605 = vsel %vm3563, %v4595, -inf
        %4606 = vmax.xlane.f32.xlu0 %v4605
        %v4607 = vpop.xlane.xlu0 %4606
        %v4608 = vsub.f32 %v4592, %v4598
        %v4609 = vsub.f32 %v4593, %v4601
        %v4610 = vsub.f32 %v4594, %v4604
        %v4611 = vsub.f32 %v4595, %v4607
        %v4612 = vmul.f32 %v4608, 1.442695
        %v4613 = vpow.pop %v4612
        %v4614 = vmul.f32 %v4609, 1.442695
        %v4615 = vpow.pop %v4614
        %v4616 = vmul.f32 %v4610, 1.442695
        %v4617 = vpow.pop %v4616
        %v4618 = vmul.f32 %v4611, 1.442695
        %v4619 = vpow.pop %v4618
        %v4620 = vsel %vm3563, %v4613, 0.0
        %4621 = vadd.xlane.f32.xlu0 %v4620
        %v4622 = vpop.xlane.xlu0 %4621
        %v4623 = vsel %vm3563, %v4615, 0.0
        %4624 = vadd.xlane.f32.xlu0 %v4623
        %v4625 = vpop.xlane.xlu0 %4624
        %v4626 = vsel %vm3563, %v4617, 0.0
        %4627 = vadd.xlane.f32.xlu0 %v4626
        %v4628 = vpop.xlane.xlu0 %4627
        %v4629 = vsel %vm3563, %v4619, 0.0
        %4630 = vadd.xlane.f32.xlu0 %v4629
        %v4631 = vpop.xlane.xlu0 %4630
        %v4632 = vrcp.pop %v4622
        %v4633 = vrcp.pop %v4625
        %v4634 = vrcp.pop %v4628
        %v4635 = vrcp.pop %v4631
        %v4636 = vmul.f32 %v4613, %v4632
        %v4637 = vmul.f32 %v4615, %v4633
        %v4638 = vmul.f32 %v4617, %v4634
        %v4639 = vmul.f32 %v4619, %v4635
        %v4641 = vsel %vm3608, %v4636, 0
        %v4643 = vsel %vm2057, %v4272, 0
        %4645 = vmatprep.subr.mxu0 0.0
        %4646 = vmatpush1.msra.mxu0 %v4643
        %4647 = vmatprep.subr.mxu0 0.0
        %4648 = vmatpush1.msra.mxu0 0.0
        %4649 = vmatprep.subr.mxu0 0.0
        %4650 = vmatpush1.msra.mxu0 0.0
        %4651 = vmatprep.subr.mxu0 0.0
        %4652 = vmatpush1.msra.mxu0 0.0
        %4653 = vmatprep.subr.mxu0 0.0
        %4654 = vmatpush1.msra.mxu0 0.0
        %4655 = vmatprep.subr.mxu0 0.0
        %4656 = vmatpush1.msra.mxu0 0.0
        %4657 = vmatprep.subr.mxu0 0.0
        %4658 = vmatpush1.msra.mxu0 0.0
        %4659 = vmatprep.subr.mxu0 0.0
        %4660 = vmatpush1.msra.mxu0 0.0
        %4661 = vmatprep.subr.mxu0 0.0
        %4662 = vmatpush1.msra.mxu0 0.0
        %4663 = vmatprep.subr.mxu0 0.0
        %4664 = vmatpush1.msra.mxu0 0.0
        %4665 = vmatprep.subr.mxu0 0.0
        %4666 = vmatpush1.msra.mxu0 0.0
        %4667 = vmatprep.subr.mxu0 0.0
        %4668 = vmatpush1.msra.mxu0 0.0
        %4669 = vmatprep.subr.mxu0 0.0
        %4670 = vmatpush1.msra.mxu0 0.0
        %4671 = vmatprep.subr.mxu0 0.0
        %4672 = vmatpush1.msra.mxu0 0.0
        %4673 = vmatprep.subr.mxu0 0.0
        %4674 = vmatpush1.msra.mxu0 0.0
        %4675 = vmatprep.subr.mxu0 0.0
        %4676 = vmatpush1.msra.mxu0 0.0
        %4677 = vmatprep.subr.mxu0 0.0
        %4678 = vmatpush1.msra.mxu0 0.0
        %4679 = vmatprep.subr.mxu0 0.0
        %4680 = vmatpush1.msra.mxu0 0.0
        %4681 = vmatprep.subr.mxu0 0.0
        %4682 = vmatpush1.msra.mxu0 0.0
        %4683 = vmatprep.subr.mxu0 0.0
        %4684 = vmatpush1.msra.mxu0 0.0
        %4685 = vmatprep.subr.mxu0 0.0
        %4686 = vmatpush1.msra.mxu0 0.0
        %4687 = vmatprep.subr.mxu0 0.0
        %4688 = vmatpush1.msra.mxu0 0.0
        %4689 = vmatprep.subr.mxu0 0.0
        %4690 = vmatpush1.msra.mxu0 0.0
        %4691 = vmatprep.subr.mxu0 0.0
        %4692 = vmatpush1.msra.mxu0 0.0
        %4693 = vmatprep.subr.mxu0 0.0
        %4694 = vmatpush1.msra.mxu0 0.0
        %4695 = vmatprep.subr.mxu0 0.0
        %4696 = vmatpush1.msra.mxu0 0.0
        %4697 = vmatprep.subr.mxu0 0.0
        %4698 = vmatpush1.msra.mxu0 0.0
        %4699 = vmatprep.subr.mxu0 0.0
        %4700 = vmatpush1.msra.mxu0 0.0
        %4701 = vmatprep.subr.mxu0 0.0
        %4702 = vmatpush1.msra.mxu0 0.0
        %4703 = vmatprep.subr.mxu0 0.0
        %4704 = vmatpush1.msra.mxu0 0.0
        %4705 = vmatprep.subr.mxu0 0.0
        %4706 = vmatpush1.msra.mxu0 0.0
        %4707 = vmatprep.subr.mxu0 0.0
        %4708 = vmatpush1.msra.mxu0 0.0
        %4709 = vmatprep.mubr.f32.mxu0 0.0
        %4710 = vmatmul.mubr.f32.gmra.mrb[0].mxu0 %v4641
        %v4711 = vpop.f32.mrb[0].mxu0
        %v4712 = vadd.f32 0.0, %v4711
        %v4713 = vpop.f32.mrb[0].mxu0
        %4714 = vdwg.mxu0
        %v4716 = vsel %vm3608, %v4637, 0
        %v4718 = vsel %vm2057, %v4291, 0
        %4720 = vmatprep.subr.mxu0 0.0
        %4721 = vmatpush1.msra.mxu0 %v4718
        %4722 = vmatprep.subr.mxu0 0.0
        %4723 = vmatpush1.msra.mxu0 0.0
        %4724 = vmatprep.subr.mxu0 0.0
        %4725 = vmatpush1.msra.mxu0 0.0
        %4726 = vmatprep.subr.mxu0 0.0
        %4727 = vmatpush1.msra.mxu0 0.0
        %4728 = vmatprep.subr.mxu0 0.0
        %4729 = vmatpush1.msra.mxu0 0.0
        %4730 = vmatprep.subr.mxu0 0.0
        %4731 = vmatpush1.msra.mxu0 0.0
        %4732 = vmatprep.subr.mxu0 0.0
        %4733 = vmatpush1.msra.mxu0 0.0
        %4734 = vmatprep.subr.mxu0 0.0
        %4735 = vmatpush1.msra.mxu0 0.0
        %4736 = vmatprep.subr.mxu0 0.0
        %4737 = vmatpush1.msra.mxu0 0.0
        %4738 = vmatprep.subr.mxu0 0.0
        %4739 = vmatpush1.msra.mxu0 0.0
        %4740 = vmatprep.subr.mxu0 0.0
        %4741 = vmatpush1.msra.mxu0 0.0
        %4742 = vmatprep.subr.mxu0 0.0
        %4743 = vmatpush1.msra.mxu0 0.0
        %4744 = vmatprep.subr.mxu0 0.0
        %4745 = vmatpush1.msra.mxu0 0.0
        %4746 = vmatprep.subr.mxu0 0.0
        %4747 = vmatpush1.msra.mxu0 0.0
        %4748 = vmatprep.subr.mxu0 0.0
        %4749 = vmatpush1.msra.mxu0 0.0
        %4750 = vmatprep.subr.mxu0 0.0
        %4751 = vmatpush1.msra.mxu0 0.0
        %4752 = vmatprep.subr.mxu0 0.0
        %4753 = vmatpush1.msra.mxu0 0.0
        %4754 = vmatprep.subr.mxu0 0.0
        %4755 = vmatpush1.msra.mxu0 0.0
        %4756 = vmatprep.subr.mxu0 0.0
        %4757 = vmatpush1.msra.mxu0 0.0
        %4758 = vmatprep.subr.mxu0 0.0
        %4759 = vmatpush1.msra.mxu0 0.0
        %4760 = vmatprep.subr.mxu0 0.0
        %4761 = vmatpush1.msra.mxu0 0.0
        %4762 = vmatprep.subr.mxu0 0.0
        %4763 = vmatpush1.msra.mxu0 0.0
        %4764 = vmatprep.subr.mxu0 0.0
        %4765 = vmatpush1.msra.mxu0 0.0
        %4766 = vmatprep.subr.mxu0 0.0
        %4767 = vmatpush1.msra.mxu0 0.0
        %4768 = vmatprep.subr.mxu0 0.0
        %4769 = vmatpush1.msra.mxu0 0.0
        %4770 = vmatprep.subr.mxu0 0.0
        %4771 = vmatpush1.msra.mxu0 0.0
        %4772 = vmatprep.subr.mxu0 0.0
        %4773 = vmatpush1.msra.mxu0 0.0
        %4774 = vmatprep.subr.mxu0 0.0
        %4775 = vmatpush1.msra.mxu0 0.0
        %4776 = vmatprep.subr.mxu0 0.0
        %4777 = vmatpush1.msra.mxu0 0.0
        %4778 = vmatprep.subr.mxu0 0.0
        %4779 = vmatpush1.msra.mxu0 0.0
        %4780 = vmatprep.subr.mxu0 0.0
        %4781 = vmatpush1.msra.mxu0 0.0
        %4782 = vmatprep.subr.mxu0 0.0
        %4783 = vmatpush1.msra.mxu0 0.0
        %4784 = vmatprep.mubr.f32.mxu0 0.0
        %4785 = vmatmul.mubr.f32.gmra.mrb[0].mxu0 %v4716
        %v4786 = vpop.f32.mrb[0].mxu0
        %v4787 = vadd.f32 0.0, %v4786
        %v4788 = vpop.f32.mrb[0].mxu0
        %4789 = vdwg.mxu0
        %v4791 = vsel %vm3608, %v4638, 0
        %v4793 = vsel %vm2057, %v4293, 0
        %4795 = vmatprep.subr.mxu0 0.0
        %4796 = vmatpush1.msra.mxu0 %v4793
        %4797 = vmatprep.subr.mxu0 0.0
        %4798 = vmatpush1.msra.mxu0 0.0
        %4799 = vmatprep.subr.mxu0 0.0
        %4800 = vmatpush1.msra.mxu0 0.0
        %4801 = vmatprep.subr.mxu0 0.0
        %4802 = vmatpush1.msra.mxu0 0.0
        %4803 = vmatprep.subr.mxu0 0.0
        %4804 = vmatpush1.msra.mxu0 0.0
        %4805 = vmatprep.subr.mxu0 0.0
        %4806 = vmatpush1.msra.mxu0 0.0
        %4807 = vmatprep.subr.mxu0 0.0
        %4808 = vmatpush1.msra.mxu0 0.0
        %4809 = vmatprep.subr.mxu0 0.0
        %4810 = vmatpush1.msra.mxu0 0.0
        %4811 = vmatprep.subr.mxu0 0.0
        %4812 = vmatpush1.msra.mxu0 0.0
        %4813 = vmatprep.subr.mxu0 0.0
        %4814 = vmatpush1.msra.mxu0 0.0
        %4815 = vmatprep.subr.mxu0 0.0
        %4816 = vmatpush1.msra.mxu0 0.0
        %4817 = vmatprep.subr.mxu0 0.0
        %4818 = vmatpush1.msra.mxu0 0.0
        %4819 = vmatprep.subr.mxu0 0.0
        %4820 = vmatpush1.msra.mxu0 0.0
        %4821 = vmatprep.subr.mxu0 0.0
        %4822 = vmatpush1.msra.mxu0 0.0
        %4823 = vmatprep.subr.mxu0 0.0
        %4824 = vmatpush1.msra.mxu0 0.0
        %4825 = vmatprep.subr.mxu0 0.0
        %4826 = vmatpush1.msra.mxu0 0.0
        %4827 = vmatprep.subr.mxu0 0.0
        %4828 = vmatpush1.msra.mxu0 0.0
        %4829 = vmatprep.subr.mxu0 0.0
        %4830 = vmatpush1.msra.mxu0 0.0
        %4831 = vmatprep.subr.mxu0 0.0
        %4832 = vmatpush1.msra.mxu0 0.0
        %4833 = vmatprep.subr.mxu0 0.0
        %4834 = vmatpush1.msra.mxu0 0.0
        %4835 = vmatprep.subr.mxu0 0.0
        %4836 = vmatpush1.msra.mxu0 0.0
        %4837 = vmatprep.subr.mxu0 0.0
        %4838 = vmatpush1.msra.mxu0 0.0
        %4839 = vmatprep.subr.mxu0 0.0
        %4840 = vmatpush1.msra.mxu0 0.0
        %4841 = vmatprep.subr.mxu0 0.0
        %4842 = vmatpush1.msra.mxu0 0.0
        %4843 = vmatprep.subr.mxu0 0.0
        %4844 = vmatpush1.msra.mxu0 0.0
        %4845 = vmatprep.subr.mxu0 0.0
        %4846 = vmatpush1.msra.mxu0 0.0
        %4847 = vmatprep.subr.mxu0 0.0
        %4848 = vmatpush1.msra.mxu0 0.0
        %4849 = vmatprep.subr.mxu0 0.0
        %4850 = vmatpush1.msra.mxu0 0.0
        %4851 = vmatprep.subr.mxu0 0.0
        %4852 = vmatpush1.msra.mxu0 0.0
        %4853 = vmatprep.subr.mxu0 0.0
        %4854 = vmatpush1.msra.mxu0 0.0
        %4855 = vmatprep.subr.mxu0 0.0
        %4856 = vmatpush1.msra.mxu0 0.0
        %4857 = vmatprep.subr.mxu0 0.0
        %4858 = vmatpush1.msra.mxu0 0.0
        %4859 = vmatprep.mubr.f32.mxu0 0.0
        %4860 = vmatmul.mubr.f32.gmra.mrb[0].mxu0 %v4791
        %v4861 = vpop.f32.mrb[0].mxu0
        %v4862 = vadd.f32 0.0, %v4861
        %v4863 = vpop.f32.mrb[0].mxu0
        %4864 = vdwg.mxu0
        %v4866 = vsel %vm3608, %v4639, 0
        %v4868 = vsel %vm2057, %v4295, 0
        %4870 = vmatprep.subr.mxu0 0.0
        %4871 = vmatpush1.msra.mxu0 %v4868
        %4872 = vmatprep.subr.mxu0 0.0
        %4873 = vmatpush1.msra.mxu0 0.0
        %4874 = vmatprep.subr.mxu0 0.0
        %4875 = vmatpush1.msra.mxu0 0.0
        %4876 = vmatprep.subr.mxu0 0.0
        %4877 = vmatpush1.msra.mxu0 0.0
        %4878 = vmatprep.subr.mxu0 0.0
        %4879 = vmatpush1.msra.mxu0 0.0
        %4880 = vmatprep.subr.mxu0 0.0
        %4881 = vmatpush1.msra.mxu0 0.0
        %4882 = vmatprep.subr.mxu0 0.0
        %4883 = vmatpush1.msra.mxu0 0.0
        %4884 = vmatprep.subr.mxu0 0.0
        %4885 = vmatpush1.msra.mxu0 0.0
        %4886 = vmatprep.subr.mxu0 0.0
        %4887 = vmatpush1.msra.mxu0 0.0
        %4888 = vmatprep.subr.mxu0 0.0
        %4889 = vmatpush1.msra.mxu0 0.0
        %4890 = vmatprep.subr.mxu0 0.0
        %4891 = vmatpush1.msra.mxu0 0.0
        %4892 = vmatprep.subr.mxu0 0.0
        %4893 = vmatpush1.msra.mxu0 0.0
        %4894 = vmatprep.subr.mxu0 0.0
        %4895 = vmatpush1.msra.mxu0 0.0
        %4896 = vmatprep.subr.mxu0 0.0
        %4897 = vmatpush1.msra.mxu0 0.0
        %4898 = vmatprep.subr.mxu0 0.0
        %4899 = vmatpush1.msra.mxu0 0.0
        %4900 = vmatprep.subr.mxu0 0.0
        %4901 = vmatpush1.msra.mxu0 0.0
        %4902 = vmatprep.subr.mxu0 0.0
        %4903 = vmatpush1.msra.mxu0 0.0
        %4904 = vmatprep.subr.mxu0 0.0
        %4905 = vmatpush1.msra.mxu0 0.0
        %4906 = vmatprep.subr.mxu0 0.0
        %4907 = vmatpush1.msra.mxu0 0.0
        %4908 = vmatprep.subr.mxu0 0.0
        %4909 = vmatpush1.msra.mxu0 0.0
        %4910 = vmatprep.subr.mxu0 0.0
        %4911 = vmatpush1.msra.mxu0 0.0
        %4912 = vmatprep.subr.mxu0 0.0
        %4913 = vmatpush1.msra.mxu0 0.0
        %4914 = vmatprep.subr.mxu0 0.0
        %4915 = vmatpush1.msra.mxu0 0.0
        %4916 = vmatprep.subr.mxu0 0.0
        %4917 = vmatpush1.msra.mxu0 0.0
        %4918 = vmatprep.subr.mxu0 0.0
        %4919 = vmatpush1.msra.mxu0 0.0
        %4920 = vmatprep.subr.mxu0 0.0
        %4921 = vmatpush1.msra.mxu0 0.0
        %4922 = vmatprep.subr.mxu0 0.0
        %4923 = vmatpush1.msra.mxu0 0.0
        %4924 = vmatprep.subr.mxu0 0.0
        %4925 = vmatpush1.msra.mxu0 0.0
        %4926 = vmatprep.subr.mxu0 0.0
        %4927 = vmatpush1.msra.mxu0 0.0
        %4928 = vmatprep.subr.mxu0 0.0
        %4929 = vmatpush1.msra.mxu0 0.0
        %4930 = vmatprep.subr.mxu0 0.0
        %4931 = vmatpush1.msra.mxu0 0.0
        %4932 = vmatprep.subr.mxu0 0.0
        %4933 = vmatpush1.msra.mxu0 0.0
        %4934 = vmatprep.mubr.f32.mxu0 0.0
        %4935 = vmatmul.mubr.f32.gmra.mrb[0].mxu0 %v4866
        %v4936 = vpop.f32.mrb[0].mxu0
        %v4937 = vadd.f32 0.0, %v4936
        %v4938 = vpop.f32.mrb[0].mxu0
        %4939 = vdwg.mxu0
        %4941 = vrot.lane.b32.xlu0 %v4787, 32
        %v4942 = vpop.permute.xlu0 %4941
        %4945 = vrot.lane.b32.xlu0 %v4862, 64
        %v4946 = vpop.permute.xlu0 %4945
        %4949 = vrot.lane.b32.xlu0 %v4937, 96
        %v4950 = vpop.permute.xlu0 %4949
        %v4952 = vsel %vm2864, %v4712, %v4942
        %v4953 = vsel %vm2872, %v4952, %v4946
        %v4954 = vsel %vm2880, %v4953, %v4950
        %4955 = vmatprep.subr.mxu0 0.0
        %4956 = vmatpush1.msra.mxu0 %v4046
        %4957 = vmatprep.subr.mxu0 0.0
        %4958 = vmatpush1.msra.mxu0 %v4047
        %4959 = vmatprep.subr.mxu0 0.0
        %4960 = vmatpush1.msra.mxu0 %v4048
        %4961 = vmatprep.subr.mxu0 0.0
        %4962 = vmatpush1.msra.mxu0 %v4049
        %4963 = vmatprep.subr.mxu0 0.0
        %4964 = vmatpush1.msra.mxu0 %v4050
        %4965 = vmatprep.subr.mxu0 0.0
        %4966 = vmatpush1.msra.mxu0 %v4051
        %4967 = vmatprep.subr.mxu0 0.0
        %4968 = vmatpush1.msra.mxu0 %v4052
        %4969 = vmatprep.subr.mxu0 0.0
        %4970 = vmatpush1.msra.mxu0 %v4053
        %4971 = vmatprep.subr.mxu0 0.0
        %4972 = vmatpush1.msra.mxu0 %v4054
        %4973 = vmatprep.subr.mxu0 0.0
        %4974 = vmatpush1.msra.mxu0 %v4055
        %4975 = vmatprep.subr.mxu0 0.0
        %4976 = vmatpush1.msra.mxu0 %v4056
        %4977 = vmatprep.subr.mxu0 0.0
        %4978 = vmatpush1.msra.mxu0 %v4057
        %4979 = vmatprep.subr.mxu0 0.0
        %4980 = vmatpush1.msra.mxu0 %v4058
        %4981 = vmatprep.subr.mxu0 0.0
        %4982 = vmatpush1.msra.mxu0 %v4059
        %4983 = vmatprep.subr.mxu0 0.0
        %4984 = vmatpush1.msra.mxu0 %v4060
        %4985 = vmatprep.subr.mxu0 0.0
        %4986 = vmatpush1.msra.mxu0 %v4061
        %4987 = vmatprep.subr.mxu0 0.0
        %4988 = vmatpush1.msra.mxu0 0.0
        %4989 = vmatprep.subr.mxu0 0.0
        %4990 = vmatpush1.msra.mxu0 0.0
        %4991 = vmatprep.subr.mxu0 0.0
        %4992 = vmatpush1.msra.mxu0 0.0
        %4993 = vmatprep.subr.mxu0 0.0
        %4994 = vmatpush1.msra.mxu0 0.0
        %4995 = vmatprep.subr.mxu0 0.0
        %4996 = vmatpush1.msra.mxu0 0.0
        %4997 = vmatprep.subr.mxu0 0.0
        %4998 = vmatpush1.msra.mxu0 0.0
        %4999 = vmatprep.subr.mxu0 0.0
        %5000 = vmatpush1.msra.mxu0 0.0
        %5001 = vmatprep.subr.mxu0 0.0
        %5002 = vmatpush1.msra.mxu0 0.0
        %5003 = vmatprep.subr.mxu0 0.0
        %5004 = vmatpush1.msra.mxu0 0.0
        %5005 = vmatprep.subr.mxu0 0.0
        %5006 = vmatpush1.msra.mxu0 0.0
        %5007 = vmatprep.subr.mxu0 0.0
        %5008 = vmatpush1.msra.mxu0 0.0
        %5009 = vmatprep.subr.mxu0 0.0
        %5010 = vmatpush1.msra.mxu0 0.0
        %5011 = vmatprep.subr.mxu0 0.0
        %5012 = vmatpush1.msra.mxu0 0.0
        %5013 = vmatprep.subr.mxu0 0.0
        %5014 = vmatpush1.msra.mxu0 0.0
        %5015 = vmatprep.subr.mxu0 0.0
        %5016 = vmatpush1.msra.mxu0 0.0
        %5017 = vmatprep.subr.mxu0 0.0
        %5018 = vmatpush1.msra.mxu0 0.0
        %5019 = vmatprep.mubr.f32.mxu0 0.0
        %5020 = vmatmul.mubr.f32.gmra.mrb[0].mxu0 %v4954
        %v5021 = vpop.f32.mrb[0].mxu0
        %v5022 = vadd.f32 0.0, %v5021
        %v5023 = vpop.f32.mrb[0].mxu0
        %5024 = vdwg.mxu0
        %s5025 = scalar_lea.vmem [#allocation11], 256
        %v5026 = vld [vmem:[%s5025] sm:$0xff]
        %v5027 = vld [vmem:[%s5025 + $0x8] sm:$0xff]
        %v5028 = vld [vmem:[%s5025 + $0x10] sm:$0xff]
        %v5029 = vld [vmem:[%s5025 + $0x18] sm:$0xff]
        %v5030 = vld [vmem:[%s5025 + $0x20] sm:$0xff]
        %v5031 = vld [vmem:[%s5025 + $0x28] sm:$0xff]
        %v5032 = vld [vmem:[%s5025 + $0x30] sm:$0xff]
        %v5033 = vld [vmem:[%s5025 + $0x38] sm:$0xff]
        %v5034 = vld [vmem:[%s5025 + $0x40] sm:$0xff]
        %v5035 = vld [vmem:[%s5025 + $0x48] sm:$0xff]
        %v5036 = vld [vmem:[%s5025 + $0x50] sm:$0xff]
        %v5037 = vld [vmem:[%s5025 + $0x58] sm:$0xff]
        %v5038 = vld [vmem:[%s5025 + $0x60] sm:$0xff]
        %v5039 = vld [vmem:[%s5025 + $0x68] sm:$0xff]
        %v5040 = vld [vmem:[%s5025 + $0x70] sm:$0xff]
        %v5041 = vld [vmem:[%s5025 + $0x78] sm:$0xff]
        %s5042 = scalar_lea.vmem [#allocation13], 256
        %v5043 = vld [vmem:[%s5042] sm:$0xff]
        %v5044 = vld [vmem:[%s5042 + $0x8] sm:$0xff]
        %v5045 = vld [vmem:[%s5042 + $0x10] sm:$0xff]
        %v5046 = vld [vmem:[%s5042 + $0x18] sm:$0xff]
        %v5047 = vld [vmem:[%s5042 + $0x20] sm:$0xff]
        %v5048 = vld [vmem:[%s5042 + $0x28] sm:$0xff]
        %v5049 = vld [vmem:[%s5042 + $0x30] sm:$0xff]
        %v5050 = vld [vmem:[%s5042 + $0x38] sm:$0xff]
        %v5051 = vld [vmem:[%s5042 + $0x40] sm:$0xff]
        %v5052 = vld [vmem:[%s5042 + $0x48] sm:$0xff]
        %v5053 = vld [vmem:[%s5042 + $0x50] sm:$0xff]
        %v5054 = vld [vmem:[%s5042 + $0x58] sm:$0xff]
        %v5055 = vld [vmem:[%s5042 + $0x60] sm:$0xff]
        %v5056 = vld [vmem:[%s5042 + $0x68] sm:$0xff]
        %v5057 = vld [vmem:[%s5042 + $0x70] sm:$0xff]
        %v5058 = vld [vmem:[%s5042 + $0x78] sm:$0xff]
        %s5059 = scalar_lea.vmem [#allocation14], 256
        %v5060 = vld [vmem:[%s5059] sm:$0xff]
        %v5061 = vld [vmem:[%s5059 + $0x8] sm:$0xff]
        %v5062 = vld [vmem:[%s5059 + $0x10] sm:$0xff]
        %v5063 = vld [vmem:[%s5059 + $0x18] sm:$0xff]
        %v5064 = vld [vmem:[%s5059 + $0x20] sm:$0xff]
        %v5065 = vld [vmem:[%s5059 + $0x28] sm:$0xff]
        %v5066 = vld [vmem:[%s5059 + $0x30] sm:$0xff]
        %v5067 = vld [vmem:[%s5059 + $0x38] sm:$0xff]
        %v5068 = vld [vmem:[%s5059 + $0x40] sm:$0xff]
        %v5069 = vld [vmem:[%s5059 + $0x48] sm:$0xff]
        %v5070 = vld [vmem:[%s5059 + $0x50] sm:$0xff]
        %v5071 = vld [vmem:[%s5059 + $0x58] sm:$0xff]
        %v5072 = vld [vmem:[%s5059 + $0x60] sm:$0xff]
        %v5073 = vld [vmem:[%s5059 + $0x68] sm:$0xff]
        %v5074 = vld [vmem:[%s5059 + $0x70] sm:$0xff]
        %v5075 = vld [vmem:[%s5059 + $0x78] sm:$0xff]
        %s5076 = scalar_lea.vmem [#allocation16], 256
        %v5077 = vld [vmem:[%s5076] sm:$0xff]
        %v5078 = vld [vmem:[%s5076 + $0x8] sm:$0xff]
        %v5079 = vld [vmem:[%s5076 + $0x10] sm:$0xff]
        %v5080 = vld [vmem:[%s5076 + $0x18] sm:$0xff]
        %v5081 = vld [vmem:[%s5076 + $0x20] sm:$0xff]
        %v5082 = vld [vmem:[%s5076 + $0x28] sm:$0xff]
        %v5083 = vld [vmem:[%s5076 + $0x30] sm:$0xff]
        %v5084 = vld [vmem:[%s5076 + $0x38] sm:$0xff]
        %v5085 = vld [vmem:[%s5076 + $0x40] sm:$0xff]
        %v5086 = vld [vmem:[%s5076 + $0x48] sm:$0xff]
        %v5087 = vld [vmem:[%s5076 + $0x50] sm:$0xff]
        %v5088 = vld [vmem:[%s5076 + $0x58] sm:$0xff]
        %v5089 = vld [vmem:[%s5076 + $0x60] sm:$0xff]
        %v5090 = vld [vmem:[%s5076 + $0x68] sm:$0xff]
        %v5091 = vld [vmem:[%s5076 + $0x70] sm:$0xff]
        %v5092 = vld [vmem:[%s5076 + $0x78] sm:$0xff]
        %5093 = vmatprep.subr.mxu0 0.0
        %5094 = vmatpush1.msra.mxu0 %v5026
        %5095 = vmatprep.subr.mxu0 0.0
        %5096 = vmatpush1.msra.mxu0 %v5027
        %5097 = vmatprep.subr.mxu0 0.0
        %5098 = vmatpush1.msra.mxu0 %v5028
        %5099 = vmatprep.subr.mxu0 0.0
        %5100 = vmatpush1.msra.mxu0 %v5029
        %5101 = vmatprep.subr.mxu0 0.0
        %5102 = vmatpush1.msra.mxu0 %v5030
        %5103 = vmatprep.subr.mxu0 0.0
        %5104 = vmatpush1.msra.mxu0 %v5031
        %5105 = vmatprep.subr.mxu0 0.0
        %5106 = vmatpush1.msra.mxu0 %v5032
        %5107 = vmatprep.subr.mxu0 0.0
        %5108 = vmatpush1.msra.mxu0 %v5033
        %5109 = vmatprep.subr.mxu0 0.0
        %5110 = vmatpush1.msra.mxu0 %v5034
        %5111 = vmatprep.subr.mxu0 0.0
        %5112 = vmatpush1.msra.mxu0 %v5035
        %5113 = vmatprep.subr.mxu0 0.0
        %5114 = vmatpush1.msra.mxu0 %v5036
        %5115 = vmatprep.subr.mxu0 0.0
        %5116 = vmatpush1.msra.mxu0 %v5037
        %5117 = vmatprep.subr.mxu0 0.0
        %5118 = vmatpush1.msra.mxu0 %v5038
        %5119 = vmatprep.subr.mxu0 0.0
        %5120 = vmatpush1.msra.mxu0 %v5039
        %5121 = vmatprep.subr.mxu0 0.0
        %5122 = vmatpush1.msra.mxu0 %v5040
        %5123 = vmatprep.subr.mxu0 0.0
        %5124 = vmatpush1.msra.mxu0 %v5041
        %5125 = vmatprep.subr.mxu0 0.0
        %5126 = vmatpush1.msra.mxu0 0.0
        %5127 = vmatprep.subr.mxu0 0.0
        %5128 = vmatpush1.msra.mxu0 0.0
        %5129 = vmatprep.subr.mxu0 0.0
        %5130 = vmatpush1.msra.mxu0 0.0
        %5131 = vmatprep.subr.mxu0 0.0
        %5132 = vmatpush1.msra.mxu0 0.0
        %5133 = vmatprep.subr.mxu0 0.0
        %5134 = vmatpush1.msra.mxu0 0.0
        %5135 = vmatprep.subr.mxu0 0.0
        %5136 = vmatpush1.msra.mxu0 0.0
        %5137 = vmatprep.subr.mxu0 0.0
        %5138 = vmatpush1.msra.mxu0 0.0
        %5139 = vmatprep.subr.mxu0 0.0
        %5140 = vmatpush1.msra.mxu0 0.0
        %5141 = vmatprep.subr.mxu0 0.0
        %5142 = vmatpush1.msra.mxu0 0.0
        %5143 = vmatprep.subr.mxu0 0.0
        %5144 = vmatpush1.msra.mxu0 0.0
        %5145 = vmatprep.subr.mxu0 0.0
        %5146 = vmatpush1.msra.mxu0 0.0
        %5147 = vmatprep.subr.mxu0 0.0
        %5148 = vmatpush1.msra.mxu0 0.0
        %5149 = vmatprep.subr.mxu0 0.0
        %5150 = vmatpush1.msra.mxu0 0.0
        %5151 = vmatprep.subr.mxu0 0.0
        %5152 = vmatpush1.msra.mxu0 0.0
        %5153 = vmatprep.subr.mxu0 0.0
        %5154 = vmatpush1.msra.mxu0 0.0
        %5155 = vmatprep.subr.mxu0 0.0
        %5156 = vmatpush1.msra.mxu0 0.0
        %5157 = vmatprep.mubr.f32.mxu0 0.0
        %5158 = vmatmul.mubr.f32.gmra.mrb[0].mxu0 %v549
        %v5159 = vpop.f32.mrb[0].mxu0
        %v5160 = vadd.f32 0.0, %v5159
        %v5161 = vpop.f32.mrb[0].mxu0
        %5162 = vdwg.mxu0
        %5163 = vmatprep.subr.mxu0 0.0
        %5164 = vmatpush1.msra.mxu0 %v5043
        %5165 = vmatprep.subr.mxu0 0.0
        %5166 = vmatpush1.msra.mxu0 %v5044
        %5167 = vmatprep.subr.mxu0 0.0
        %5168 = vmatpush1.msra.mxu0 %v5045
        %5169 = vmatprep.subr.mxu0 0.0
        %5170 = vmatpush1.msra.mxu0 %v5046
        %5171 = vmatprep.subr.mxu0 0.0
        %5172 = vmatpush1.msra.mxu0 %v5047
        %5173 = vmatprep.subr.mxu0 0.0
        %5174 = vmatpush1.msra.mxu0 %v5048
        %5175 = vmatprep.subr.mxu0 0.0
        %5176 = vmatpush1.msra.mxu0 %v5049
        %5177 = vmatprep.subr.mxu0 0.0
        %5178 = vmatpush1.msra.mxu0 %v5050
        %5179 = vmatprep.subr.mxu0 0.0
        %5180 = vmatpush1.msra.mxu0 %v5051
        %5181 = vmatprep.subr.mxu0 0.0
        %5182 = vmatpush1.msra.mxu0 %v5052
        %5183 = vmatprep.subr.mxu0 0.0
        %5184 = vmatpush1.msra.mxu0 %v5053
        %5185 = vmatprep.subr.mxu0 0.0
        %5186 = vmatpush1.msra.mxu0 %v5054
        %5187 = vmatprep.subr.mxu0 0.0
        %5188 = vmatpush1.msra.mxu0 %v5055
        %5189 = vmatprep.subr.mxu0 0.0
        %5190 = vmatpush1.msra.mxu0 %v5056
        %5191 = vmatprep.subr.mxu0 0.0
        %5192 = vmatpush1.msra.mxu0 %v5057
        %5193 = vmatprep.subr.mxu0 0.0
        %5194 = vmatpush1.msra.mxu0 %v5058
        %5195 = vmatprep.subr.mxu0 0.0
        %5196 = vmatpush1.msra.mxu0 0.0
        %5197 = vmatprep.subr.mxu0 0.0
        %5198 = vmatpush1.msra.mxu0 0.0
        %5199 = vmatprep.subr.mxu0 0.0
        %5200 = vmatpush1.msra.mxu0 0.0
        %5201 = vmatprep.subr.mxu0 0.0
        %5202 = vmatpush1.msra.mxu0 0.0
        %5203 = vmatprep.subr.mxu0 0.0
        %5204 = vmatpush1.msra.mxu0 0.0
        %5205 = vmatprep.subr.mxu0 0.0
        %5206 = vmatpush1.msra.mxu0 0.0
        %5207 = vmatprep.subr.mxu0 0.0
        %5208 = vmatpush1.msra.mxu0 0.0
        %5209 = vmatprep.subr.mxu0 0.0
        %5210 = vmatpush1.msra.mxu0 0.0
        %5211 = vmatprep.subr.mxu0 0.0
        %5212 = vmatpush1.msra.mxu0 0.0
        %5213 = vmatprep.subr.mxu0 0.0
        %5214 = vmatpush1.msra.mxu0 0.0
        %5215 = vmatprep.subr.mxu0 0.0
        %5216 = vmatpush1.msra.mxu0 0.0
        %5217 = vmatprep.subr.mxu0 0.0
        %5218 = vmatpush1.msra.mxu0 0.0
        %5219 = vmatprep.subr.mxu0 0.0
        %5220 = vmatpush1.msra.mxu0 0.0
        %5221 = vmatprep.subr.mxu0 0.0
        %5222 = vmatpush1.msra.mxu0 0.0
        %5223 = vmatprep.subr.mxu0 0.0
        %5224 = vmatpush1.msra.mxu0 0.0
        %5225 = vmatprep.subr.mxu0 0.0
        %5226 = vmatpush1.msra.mxu0 0.0
        %5227 = vmatprep.mubr.f32.mxu0 0.0
        %5228 = vmatmul.mubr.f32.gmra.mrb[0].mxu0 %v549
        %v5229 = vpop.f32.mrb[0].mxu0
        %v5230 = vadd.f32 0.0, %v5229
        %v5231 = vpop.f32.mrb[0].mxu0
        %5232 = vdwg.mxu0
        %5233 = vmatprep.subr.mxu0 0.0
        %5234 = vmatpush1.msra.mxu0 %v5060
        %5235 = vmatprep.subr.mxu0 0.0
        %5236 = vmatpush1.msra.mxu0 %v5061
        %5237 = vmatprep.subr.mxu0 0.0
        %5238 = vmatpush1.msra.mxu0 %v5062
        %5239 = vmatprep.subr.mxu0 0.0
        %5240 = vmatpush1.msra.mxu0 %v5063
        %5241 = vmatprep.subr.mxu0 0.0
        %5242 = vmatpush1.msra.mxu0 %v5064
        %5243 = vmatprep.subr.mxu0 0.0
        %5244 = vmatpush1.msra.mxu0 %v5065
        %5245 = vmatprep.subr.mxu0 0.0
        %5246 = vmatpush1.msra.mxu0 %v5066
        %5247 = vmatprep.subr.mxu0 0.0
        %5248 = vmatpush1.msra.mxu0 %v5067
        %5249 = vmatprep.subr.mxu0 0.0
        %5250 = vmatpush1.msra.mxu0 %v5068
        %5251 = vmatprep.subr.mxu0 0.0
        %5252 = vmatpush1.msra.mxu0 %v5069
        %5253 = vmatprep.subr.mxu0 0.0
        %5254 = vmatpush1.msra.mxu0 %v5070
        %5255 = vmatprep.subr.mxu0 0.0
        %5256 = vmatpush1.msra.mxu0 %v5071
        %5257 = vmatprep.subr.mxu0 0.0
        %5258 = vmatpush1.msra.mxu0 %v5072
        %5259 = vmatprep.subr.mxu0 0.0
        %5260 = vmatpush1.msra.mxu0 %v5073
        %5261 = vmatprep.subr.mxu0 0.0
        %5262 = vmatpush1.msra.mxu0 %v5074
        %5263 = vmatprep.subr.mxu0 0.0
        %5264 = vmatpush1.msra.mxu0 %v5075
        %5265 = vmatprep.subr.mxu0 0.0
        %5266 = vmatpush1.msra.mxu0 0.0
        %5267 = vmatprep.subr.mxu0 0.0
        %5268 = vmatpush1.msra.mxu0 0.0
        %5269 = vmatprep.subr.mxu0 0.0
        %5270 = vmatpush1.msra.mxu0 0.0
        %5271 = vmatprep.subr.mxu0 0.0
        %5272 = vmatpush1.msra.mxu0 0.0
        %5273 = vmatprep.subr.mxu0 0.0
        %5274 = vmatpush1.msra.mxu0 0.0
        %5275 = vmatprep.subr.mxu0 0.0
        %5276 = vmatpush1.msra.mxu0 0.0
        %5277 = vmatprep.subr.mxu0 0.0
        %5278 = vmatpush1.msra.mxu0 0.0
        %5279 = vmatprep.subr.mxu0 0.0
        %5280 = vmatpush1.msra.mxu0 0.0
        %5281 = vmatprep.subr.mxu0 0.0
        %5282 = vmatpush1.msra.mxu0 0.0
        %5283 = vmatprep.subr.mxu0 0.0
        %5284 = vmatpush1.msra.mxu0 0.0
        %5285 = vmatprep.subr.mxu0 0.0
        %5286 = vmatpush1.msra.mxu0 0.0
        %5287 = vmatprep.subr.mxu0 0.0
        %5288 = vmatpush1.msra.mxu0 0.0
        %5289 = vmatprep.subr.mxu0 0.0
        %5290 = vmatpush1.msra.mxu0 0.0
        %5291 = vmatprep.subr.mxu0 0.0
        %5292 = vmatpush1.msra.mxu0 0.0
        %5293 = vmatprep.subr.mxu0 0.0
        %5294 = vmatpush1.msra.mxu0 0.0
        %5295 = vmatprep.subr.mxu0 0.0
        %5296 = vmatpush1.msra.mxu0 0.0
        %5297 = vmatprep.mubr.f32.mxu0 0.0
        %5298 = vmatmul.mubr.f32.gmra.mrb[0].mxu0 %v549
        %v5299 = vpop.f32.mrb[0].mxu0
        %v5300 = vadd.f32 0.0, %v5299
        %v5301 = vpop.f32.mrb[0].mxu0
        %5302 = vdwg.mxu0
        %5304 = vrot.lane.b32.xlu0 %v5160, 96
        %v5305 = vpop.permute.xlu0 %5304
        %5306 = vrot.lane.b32.xlu0 %v5160, 64
        %v5307 = vpop.permute.xlu0 %5306
        %5308 = vrot.lane.b32.xlu0 %v5160, 32
        %v5309 = vpop.permute.xlu0 %5308
        %5311 = vrot.lane.b32.xlu0 %v5230, 96
        %v5312 = vpop.permute.xlu0 %5311
        %5313 = vrot.lane.b32.xlu0 %v5230, 64
        %v5314 = vpop.permute.xlu0 %5313
        %5315 = vrot.lane.b32.xlu0 %v5230, 32
        %v5316 = vpop.permute.xlu0 %5315
        %5318 = vrot.lane.b32.xlu0 %v5300, 96
        %v5319 = vpop.permute.xlu0 %5318
        %5320 = vrot.lane.b32.xlu0 %v5300, 64
        %v5321 = vpop.permute.xlu0 %5320
        %5322 = vrot.lane.b32.xlu0 %v5300, 32
        %v5323 = vpop.permute.xlu0 %5322
        %v5324 = vsel %vm2864, %v5160, 0
        %v5326 = vsel %vm2864, %v5230, 0
        %5328 = vmatprep.subr.mxu0 0.0
        %5329 = vmatpush1.xpose.msra.mxu0 %v5326
        %5330 = vmatprep.subr.mxu0 0.0
        %5331 = vmatpush1.xpose.msra.mxu0 0.0
        %5332 = vmatprep.subr.mxu0 0.0
        %5333 = vmatpush1.xpose.msra.mxu0 0.0
        %5334 = vmatprep.subr.mxu0 0.0
        %5335 = vmatpush1.xpose.msra.mxu0 0.0
        %5336 = vmatprep.subr.mxu0 0.0
        %5337 = vmatpush1.xpose.msra.mxu0 0.0
        %5338 = vmatprep.subr.mxu0 0.0
        %5339 = vmatpush1.xpose.msra.mxu0 0.0
        %5340 = vmatprep.subr.mxu0 0.0
        %5341 = vmatpush1.xpose.msra.mxu0 0.0
        %5342 = vmatprep.subr.mxu0 0.0
        %5343 = vmatpush1.xpose.msra.mxu0 0.0
        %5344 = vmatprep.subr.mxu0 0.0
        %5345 = vmatpush1.xpose.msra.mxu0 0.0
        %5346 = vmatprep.subr.mxu0 0.0
        %5347 = vmatpush1.xpose.msra.mxu0 0.0
        %5348 = vmatprep.subr.mxu0 0.0
        %5349 = vmatpush1.xpose.msra.mxu0 0.0
        %5350 = vmatprep.subr.mxu0 0.0
        %5351 = vmatpush1.xpose.msra.mxu0 0.0
        %5352 = vmatprep.subr.mxu0 0.0
        %5353 = vmatpush1.xpose.msra.mxu0 0.0
        %5354 = vmatprep.subr.mxu0 0.0
        %5355 = vmatpush1.xpose.msra.mxu0 0.0
        %5356 = vmatprep.subr.mxu0 0.0
        %5357 = vmatpush1.xpose.msra.mxu0 0.0
        %5358 = vmatprep.subr.mxu0 0.0
        %5359 = vmatpush1.xpose.msra.mxu0 0.0
        %5360 = vmatprep.subr.mxu0 0.0
        %5361 = vmatpush1.xpose.msra.mxu0 0.0
        %5362 = vmatprep.subr.mxu0 0.0
        %5363 = vmatpush1.xpose.msra.mxu0 0.0
        %5364 = vmatprep.subr.mxu0 0.0
        %5365 = vmatpush1.xpose.msra.mxu0 0.0
        %5366 = vmatprep.subr.mxu0 0.0
        %5367 = vmatpush1.xpose.msra.mxu0 0.0
        %5368 = vmatprep.subr.mxu0 0.0
        %5369 = vmatpush1.xpose.msra.mxu0 0.0
        %5370 = vmatprep.subr.mxu0 0.0
        %5371 = vmatpush1.xpose.msra.mxu0 0.0
        %5372 = vmatprep.subr.mxu0 0.0
        %5373 = vmatpush1.xpose.msra.mxu0 0.0
        %5374 = vmatprep.subr.mxu0 0.0
        %5375 = vmatpush1.xpose.msra.mxu0 0.0
        %5376 = vmatprep.subr.mxu0 0.0
        %5377 = vmatpush1.xpose.msra.mxu0 0.0
        %5378 = vmatprep.subr.mxu0 0.0
        %5379 = vmatpush1.xpose.msra.mxu0 0.0
        %5380 = vmatprep.subr.mxu0 0.0
        %5381 = vmatpush1.xpose.msra.mxu0 0.0
        %5382 = vmatprep.subr.mxu0 0.0
        %5383 = vmatpush1.xpose.msra.mxu0 0.0
        %5384 = vmatprep.subr.mxu0 0.0
        %5385 = vmatpush1.xpose.msra.mxu0 0.0
        %5386 = vmatprep.subr.mxu0 0.0
        %5387 = vmatpush1.xpose.msra.mxu0 0.0
        %5388 = vmatprep.subr.mxu0 0.0
        %5389 = vmatpush1.xpose.msra.mxu0 0.0
        %5390 = vmatprep.subr.mxu0 0.0
        %5391 = vmatpush1.xpose.msra.mxu0 0.0
        %5392 = vmatprep.mubr.f32.mxu0 0.0
        %5393 = vmatmul.mubr.f32.gmra.mrb[0].mxu0 %v5324
        %v5394 = vpop.f32.mrb[0].mxu0
        %v5395 = vadd.f32 0.0, %v5394
        %v5396 = vpop.f32.mrb[0].mxu0
        %5397 = vdwg.mxu0
        %v5398 = vsel %vm2864, %v5305, 0
        %v5400 = vsel %vm2864, %v5312, 0
        %5402 = vmatprep.subr.mxu0 0.0
        %5403 = vmatpush1.xpose.msra.mxu0 %v5400
        %5404 = vmatprep.subr.mxu0 0.0
        %5405 = vmatpush1.xpose.msra.mxu0 0.0
        %5406 = vmatprep.subr.mxu0 0.0
        %5407 = vmatpush1.xpose.msra.mxu0 0.0
        %5408 = vmatprep.subr.mxu0 0.0
        %5409 = vmatpush1.xpose.msra.mxu0 0.0
        %5410 = vmatprep.subr.mxu0 0.0
        %5411 = vmatpush1.xpose.msra.mxu0 0.0
        %5412 = vmatprep.subr.mxu0 0.0
        %5413 = vmatpush1.xpose.msra.mxu0 0.0
        %5414 = vmatprep.subr.mxu0 0.0
        %5415 = vmatpush1.xpose.msra.mxu0 0.0
        %5416 = vmatprep.subr.mxu0 0.0
        %5417 = vmatpush1.xpose.msra.mxu0 0.0
        %5418 = vmatprep.subr.mxu0 0.0
        %5419 = vmatpush1.xpose.msra.mxu0 0.0
        %5420 = vmatprep.subr.mxu0 0.0
        %5421 = vmatpush1.xpose.msra.mxu0 0.0
        %5422 = vmatprep.subr.mxu0 0.0
        %5423 = vmatpush1.xpose.msra.mxu0 0.0
        %5424 = vmatprep.subr.mxu0 0.0
        %5425 = vmatpush1.xpose.msra.mxu0 0.0
        %5426 = vmatprep.subr.mxu0 0.0
        %5427 = vmatpush1.xpose.msra.mxu0 0.0
        %5428 = vmatprep.subr.mxu0 0.0
        %5429 = vmatpush1.xpose.msra.mxu0 0.0
        %5430 = vmatprep.subr.mxu0 0.0
        %5431 = vmatpush1.xpose.msra.mxu0 0.0
        %5432 = vmatprep.subr.mxu0 0.0
        %5433 = vmatpush1.xpose.msra.mxu0 0.0
        %5434 = vmatprep.subr.mxu0 0.0
        %5435 = vmatpush1.xpose.msra.mxu0 0.0
        %5436 = vmatprep.subr.mxu0 0.0
        %5437 = vmatpush1.xpose.msra.mxu0 0.0
        %5438 = vmatprep.subr.mxu0 0.0
        %5439 = vmatpush1.xpose.msra.mxu0 0.0
        %5440 = vmatprep.subr.mxu0 0.0
        %5441 = vmatpush1.xpose.msra.mxu0 0.0
        %5442 = vmatprep.subr.mxu0 0.0
        %5443 = vmatpush1.xpose.msra.mxu0 0.0
        %5444 = vmatprep.subr.mxu0 0.0
        %5445 = vmatpush1.xpose.msra.mxu0 0.0
        %5446 = vmatprep.subr.mxu0 0.0
        %5447 = vmatpush1.xpose.msra.mxu0 0.0
        %5448 = vmatprep.subr.mxu0 0.0
        %5449 = vmatpush1.xpose.msra.mxu0 0.0
        %5450 = vmatprep.subr.mxu0 0.0
        %5451 = vmatpush1.xpose.msra.mxu0 0.0
        %5452 = vmatprep.subr.mxu0 0.0
        %5453 = vmatpush1.xpose.msra.mxu0 0.0
        %5454 = vmatprep.subr.mxu0 0.0
        %5455 = vmatpush1.xpose.msra.mxu0 0.0
        %5456 = vmatprep.subr.mxu0 0.0
        %5457 = vmatpush1.xpose.msra.mxu0 0.0
        %5458 = vmatprep.subr.mxu0 0.0
        %5459 = vmatpush1.xpose.msra.mxu0 0.0
        %5460 = vmatprep.subr.mxu0 0.0
        %5461 = vmatpush1.xpose.msra.mxu0 0.0
        %5462 = vmatprep.subr.mxu0 0.0
        %5463 = vmatpush1.xpose.msra.mxu0 0.0
        %5464 = vmatprep.subr.mxu0 0.0
        %5465 = vmatpush1.xpose.msra.mxu0 0.0
        %5466 = vmatprep.mubr.f32.mxu0 0.0
        %5467 = vmatmul.mubr.f32.gmra.mrb[0].mxu0 %v5398
        %v5468 = vpop.f32.mrb[0].mxu0
        %v5469 = vadd.f32 0.0, %v5468
        %v5470 = vpop.f32.mrb[0].mxu0
        %5471 = vdwg.mxu0
        %v5472 = vsel %vm2864, %v5307, 0
        %v5474 = vsel %vm2864, %v5314, 0
        %5476 = vmatprep.subr.mxu0 0.0
        %5477 = vmatpush1.xpose.msra.mxu0 %v5474
        %5478 = vmatprep.subr.mxu0 0.0
        %5479 = vmatpush1.xpose.msra.mxu0 0.0
        %5480 = vmatprep.subr.mxu0 0.0
        %5481 = vmatpush1.xpose.msra.mxu0 0.0
        %5482 = vmatprep.subr.mxu0 0.0
        %5483 = vmatpush1.xpose.msra.mxu0 0.0
        %5484 = vmatprep.subr.mxu0 0.0
        %5485 = vmatpush1.xpose.msra.mxu0 0.0
        %5486 = vmatprep.subr.mxu0 0.0
        %5487 = vmatpush1.xpose.msra.mxu0 0.0
        %5488 = vmatprep.subr.mxu0 0.0
        %5489 = vmatpush1.xpose.msra.mxu0 0.0
        %5490 = vmatprep.subr.mxu0 0.0
        %5491 = vmatpush1.xpose.msra.mxu0 0.0
        %5492 = vmatprep.subr.mxu0 0.0
        %5493 = vmatpush1.xpose.msra.mxu0 0.0
        %5494 = vmatprep.subr.mxu0 0.0
        %5495 = vmatpush1.xpose.msra.mxu0 0.0
        %5496 = vmatprep.subr.mxu0 0.0
        %5497 = vmatpush1.xpose.msra.mxu0 0.0
        %5498 = vmatprep.subr.mxu0 0.0
        %5499 = vmatpush1.xpose.msra.mxu0 0.0
        %5500 = vmatprep.subr.mxu0 0.0
        %5501 = vmatpush1.xpose.msra.mxu0 0.0
        %5502 = vmatprep.subr.mxu0 0.0
        %5503 = vmatpush1.xpose.msra.mxu0 0.0
        %5504 = vmatprep.subr.mxu0 0.0
        %5505 = vmatpush1.xpose.msra.mxu0 0.0
        %5506 = vmatprep.subr.mxu0 0.0
        %5507 = vmatpush1.xpose.msra.mxu0 0.0
        %5508 = vmatprep.subr.mxu0 0.0
        %5509 = vmatpush1.xpose.msra.mxu0 0.0
        %5510 = vmatprep.subr.mxu0 0.0
        %5511 = vmatpush1.xpose.msra.mxu0 0.0
        %5512 = vmatprep.subr.mxu0 0.0
        %5513 = vmatpush1.xpose.msra.mxu0 0.0
        %5514 = vmatprep.subr.mxu0 0.0
        %5515 = vmatpush1.xpose.msra.mxu0 0.0
        %5516 = vmatprep.subr.mxu0 0.0
        %5517 = vmatpush1.xpose.msra.mxu0 0.0
        %5518 = vmatprep.subr.mxu0 0.0
        %5519 = vmatpush1.xpose.msra.mxu0 0.0
        %5520 = vmatprep.subr.mxu0 0.0
        %5521 = vmatpush1.xpose.msra.mxu0 0.0
        %5522 = vmatprep.subr.mxu0 0.0
        %5523 = vmatpush1.xpose.msra.mxu0 0.0
        %5524 = vmatprep.subr.mxu0 0.0
        %5525 = vmatpush1.xpose.msra.mxu0 0.0
        %5526 = vmatprep.subr.mxu0 0.0
        %5527 = vmatpush1.xpose.msra.mxu0 0.0
        %5528 = vmatprep.subr.mxu0 0.0
        %5529 = vmatpush1.xpose.msra.mxu0 0.0
        %5530 = vmatprep.subr.mxu0 0.0
        %5531 = vmatpush1.xpose.msra.mxu0 0.0
        %5532 = vmatprep.subr.mxu0 0.0
        %5533 = vmatpush1.xpose.msra.mxu0 0.0
        %5534 = vmatprep.subr.mxu0 0.0
        %5535 = vmatpush1.xpose.msra.mxu0 0.0
        %5536 = vmatprep.subr.mxu0 0.0
        %5537 = vmatpush1.xpose.msra.mxu0 0.0
        %5538 = vmatprep.subr.mxu0 0.0
        %5539 = vmatpush1.xpose.msra.mxu0 0.0
        %5540 = vmatprep.mubr.f32.mxu0 0.0
        %5541 = vmatmul.mubr.f32.gmra.mrb[0].mxu0 %v5472
        %v5542 = vpop.f32.mrb[0].mxu0
        %v5543 = vadd.f32 0.0, %v5542
        %v5544 = vpop.f32.mrb[0].mxu0
        %5545 = vdwg.mxu0
        %v5546 = vsel %vm2864, %v5309, 0
        %v5548 = vsel %vm2864, %v5316, 0
        %5550 = vmatprep.subr.mxu0 0.0
        %5551 = vmatpush1.xpose.msra.mxu0 %v5548
        %5552 = vmatprep.subr.mxu0 0.0
        %5553 = vmatpush1.xpose.msra.mxu0 0.0
        %5554 = vmatprep.subr.mxu0 0.0
        %5555 = vmatpush1.xpose.msra.mxu0 0.0
        %5556 = vmatprep.subr.mxu0 0.0
        %5557 = vmatpush1.xpose.msra.mxu0 0.0
        %5558 = vmatprep.subr.mxu0 0.0
        %5559 = vmatpush1.xpose.msra.mxu0 0.0
        %5560 = vmatprep.subr.mxu0 0.0
        %5561 = vmatpush1.xpose.msra.mxu0 0.0
        %5562 = vmatprep.subr.mxu0 0.0
        %5563 = vmatpush1.xpose.msra.mxu0 0.0
        %5564 = vmatprep.subr.mxu0 0.0
        %5565 = vmatpush1.xpose.msra.mxu0 0.0
        %5566 = vmatprep.subr.mxu0 0.0
        %5567 = vmatpush1.xpose.msra.mxu0 0.0
        %5568 = vmatprep.subr.mxu0 0.0
        %5569 = vmatpush1.xpose.msra.mxu0 0.0
        %5570 = vmatprep.subr.mxu0 0.0
        %5571 = vmatpush1.xpose.msra.mxu0 0.0
        %5572 = vmatprep.subr.mxu0 0.0
        %5573 = vmatpush1.xpose.msra.mxu0 0.0
        %5574 = vmatprep.subr.mxu0 0.0
        %5575 = vmatpush1.xpose.msra.mxu0 0.0
        %5576 = vmatprep.subr.mxu0 0.0
        %5577 = vmatpush1.xpose.msra.mxu0 0.0
        %5578 = vmatprep.subr.mxu0 0.0
        %5579 = vmatpush1.xpose.msra.mxu0 0.0
        %5580 = vmatprep.subr.mxu0 0.0
        %5581 = vmatpush1.xpose.msra.mxu0 0.0
        %5582 = vmatprep.subr.mxu0 0.0
        %5583 = vmatpush1.xpose.msra.mxu0 0.0
        %5584 = vmatprep.subr.mxu0 0.0
        %5585 = vmatpush1.xpose.msra.mxu0 0.0
        %5586 = vmatprep.subr.mxu0 0.0
        %5587 = vmatpush1.xpose.msra.mxu0 0.0
        %5588 = vmatprep.subr.mxu0 0.0
        %5589 = vmatpush1.xpose.msra.mxu0 0.0
        %5590 = vmatprep.subr.mxu0 0.0
        %5591 = vmatpush1.xpose.msra.mxu0 0.0
        %5592 = vmatprep.subr.mxu0 0.0
        %5593 = vmatpush1.xpose.msra.mxu0 0.0
        %5594 = vmatprep.subr.mxu0 0.0
        %5595 = vmatpush1.xpose.msra.mxu0 0.0
        %5596 = vmatprep.subr.mxu0 0.0
        %5597 = vmatpush1.xpose.msra.mxu0 0.0
        %5598 = vmatprep.subr.mxu0 0.0
        %5599 = vmatpush1.xpose.msra.mxu0 0.0
        %5600 = vmatprep.subr.mxu0 0.0
        %5601 = vmatpush1.xpose.msra.mxu0 0.0
        %5602 = vmatprep.subr.mxu0 0.0
        %5603 = vmatpush1.xpose.msra.mxu0 0.0
        %5604 = vmatprep.subr.mxu0 0.0
        %5605 = vmatpush1.xpose.msra.mxu0 0.0
        %5606 = vmatprep.subr.mxu0 0.0
        %5607 = vmatpush1.xpose.msra.mxu0 0.0
        %5608 = vmatprep.subr.mxu0 0.0
        %5609 = vmatpush1.xpose.msra.mxu0 0.0
        %5610 = vmatprep.subr.mxu0 0.0
        %5611 = vmatpush1.xpose.msra.mxu0 0.0
        %5612 = vmatprep.subr.mxu0 0.0
        %5613 = vmatpush1.xpose.msra.mxu0 0.0
        %5614 = vmatprep.mubr.f32.mxu0 0.0
        %5615 = vmatmul.mubr.f32.gmra.mrb[0].mxu0 %v5546
        %v5616 = vpop.f32.mrb[0].mxu0
        %v5617 = vadd.f32 0.0, %v5616
        %v5618 = vpop.f32.mrb[0].mxu0
        %5619 = vdwg.mxu0
        %v5620 = vmul.f32 %v5395, 0.17677669
        %v5621 = vmul.f32 %v5469, 0.17677669
        %v5622 = vmul.f32 %v5543, 0.17677669
        %v5623 = vmul.f32 %v5617, 0.17677669
        %v5624 = vsel %vm3563, %v5620, -inf
        %5625 = vmax.xlane.f32.xlu0 %v5624
        %v5626 = vpop.xlane.xlu0 %5625
        %v5627 = vsel %vm3563, %v5621, -inf
        %5628 = vmax.xlane.f32.xlu0 %v5627
        %v5629 = vpop.xlane.xlu0 %5628
        %v5630 = vsel %vm3563, %v5622, -inf
        %5631 = vmax.xlane.f32.xlu0 %v5630
        %v5632 = vpop.xlane.xlu0 %5631
        %v5633 = vsel %vm3563, %v5623, -inf
        %5634 = vmax.xlane.f32.xlu0 %v5633
        %v5635 = vpop.xlane.xlu0 %5634
        %v5636 = vsub.f32 %v5620, %v5626
        %v5637 = vsub.f32 %v5621, %v5629
        %v5638 = vsub.f32 %v5622, %v5632
        %v5639 = vsub.f32 %v5623, %v5635
        %v5640 = vmul.f32 %v5636, 1.442695
        %v5641 = vpow.pop %v5640
        %v5642 = vmul.f32 %v5637, 1.442695
        %v5643 = vpow.pop %v5642
        %v5644 = vmul.f32 %v5638, 1.442695
        %v5645 = vpow.pop %v5644
        %v5646 = vmul.f32 %v5639, 1.442695
        %v5647 = vpow.pop %v5646
        %v5648 = vsel %vm3563, %v5641, 0.0
        %5649 = vadd.xlane.f32.xlu0 %v5648
        %v5650 = vpop.xlane.xlu0 %5649
        %v5651 = vsel %vm3563, %v5643, 0.0
        %5652 = vadd.xlane.f32.xlu0 %v5651
        %v5653 = vpop.xlane.xlu0 %5652
        %v5654 = vsel %vm3563, %v5645, 0.0
        %5655 = vadd.xlane.f32.xlu0 %v5654
        %v5656 = vpop.xlane.xlu0 %5655
        %v5657 = vsel %vm3563, %v5647, 0.0
        %5658 = vadd.xlane.f32.xlu0 %v5657
        %v5659 = vpop.xlane.xlu0 %5658
        %v5660 = vrcp.pop %v5650
        %v5661 = vrcp.pop %v5653
        %v5662 = vrcp.pop %v5656
        %v5663 = vrcp.pop %v5659
        %v5664 = vmul.f32 %v5641, %v5660
        %v5665 = vmul.f32 %v5643, %v5661
        %v5666 = vmul.f32 %v5645, %v5662
        %v5667 = vmul.f32 %v5647, %v5663
        %v5669 = vsel %vm3608, %v5664, 0
        %v5671 = vsel %vm2057, %v5300, 0
        %5673 = vmatprep.subr.mxu0 0.0
        %5674 = vmatpush1.msra.mxu0 %v5671
        %5675 = vmatprep.subr.mxu0 0.0
        %5676 = vmatpush1.msra.mxu0 0.0
        %5677 = vmatprep.subr.mxu0 0.0
        %5678 = vmatpush1.msra.mxu0 0.0
        %5679 = vmatprep.subr.mxu0 0.0
        %5680 = vmatpush1.msra.mxu0 0.0
        %5681 = vmatprep.subr.mxu0 0.0
        %5682 = vmatpush1.msra.mxu0 0.0
        %5683 = vmatprep.subr.mxu0 0.0
        %5684 = vmatpush1.msra.mxu0 0.0
        %5685 = vmatprep.subr.mxu0 0.0
        %5686 = vmatpush1.msra.mxu0 0.0
        %5687 = vmatprep.subr.mxu0 0.0
        %5688 = vmatpush1.msra.mxu0 0.0
        %5689 = vmatprep.subr.mxu0 0.0
        %5690 = vmatpush1.msra.mxu0 0.0
        %5691 = vmatprep.subr.mxu0 0.0
        %5692 = vmatpush1.msra.mxu0 0.0
        %5693 = vmatprep.subr.mxu0 0.0
        %5694 = vmatpush1.msra.mxu0 0.0
        %5695 = vmatprep.subr.mxu0 0.0
        %5696 = vmatpush1.msra.mxu0 0.0
        %5697 = vmatprep.subr.mxu0 0.0
        %5698 = vmatpush1.msra.mxu0 0.0
        %5699 = vmatprep.subr.mxu0 0.0
        %5700 = vmatpush1.msra.mxu0 0.0
        %5701 = vmatprep.subr.mxu0 0.0
        %5702 = vmatpush1.msra.mxu0 0.0
        %5703 = vmatprep.subr.mxu0 0.0
        %5704 = vmatpush1.msra.mxu0 0.0
        %5705 = vmatprep.subr.mxu0 0.0
        %5706 = vmatpush1.msra.mxu0 0.0
        %5707 = vmatprep.subr.mxu0 0.0
        %5708 = vmatpush1.msra.mxu0 0.0
        %5709 = vmatprep.subr.mxu0 0.0
        %5710 = vmatpush1.msra.mxu0 0.0
        %5711 = vmatprep.subr.mxu0 0.0
        %5712 = vmatpush1.msra.mxu0 0.0
        %5713 = vmatprep.subr.mxu0 0.0
        %5714 = vmatpush1.msra.mxu0 0.0
        %5715 = vmatprep.subr.mxu0 0.0
        %5716 = vmatpush1.msra.mxu0 0.0
        %5717 = vmatprep.subr.mxu0 0.0
        %5718 = vmatpush1.msra.mxu0 0.0
        %5719 = vmatprep.subr.mxu0 0.0
        %5720 = vmatpush1.msra.mxu0 0.0
        %5721 = vmatprep.subr.mxu0 0.0
        %5722 = vmatpush1.msra.mxu0 0.0
        %5723 = vmatprep.subr.mxu0 0.0
        %5724 = vmatpush1.msra.mxu0 0.0
        %5725 = vmatprep.subr.mxu0 0.0
        %5726 = vmatpush1.msra.mxu0 0.0
        %5727 = vmatprep.subr.mxu0 0.0
        %5728 = vmatpush1.msra.mxu0 0.0
        %5729 = vmatprep.subr.mxu0 0.0
        %5730 = vmatpush1.msra.mxu0 0.0
        %5731 = vmatprep.subr.mxu0 0.0
        %5732 = vmatpush1.msra.mxu0 0.0
        %5733 = vmatprep.subr.mxu0 0.0
        %5734 = vmatpush1.msra.mxu0 0.0
        %5735 = vmatprep.subr.mxu0 0.0
        %5736 = vmatpush1.msra.mxu0 0.0
        %5737 = vmatprep.mubr.f32.mxu0 0.0
        %5738 = vmatmul.mubr.f32.gmra.mrb[0].mxu0 %v5669
        %v5739 = vpop.f32.mrb[0].mxu0
        %v5740 = vadd.f32 0.0, %v5739
        %v5741 = vpop.f32.mrb[0].mxu0
        %5742 = vdwg.mxu0
        %v5744 = vsel %vm3608, %v5665, 0
        %v5746 = vsel %vm2057, %v5319, 0
        %5748 = vmatprep.subr.mxu0 0.0
        %5749 = vmatpush1.msra.mxu0 %v5746
        %5750 = vmatprep.subr.mxu0 0.0
        %5751 = vmatpush1.msra.mxu0 0.0
        %5752 = vmatprep.subr.mxu0 0.0
        %5753 = vmatpush1.msra.mxu0 0.0
        %5754 = vmatprep.subr.mxu0 0.0
        %5755 = vmatpush1.msra.mxu0 0.0
        %5756 = vmatprep.subr.mxu0 0.0
        %5757 = vmatpush1.msra.mxu0 0.0
        %5758 = vmatprep.subr.mxu0 0.0
        %5759 = vmatpush1.msra.mxu0 0.0
        %5760 = vmatprep.subr.mxu0 0.0
        %5761 = vmatpush1.msra.mxu0 0.0
        %5762 = vmatprep.subr.mxu0 0.0
        %5763 = vmatpush1.msra.mxu0 0.0
        %5764 = vmatprep.subr.mxu0 0.0
        %5765 = vmatpush1.msra.mxu0 0.0
        %5766 = vmatprep.subr.mxu0 0.0
        %5767 = vmatpush1.msra.mxu0 0.0
        %5768 = vmatprep.subr.mxu0 0.0
        %5769 = vmatpush1.msra.mxu0 0.0
        %5770 = vmatprep.subr.mxu0 0.0
        %5771 = vmatpush1.msra.mxu0 0.0
        %5772 = vmatprep.subr.mxu0 0.0
        %5773 = vmatpush1.msra.mxu0 0.0
        %5774 = vmatprep.subr.mxu0 0.0
        %5775 = vmatpush1.msra.mxu0 0.0
        %5776 = vmatprep.subr.mxu0 0.0
        %5777 = vmatpush1.msra.mxu0 0.0
        %5778 = vmatprep.subr.mxu0 0.0
        %5779 = vmatpush1.msra.mxu0 0.0
        %5780 = vmatprep.subr.mxu0 0.0
        %5781 = vmatpush1.msra.mxu0 0.0
        %5782 = vmatprep.subr.mxu0 0.0
        %5783 = vmatpush1.msra.mxu0 0.0
        %5784 = vmatprep.subr.mxu0 0.0
        %5785 = vmatpush1.msra.mxu0 0.0
        %5786 = vmatprep.subr.mxu0 0.0
        %5787 = vmatpush1.msra.mxu0 0.0
        %5788 = vmatprep.subr.mxu0 0.0
        %5789 = vmatpush1.msra.mxu0 0.0
        %5790 = vmatprep.subr.mxu0 0.0
        %5791 = vmatpush1.msra.mxu0 0.0
        %5792 = vmatprep.subr.mxu0 0.0
        %5793 = vmatpush1.msra.mxu0 0.0
        %5794 = vmatprep.subr.mxu0 0.0
        %5795 = vmatpush1.msra.mxu0 0.0
        %5796 = vmatprep.subr.mxu0 0.0
        %5797 = vmatpush1.msra.mxu0 0.0
        %5798 = vmatprep.subr.mxu0 0.0
        %5799 = vmatpush1.msra.mxu0 0.0
        %5800 = vmatprep.subr.mxu0 0.0
        %5801 = vmatpush1.msra.mxu0 0.0
        %5802 = vmatprep.subr.mxu0 0.0
        %5803 = vmatpush1.msra.mxu0 0.0
        %5804 = vmatprep.subr.mxu0 0.0
        %5805 = vmatpush1.msra.mxu0 0.0
        %5806 = vmatprep.subr.mxu0 0.0
        %5807 = vmatpush1.msra.mxu0 0.0
        %5808 = vmatprep.subr.mxu0 0.0
        %5809 = vmatpush1.msra.mxu0 0.0
        %5810 = vmatprep.subr.mxu0 0.0
        %5811 = vmatpush1.msra.mxu0 0.0
        %5812 = vmatprep.mubr.f32.mxu0 0.0
        %5813 = vmatmul.mubr.f32.gmra.mrb[0].mxu0 %v5744
        %v5814 = vpop.f32.mrb[0].mxu0
        %v5815 = vadd.f32 0.0, %v5814
        %v5816 = vpop.f32.mrb[0].mxu0
        %5817 = vdwg.mxu0
        %v5819 = vsel %vm3608, %v5666, 0
        %v5821 = vsel %vm2057, %v5321, 0
        %5823 = vmatprep.subr.mxu0 0.0
        %5824 = vmatpush1.msra.mxu0 %v5821
        %5825 = vmatprep.subr.mxu0 0.0
        %5826 = vmatpush1.msra.mxu0 0.0
        %5827 = vmatprep.subr.mxu0 0.0
        %5828 = vmatpush1.msra.mxu0 0.0
        %5829 = vmatprep.subr.mxu0 0.0
        %5830 = vmatpush1.msra.mxu0 0.0
        %5831 = vmatprep.subr.mxu0 0.0
        %5832 = vmatpush1.msra.mxu0 0.0
        %5833 = vmatprep.subr.mxu0 0.0
        %5834 = vmatpush1.msra.mxu0 0.0
        %5835 = vmatprep.subr.mxu0 0.0
        %5836 = vmatpush1.msra.mxu0 0.0
        %5837 = vmatprep.subr.mxu0 0.0
        %5838 = vmatpush1.msra.mxu0 0.0
        %5839 = vmatprep.subr.mxu0 0.0
        %5840 = vmatpush1.msra.mxu0 0.0
        %5841 = vmatprep.subr.mxu0 0.0
        %5842 = vmatpush1.msra.mxu0 0.0
        %5843 = vmatprep.subr.mxu0 0.0
        %5844 = vmatpush1.msra.mxu0 0.0
        %5845 = vmatprep.subr.mxu0 0.0
        %5846 = vmatpush1.msra.mxu0 0.0
        %5847 = vmatprep.subr.mxu0 0.0
        %5848 = vmatpush1.msra.mxu0 0.0
        %5849 = vmatprep.subr.mxu0 0.0
        %5850 = vmatpush1.msra.mxu0 0.0
        %5851 = vmatprep.subr.mxu0 0.0
        %5852 = vmatpush1.msra.mxu0 0.0
        %5853 = vmatprep.subr.mxu0 0.0
        %5854 = vmatpush1.msra.mxu0 0.0
        %5855 = vmatprep.subr.mxu0 0.0
        %5856 = vmatpush1.msra.mxu0 0.0
        %5857 = vmatprep.subr.mxu0 0.0
        %5858 = vmatpush1.msra.mxu0 0.0
        %5859 = vmatprep.subr.mxu0 0.0
        %5860 = vmatpush1.msra.mxu0 0.0
        %5861 = vmatprep.subr.mxu0 0.0
        %5862 = vmatpush1.msra.mxu0 0.0
        %5863 = vmatprep.subr.mxu0 0.0
        %5864 = vmatpush1.msra.mxu0 0.0
        %5865 = vmatprep.subr.mxu0 0.0
        %5866 = vmatpush1.msra.mxu0 0.0
        %5867 = vmatprep.subr.mxu0 0.0
        %5868 = vmatpush1.msra.mxu0 0.0
        %5869 = vmatprep.subr.mxu0 0.0
        %5870 = vmatpush1.msra.mxu0 0.0
        %5871 = vmatprep.subr.mxu0 0.0
        %5872 = vmatpush1.msra.mxu0 0.0
        %5873 = vmatprep.subr.mxu0 0.0
        %5874 = vmatpush1.msra.mxu0 0.0
        %5875 = vmatprep.subr.mxu0 0.0
        %5876 = vmatpush1.msra.mxu0 0.0
        %5877 = vmatprep.subr.mxu0 0.0
        %5878 = vmatpush1.msra.mxu0 0.0
        %5879 = vmatprep.subr.mxu0 0.0
        %5880 = vmatpush1.msra.mxu0 0.0
        %5881 = vmatprep.subr.mxu0 0.0
        %5882 = vmatpush1.msra.mxu0 0.0
        %5883 = vmatprep.subr.mxu0 0.0
        %5884 = vmatpush1.msra.mxu0 0.0
        %5885 = vmatprep.subr.mxu0 0.0
        %5886 = vmatpush1.msra.mxu0 0.0
        %5887 = vmatprep.mubr.f32.mxu0 0.0
        %5888 = vmatmul.mubr.f32.gmra.mrb[0].mxu0 %v5819
        %v5889 = vpop.f32.mrb[0].mxu0
        %v5890 = vadd.f32 0.0, %v5889
        %v5891 = vpop.f32.mrb[0].mxu0
        %5892 = vdwg.mxu0
        %v5894 = vsel %vm3608, %v5667, 0
        %v5896 = vsel %vm2057, %v5323, 0
        %5898 = vmatprep.subr.mxu0 0.0
        %5899 = vmatpush1.msra.mxu0 %v5896
        %5900 = vmatprep.subr.mxu0 0.0
        %5901 = vmatpush1.msra.mxu0 0.0
        %5902 = vmatprep.subr.mxu0 0.0
        %5903 = vmatpush1.msra.mxu0 0.0
        %5904 = vmatprep.subr.mxu0 0.0
        %5905 = vmatpush1.msra.mxu0 0.0
        %5906 = vmatprep.subr.mxu0 0.0
        %5907 = vmatpush1.msra.mxu0 0.0
        %5908 = vmatprep.subr.mxu0 0.0
        %5909 = vmatpush1.msra.mxu0 0.0
        %5910 = vmatprep.subr.mxu0 0.0
        %5911 = vmatpush1.msra.mxu0 0.0
        %5912 = vmatprep.subr.mxu0 0.0
        %5913 = vmatpush1.msra.mxu0 0.0
        %5914 = vmatprep.subr.mxu0 0.0
        %5915 = vmatpush1.msra.mxu0 0.0
        %5916 = vmatprep.subr.mxu0 0.0
        %5917 = vmatpush1.msra.mxu0 0.0
        %5918 = vmatprep.subr.mxu0 0.0
        %5919 = vmatpush1.msra.mxu0 0.0
        %5920 = vmatprep.subr.mxu0 0.0
        %5921 = vmatpush1.msra.mxu0 0.0
        %5922 = vmatprep.subr.mxu0 0.0
        %5923 = vmatpush1.msra.mxu0 0.0
        %5924 = vmatprep.subr.mxu0 0.0
        %5925 = vmatpush1.msra.mxu0 0.0
        %5926 = vmatprep.subr.mxu0 0.0
        %5927 = vmatpush1.msra.mxu0 0.0
        %5928 = vmatprep.subr.mxu0 0.0
        %5929 = vmatpush1.msra.mxu0 0.0
        %5930 = vmatprep.subr.mxu0 0.0
        %5931 = vmatpush1.msra.mxu0 0.0
        %5932 = vmatprep.subr.mxu0 0.0
        %5933 = vmatpush1.msra.mxu0 0.0
        %5934 = vmatprep.subr.mxu0 0.0
        %5935 = vmatpush1.msra.mxu0 0.0
        %5936 = vmatprep.subr.mxu0 0.0
        %5937 = vmatpush1.msra.mxu0 0.0
        %5938 = vmatprep.subr.mxu0 0.0
        %5939 = vmatpush1.msra.mxu0 0.0
        %5940 = vmatprep.subr.mxu0 0.0
        %5941 = vmatpush1.msra.mxu0 0.0
        %5942 = vmatprep.subr.mxu0 0.0
        %5943 = vmatpush1.msra.mxu0 0.0
        %5944 = vmatprep.subr.mxu0 0.0
        %5945 = vmatpush1.msra.mxu0 0.0
        %5946 = vmatprep.subr.mxu0 0.0
        %5947 = vmatpush1.msra.mxu0 0.0
        %5948 = vmatprep.subr.mxu0 0.0
        %5949 = vmatpush1.msra.mxu0 0.0
        %5950 = vmatprep.subr.mxu0 0.0
        %5951 = vmatpush1.msra.mxu0 0.0
        %5952 = vmatprep.subr.mxu0 0.0
        %5953 = vmatpush1.msra.mxu0 0.0
        %5954 = vmatprep.subr.mxu0 0.0
        %5955 = vmatpush1.msra.mxu0 0.0
        %5956 = vmatprep.subr.mxu0 0.0
        %5957 = vmatpush1.msra.mxu0 0.0
        %5958 = vmatprep.subr.mxu0 0.0
        %5959 = vmatpush1.msra.mxu0 0.0
        %5960 = vmatprep.subr.mxu0 0.0
        %5961 = vmatpush1.msra.mxu0 0.0
        %5962 = vmatprep.mubr.f32.mxu0 0.0
        %5963 = vmatmul.mubr.f32.gmra.mrb[0].mxu0 %v5894
        %v5964 = vpop.f32.mrb[0].mxu0
        %v5965 = vadd.f32 0.0, %v5964
        %v5966 = vpop.f32.mrb[0].mxu0
        %5967 = vdwg.mxu0
        %5969 = vrot.lane.b32.xlu0 %v5815, 32
        %v5970 = vpop.permute.xlu0 %5969
        %5973 = vrot.lane.b32.xlu0 %v5890, 64
        %v5974 = vpop.permute.xlu0 %5973
        %5977 = vrot.lane.b32.xlu0 %v5965, 96
        %v5978 = vpop.permute.xlu0 %5977
        %v5980 = vsel %vm2864, %v5740, %v5970
        %v5981 = vsel %vm2872, %v5980, %v5974
        %v5982 = vsel %vm2880, %v5981, %v5978
        %5983 = vmatprep.subr.mxu0 0.0
        %5984 = vmatpush1.msra.mxu0 %v5077
        %5985 = vmatprep.subr.mxu0 0.0
        %5986 = vmatpush1.msra.mxu0 %v5078
        %5987 = vmatprep.subr.mxu0 0.0
        %5988 = vmatpush1.msra.mxu0 %v5079
        %5989 = vmatprep.subr.mxu0 0.0
        %5990 = vmatpush1.msra.mxu0 %v5080
        %5991 = vmatprep.subr.mxu0 0.0
        %5992 = vmatpush1.msra.mxu0 %v5081
        %5993 = vmatprep.subr.mxu0 0.0
        %5994 = vmatpush1.msra.mxu0 %v5082
        %5995 = vmatprep.subr.mxu0 0.0
        %5996 = vmatpush1.msra.mxu0 %v5083
        %5997 = vmatprep.subr.mxu0 0.0
        %5998 = vmatpush1.msra.mxu0 %v5084
        %5999 = vmatprep.subr.mxu0 0.0
        %6000 = vmatpush1.msra.mxu0 %v5085
        %6001 = vmatprep.subr.mxu0 0.0
        %6002 = vmatpush1.msra.mxu0 %v5086
        %6003 = vmatprep.subr.mxu0 0.0
        %6004 = vmatpush1.msra.mxu0 %v5087
        %6005 = vmatprep.subr.mxu0 0.0
        %6006 = vmatpush1.msra.mxu0 %v5088
        %6007 = vmatprep.subr.mxu0 0.0
        %6008 = vmatpush1.msra.mxu0 %v5089
        %6009 = vmatprep.subr.mxu0 0.0
        %6010 = vmatpush1.msra.mxu0 %v5090
        %6011 = vmatprep.subr.mxu0 0.0
        %6012 = vmatpush1.msra.mxu0 %v5091
        %6013 = vmatprep.subr.mxu0 0.0
        %6014 = vmatpush1.msra.mxu0 %v5092
        %6015 = vmatprep.subr.mxu0 0.0
        %6016 = vmatpush1.msra.mxu0 0.0
        %6017 = vmatprep.subr.mxu0 0.0
        %6018 = vmatpush1.msra.mxu0 0.0
        %6019 = vmatprep.subr.mxu0 0.0
        %6020 = vmatpush1.msra.mxu0 0.0
        %6021 = vmatprep.subr.mxu0 0.0
        %6022 = vmatpush1.msra.mxu0 0.0
        %6023 = vmatprep.subr.mxu0 0.0
        %6024 = vmatpush1.msra.mxu0 0.0
        %6025 = vmatprep.subr.mxu0 0.0
        %6026 = vmatpush1.msra.mxu0 0.0
        %6027 = vmatprep.subr.mxu0 0.0
        %6028 = vmatpush1.msra.mxu0 0.0
        %6029 = vmatprep.subr.mxu0 0.0
        %6030 = vmatpush1.msra.mxu0 0.0
        %6031 = vmatprep.subr.mxu0 0.0
        %6032 = vmatpush1.msra.mxu0 0.0
        %6033 = vmatprep.subr.mxu0 0.0
        %6034 = vmatpush1.msra.mxu0 0.0
        %6035 = vmatprep.subr.mxu0 0.0
        %6036 = vmatpush1.msra.mxu0 0.0
        %6037 = vmatprep.subr.mxu0 0.0
        %6038 = vmatpush1.msra.mxu0 0.0
        %6039 = vmatprep.subr.mxu0 0.0
        %6040 = vmatpush1.msra.mxu0 0.0
        %6041 = vmatprep.subr.mxu0 0.0
        %6042 = vmatpush1.msra.mxu0 0.0
        %6043 = vmatprep.subr.mxu0 0.0
        %6044 = vmatpush1.msra.mxu0 0.0
        %6045 = vmatprep.subr.mxu0 0.0
        %6046 = vmatpush1.msra.mxu0 0.0
        %6047 = vmatprep.mubr.f32.mxu0 0.0
        %6048 = vmatmul.mubr.f32.gmra.mrb[0].mxu0 %v5982
        %v6049 = vpop.f32.mrb[0].mxu0
        %v6050 = vadd.f32 0.0, %v6049
        %v6051 = vpop.f32.mrb[0].mxu0
        %6052 = vdwg.mxu0
        %s6053 = scalar_lea.vmem [#allocation11], 384
        %v6054 = vld [vmem:[%s6053] sm:$0xff]
        %v6055 = vld [vmem:[%s6053 + $0x8] sm:$0xff]
        %v6056 = vld [vmem:[%s6053 + $0x10] sm:$0xff]
        %v6057 = vld [vmem:[%s6053 + $0x18] sm:$0xff]
        %v6058 = vld [vmem:[%s6053 + $0x20] sm:$0xff]
        %v6059 = vld [vmem:[%s6053 + $0x28] sm:$0xff]
        %v6060 = vld [vmem:[%s6053 + $0x30] sm:$0xff]
        %v6061 = vld [vmem:[%s6053 + $0x38] sm:$0xff]
        %v6062 = vld [vmem:[%s6053 + $0x40] sm:$0xff]
        %v6063 = vld [vmem:[%s6053 + $0x48] sm:$0xff]
        %v6064 = vld [vmem:[%s6053 + $0x50] sm:$0xff]
        %v6065 = vld [vmem:[%s6053 + $0x58] sm:$0xff]
        %v6066 = vld [vmem:[%s6053 + $0x60] sm:$0xff]
        %v6067 = vld [vmem:[%s6053 + $0x68] sm:$0xff]
        %v6068 = vld [vmem:[%s6053 + $0x70] sm:$0xff]
        %v6069 = vld [vmem:[%s6053 + $0x78] sm:$0xff]
        %s6070 = scalar_lea.vmem [#allocation13], 384
        %v6071 = vld [vmem:[%s6070] sm:$0xff]
        %v6072 = vld [vmem:[%s6070 + $0x8] sm:$0xff]
        %v6073 = vld [vmem:[%s6070 + $0x10] sm:$0xff]
        %v6074 = vld [vmem:[%s6070 + $0x18] sm:$0xff]
        %v6075 = vld [vmem:[%s6070 + $0x20] sm:$0xff]
        %v6076 = vld [vmem:[%s6070 + $0x28] sm:$0xff]
        %v6077 = vld [vmem:[%s6070 + $0x30] sm:$0xff]
        %v6078 = vld [vmem:[%s6070 + $0x38] sm:$0xff]
        %v6079 = vld [vmem:[%s6070 + $0x40] sm:$0xff]
        %v6080 = vld [vmem:[%s6070 + $0x48] sm:$0xff]
        %v6081 = vld [vmem:[%s6070 + $0x50] sm:$0xff]
        %v6082 = vld [vmem:[%s6070 + $0x58] sm:$0xff]
        %v6083 = vld [vmem:[%s6070 + $0x60] sm:$0xff]
        %v6084 = vld [vmem:[%s6070 + $0x68] sm:$0xff]
        %v6085 = vld [vmem:[%s6070 + $0x70] sm:$0xff]
        %v6086 = vld [vmem:[%s6070 + $0x78] sm:$0xff]
        %s6087 = scalar_lea.vmem [#allocation14], 384
        %v6088 = vld [vmem:[%s6087] sm:$0xff]
        %v6089 = vld [vmem:[%s6087 + $0x8] sm:$0xff]
        %v6090 = vld [vmem:[%s6087 + $0x10] sm:$0xff]
        %v6091 = vld [vmem:[%s6087 + $0x18] sm:$0xff]
        %v6092 = vld [vmem:[%s6087 + $0x20] sm:$0xff]
        %v6093 = vld [vmem:[%s6087 + $0x28] sm:$0xff]
        %v6094 = vld [vmem:[%s6087 + $0x30] sm:$0xff]
        %v6095 = vld [vmem:[%s6087 + $0x38] sm:$0xff]
        %v6096 = vld [vmem:[%s6087 + $0x40] sm:$0xff]
        %v6097 = vld [vmem:[%s6087 + $0x48] sm:$0xff]
        %v6098 = vld [vmem:[%s6087 + $0x50] sm:$0xff]
        %v6099 = vld [vmem:[%s6087 + $0x58] sm:$0xff]
        %v6100 = vld [vmem:[%s6087 + $0x60] sm:$0xff]
        %v6101 = vld [vmem:[%s6087 + $0x68] sm:$0xff]
        %v6102 = vld [vmem:[%s6087 + $0x70] sm:$0xff]
        %v6103 = vld [vmem:[%s6087 + $0x78] sm:$0xff]
        %s6104 = scalar_lea.vmem [#allocation16], 384
        %v6105 = vld [vmem:[%s6104] sm:$0xff]
        %v6106 = vld [vmem:[%s6104 + $0x8] sm:$0xff]
        %v6107 = vld [vmem:[%s6104 + $0x10] sm:$0xff]
        %v6108 = vld [vmem:[%s6104 + $0x18] sm:$0xff]
        %v6109 = vld [vmem:[%s6104 + $0x20] sm:$0xff]
        %v6110 = vld [vmem:[%s6104 + $0x28] sm:$0xff]
        %v6111 = vld [vmem:[%s6104 + $0x30] sm:$0xff]
        %v6112 = vld [vmem:[%s6104 + $0x38] sm:$0xff]
        %v6113 = vld [vmem:[%s6104 + $0x40] sm:$0xff]
        %v6114 = vld [vmem:[%s6104 + $0x48] sm:$0xff]
        %v6115 = vld [vmem:[%s6104 + $0x50] sm:$0xff]
        %v6116 = vld [vmem:[%s6104 + $0x58] sm:$0xff]
        %v6117 = vld [vmem:[%s6104 + $0x60] sm:$0xff]
        %v6118 = vld [vmem:[%s6104 + $0x68] sm:$0xff]
        %v6119 = vld [vmem:[%s6104 + $0x70] sm:$0xff]
        %v6120 = vld [vmem:[%s6104 + $0x78] sm:$0xff]
        %v6122 = vrot.slane %v549, 4
        %6124 = vmatprep.subr.mxu0 0.0
        %6125 = vmatpush1.msra.mxu0 %v6054
        %6126 = vmatprep.subr.mxu0 0.0
        %6127 = vmatpush1.msra.mxu0 %v6055
        %6128 = vmatprep.subr.mxu0 0.0
        %6129 = vmatpush1.msra.mxu0 %v6056
        %6130 = vmatprep.subr.mxu0 0.0
        %6131 = vmatpush1.msra.mxu0 %v6057
        %6132 = vmatprep.subr.mxu0 0.0
        %6133 = vmatpush1.msra.mxu0 %v6058
        %6134 = vmatprep.subr.mxu0 0.0
        %6135 = vmatpush1.msra.mxu0 %v6059
        %6136 = vmatprep.subr.mxu0 0.0
        %6137 = vmatpush1.msra.mxu0 %v6060
        %6138 = vmatprep.subr.mxu0 0.0
        %6139 = vmatpush1.msra.mxu0 %v6061
        %6140 = vmatprep.subr.mxu0 0.0
        %6141 = vmatpush1.msra.mxu0 %v6062
        %6142 = vmatprep.subr.mxu0 0.0
        %6143 = vmatpush1.msra.mxu0 %v6063
        %6144 = vmatprep.subr.mxu0 0.0
        %6145 = vmatpush1.msra.mxu0 %v6064
        %6146 = vmatprep.subr.mxu0 0.0
        %6147 = vmatpush1.msra.mxu0 %v6065
        %6148 = vmatprep.subr.mxu0 0.0
        %6149 = vmatpush1.msra.mxu0 %v6066
        %6150 = vmatprep.subr.mxu0 0.0
        %6151 = vmatpush1.msra.mxu0 %v6067
        %6152 = vmatprep.subr.mxu0 0.0
        %6153 = vmatpush1.msra.mxu0 %v6068
        %6154 = vmatprep.subr.mxu0 0.0
        %6155 = vmatpush1.msra.mxu0 %v6069
        %6156 = vmatprep.subr.mxu0 0.0
        %6157 = vmatpush1.msra.mxu0 0.0
        %6158 = vmatprep.subr.mxu0 0.0
        %6159 = vmatpush1.msra.mxu0 0.0
        %6160 = vmatprep.subr.mxu0 0.0
        %6161 = vmatpush1.msra.mxu0 0.0
        %6162 = vmatprep.subr.mxu0 0.0
        %6163 = vmatpush1.msra.mxu0 0.0
        %6164 = vmatprep.subr.mxu0 0.0
        %6165 = vmatpush1.msra.mxu0 0.0
        %6166 = vmatprep.subr.mxu0 0.0
        %6167 = vmatpush1.msra.mxu0 0.0
        %6168 = vmatprep.subr.mxu0 0.0
        %6169 = vmatpush1.msra.mxu0 0.0
        %6170 = vmatprep.subr.mxu0 0.0
        %6171 = vmatpush1.msra.mxu0 0.0
        %6172 = vmatprep.subr.mxu0 0.0
        %6173 = vmatpush1.msra.mxu0 0.0
        %6174 = vmatprep.subr.mxu0 0.0
        %6175 = vmatpush1.msra.mxu0 0.0
        %6176 = vmatprep.subr.mxu0 0.0
        %6177 = vmatpush1.msra.mxu0 0.0
        %6178 = vmatprep.subr.mxu0 0.0
        %6179 = vmatpush1.msra.mxu0 0.0
        %6180 = vmatprep.subr.mxu0 0.0
        %6181 = vmatpush1.msra.mxu0 0.0
        %6182 = vmatprep.subr.mxu0 0.0
        %6183 = vmatpush1.msra.mxu0 0.0
        %6184 = vmatprep.subr.mxu0 0.0
        %6185 = vmatpush1.msra.mxu0 0.0
        %6186 = vmatprep.subr.mxu0 0.0
        %6187 = vmatpush1.msra.mxu0 0.0
        %6188 = vmatprep.mubr.f32.mxu0 0.0
        %6189 = vmatmul.mubr.f32.gmra.mrb[0].mxu0 %v6122
        %v6190 = vpop.f32.mrb[0].mxu0
        %v6191 = vadd.f32 0.0, %v6190
        %v6192 = vpop.f32.mrb[0].mxu0
        %6193 = vdwg.mxu0
        %6194 = vmatprep.subr.mxu0 0.0
        %6195 = vmatpush1.msra.mxu0 %v6071
        %6196 = vmatprep.subr.mxu0 0.0
        %6197 = vmatpush1.msra.mxu0 %v6072
        %6198 = vmatprep.subr.mxu0 0.0
        %6199 = vmatpush1.msra.mxu0 %v6073
        %6200 = vmatprep.subr.mxu0 0.0
        %6201 = vmatpush1.msra.mxu0 %v6074
        %6202 = vmatprep.subr.mxu0 0.0
        %6203 = vmatpush1.msra.mxu0 %v6075
        %6204 = vmatprep.subr.mxu0 0.0
        %6205 = vmatpush1.msra.mxu0 %v6076
        %6206 = vmatprep.subr.mxu0 0.0
        %6207 = vmatpush1.msra.mxu0 %v6077
        %6208 = vmatprep.subr.mxu0 0.0
        %6209 = vmatpush1.msra.mxu0 %v6078
        %6210 = vmatprep.subr.mxu0 0.0
        %6211 = vmatpush1.msra.mxu0 %v6079
        %6212 = vmatprep.subr.mxu0 0.0
        %6213 = vmatpush1.msra.mxu0 %v6080
        %6214 = vmatprep.subr.mxu0 0.0
        %6215 = vmatpush1.msra.mxu0 %v6081
        %6216 = vmatprep.subr.mxu0 0.0
        %6217 = vmatpush1.msra.mxu0 %v6082
        %6218 = vmatprep.subr.mxu0 0.0
        %6219 = vmatpush1.msra.mxu0 %v6083
        %6220 = vmatprep.subr.mxu0 0.0
        %6221 = vmatpush1.msra.mxu0 %v6084
        %6222 = vmatprep.subr.mxu0 0.0
        %6223 = vmatpush1.msra.mxu0 %v6085
        %6224 = vmatprep.subr.mxu0 0.0
        %6225 = vmatpush1.msra.mxu0 %v6086
        %6226 = vmatprep.subr.mxu0 0.0
        %6227 = vmatpush1.msra.mxu0 0.0
        %6228 = vmatprep.subr.mxu0 0.0
        %6229 = vmatpush1.msra.mxu0 0.0
        %6230 = vmatprep.subr.mxu0 0.0
        %6231 = vmatpush1.msra.mxu0 0.0
        %6232 = vmatprep.subr.mxu0 0.0
        %6233 = vmatpush1.msra.mxu0 0.0
        %6234 = vmatprep.subr.mxu0 0.0
        %6235 = vmatpush1.msra.mxu0 0.0
        %6236 = vmatprep.subr.mxu0 0.0
        %6237 = vmatpush1.msra.mxu0 0.0
        %6238 = vmatprep.subr.mxu0 0.0
        %6239 = vmatpush1.msra.mxu0 0.0
        %6240 = vmatprep.subr.mxu0 0.0
        %6241 = vmatpush1.msra.mxu0 0.0
        %6242 = vmatprep.subr.mxu0 0.0
        %6243 = vmatpush1.msra.mxu0 0.0
        %6244 = vmatprep.subr.mxu0 0.0
        %6245 = vmatpush1.msra.mxu0 0.0
        %6246 = vmatprep.subr.mxu0 0.0
        %6247 = vmatpush1.msra.mxu0 0.0
        %6248 = vmatprep.subr.mxu0 0.0
        %6249 = vmatpush1.msra.mxu0 0.0
        %6250 = vmatprep.subr.mxu0 0.0
        %6251 = vmatpush1.msra.mxu0 0.0
        %6252 = vmatprep.subr.mxu0 0.0
        %6253 = vmatpush1.msra.mxu0 0.0
        %6254 = vmatprep.subr.mxu0 0.0
        %6255 = vmatpush1.msra.mxu0 0.0
        %6256 = vmatprep.subr.mxu0 0.0
        %6257 = vmatpush1.msra.mxu0 0.0
        %6258 = vmatprep.mubr.f32.mxu0 0.0
        %6259 = vmatmul.mubr.f32.gmra.mrb[0].mxu0 %v6122
        %v6260 = vpop.f32.mrb[0].mxu0
        %v6261 = vadd.f32 0.0, %v6260
        %v6262 = vpop.f32.mrb[0].mxu0
        %6263 = vdwg.mxu0
        %6264 = vmatprep.subr.mxu0 0.0
        %6265 = vmatpush1.msra.mxu0 %v6088
        %6266 = vmatprep.subr.mxu0 0.0
        %6267 = vmatpush1.msra.mxu0 %v6089
        %6268 = vmatprep.subr.mxu0 0.0
        %6269 = vmatpush1.msra.mxu0 %v6090
        %6270 = vmatprep.subr.mxu0 0.0
        %6271 = vmatpush1.msra.mxu0 %v6091
        %6272 = vmatprep.subr.mxu0 0.0
        %6273 = vmatpush1.msra.mxu0 %v6092
        %6274 = vmatprep.subr.mxu0 0.0
        %6275 = vmatpush1.msra.mxu0 %v6093
        %6276 = vmatprep.subr.mxu0 0.0
        %6277 = vmatpush1.msra.mxu0 %v6094
        %6278 = vmatprep.subr.mxu0 0.0
        %6279 = vmatpush1.msra.mxu0 %v6095
        %6280 = vmatprep.subr.mxu0 0.0
        %6281 = vmatpush1.msra.mxu0 %v6096
        %6282 = vmatprep.subr.mxu0 0.0
        %6283 = vmatpush1.msra.mxu0 %v6097
        %6284 = vmatprep.subr.mxu0 0.0
        %6285 = vmatpush1.msra.mxu0 %v6098
        %6286 = vmatprep.subr.mxu0 0.0
        %6287 = vmatpush1.msra.mxu0 %v6099
        %6288 = vmatprep.subr.mxu0 0.0
        %6289 = vmatpush1.msra.mxu0 %v6100
        %6290 = vmatprep.subr.mxu0 0.0
        %6291 = vmatpush1.msra.mxu0 %v6101
        %6292 = vmatprep.subr.mxu0 0.0
        %6293 = vmatpush1.msra.mxu0 %v6102
        %6294 = vmatprep.subr.mxu0 0.0
        %6295 = vmatpush1.msra.mxu0 %v6103
        %6296 = vmatprep.subr.mxu0 0.0
        %6297 = vmatpush1.msra.mxu0 0.0
        %6298 = vmatprep.subr.mxu0 0.0
        %6299 = vmatpush1.msra.mxu0 0.0
        %6300 = vmatprep.subr.mxu0 0.0
        %6301 = vmatpush1.msra.mxu0 0.0
        %6302 = vmatprep.subr.mxu0 0.0
        %6303 = vmatpush1.msra.mxu0 0.0
        %6304 = vmatprep.subr.mxu0 0.0
        %6305 = vmatpush1.msra.mxu0 0.0
        %6306 = vmatprep.subr.mxu0 0.0
        %6307 = vmatpush1.msra.mxu0 0.0
        %6308 = vmatprep.subr.mxu0 0.0
        %6309 = vmatpush1.msra.mxu0 0.0
        %6310 = vmatprep.subr.mxu0 0.0
        %6311 = vmatpush1.msra.mxu0 0.0
        %6312 = vmatprep.subr.mxu0 0.0
        %6313 = vmatpush1.msra.mxu0 0.0
        %6314 = vmatprep.subr.mxu0 0.0
        %6315 = vmatpush1.msra.mxu0 0.0
        %6316 = vmatprep.subr.mxu0 0.0
        %6317 = vmatpush1.msra.mxu0 0.0
        %6318 = vmatprep.subr.mxu0 0.0
        %6319 = vmatpush1.msra.mxu0 0.0
        %6320 = vmatprep.subr.mxu0 0.0
        %6321 = vmatpush1.msra.mxu0 0.0
        %6322 = vmatprep.subr.mxu0 0.0
        %6323 = vmatpush1.msra.mxu0 0.0
        %6324 = vmatprep.subr.mxu0 0.0
        %6325 = vmatpush1.msra.mxu0 0.0
        %6326 = vmatprep.subr.mxu0 0.0
        %6327 = vmatpush1.msra.mxu0 0.0
        %6328 = vmatprep.mubr.f32.mxu0 0.0
        %6329 = vmatmul.mubr.f32.gmra.mrb[0].mxu0 %v6122
        %v6330 = vpop.f32.mrb[0].mxu0
        %v6331 = vadd.f32 0.0, %v6330
        %v6332 = vpop.f32.mrb[0].mxu0
        %6333 = vdwg.mxu0
        %6335 = vrot.lane.b32.xlu0 %v6191, 96
        %v6336 = vpop.permute.xlu0 %6335
        %6337 = vrot.lane.b32.xlu0 %v6191, 64
        %v6338 = vpop.permute.xlu0 %6337
        %6339 = vrot.lane.b32.xlu0 %v6191, 32
        %v6340 = vpop.permute.xlu0 %6339
        %6342 = vrot.lane.b32.xlu0 %v6261, 96
        %v6343 = vpop.permute.xlu0 %6342
        %6344 = vrot.lane.b32.xlu0 %v6261, 64
        %v6345 = vpop.permute.xlu0 %6344
        %6346 = vrot.lane.b32.xlu0 %v6261, 32
        %v6347 = vpop.permute.xlu0 %6346
        %6349 = vrot.lane.b32.xlu0 %v6331, 96
        %v6350 = vpop.permute.xlu0 %6349
        %6351 = vrot.lane.b32.xlu0 %v6331, 64
        %v6352 = vpop.permute.xlu0 %6351
        %6353 = vrot.lane.b32.xlu0 %v6331, 32
        %v6354 = vpop.permute.xlu0 %6353
        %v6355 = vsel %vm2864, %v6191, 0
        %v6357 = vsel %vm2864, %v6261, 0
        %6359 = vmatprep.subr.mxu0 0.0
        %6360 = vmatpush1.xpose.msra.mxu0 %v6357
        %6361 = vmatprep.subr.mxu0 0.0
        %6362 = vmatpush1.xpose.msra.mxu0 0.0
        %6363 = vmatprep.subr.mxu0 0.0
        %6364 = vmatpush1.xpose.msra.mxu0 0.0
        %6365 = vmatprep.subr.mxu0 0.0
        %6366 = vmatpush1.xpose.msra.mxu0 0.0
        %6367 = vmatprep.subr.mxu0 0.0
        %6368 = vmatpush1.xpose.msra.mxu0 0.0
        %6369 = vmatprep.subr.mxu0 0.0
        %6370 = vmatpush1.xpose.msra.mxu0 0.0
        %6371 = vmatprep.subr.mxu0 0.0
        %6372 = vmatpush1.xpose.msra.mxu0 0.0
        %6373 = vmatprep.subr.mxu0 0.0
        %6374 = vmatpush1.xpose.msra.mxu0 0.0
        %6375 = vmatprep.subr.mxu0 0.0
        %6376 = vmatpush1.xpose.msra.mxu0 0.0
        %6377 = vmatprep.subr.mxu0 0.0
        %6378 = vmatpush1.xpose.msra.mxu0 0.0
        %6379 = vmatprep.subr.mxu0 0.0
        %6380 = vmatpush1.xpose.msra.mxu0 0.0
        %6381 = vmatprep.subr.mxu0 0.0
        %6382 = vmatpush1.xpose.msra.mxu0 0.0
        %6383 = vmatprep.subr.mxu0 0.0
        %6384 = vmatpush1.xpose.msra.mxu0 0.0
        %6385 = vmatprep.subr.mxu0 0.0
        %6386 = vmatpush1.xpose.msra.mxu0 0.0
        %6387 = vmatprep.subr.mxu0 0.0
        %6388 = vmatpush1.xpose.msra.mxu0 0.0
        %6389 = vmatprep.subr.mxu0 0.0
        %6390 = vmatpush1.xpose.msra.mxu0 0.0
        %6391 = vmatprep.subr.mxu0 0.0
        %6392 = vmatpush1.xpose.msra.mxu0 0.0
        %6393 = vmatprep.subr.mxu0 0.0
        %6394 = vmatpush1.xpose.msra.mxu0 0.0
        %6395 = vmatprep.subr.mxu0 0.0
        %6396 = vmatpush1.xpose.msra.mxu0 0.0
        %6397 = vmatprep.subr.mxu0 0.0
        %6398 = vmatpush1.xpose.msra.mxu0 0.0
        %6399 = vmatprep.subr.mxu0 0.0
        %6400 = vmatpush1.xpose.msra.mxu0 0.0
        %6401 = vmatprep.subr.mxu0 0.0
        %6402 = vmatpush1.xpose.msra.mxu0 0.0
        %6403 = vmatprep.subr.mxu0 0.0
        %6404 = vmatpush1.xpose.msra.mxu0 0.0
        %6405 = vmatprep.subr.mxu0 0.0
        %6406 = vmatpush1.xpose.msra.mxu0 0.0
        %6407 = vmatprep.subr.mxu0 0.0
        %6408 = vmatpush1.xpose.msra.mxu0 0.0
        %6409 = vmatprep.subr.mxu0 0.0
        %6410 = vmatpush1.xpose.msra.mxu0 0.0
        %6411 = vmatprep.subr.mxu0 0.0
        %6412 = vmatpush1.xpose.msra.mxu0 0.0
        %6413 = vmatprep.subr.mxu0 0.0
        %6414 = vmatpush1.xpose.msra.mxu0 0.0
        %6415 = vmatprep.subr.mxu0 0.0
        %6416 = vmatpush1.xpose.msra.mxu0 0.0
        %6417 = vmatprep.subr.mxu0 0.0
        %6418 = vmatpush1.xpose.msra.mxu0 0.0
        %6419 = vmatprep.subr.mxu0 0.0
        %6420 = vmatpush1.xpose.msra.mxu0 0.0
        %6421 = vmatprep.subr.mxu0 0.0
        %6422 = vmatpush1.xpose.msra.mxu0 0.0
        %6423 = vmatprep.mubr.f32.mxu0 0.0
        %6424 = vmatmul.mubr.f32.gmra.mrb[0].mxu0 %v6355
        %v6425 = vpop.f32.mrb[0].mxu0
        %v6426 = vadd.f32 0.0, %v6425
        %v6427 = vpop.f32.mrb[0].mxu0
        %6428 = vdwg.mxu0
        %v6429 = vsel %vm2864, %v6336, 0
        %v6431 = vsel %vm2864, %v6343, 0
        %6433 = vmatprep.subr.mxu0 0.0
        %6434 = vmatpush1.xpose.msra.mxu0 %v6431
        %6435 = vmatprep.subr.mxu0 0.0
        %6436 = vmatpush1.xpose.msra.mxu0 0.0
        %6437 = vmatprep.subr.mxu0 0.0
        %6438 = vmatpush1.xpose.msra.mxu0 0.0
        %6439 = vmatprep.subr.mxu0 0.0
        %6440 = vmatpush1.xpose.msra.mxu0 0.0
        %6441 = vmatprep.subr.mxu0 0.0
        %6442 = vmatpush1.xpose.msra.mxu0 0.0
        %6443 = vmatprep.subr.mxu0 0.0
        %6444 = vmatpush1.xpose.msra.mxu0 0.0
        %6445 = vmatprep.subr.mxu0 0.0
        %6446 = vmatpush1.xpose.msra.mxu0 0.0
        %6447 = vmatprep.subr.mxu0 0.0
        %6448 = vmatpush1.xpose.msra.mxu0 0.0
        %6449 = vmatprep.subr.mxu0 0.0
        %6450 = vmatpush1.xpose.msra.mxu0 0.0
        %6451 = vmatprep.subr.mxu0 0.0
        %6452 = vmatpush1.xpose.msra.mxu0 0.0
        %6453 = vmatprep.subr.mxu0 0.0
        %6454 = vmatpush1.xpose.msra.mxu0 0.0
        %6455 = vmatprep.subr.mxu0 0.0
        %6456 = vmatpush1.xpose.msra.mxu0 0.0
        %6457 = vmatprep.subr.mxu0 0.0
        %6458 = vmatpush1.xpose.msra.mxu0 0.0
        %6459 = vmatprep.subr.mxu0 0.0
        %6460 = vmatpush1.xpose.msra.mxu0 0.0
        %6461 = vmatprep.subr.mxu0 0.0
        %6462 = vmatpush1.xpose.msra.mxu0 0.0
        %6463 = vmatprep.subr.mxu0 0.0
        %6464 = vmatpush1.xpose.msra.mxu0 0.0
        %6465 = vmatprep.subr.mxu0 0.0
        %6466 = vmatpush1.xpose.msra.mxu0 0.0
        %6467 = vmatprep.subr.mxu0 0.0
        %6468 = vmatpush1.xpose.msra.mxu0 0.0
        %6469 = vmatprep.subr.mxu0 0.0
        %6470 = vmatpush1.xpose.msra.mxu0 0.0
        %6471 = vmatprep.subr.mxu0 0.0
        %6472 = vmatpush1.xpose.msra.mxu0 0.0
        %6473 = vmatprep.subr.mxu0 0.0
        %6474 = vmatpush1.xpose.msra.mxu0 0.0
        %6475 = vmatprep.subr.mxu0 0.0
        %6476 = vmatpush1.xpose.msra.mxu0 0.0
        %6477 = vmatprep.subr.mxu0 0.0
        %6478 = vmatpush1.xpose.msra.mxu0 0.0
        %6479 = vmatprep.subr.mxu0 0.0
        %6480 = vmatpush1.xpose.msra.mxu0 0.0
        %6481 = vmatprep.subr.mxu0 0.0
        %6482 = vmatpush1.xpose.msra.mxu0 0.0
        %6483 = vmatprep.subr.mxu0 0.0
        %6484 = vmatpush1.xpose.msra.mxu0 0.0
        %6485 = vmatprep.subr.mxu0 0.0
        %6486 = vmatpush1.xpose.msra.mxu0 0.0
        %6487 = vmatprep.subr.mxu0 0.0
        %6488 = vmatpush1.xpose.msra.mxu0 0.0
        %6489 = vmatprep.subr.mxu0 0.0
        %6490 = vmatpush1.xpose.msra.mxu0 0.0
        %6491 = vmatprep.subr.mxu0 0.0
        %6492 = vmatpush1.xpose.msra.mxu0 0.0
        %6493 = vmatprep.subr.mxu0 0.0
        %6494 = vmatpush1.xpose.msra.mxu0 0.0
        %6495 = vmatprep.subr.mxu0 0.0
        %6496 = vmatpush1.xpose.msra.mxu0 0.0
        %6497 = vmatprep.mubr.f32.mxu0 0.0
        %6498 = vmatmul.mubr.f32.gmra.mrb[0].mxu0 %v6429
        %v6499 = vpop.f32.mrb[0].mxu0
        %v6500 = vadd.f32 0.0, %v6499
        %v6501 = vpop.f32.mrb[0].mxu0
        %6502 = vdwg.mxu0
        %v6503 = vsel %vm2864, %v6338, 0
        %v6505 = vsel %vm2864, %v6345, 0
        %6507 = vmatprep.subr.mxu0 0.0
        %6508 = vmatpush1.xpose.msra.mxu0 %v6505
        %6509 = vmatprep.subr.mxu0 0.0
        %6510 = vmatpush1.xpose.msra.mxu0 0.0
        %6511 = vmatprep.subr.mxu0 0.0
        %6512 = vmatpush1.xpose.msra.mxu0 0.0
        %6513 = vmatprep.subr.mxu0 0.0
        %6514 = vmatpush1.xpose.msra.mxu0 0.0
        %6515 = vmatprep.subr.mxu0 0.0
        %6516 = vmatpush1.xpose.msra.mxu0 0.0
        %6517 = vmatprep.subr.mxu0 0.0
        %6518 = vmatpush1.xpose.msra.mxu0 0.0
        %6519 = vmatprep.subr.mxu0 0.0
        %6520 = vmatpush1.xpose.msra.mxu0 0.0
        %6521 = vmatprep.subr.mxu0 0.0
        %6522 = vmatpush1.xpose.msra.mxu0 0.0
        %6523 = vmatprep.subr.mxu0 0.0
        %6524 = vmatpush1.xpose.msra.mxu0 0.0
        %6525 = vmatprep.subr.mxu0 0.0
        %6526 = vmatpush1.xpose.msra.mxu0 0.0
        %6527 = vmatprep.subr.mxu0 0.0
        %6528 = vmatpush1.xpose.msra.mxu0 0.0
        %6529 = vmatprep.subr.mxu0 0.0
        %6530 = vmatpush1.xpose.msra.mxu0 0.0
        %6531 = vmatprep.subr.mxu0 0.0
        %6532 = vmatpush1.xpose.msra.mxu0 0.0
        %6533 = vmatprep.subr.mxu0 0.0
        %6534 = vmatpush1.xpose.msra.mxu0 0.0
        %6535 = vmatprep.subr.mxu0 0.0
        %6536 = vmatpush1.xpose.msra.mxu0 0.0
        %6537 = vmatprep.subr.mxu0 0.0
        %6538 = vmatpush1.xpose.msra.mxu0 0.0
        %6539 = vmatprep.subr.mxu0 0.0
        %6540 = vmatpush1.xpose.msra.mxu0 0.0
        %6541 = vmatprep.subr.mxu0 0.0
        %6542 = vmatpush1.xpose.msra.mxu0 0.0
        %6543 = vmatprep.subr.mxu0 0.0
        %6544 = vmatpush1.xpose.msra.mxu0 0.0
        %6545 = vmatprep.subr.mxu0 0.0
        %6546 = vmatpush1.xpose.msra.mxu0 0.0
        %6547 = vmatprep.subr.mxu0 0.0
        %6548 = vmatpush1.xpose.msra.mxu0 0.0
        %6549 = vmatprep.subr.mxu0 0.0
        %6550 = vmatpush1.xpose.msra.mxu0 0.0
        %6551 = vmatprep.subr.mxu0 0.0
        %6552 = vmatpush1.xpose.msra.mxu0 0.0
        %6553 = vmatprep.subr.mxu0 0.0
        %6554 = vmatpush1.xpose.msra.mxu0 0.0
        %6555 = vmatprep.subr.mxu0 0.0
        %6556 = vmatpush1.xpose.msra.mxu0 0.0
        %6557 = vmatprep.subr.mxu0 0.0
        %6558 = vmatpush1.xpose.msra.mxu0 0.0
        %6559 = vmatprep.subr.mxu0 0.0
        %6560 = vmatpush1.xpose.msra.mxu0 0.0
        %6561 = vmatprep.subr.mxu0 0.0
        %6562 = vmatpush1.xpose.msra.mxu0 0.0
        %6563 = vmatprep.subr.mxu0 0.0
        %6564 = vmatpush1.xpose.msra.mxu0 0.0
        %6565 = vmatprep.subr.mxu0 0.0
        %6566 = vmatpush1.xpose.msra.mxu0 0.0
        %6567 = vmatprep.subr.mxu0 0.0
        %6568 = vmatpush1.xpose.msra.mxu0 0.0
        %6569 = vmatprep.subr.mxu0 0.0
        %6570 = vmatpush1.xpose.msra.mxu0 0.0
        %6571 = vmatprep.mubr.f32.mxu0 0.0
        %6572 = vmatmul.mubr.f32.gmra.mrb[0].mxu0 %v6503
        %v6573 = vpop.f32.mrb[0].mxu0
        %v6574 = vadd.f32 0.0, %v6573
        %v6575 = vpop.f32.mrb[0].mxu0
        %6576 = vdwg.mxu0
        %v6577 = vsel %vm2864, %v6340, 0
        %v6579 = vsel %vm2864, %v6347, 0
        %6581 = vmatprep.subr.mxu0 0.0
        %6582 = vmatpush1.xpose.msra.mxu0 %v6579
        %6583 = vmatprep.subr.mxu0 0.0
        %6584 = vmatpush1.xpose.msra.mxu0 0.0
        %6585 = vmatprep.subr.mxu0 0.0
        %6586 = vmatpush1.xpose.msra.mxu0 0.0
        %6587 = vmatprep.subr.mxu0 0.0
        %6588 = vmatpush1.xpose.msra.mxu0 0.0
        %6589 = vmatprep.subr.mxu0 0.0
        %6590 = vmatpush1.xpose.msra.mxu0 0.0
        %6591 = vmatprep.subr.mxu0 0.0
        %6592 = vmatpush1.xpose.msra.mxu0 0.0
        %6593 = vmatprep.subr.mxu0 0.0
        %6594 = vmatpush1.xpose.msra.mxu0 0.0
        %6595 = vmatprep.subr.mxu0 0.0
        %6596 = vmatpush1.xpose.msra.mxu0 0.0
        %6597 = vmatprep.subr.mxu0 0.0
        %6598 = vmatpush1.xpose.msra.mxu0 0.0
        %6599 = vmatprep.subr.mxu0 0.0
        %6600 = vmatpush1.xpose.msra.mxu0 0.0
        %6601 = vmatprep.subr.mxu0 0.0
        %6602 = vmatpush1.xpose.msra.mxu0 0.0
        %6603 = vmatprep.subr.mxu0 0.0
        %6604 = vmatpush1.xpose.msra.mxu0 0.0
        %6605 = vmatprep.subr.mxu0 0.0
        %6606 = vmatpush1.xpose.msra.mxu0 0.0
        %6607 = vmatprep.subr.mxu0 0.0
        %6608 = vmatpush1.xpose.msra.mxu0 0.0
        %6609 = vmatprep.subr.mxu0 0.0
        %6610 = vmatpush1.xpose.msra.mxu0 0.0
        %6611 = vmatprep.subr.mxu0 0.0
        %6612 = vmatpush1.xpose.msra.mxu0 0.0
        %6613 = vmatprep.subr.mxu0 0.0
        %6614 = vmatpush1.xpose.msra.mxu0 0.0
        %6615 = vmatprep.subr.mxu0 0.0
        %6616 = vmatpush1.xpose.msra.mxu0 0.0
        %6617 = vmatprep.subr.mxu0 0.0
        %6618 = vmatpush1.xpose.msra.mxu0 0.0
        %6619 = vmatprep.subr.mxu0 0.0
        %6620 = vmatpush1.xpose.msra.mxu0 0.0
        %6621 = vmatprep.subr.mxu0 0.0
        %6622 = vmatpush1.xpose.msra.mxu0 0.0
        %6623 = vmatprep.subr.mxu0 0.0
        %6624 = vmatpush1.xpose.msra.mxu0 0.0
        %6625 = vmatprep.subr.mxu0 0.0
        %6626 = vmatpush1.xpose.msra.mxu0 0.0
        %6627 = vmatprep.subr.mxu0 0.0
        %6628 = vmatpush1.xpose.msra.mxu0 0.0
        %6629 = vmatprep.subr.mxu0 0.0
        %6630 = vmatpush1.xpose.msra.mxu0 0.0
        %6631 = vmatprep.subr.mxu0 0.0
        %6632 = vmatpush1.xpose.msra.mxu0 0.0
        %6633 = vmatprep.subr.mxu0 0.0
        %6634 = vmatpush1.xpose.msra.mxu0 0.0
        %6635 = vmatprep.subr.mxu0 0.0
        %6636 = vmatpush1.xpose.msra.mxu0 0.0
        %6637 = vmatprep.subr.mxu0 0.0
        %6638 = vmatpush1.xpose.msra.mxu0 0.0
        %6639 = vmatprep.subr.mxu0 0.0
        %6640 = vmatpush1.xpose.msra.mxu0 0.0
        %6641 = vmatprep.subr.mxu0 0.0
        %6642 = vmatpush1.xpose.msra.mxu0 0.0
        %6643 = vmatprep.subr.mxu0 0.0
        %6644 = vmatpush1.xpose.msra.mxu0 0.0
        %6645 = vmatprep.mubr.f32.mxu0 0.0
        %6646 = vmatmul.mubr.f32.gmra.mrb[0].mxu0 %v6577
        %v6647 = vpop.f32.mrb[0].mxu0
        %v6648 = vadd.f32 0.0, %v6647
        %v6649 = vpop.f32.mrb[0].mxu0
        %6650 = vdwg.mxu0
        %v6651 = vmul.f32 %v6426, 0.17677669
        %v6652 = vmul.f32 %v6500, 0.17677669
        %v6653 = vmul.f32 %v6574, 0.17677669
        %v6654 = vmul.f32 %v6648, 0.17677669
        %v6655 = vsel %vm3563, %v6651, -inf
        %6656 = vmax.xlane.f32.xlu0 %v6655
        %v6657 = vpop.xlane.xlu0 %6656
        %v6658 = vsel %vm3563, %v6652, -inf
        %6659 = vmax.xlane.f32.xlu0 %v6658
        %v6660 = vpop.xlane.xlu0 %6659
        %v6661 = vsel %vm3563, %v6653, -inf
        %6662 = vmax.xlane.f32.xlu0 %v6661
        %v6663 = vpop.xlane.xlu0 %6662
        %v6664 = vsel %vm3563, %v6654, -inf
        %6665 = vmax.xlane.f32.xlu0 %v6664
        %v6666 = vpop.xlane.xlu0 %6665
        %v6667 = vsub.f32 %v6651, %v6657
        %v6668 = vsub.f32 %v6652, %v6660
        %v6669 = vsub.f32 %v6653, %v6663
        %v6670 = vsub.f32 %v6654, %v6666
        %v6671 = vmul.f32 %v6667, 1.442695
        %v6672 = vpow.pop %v6671
        %v6673 = vmul.f32 %v6668, 1.442695
        %v6674 = vpow.pop %v6673
        %v6675 = vmul.f32 %v6669, 1.442695
        %v6676 = vpow.pop %v6675
        %v6677 = vmul.f32 %v6670, 1.442695
        %v6678 = vpow.pop %v6677
        %v6679 = vsel %vm3563, %v6672, 0.0
        %6680 = vadd.xlane.f32.xlu0 %v6679
        %v6681 = vpop.xlane.xlu0 %6680
        %v6682 = vsel %vm3563, %v6674, 0.0
        %6683 = vadd.xlane.f32.xlu0 %v6682
        %v6684 = vpop.xlane.xlu0 %6683
        %v6685 = vsel %vm3563, %v6676, 0.0
        %6686 = vadd.xlane.f32.xlu0 %v6685
        %v6687 = vpop.xlane.xlu0 %6686
        %v6688 = vsel %vm3563, %v6678, 0.0
        %6689 = vadd.xlane.f32.xlu0 %v6688
        %v6690 = vpop.xlane.xlu0 %6689
        %v6691 = vrcp.pop %v6681
        %v6692 = vrcp.pop %v6684
        %v6693 = vrcp.pop %v6687
        %v6694 = vrcp.pop %v6690
        %v6695 = vmul.f32 %v6672, %v6691
        %v6696 = vmul.f32 %v6674, %v6692
        %v6697 = vmul.f32 %v6676, %v6693
        %v6698 = vmul.f32 %v6678, %v6694
        %v6700 = vsel %vm3608, %v6695, 0
        %v6702 = vsel %vm2057, %v6331, 0
        %6704 = vmatprep.subr.mxu0 0.0
        %6705 = vmatpush1.msra.mxu0 %v6702
        %6706 = vmatprep.subr.mxu0 0.0
        %6707 = vmatpush1.msra.mxu0 0.0
        %6708 = vmatprep.subr.mxu0 0.0
        %6709 = vmatpush1.msra.mxu0 0.0
        %6710 = vmatprep.subr.mxu0 0.0
        %6711 = vmatpush1.msra.mxu0 0.0
        %6712 = vmatprep.subr.mxu0 0.0
        %6713 = vmatpush1.msra.mxu0 0.0
        %6714 = vmatprep.subr.mxu0 0.0
        %6715 = vmatpush1.msra.mxu0 0.0
        %6716 = vmatprep.subr.mxu0 0.0
        %6717 = vmatpush1.msra.mxu0 0.0
        %6718 = vmatprep.subr.mxu0 0.0
        %6719 = vmatpush1.msra.mxu0 0.0
        %6720 = vmatprep.subr.mxu0 0.0
        %6721 = vmatpush1.msra.mxu0 0.0
        %6722 = vmatprep.subr.mxu0 0.0
        %6723 = vmatpush1.msra.mxu0 0.0
        %6724 = vmatprep.subr.mxu0 0.0
        %6725 = vmatpush1.msra.mxu0 0.0
        %6726 = vmatprep.subr.mxu0 0.0
        %6727 = vmatpush1.msra.mxu0 0.0
        %6728 = vmatprep.subr.mxu0 0.0
        %6729 = vmatpush1.msra.mxu0 0.0
        %6730 = vmatprep.subr.mxu0 0.0
        %6731 = vmatpush1.msra.mxu0 0.0
        %6732 = vmatprep.subr.mxu0 0.0
        %6733 = vmatpush1.msra.mxu0 0.0
        %6734 = vmatprep.subr.mxu0 0.0
        %6735 = vmatpush1.msra.mxu0 0.0
        %6736 = vmatprep.subr.mxu0 0.0
        %6737 = vmatpush1.msra.mxu0 0.0
        %6738 = vmatprep.subr.mxu0 0.0
        %6739 = vmatpush1.msra.mxu0 0.0
        %6740 = vmatprep.subr.mxu0 0.0
        %6741 = vmatpush1.msra.mxu0 0.0
        %6742 = vmatprep.subr.mxu0 0.0
        %6743 = vmatpush1.msra.mxu0 0.0
        %6744 = vmatprep.subr.mxu0 0.0
        %6745 = vmatpush1.msra.mxu0 0.0
        %6746 = vmatprep.subr.mxu0 0.0
        %6747 = vmatpush1.msra.mxu0 0.0
        %6748 = vmatprep.subr.mxu0 0.0
        %6749 = vmatpush1.msra.mxu0 0.0
        %6750 = vmatprep.subr.mxu0 0.0
        %6751 = vmatpush1.msra.mxu0 0.0
        %6752 = vmatprep.subr.mxu0 0.0
        %6753 = vmatpush1.msra.mxu0 0.0
        %6754 = vmatprep.subr.mxu0 0.0
        %6755 = vmatpush1.msra.mxu0 0.0
        %6756 = vmatprep.subr.mxu0 0.0
        %6757 = vmatpush1.msra.mxu0 0.0
        %6758 = vmatprep.subr.mxu0 0.0
        %6759 = vmatpush1.msra.mxu0 0.0
        %6760 = vmatprep.subr.mxu0 0.0
        %6761 = vmatpush1.msra.mxu0 0.0
        %6762 = vmatprep.subr.mxu0 0.0
        %6763 = vmatpush1.msra.mxu0 0.0
        %6764 = vmatprep.subr.mxu0 0.0
        %6765 = vmatpush1.msra.mxu0 0.0
        %6766 = vmatprep.subr.mxu0 0.0
        %6767 = vmatpush1.msra.mxu0 0.0
        %6768 = vmatprep.mubr.f32.mxu0 0.0
        %6769 = vmatmul.mubr.f32.gmra.mrb[0].mxu0 %v6700
        %v6770 = vpop.f32.mrb[0].mxu0
        %v6771 = vadd.f32 0.0, %v6770
        %v6772 = vpop.f32.mrb[0].mxu0
        %6773 = vdwg.mxu0
        %v6775 = vsel %vm3608, %v6696, 0
        %v6777 = vsel %vm2057, %v6350, 0
        %6779 = vmatprep.subr.mxu0 0.0
        %6780 = vmatpush1.msra.mxu0 %v6777
        %6781 = vmatprep.subr.mxu0 0.0
        %6782 = vmatpush1.msra.mxu0 0.0
        %6783 = vmatprep.subr.mxu0 0.0
        %6784 = vmatpush1.msra.mxu0 0.0
        %6785 = vmatprep.subr.mxu0 0.0
        %6786 = vmatpush1.msra.mxu0 0.0
        %6787 = vmatprep.subr.mxu0 0.0
        %6788 = vmatpush1.msra.mxu0 0.0
        %6789 = vmatprep.subr.mxu0 0.0
        %6790 = vmatpush1.msra.mxu0 0.0
        %6791 = vmatprep.subr.mxu0 0.0
        %6792 = vmatpush1.msra.mxu0 0.0
        %6793 = vmatprep.subr.mxu0 0.0
        %6794 = vmatpush1.msra.mxu0 0.0
        %6795 = vmatprep.subr.mxu0 0.0
        %6796 = vmatpush1.msra.mxu0 0.0
        %6797 = vmatprep.subr.mxu0 0.0
        %6798 = vmatpush1.msra.mxu0 0.0
        %6799 = vmatprep.subr.mxu0 0.0
        %6800 = vmatpush1.msra.mxu0 0.0
        %6801 = vmatprep.subr.mxu0 0.0
        %6802 = vmatpush1.msra.mxu0 0.0
        %6803 = vmatprep.subr.mxu0 0.0
        %6804 = vmatpush1.msra.mxu0 0.0
        %6805 = vmatprep.subr.mxu0 0.0
        %6806 = vmatpush1.msra.mxu0 0.0
        %6807 = vmatprep.subr.mxu0 0.0
        %6808 = vmatpush1.msra.mxu0 0.0
        %6809 = vmatprep.subr.mxu0 0.0
        %6810 = vmatpush1.msra.mxu0 0.0
        %6811 = vmatprep.subr.mxu0 0.0
        %6812 = vmatpush1.msra.mxu0 0.0
        %6813 = vmatprep.subr.mxu0 0.0
        %6814 = vmatpush1.msra.mxu0 0.0
        %6815 = vmatprep.subr.mxu0 0.0
        %6816 = vmatpush1.msra.mxu0 0.0
        %6817 = vmatprep.subr.mxu0 0.0
        %6818 = vmatpush1.msra.mxu0 0.0
        %6819 = vmatprep.subr.mxu0 0.0
        %6820 = vmatpush1.msra.mxu0 0.0
        %6821 = vmatprep.subr.mxu0 0.0
        %6822 = vmatpush1.msra.mxu0 0.0
        %6823 = vmatprep.subr.mxu0 0.0
        %6824 = vmatpush1.msra.mxu0 0.0
        %6825 = vmatprep.subr.mxu0 0.0
        %6826 = vmatpush1.msra.mxu0 0.0
        %6827 = vmatprep.subr.mxu0 0.0
        %6828 = vmatpush1.msra.mxu0 0.0
        %6829 = vmatprep.subr.mxu0 0.0
        %6830 = vmatpush1.msra.mxu0 0.0
        %6831 = vmatprep.subr.mxu0 0.0
        %6832 = vmatpush1.msra.mxu0 0.0
        %6833 = vmatprep.subr.mxu0 0.0
        %6834 = vmatpush1.msra.mxu0 0.0
        %6835 = vmatprep.subr.mxu0 0.0
        %6836 = vmatpush1.msra.mxu0 0.0
        %6837 = vmatprep.subr.mxu0 0.0
        %6838 = vmatpush1.msra.mxu0 0.0
        %6839 = vmatprep.subr.mxu0 0.0
        %6840 = vmatpush1.msra.mxu0 0.0
        %6841 = vmatprep.subr.mxu0 0.0
        %6842 = vmatpush1.msra.mxu0 0.0
        %6843 = vmatprep.mubr.f32.mxu0 0.0
        %6844 = vmatmul.mubr.f32.gmra.mrb[0].mxu0 %v6775
        %v6845 = vpop.f32.mrb[0].mxu0
        %v6846 = vadd.f32 0.0, %v6845
        %v6847 = vpop.f32.mrb[0].mxu0
        %6848 = vdwg.mxu0
        %v6850 = vsel %vm3608, %v6697, 0
        %v6852 = vsel %vm2057, %v6352, 0
        %6854 = vmatprep.subr.mxu0 0.0
        %6855 = vmatpush1.msra.mxu0 %v6852
        %6856 = vmatprep.subr.mxu0 0.0
        %6857 = vmatpush1.msra.mxu0 0.0
        %6858 = vmatprep.subr.mxu0 0.0
        %6859 = vmatpush1.msra.mxu0 0.0
        %6860 = vmatprep.subr.mxu0 0.0
        %6861 = vmatpush1.msra.mxu0 0.0
        %6862 = vmatprep.subr.mxu0 0.0
        %6863 = vmatpush1.msra.mxu0 0.0
        %6864 = vmatprep.subr.mxu0 0.0
        %6865 = vmatpush1.msra.mxu0 0.0
        %6866 = vmatprep.subr.mxu0 0.0
        %6867 = vmatpush1.msra.mxu0 0.0
        %6868 = vmatprep.subr.mxu0 0.0
        %6869 = vmatpush1.msra.mxu0 0.0
        %6870 = vmatprep.subr.mxu0 0.0
        %6871 = vmatpush1.msra.mxu0 0.0
        %6872 = vmatprep.subr.mxu0 0.0
        %6873 = vmatpush1.msra.mxu0 0.0
        %6874 = vmatprep.subr.mxu0 0.0
        %6875 = vmatpush1.msra.mxu0 0.0
        %6876 = vmatprep.subr.mxu0 0.0
        %6877 = vmatpush1.msra.mxu0 0.0
        %6878 = vmatprep.subr.mxu0 0.0
        %6879 = vmatpush1.msra.mxu0 0.0
        %6880 = vmatprep.subr.mxu0 0.0
        %6881 = vmatpush1.msra.mxu0 0.0
        %6882 = vmatprep.subr.mxu0 0.0
        %6883 = vmatpush1.msra.mxu0 0.0
        %6884 = vmatprep.subr.mxu0 0.0
        %6885 = vmatpush1.msra.mxu0 0.0
        %6886 = vmatprep.subr.mxu0 0.0
        %6887 = vmatpush1.msra.mxu0 0.0
        %6888 = vmatprep.subr.mxu0 0.0
        %6889 = vmatpush1.msra.mxu0 0.0
        %6890 = vmatprep.subr.mxu0 0.0
        %6891 = vmatpush1.msra.mxu0 0.0
        %6892 = vmatprep.subr.mxu0 0.0
        %6893 = vmatpush1.msra.mxu0 0.0
        %6894 = vmatprep.subr.mxu0 0.0
        %6895 = vmatpush1.msra.mxu0 0.0
        %6896 = vmatprep.subr.mxu0 0.0
        %6897 = vmatpush1.msra.mxu0 0.0
        %6898 = vmatprep.subr.mxu0 0.0
        %6899 = vmatpush1.msra.mxu0 0.0
        %6900 = vmatprep.subr.mxu0 0.0
        %6901 = vmatpush1.msra.mxu0 0.0
        %6902 = vmatprep.subr.mxu0 0.0
        %6903 = vmatpush1.msra.mxu0 0.0
        %6904 = vmatprep.subr.mxu0 0.0
        %6905 = vmatpush1.msra.mxu0 0.0
        %6906 = vmatprep.subr.mxu0 0.0
        %6907 = vmatpush1.msra.mxu0 0.0
        %6908 = vmatprep.subr.mxu0 0.0
        %6909 = vmatpush1.msra.mxu0 0.0
        %6910 = vmatprep.subr.mxu0 0.0
        %6911 = vmatpush1.msra.mxu0 0.0
        %6912 = vmatprep.subr.mxu0 0.0
        %6913 = vmatpush1.msra.mxu0 0.0
        %6914 = vmatprep.subr.mxu0 0.0
        %6915 = vmatpush1.msra.mxu0 0.0
        %6916 = vmatprep.subr.mxu0 0.0
        %6917 = vmatpush1.msra.mxu0 0.0
        %6918 = vmatprep.mubr.f32.mxu0 0.0
        %6919 = vmatmul.mubr.f32.gmra.mrb[0].mxu0 %v6850
        %v6920 = vpop.f32.mrb[0].mxu0
        %v6921 = vadd.f32 0.0, %v6920
        %v6922 = vpop.f32.mrb[0].mxu0
        %6923 = vdwg.mxu0
        %v6925 = vsel %vm3608, %v6698, 0
        %v6927 = vsel %vm2057, %v6354, 0
        %6929 = vmatprep.subr.mxu0 0.0
        %6930 = vmatpush1.msra.mxu0 %v6927
        %6931 = vmatprep.subr.mxu0 0.0
        %6932 = vmatpush1.msra.mxu0 0.0
        %6933 = vmatprep.subr.mxu0 0.0
        %6934 = vmatpush1.msra.mxu0 0.0
        %6935 = vmatprep.subr.mxu0 0.0
        %6936 = vmatpush1.msra.mxu0 0.0
        %6937 = vmatprep.subr.mxu0 0.0
        %6938 = vmatpush1.msra.mxu0 0.0
        %6939 = vmatprep.subr.mxu0 0.0
        %6940 = vmatpush1.msra.mxu0 0.0
        %6941 = vmatprep.subr.mxu0 0.0
        %6942 = vmatpush1.msra.mxu0 0.0
        %6943 = vmatprep.subr.mxu0 0.0
        %6944 = vmatpush1.msra.mxu0 0.0
        %6945 = vmatprep.subr.mxu0 0.0
        %6946 = vmatpush1.msra.mxu0 0.0
        %6947 = vmatprep.subr.mxu0 0.0
        %6948 = vmatpush1.msra.mxu0 0.0
        %6949 = vmatprep.subr.mxu0 0.0
        %6950 = vmatpush1.msra.mxu0 0.0
        %6951 = vmatprep.subr.mxu0 0.0
        %6952 = vmatpush1.msra.mxu0 0.0
        %6953 = vmatprep.subr.mxu0 0.0
        %6954 = vmatpush1.msra.mxu0 0.0
        %6955 = vmatprep.subr.mxu0 0.0
        %6956 = vmatpush1.msra.mxu0 0.0
        %6957 = vmatprep.subr.mxu0 0.0
        %6958 = vmatpush1.msra.mxu0 0.0
        %6959 = vmatprep.subr.mxu0 0.0
        %6960 = vmatpush1.msra.mxu0 0.0
        %6961 = vmatprep.subr.mxu0 0.0
        %6962 = vmatpush1.msra.mxu0 0.0
        %6963 = vmatprep.subr.mxu0 0.0
        %6964 = vmatpush1.msra.mxu0 0.0
        %6965 = vmatprep.subr.mxu0 0.0
        %6966 = vmatpush1.msra.mxu0 0.0
        %6967 = vmatprep.subr.mxu0 0.0
        %6968 = vmatpush1.msra.mxu0 0.0
        %6969 = vmatprep.subr.mxu0 0.0
        %6970 = vmatpush1.msra.mxu0 0.0
        %6971 = vmatprep.subr.mxu0 0.0
        %6972 = vmatpush1.msra.mxu0 0.0
        %6973 = vmatprep.subr.mxu0 0.0
        %6974 = vmatpush1.msra.mxu0 0.0
        %6975 = vmatprep.subr.mxu0 0.0
        %6976 = vmatpush1.msra.mxu0 0.0
        %6977 = vmatprep.subr.mxu0 0.0
        %6978 = vmatpush1.msra.mxu0 0.0
        %6979 = vmatprep.subr.mxu0 0.0
        %6980 = vmatpush1.msra.mxu0 0.0
        %6981 = vmatprep.subr.mxu0 0.0
        %6982 = vmatpush1.msra.mxu0 0.0
        %6983 = vmatprep.subr.mxu0 0.0
        %6984 = vmatpush1.msra.mxu0 0.0
        %6985 = vmatprep.subr.mxu0 0.0
        %6986 = vmatpush1.msra.mxu0 0.0
        %6987 = vmatprep.subr.mxu0 0.0
        %6988 = vmatpush1.msra.mxu0 0.0
        %6989 = vmatprep.subr.mxu0 0.0
        %6990 = vmatpush1.msra.mxu0 0.0
        %6991 = vmatprep.subr.mxu0 0.0
        %6992 = vmatpush1.msra.mxu0 0.0
        %6993 = vmatprep.mubr.f32.mxu0 0.0
        %6994 = vmatmul.mubr.f32.gmra.mrb[0].mxu0 %v6925
        %v6995 = vpop.f32.mrb[0].mxu0
        %v6996 = vadd.f32 0.0, %v6995
        %v6997 = vpop.f32.mrb[0].mxu0
        %6998 = vdwg.mxu0
        %7000 = vrot.lane.b32.xlu0 %v6846, 32
        %v7001 = vpop.permute.xlu0 %7000
        %7004 = vrot.lane.b32.xlu0 %v6921, 64
        %v7005 = vpop.permute.xlu0 %7004
        %7008 = vrot.lane.b32.xlu0 %v6996, 96
        %v7009 = vpop.permute.xlu0 %7008
        %v7011 = vsel %vm2864, %v6771, %v7001
        %v7012 = vsel %vm2872, %v7011, %v7005
        %v7013 = vsel %vm2880, %v7012, %v7009
        %7014 = vmatprep.subr.mxu0 0.0
        %7015 = vmatpush1.msra.mxu0 %v6105
        %7016 = vmatprep.subr.mxu0 0.0
        %7017 = vmatpush1.msra.mxu0 %v6106
        %7018 = vmatprep.subr.mxu0 0.0
        %7019 = vmatpush1.msra.mxu0 %v6107
        %7020 = vmatprep.subr.mxu0 0.0
        %7021 = vmatpush1.msra.mxu0 %v6108
        %7022 = vmatprep.subr.mxu0 0.0
        %7023 = vmatpush1.msra.mxu0 %v6109
        %7024 = vmatprep.subr.mxu0 0.0
        %7025 = vmatpush1.msra.mxu0 %v6110
        %7026 = vmatprep.subr.mxu0 0.0
        %7027 = vmatpush1.msra.mxu0 %v6111
        %7028 = vmatprep.subr.mxu0 0.0
        %7029 = vmatpush1.msra.mxu0 %v6112
        %7030 = vmatprep.subr.mxu0 0.0
        %7031 = vmatpush1.msra.mxu0 %v6113
        %7032 = vmatprep.subr.mxu0 0.0
        %7033 = vmatpush1.msra.mxu0 %v6114
        %7034 = vmatprep.subr.mxu0 0.0
        %7035 = vmatpush1.msra.mxu0 %v6115
        %7036 = vmatprep.subr.mxu0 0.0
        %7037 = vmatpush1.msra.mxu0 %v6116
        %7038 = vmatprep.subr.mxu0 0.0
        %7039 = vmatpush1.msra.mxu0 %v6117
        %7040 = vmatprep.subr.mxu0 0.0
        %7041 = vmatpush1.msra.mxu0 %v6118
        %7042 = vmatprep.subr.mxu0 0.0
        %7043 = vmatpush1.msra.mxu0 %v6119
        %7044 = vmatprep.subr.mxu0 0.0
        %7045 = vmatpush1.msra.mxu0 %v6120
        %7046 = vmatprep.subr.mxu0 0.0
        %7047 = vmatpush1.msra.mxu0 0.0
        %7048 = vmatprep.subr.mxu0 0.0
        %7049 = vmatpush1.msra.mxu0 0.0
        %7050 = vmatprep.subr.mxu0 0.0
        %7051 = vmatpush1.msra.mxu0 0.0
        %7052 = vmatprep.subr.mxu0 0.0
        %7053 = vmatpush1.msra.mxu0 0.0
        %7054 = vmatprep.subr.mxu0 0.0
        %7055 = vmatpush1.msra.mxu0 0.0
        %7056 = vmatprep.subr.mxu0 0.0
        %7057 = vmatpush1.msra.mxu0 0.0
        %7058 = vmatprep.subr.mxu0 0.0
        %7059 = vmatpush1.msra.mxu0 0.0
        %7060 = vmatprep.subr.mxu0 0.0
        %7061 = vmatpush1.msra.mxu0 0.0
        %7062 = vmatprep.subr.mxu0 0.0
        %7063 = vmatpush1.msra.mxu0 0.0
        %7064 = vmatprep.subr.mxu0 0.0
        %7065 = vmatpush1.msra.mxu0 0.0
        %7066 = vmatprep.subr.mxu0 0.0
        %7067 = vmatpush1.msra.mxu0 0.0
        %7068 = vmatprep.subr.mxu0 0.0
        %7069 = vmatpush1.msra.mxu0 0.0
        %7070 = vmatprep.subr.mxu0 0.0
        %7071 = vmatpush1.msra.mxu0 0.0
        %7072 = vmatprep.subr.mxu0 0.0
        %7073 = vmatpush1.msra.mxu0 0.0
        %7074 = vmatprep.subr.mxu0 0.0
        %7075 = vmatpush1.msra.mxu0 0.0
        %7076 = vmatprep.subr.mxu0 0.0
        %7077 = vmatpush1.msra.mxu0 0.0
        %7078 = vmatprep.mubr.f32.mxu0 0.0
        %7079 = vmatmul.mubr.f32.gmra.mrb[0].mxu0 %v7013
        %v7080 = vpop.f32.mrb[0].mxu0
        %v7081 = vadd.f32 0.0, %v7080
        %v7082 = vpop.f32.mrb[0].mxu0
        %7083 = vdwg.mxu0
        %s7084 = scalar_lea.vmem [#allocation11], 512
        %v7085 = vld [vmem:[%s7084] sm:$0xff]
        %v7086 = vld [vmem:[%s7084 + $0x8] sm:$0xff]
        %v7087 = vld [vmem:[%s7084 + $0x10] sm:$0xff]
        %v7088 = vld [vmem:[%s7084 + $0x18] sm:$0xff]
        %v7089 = vld [vmem:[%s7084 + $0x20] sm:$0xff]
        %v7090 = vld [vmem:[%s7084 + $0x28] sm:$0xff]
        %v7091 = vld [vmem:[%s7084 + $0x30] sm:$0xff]
        %v7092 = vld [vmem:[%s7084 + $0x38] sm:$0xff]
        %v7093 = vld [vmem:[%s7084 + $0x40] sm:$0xff]
        %v7094 = vld [vmem:[%s7084 + $0x48] sm:$0xff]
        %v7095 = vld [vmem:[%s7084 + $0x50] sm:$0xff]
        %v7096 = vld [vmem:[%s7084 + $0x58] sm:$0xff]
        %v7097 = vld [vmem:[%s7084 + $0x60] sm:$0xff]
        %v7098 = vld [vmem:[%s7084 + $0x68] sm:$0xff]
        %v7099 = vld [vmem:[%s7084 + $0x70] sm:$0xff]
        %v7100 = vld [vmem:[%s7084 + $0x78] sm:$0xff]
        %s7101 = scalar_lea.vmem [#allocation13], 512
        %v7102 = vld [vmem:[%s7101] sm:$0xff]
        %v7103 = vld [vmem:[%s7101 + $0x8] sm:$0xff]
        %v7104 = vld [vmem:[%s7101 + $0x10] sm:$0xff]
        %v7105 = vld [vmem:[%s7101 + $0x18] sm:$0xff]
        %v7106 = vld [vmem:[%s7101 + $0x20] sm:$0xff]
        %v7107 = vld [vmem:[%s7101 + $0x28] sm:$0xff]
        %v7108 = vld [vmem:[%s7101 + $0x30] sm:$0xff]
        %v7109 = vld [vmem:[%s7101 + $0x38] sm:$0xff]
        %v7110 = vld [vmem:[%s7101 + $0x40] sm:$0xff]
        %v7111 = vld [vmem:[%s7101 + $0x48] sm:$0xff]
        %v7112 = vld [vmem:[%s7101 + $0x50] sm:$0xff]
        %v7113 = vld [vmem:[%s7101 + $0x58] sm:$0xff]
        %v7114 = vld [vmem:[%s7101 + $0x60] sm:$0xff]
        %v7115 = vld [vmem:[%s7101 + $0x68] sm:$0xff]
        %v7116 = vld [vmem:[%s7101 + $0x70] sm:$0xff]
        %v7117 = vld [vmem:[%s7101 + $0x78] sm:$0xff]
        %s7118 = scalar_lea.vmem [#allocation14], 512
        %v7119 = vld [vmem:[%s7118] sm:$0xff]
        %v7120 = vld [vmem:[%s7118 + $0x8] sm:$0xff]
        %v7121 = vld [vmem:[%s7118 + $0x10] sm:$0xff]
        %v7122 = vld [vmem:[%s7118 + $0x18] sm:$0xff]
        %v7123 = vld [vmem:[%s7118 + $0x20] sm:$0xff]
        %v7124 = vld [vmem:[%s7118 + $0x28] sm:$0xff]
        %v7125 = vld [vmem:[%s7118 + $0x30] sm:$0xff]
        %v7126 = vld [vmem:[%s7118 + $0x38] sm:$0xff]
        %v7127 = vld [vmem:[%s7118 + $0x40] sm:$0xff]
        %v7128 = vld [vmem:[%s7118 + $0x48] sm:$0xff]
        %v7129 = vld [vmem:[%s7118 + $0x50] sm:$0xff]
        %v7130 = vld [vmem:[%s7118 + $0x58] sm:$0xff]
        %v7131 = vld [vmem:[%s7118 + $0x60] sm:$0xff]
        %v7132 = vld [vmem:[%s7118 + $0x68] sm:$0xff]
        %v7133 = vld [vmem:[%s7118 + $0x70] sm:$0xff]
        %v7134 = vld [vmem:[%s7118 + $0x78] sm:$0xff]
        %s7135 = scalar_lea.vmem [#allocation16], 512
        %v7136 = vld [vmem:[%s7135] sm:$0xff]
        %v7137 = vld [vmem:[%s7135 + $0x8] sm:$0xff]
        %v7138 = vld [vmem:[%s7135 + $0x10] sm:$0xff]
        %v7139 = vld [vmem:[%s7135 + $0x18] sm:$0xff]
        %v7140 = vld [vmem:[%s7135 + $0x20] sm:$0xff]
        %v7141 = vld [vmem:[%s7135 + $0x28] sm:$0xff]
        %v7142 = vld [vmem:[%s7135 + $0x30] sm:$0xff]
        %v7143 = vld [vmem:[%s7135 + $0x38] sm:$0xff]
        %v7144 = vld [vmem:[%s7135 + $0x40] sm:$0xff]
        %v7145 = vld [vmem:[%s7135 + $0x48] sm:$0xff]
        %v7146 = vld [vmem:[%s7135 + $0x50] sm:$0xff]
        %v7147 = vld [vmem:[%s7135 + $0x58] sm:$0xff]
        %v7148 = vld [vmem:[%s7135 + $0x60] sm:$0xff]
        %v7149 = vld [vmem:[%s7135 + $0x68] sm:$0xff]
        %v7150 = vld [vmem:[%s7135 + $0x70] sm:$0xff]
        %v7151 = vld [vmem:[%s7135 + $0x78] sm:$0xff]
        %7152 = vmatprep.subr.mxu0 0.0
        %7153 = vmatpush1.msra.mxu0 %v7085
        %7154 = vmatprep.subr.mxu0 0.0
        %7155 = vmatpush1.msra.mxu0 %v7086
        %7156 = vmatprep.subr.mxu0 0.0
        %7157 = vmatpush1.msra.mxu0 %v7087
        %7158 = vmatprep.subr.mxu0 0.0
        %7159 = vmatpush1.msra.mxu0 %v7088
        %7160 = vmatprep.subr.mxu0 0.0
        %7161 = vmatpush1.msra.mxu0 %v7089
        %7162 = vmatprep.subr.mxu0 0.0
        %7163 = vmatpush1.msra.mxu0 %v7090
        %7164 = vmatprep.subr.mxu0 0.0
        %7165 = vmatpush1.msra.mxu0 %v7091
        %7166 = vmatprep.subr.mxu0 0.0
        %7167 = vmatpush1.msra.mxu0 %v7092
        %7168 = vmatprep.subr.mxu0 0.0
        %7169 = vmatpush1.msra.mxu0 %v7093
        %7170 = vmatprep.subr.mxu0 0.0
        %7171 = vmatpush1.msra.mxu0 %v7094
        %7172 = vmatprep.subr.mxu0 0.0
        %7173 = vmatpush1.msra.mxu0 %v7095
        %7174 = vmatprep.subr.mxu0 0.0
        %7175 = vmatpush1.msra.mxu0 %v7096
        %7176 = vmatprep.subr.mxu0 0.0
        %7177 = vmatpush1.msra.mxu0 %v7097
        %7178 = vmatprep.subr.mxu0 0.0
        %7179 = vmatpush1.msra.mxu0 %v7098
        %7180 = vmatprep.subr.mxu0 0.0
        %7181 = vmatpush1.msra.mxu0 %v7099
        %7182 = vmatprep.subr.mxu0 0.0
        %7183 = vmatpush1.msra.mxu0 %v7100
        %7184 = vmatprep.subr.mxu0 0.0
        %7185 = vmatpush1.msra.mxu0 0.0
        %7186 = vmatprep.subr.mxu0 0.0
        %7187 = vmatpush1.msra.mxu0 0.0
        %7188 = vmatprep.subr.mxu0 0.0
        %7189 = vmatpush1.msra.mxu0 0.0
        %7190 = vmatprep.subr.mxu0 0.0
        %7191 = vmatpush1.msra.mxu0 0.0
        %7192 = vmatprep.subr.mxu0 0.0
        %7193 = vmatpush1.msra.mxu0 0.0
        %7194 = vmatprep.subr.mxu0 0.0
        %7195 = vmatpush1.msra.mxu0 0.0
        %7196 = vmatprep.subr.mxu0 0.0
        %7197 = vmatpush1.msra.mxu0 0.0
        %7198 = vmatprep.subr.mxu0 0.0
        %7199 = vmatpush1.msra.mxu0 0.0
        %7200 = vmatprep.subr.mxu0 0.0
        %7201 = vmatpush1.msra.mxu0 0.0
        %7202 = vmatprep.subr.mxu0 0.0
        %7203 = vmatpush1.msra.mxu0 0.0
        %7204 = vmatprep.subr.mxu0 0.0
        %7205 = vmatpush1.msra.mxu0 0.0
        %7206 = vmatprep.subr.mxu0 0.0
        %7207 = vmatpush1.msra.mxu0 0.0
        %7208 = vmatprep.subr.mxu0 0.0
        %7209 = vmatpush1.msra.mxu0 0.0
        %7210 = vmatprep.subr.mxu0 0.0
        %7211 = vmatpush1.msra.mxu0 0.0
        %7212 = vmatprep.subr.mxu0 0.0
        %7213 = vmatpush1.msra.mxu0 0.0
        %7214 = vmatprep.subr.mxu0 0.0
        %7215 = vmatpush1.msra.mxu0 0.0
        %7216 = vmatprep.mubr.f32.mxu0 0.0
        %7217 = vmatmul.mubr.f32.gmra.mrb[0].mxu0 %v550
        %v7218 = vpop.f32.mrb[0].mxu0
        %v7219 = vadd.f32 0.0, %v7218
        %v7220 = vpop.f32.mrb[0].mxu0
        %7221 = vdwg.mxu0
        %7222 = vmatprep.subr.mxu0 0.0
        %7223 = vmatpush1.msra.mxu0 %v7102
        %7224 = vmatprep.subr.mxu0 0.0
        %7225 = vmatpush1.msra.mxu0 %v7103
        %7226 = vmatprep.subr.mxu0 0.0
        %7227 = vmatpush1.msra.mxu0 %v7104
        %7228 = vmatprep.subr.mxu0 0.0
        %7229 = vmatpush1.msra.mxu0 %v7105
        %7230 = vmatprep.subr.mxu0 0.0
        %7231 = vmatpush1.msra.mxu0 %v7106
        %7232 = vmatprep.subr.mxu0 0.0
        %7233 = vmatpush1.msra.mxu0 %v7107
        %7234 = vmatprep.subr.mxu0 0.0
        %7235 = vmatpush1.msra.mxu0 %v7108
        %7236 = vmatprep.subr.mxu0 0.0
        %7237 = vmatpush1.msra.mxu0 %v7109
        %7238 = vmatprep.subr.mxu0 0.0
        %7239 = vmatpush1.msra.mxu0 %v7110
        %7240 = vmatprep.subr.mxu0 0.0
        %7241 = vmatpush1.msra.mxu0 %v7111
        %7242 = vmatprep.subr.mxu0 0.0
        %7243 = vmatpush1.msra.mxu0 %v7112
        %7244 = vmatprep.subr.mxu0 0.0
        %7245 = vmatpush1.msra.mxu0 %v7113
        %7246 = vmatprep.subr.mxu0 0.0
        %7247 = vmatpush1.msra.mxu0 %v7114
        %7248 = vmatprep.subr.mxu0 0.0
        %7249 = vmatpush1.msra.mxu0 %v7115
        %7250 = vmatprep.subr.mxu0 0.0
        %7251 = vmatpush1.msra.mxu0 %v7116
        %7252 = vmatprep.subr.mxu0 0.0
        %7253 = vmatpush1.msra.mxu0 %v7117
        %7254 = vmatprep.subr.mxu0 0.0
        %7255 = vmatpush1.msra.mxu0 0.0
        %7256 = vmatprep.subr.mxu0 0.0
        %7257 = vmatpush1.msra.mxu0 0.0
        %7258 = vmatprep.subr.mxu0 0.0
        %7259 = vmatpush1.msra.mxu0 0.0
        %7260 = vmatprep.subr.mxu0 0.0
        %7261 = vmatpush1.msra.mxu0 0.0
        %7262 = vmatprep.subr.mxu0 0.0
        %7263 = vmatpush1.msra.mxu0 0.0
        %7264 = vmatprep.subr.mxu0 0.0
        %7265 = vmatpush1.msra.mxu0 0.0
        %7266 = vmatprep.subr.mxu0 0.0
        %7267 = vmatpush1.msra.mxu0 0.0
        %7268 = vmatprep.subr.mxu0 0.0
        %7269 = vmatpush1.msra.mxu0 0.0
        %7270 = vmatprep.subr.mxu0 0.0
        %7271 = vmatpush1.msra.mxu0 0.0
        %7272 = vmatprep.subr.mxu0 0.0
        %7273 = vmatpush1.msra.mxu0 0.0
        %7274 = vmatprep.subr.mxu0 0.0
        %7275 = vmatpush1.msra.mxu0 0.0
        %7276 = vmatprep.subr.mxu0 0.0
        %7277 = vmatpush1.msra.mxu0 0.0
        %7278 = vmatprep.subr.mxu0 0.0
        %7279 = vmatpush1.msra.mxu0 0.0
        %7280 = vmatprep.subr.mxu0 0.0
        %7281 = vmatpush1.msra.mxu0 0.0
        %7282 = vmatprep.subr.mxu0 0.0
        %7283 = vmatpush1.msra.mxu0 0.0
        %7284 = vmatprep.subr.mxu0 0.0
        %7285 = vmatpush1.msra.mxu0 0.0
        %7286 = vmatprep.mubr.f32.mxu0 0.0
        %7287 = vmatmul.mubr.f32.gmra.mrb[0].mxu0 %v550
        %v7288 = vpop.f32.mrb[0].mxu0
        %v7289 = vadd.f32 0.0, %v7288
        %v7290 = vpop.f32.mrb[0].mxu0
        %7291 = vdwg.mxu0
        %7292 = vmatprep.subr.mxu0 0.0
        %7293 = vmatpush1.msra.mxu0 %v7119
        %7294 = vmatprep.subr.mxu0 0.0
        %7295 = vmatpush1.msra.mxu0 %v7120
        %7296 = vmatprep.subr.mxu0 0.0
        %7297 = vmatpush1.msra.mxu0 %v7121
        %7298 = vmatprep.subr.mxu0 0.0
        %7299 = vmatpush1.msra.mxu0 %v7122
        %7300 = vmatprep.subr.mxu0 0.0
        %7301 = vmatpush1.msra.mxu0 %v7123
        %7302 = vmatprep.subr.mxu0 0.0
        %7303 = vmatpush1.msra.mxu0 %v7124
        %7304 = vmatprep.subr.mxu0 0.0
        %7305 = vmatpush1.msra.mxu0 %v7125
        %7306 = vmatprep.subr.mxu0 0.0
        %7307 = vmatpush1.msra.mxu0 %v7126
        %7308 = vmatprep.subr.mxu0 0.0
        %7309 = vmatpush1.msra.mxu0 %v7127
        %7310 = vmatprep.subr.mxu0 0.0
        %7311 = vmatpush1.msra.mxu0 %v7128
        %7312 = vmatprep.subr.mxu0 0.0
        %7313 = vmatpush1.msra.mxu0 %v7129
        %7314 = vmatprep.subr.mxu0 0.0
        %7315 = vmatpush1.msra.mxu0 %v7130
        %7316 = vmatprep.subr.mxu0 0.0
        %7317 = vmatpush1.msra.mxu0 %v7131
        %7318 = vmatprep.subr.mxu0 0.0
        %7319 = vmatpush1.msra.mxu0 %v7132
        %7320 = vmatprep.subr.mxu0 0.0
        %7321 = vmatpush1.msra.mxu0 %v7133
        %7322 = vmatprep.subr.mxu0 0.0
        %7323 = vmatpush1.msra.mxu0 %v7134
        %7324 = vmatprep.subr.mxu0 0.0
        %7325 = vmatpush1.msra.mxu0 0.0
        %7326 = vmatprep.subr.mxu0 0.0
        %7327 = vmatpush1.msra.mxu0 0.0
        %7328 = vmatprep.subr.mxu0 0.0
        %7329 = vmatpush1.msra.mxu0 0.0
        %7330 = vmatprep.subr.mxu0 0.0
        %7331 = vmatpush1.msra.mxu0 0.0
        %7332 = vmatprep.subr.mxu0 0.0
        %7333 = vmatpush1.msra.mxu0 0.0
        %7334 = vmatprep.subr.mxu0 0.0
        %7335 = vmatpush1.msra.mxu0 0.0
        %7336 = vmatprep.subr.mxu0 0.0
        %7337 = vmatpush1.msra.mxu0 0.0
        %7338 = vmatprep.subr.mxu0 0.0
        %7339 = vmatpush1.msra.mxu0 0.0
        %7340 = vmatprep.subr.mxu0 0.0
        %7341 = vmatpush1.msra.mxu0 0.0
        %7342 = vmatprep.subr.mxu0 0.0
        %7343 = vmatpush1.msra.mxu0 0.0
        %7344 = vmatprep.subr.mxu0 0.0
        %7345 = vmatpush1.msra.mxu0 0.0
        %7346 = vmatprep.subr.mxu0 0.0
        %7347 = vmatpush1.msra.mxu0 0.0
        %7348 = vmatprep.subr.mxu0 0.0
        %7349 = vmatpush1.msra.mxu0 0.0
        %7350 = vmatprep.subr.mxu0 0.0
        %7351 = vmatpush1.msra.mxu0 0.0
        %7352 = vmatprep.subr.mxu0 0.0
        %7353 = vmatpush1.msra.mxu0 0.0
        %7354 = vmatprep.subr.mxu0 0.0
        %7355 = vmatpush1.msra.mxu0 0.0
        %7356 = vmatprep.mubr.f32.mxu0 0.0
        %7357 = vmatmul.mubr.f32.gmra.mrb[0].mxu0 %v550
        %v7358 = vpop.f32.mrb[0].mxu0
        %v7359 = vadd.f32 0.0, %v7358
        %v7360 = vpop.f32.mrb[0].mxu0
        %7361 = vdwg.mxu0
        %7363 = vrot.lane.b32.xlu0 %v7219, 96
        %v7364 = vpop.permute.xlu0 %7363
        %7365 = vrot.lane.b32.xlu0 %v7219, 64
        %v7366 = vpop.permute.xlu0 %7365
        %7367 = vrot.lane.b32.xlu0 %v7219, 32
        %v7368 = vpop.permute.xlu0 %7367
        %7370 = vrot.lane.b32.xlu0 %v7289, 96
        %v7371 = vpop.permute.xlu0 %7370
        %7372 = vrot.lane.b32.xlu0 %v7289, 64
        %v7373 = vpop.permute.xlu0 %7372
        %7374 = vrot.lane.b32.xlu0 %v7289, 32
        %v7375 = vpop.permute.xlu0 %7374
        %7377 = vrot.lane.b32.xlu0 %v7359, 96
        %v7378 = vpop.permute.xlu0 %7377
        %7379 = vrot.lane.b32.xlu0 %v7359, 64
        %v7380 = vpop.permute.xlu0 %7379
        %7381 = vrot.lane.b32.xlu0 %v7359, 32
        %v7382 = vpop.permute.xlu0 %7381
        %v7383 = vsel %vm2864, %v7219, 0
        %v7385 = vsel %vm2864, %v7289, 0
        %7387 = vmatprep.subr.mxu0 0.0
        %7388 = vmatpush1.xpose.msra.mxu0 %v7385
        %7389 = vmatprep.subr.mxu0 0.0
        %7390 = vmatpush1.xpose.msra.mxu0 0.0
        %7391 = vmatprep.subr.mxu0 0.0
        %7392 = vmatpush1.xpose.msra.mxu0 0.0
        %7393 = vmatprep.subr.mxu0 0.0
        %7394 = vmatpush1.xpose.msra.mxu0 0.0
        %7395 = vmatprep.subr.mxu0 0.0
        %7396 = vmatpush1.xpose.msra.mxu0 0.0
        %7397 = vmatprep.subr.mxu0 0.0
        %7398 = vmatpush1.xpose.msra.mxu0 0.0
        %7399 = vmatprep.subr.mxu0 0.0
        %7400 = vmatpush1.xpose.msra.mxu0 0.0
        %7401 = vmatprep.subr.mxu0 0.0
        %7402 = vmatpush1.xpose.msra.mxu0 0.0
        %7403 = vmatprep.subr.mxu0 0.0
        %7404 = vmatpush1.xpose.msra.mxu0 0.0
        %7405 = vmatprep.subr.mxu0 0.0
        %7406 = vmatpush1.xpose.msra.mxu0 0.0
        %7407 = vmatprep.subr.mxu0 0.0
        %7408 = vmatpush1.xpose.msra.mxu0 0.0
        %7409 = vmatprep.subr.mxu0 0.0
        %7410 = vmatpush1.xpose.msra.mxu0 0.0
        %7411 = vmatprep.subr.mxu0 0.0
        %7412 = vmatpush1.xpose.msra.mxu0 0.0
        %7413 = vmatprep.subr.mxu0 0.0
        %7414 = vmatpush1.xpose.msra.mxu0 0.0
        %7415 = vmatprep.subr.mxu0 0.0
        %7416 = vmatpush1.xpose.msra.mxu0 0.0
        %7417 = vmatprep.subr.mxu0 0.0
        %7418 = vmatpush1.xpose.msra.mxu0 0.0
        %7419 = vmatprep.subr.mxu0 0.0
        %7420 = vmatpush1.xpose.msra.mxu0 0.0
        %7421 = vmatprep.subr.mxu0 0.0
        %7422 = vmatpush1.xpose.msra.mxu0 0.0
        %7423 = vmatprep.subr.mxu0 0.0
        %7424 = vmatpush1.xpose.msra.mxu0 0.0
        %7425 = vmatprep.subr.mxu0 0.0
        %7426 = vmatpush1.xpose.msra.mxu0 0.0
        %7427 = vmatprep.subr.mxu0 0.0
        %7428 = vmatpush1.xpose.msra.mxu0 0.0
        %7429 = vmatprep.subr.mxu0 0.0
        %7430 = vmatpush1.xpose.msra.mxu0 0.0
        %7431 = vmatprep.subr.mxu0 0.0
        %7432 = vmatpush1.xpose.msra.mxu0 0.0
        %7433 = vmatprep.subr.mxu0 0.0
        %7434 = vmatpush1.xpose.msra.mxu0 0.0
        %7435 = vmatprep.subr.mxu0 0.0
        %7436 = vmatpush1.xpose.msra.mxu0 0.0
        %7437 = vmatprep.subr.mxu0 0.0
        %7438 = vmatpush1.xpose.msra.mxu0 0.0
        %7439 = vmatprep.subr.mxu0 0.0
        %7440 = vmatpush1.xpose.msra.mxu0 0.0
        %7441 = vmatprep.subr.mxu0 0.0
        %7442 = vmatpush1.xpose.msra.mxu0 0.0
        %7443 = vmatprep.subr.mxu0 0.0
        %7444 = vmatpush1.xpose.msra.mxu0 0.0
        %7445 = vmatprep.subr.mxu0 0.0
        %7446 = vmatpush1.xpose.msra.mxu0 0.0
        %7447 = vmatprep.subr.mxu0 0.0
        %7448 = vmatpush1.xpose.msra.mxu0 0.0
        %7449 = vmatprep.subr.mxu0 0.0
        %7450 = vmatpush1.xpose.msra.mxu0 0.0
        %7451 = vmatprep.mubr.f32.mxu0 0.0
        %7452 = vmatmul.mubr.f32.gmra.mrb[0].mxu0 %v7383
        %v7453 = vpop.f32.mrb[0].mxu0
        %v7454 = vadd.f32 0.0, %v7453
        %v7455 = vpop.f32.mrb[0].mxu0
        %7456 = vdwg.mxu0
        %v7457 = vsel %vm2864, %v7364, 0
        %v7459 = vsel %vm2864, %v7371, 0
        %7461 = vmatprep.subr.mxu0 0.0
        %7462 = vmatpush1.xpose.msra.mxu0 %v7459
        %7463 = vmatprep.subr.mxu0 0.0
        %7464 = vmatpush1.xpose.msra.mxu0 0.0
        %7465 = vmatprep.subr.mxu0 0.0
        %7466 = vmatpush1.xpose.msra.mxu0 0.0
        %7467 = vmatprep.subr.mxu0 0.0
        %7468 = vmatpush1.xpose.msra.mxu0 0.0
        %7469 = vmatprep.subr.mxu0 0.0
        %7470 = vmatpush1.xpose.msra.mxu0 0.0
        %7471 = vmatprep.subr.mxu0 0.0
        %7472 = vmatpush1.xpose.msra.mxu0 0.0
        %7473 = vmatprep.subr.mxu0 0.0
        %7474 = vmatpush1.xpose.msra.mxu0 0.0
        %7475 = vmatprep.subr.mxu0 0.0
        %7476 = vmatpush1.xpose.msra.mxu0 0.0
        %7477 = vmatprep.subr.mxu0 0.0
        %7478 = vmatpush1.xpose.msra.mxu0 0.0
        %7479 = vmatprep.subr.mxu0 0.0
        %7480 = vmatpush1.xpose.msra.mxu0 0.0
        %7481 = vmatprep.subr.mxu0 0.0
        %7482 = vmatpush1.xpose.msra.mxu0 0.0
        %7483 = vmatprep.subr.mxu0 0.0
        %7484 = vmatpush1.xpose.msra.mxu0 0.0
        %7485 = vmatprep.subr.mxu0 0.0
        %7486 = vmatpush1.xpose.msra.mxu0 0.0
        %7487 = vmatprep.subr.mxu0 0.0
        %7488 = vmatpush1.xpose.msra.mxu0 0.0
        %7489 = vmatprep.subr.mxu0 0.0
        %7490 = vmatpush1.xpose.msra.mxu0 0.0
        %7491 = vmatprep.subr.mxu0 0.0
        %7492 = vmatpush1.xpose.msra.mxu0 0.0
        %7493 = vmatprep.subr.mxu0 0.0
        %7494 = vmatpush1.xpose.msra.mxu0 0.0
        %7495 = vmatprep.subr.mxu0 0.0
        %7496 = vmatpush1.xpose.msra.mxu0 0.0
        %7497 = vmatprep.subr.mxu0 0.0
        %7498 = vmatpush1.xpose.msra.mxu0 0.0
        %7499 = vmatprep.subr.mxu0 0.0
        %7500 = vmatpush1.xpose.msra.mxu0 0.0
        %7501 = vmatprep.subr.mxu0 0.0
        %7502 = vmatpush1.xpose.msra.mxu0 0.0
        %7503 = vmatprep.subr.mxu0 0.0
        %7504 = vmatpush1.xpose.msra.mxu0 0.0
        %7505 = vmatprep.subr.mxu0 0.0
        %7506 = vmatpush1.xpose.msra.mxu0 0.0
        %7507 = vmatprep.subr.mxu0 0.0
        %7508 = vmatpush1.xpose.msra.mxu0 0.0
        %7509 = vmatprep.subr.mxu0 0.0
        %7510 = vmatpush1.xpose.msra.mxu0 0.0
        %7511 = vmatprep.subr.mxu0 0.0
        %7512 = vmatpush1.xpose.msra.mxu0 0.0
        %7513 = vmatprep.subr.mxu0 0.0
        %7514 = vmatpush1.xpose.msra.mxu0 0.0
        %7515 = vmatprep.subr.mxu0 0.0
        %7516 = vmatpush1.xpose.msra.mxu0 0.0
        %7517 = vmatprep.subr.mxu0 0.0
        %7518 = vmatpush1.xpose.msra.mxu0 0.0
        %7519 = vmatprep.subr.mxu0 0.0
        %7520 = vmatpush1.xpose.msra.mxu0 0.0
        %7521 = vmatprep.subr.mxu0 0.0
        %7522 = vmatpush1.xpose.msra.mxu0 0.0
        %7523 = vmatprep.subr.mxu0 0.0
        %7524 = vmatpush1.xpose.msra.mxu0 0.0
        %7525 = vmatprep.mubr.f32.mxu0 0.0
        %7526 = vmatmul.mubr.f32.gmra.mrb[0].mxu0 %v7457
        %v7527 = vpop.f32.mrb[0].mxu0
        %v7528 = vadd.f32 0.0, %v7527
        %v7529 = vpop.f32.mrb[0].mxu0
        %7530 = vdwg.mxu0
        %v7531 = vsel %vm2864, %v7366, 0
        %v7533 = vsel %vm2864, %v7373, 0
        %7535 = vmatprep.subr.mxu0 0.0
        %7536 = vmatpush1.xpose.msra.mxu0 %v7533
        %7537 = vmatprep.subr.mxu0 0.0
        %7538 = vmatpush1.xpose.msra.mxu0 0.0
        %7539 = vmatprep.subr.mxu0 0.0
        %7540 = vmatpush1.xpose.msra.mxu0 0.0
        %7541 = vmatprep.subr.mxu0 0.0
        %7542 = vmatpush1.xpose.msra.mxu0 0.0
        %7543 = vmatprep.subr.mxu0 0.0
        %7544 = vmatpush1.xpose.msra.mxu0 0.0
        %7545 = vmatprep.subr.mxu0 0.0
        %7546 = vmatpush1.xpose.msra.mxu0 0.0
        %7547 = vmatprep.subr.mxu0 0.0
        %7548 = vmatpush1.xpose.msra.mxu0 0.0
        %7549 = vmatprep.subr.mxu0 0.0
        %7550 = vmatpush1.xpose.msra.mxu0 0.0
        %7551 = vmatprep.subr.mxu0 0.0
        %7552 = vmatpush1.xpose.msra.mxu0 0.0
        %7553 = vmatprep.subr.mxu0 0.0
        %7554 = vmatpush1.xpose.msra.mxu0 0.0
        %7555 = vmatprep.subr.mxu0 0.0
        %7556 = vmatpush1.xpose.msra.mxu0 0.0
        %7557 = vmatprep.subr.mxu0 0.0
        %7558 = vmatpush1.xpose.msra.mxu0 0.0
        %7559 = vmatprep.subr.mxu0 0.0
        %7560 = vmatpush1.xpose.msra.mxu0 0.0
        %7561 = vmatprep.subr.mxu0 0.0
        %7562 = vmatpush1.xpose.msra.mxu0 0.0
        %7563 = vmatprep.subr.mxu0 0.0
        %7564 = vmatpush1.xpose.msra.mxu0 0.0
        %7565 = vmatprep.subr.mxu0 0.0
        %7566 = vmatpush1.xpose.msra.mxu0 0.0
        %7567 = vmatprep.subr.mxu0 0.0
        %7568 = vmatpush1.xpose.msra.mxu0 0.0
        %7569 = vmatprep.subr.mxu0 0.0
        %7570 = vmatpush1.xpose.msra.mxu0 0.0
        %7571 = vmatprep.subr.mxu0 0.0
        %7572 = vmatpush1.xpose.msra.mxu0 0.0
        %7573 = vmatprep.subr.mxu0 0.0
        %7574 = vmatpush1.xpose.msra.mxu0 0.0
        %7575 = vmatprep.subr.mxu0 0.0
        %7576 = vmatpush1.xpose.msra.mxu0 0.0
        %7577 = vmatprep.subr.mxu0 0.0
        %7578 = vmatpush1.xpose.msra.mxu0 0.0
        %7579 = vmatprep.subr.mxu0 0.0
        %7580 = vmatpush1.xpose.msra.mxu0 0.0
        %7581 = vmatprep.subr.mxu0 0.0
        %7582 = vmatpush1.xpose.msra.mxu0 0.0
        %7583 = vmatprep.subr.mxu0 0.0
        %7584 = vmatpush1.xpose.msra.mxu0 0.0
        %7585 = vmatprep.subr.mxu0 0.0
        %7586 = vmatpush1.xpose.msra.mxu0 0.0
        %7587 = vmatprep.subr.mxu0 0.0
        %7588 = vmatpush1.xpose.msra.mxu0 0.0
        %7589 = vmatprep.subr.mxu0 0.0
        %7590 = vmatpush1.xpose.msra.mxu0 0.0
        %7591 = vmatprep.subr.mxu0 0.0
        %7592 = vmatpush1.xpose.msra.mxu0 0.0
        %7593 = vmatprep.subr.mxu0 0.0
        %7594 = vmatpush1.xpose.msra.mxu0 0.0
        %7595 = vmatprep.subr.mxu0 0.0
        %7596 = vmatpush1.xpose.msra.mxu0 0.0
        %7597 = vmatprep.subr.mxu0 0.0
        %7598 = vmatpush1.xpose.msra.mxu0 0.0
        %7599 = vmatprep.mubr.f32.mxu0 0.0
        %7600 = vmatmul.mubr.f32.gmra.mrb[0].mxu0 %v7531
        %v7601 = vpop.f32.mrb[0].mxu0
        %v7602 = vadd.f32 0.0, %v7601
        %v7603 = vpop.f32.mrb[0].mxu0
        %7604 = vdwg.mxu0
        %v7605 = vsel %vm2864, %v7368, 0
        %v7607 = vsel %vm2864, %v7375, 0
        %7609 = vmatprep.subr.mxu0 0.0
        %7610 = vmatpush1.xpose.msra.mxu0 %v7607
        %7611 = vmatprep.subr.mxu0 0.0
        %7612 = vmatpush1.xpose.msra.mxu0 0.0
        %7613 = vmatprep.subr.mxu0 0.0
        %7614 = vmatpush1.xpose.msra.mxu0 0.0
        %7615 = vmatprep.subr.mxu0 0.0
        %7616 = vmatpush1.xpose.msra.mxu0 0.0
        %7617 = vmatprep.subr.mxu0 0.0
        %7618 = vmatpush1.xpose.msra.mxu0 0.0
        %7619 = vmatprep.subr.mxu0 0.0
        %7620 = vmatpush1.xpose.msra.mxu0 0.0
        %7621 = vmatprep.subr.mxu0 0.0
        %7622 = vmatpush1.xpose.msra.mxu0 0.0
        %7623 = vmatprep.subr.mxu0 0.0
        %7624 = vmatpush1.xpose.msra.mxu0 0.0
        %7625 = vmatprep.subr.mxu0 0.0
        %7626 = vmatpush1.xpose.msra.mxu0 0.0
        %7627 = vmatprep.subr.mxu0 0.0
        %7628 = vmatpush1.xpose.msra.mxu0 0.0
        %7629 = vmatprep.subr.mxu0 0.0
        %7630 = vmatpush1.xpose.msra.mxu0 0.0
        %7631 = vmatprep.subr.mxu0 0.0
        %7632 = vmatpush1.xpose.msra.mxu0 0.0
        %7633 = vmatprep.subr.mxu0 0.0
        %7634 = vmatpush1.xpose.msra.mxu0 0.0
        %7635 = vmatprep.subr.mxu0 0.0
        %7636 = vmatpush1.xpose.msra.mxu0 0.0
        %7637 = vmatprep.subr.mxu0 0.0
        %7638 = vmatpush1.xpose.msra.mxu0 0.0
        %7639 = vmatprep.subr.mxu0 0.0
        %7640 = vmatpush1.xpose.msra.mxu0 0.0
        %7641 = vmatprep.subr.mxu0 0.0
        %7642 = vmatpush1.xpose.msra.mxu0 0.0
        %7643 = vmatprep.subr.mxu0 0.0
        %7644 = vmatpush1.xpose.msra.mxu0 0.0
        %7645 = vmatprep.subr.mxu0 0.0
        %7646 = vmatpush1.xpose.msra.mxu0 0.0
        %7647 = vmatprep.subr.mxu0 0.0
        %7648 = vmatpush1.xpose.msra.mxu0 0.0
        %7649 = vmatprep.subr.mxu0 0.0
        %7650 = vmatpush1.xpose.msra.mxu0 0.0
        %7651 = vmatprep.subr.mxu0 0.0
        %7652 = vmatpush1.xpose.msra.mxu0 0.0
        %7653 = vmatprep.subr.mxu0 0.0
        %7654 = vmatpush1.xpose.msra.mxu0 0.0
        %7655 = vmatprep.subr.mxu0 0.0
        %7656 = vmatpush1.xpose.msra.mxu0 0.0
        %7657 = vmatprep.subr.mxu0 0.0
        %7658 = vmatpush1.xpose.msra.mxu0 0.0
        %7659 = vmatprep.subr.mxu0 0.0
        %7660 = vmatpush1.xpose.msra.mxu0 0.0
        %7661 = vmatprep.subr.mxu0 0.0
        %7662 = vmatpush1.xpose.msra.mxu0 0.0
        %7663 = vmatprep.subr.mxu0 0.0
        %7664 = vmatpush1.xpose.msra.mxu0 0.0
        %7665 = vmatprep.subr.mxu0 0.0
        %7666 = vmatpush1.xpose.msra.mxu0 0.0
        %7667 = vmatprep.subr.mxu0 0.0
        %7668 = vmatpush1.xpose.msra.mxu0 0.0
        %7669 = vmatprep.subr.mxu0 0.0
        %7670 = vmatpush1.xpose.msra.mxu0 0.0
        %7671 = vmatprep.subr.mxu0 0.0
        %7672 = vmatpush1.xpose.msra.mxu0 0.0
        %7673 = vmatprep.mubr.f32.mxu0 0.0
        %7674 = vmatmul.mubr.f32.gmra.mrb[0].mxu0 %v7605
        %v7675 = vpop.f32.mrb[0].mxu0
        %v7676 = vadd.f32 0.0, %v7675
        %v7677 = vpop.f32.mrb[0].mxu0
        %7678 = vdwg.mxu0
        %v7679 = vmul.f32 %v7454, 0.17677669
        %v7680 = vmul.f32 %v7528, 0.17677669
        %v7681 = vmul.f32 %v7602, 0.17677669
        %v7682 = vmul.f32 %v7676, 0.17677669
        %v7683 = vsel %vm3563, %v7679, -inf
        %7684 = vmax.xlane.f32.xlu0 %v7683
        %v7685 = vpop.xlane.xlu0 %7684
        %v7686 = vsel %vm3563, %v7680, -inf
        %7687 = vmax.xlane.f32.xlu0 %v7686
        %v7688 = vpop.xlane.xlu0 %7687
        %v7689 = vsel %vm3563, %v7681, -inf
        %7690 = vmax.xlane.f32.xlu0 %v7689
        %v7691 = vpop.xlane.xlu0 %7690
        %v7692 = vsel %vm3563, %v7682, -inf
        %7693 = vmax.xlane.f32.xlu0 %v7692
        %v7694 = vpop.xlane.xlu0 %7693
        %v7695 = vsub.f32 %v7679, %v7685
        %v7696 = vsub.f32 %v7680, %v7688
        %v7697 = vsub.f32 %v7681, %v7691
        %v7698 = vsub.f32 %v7682, %v7694
        %v7699 = vmul.f32 %v7695, 1.442695
        %v7700 = vpow.pop %v7699
        %v7701 = vmul.f32 %v7696, 1.442695
        %v7702 = vpow.pop %v7701
        %v7703 = vmul.f32 %v7697, 1.442695
        %v7704 = vpow.pop %v7703
        %v7705 = vmul.f32 %v7698, 1.442695
        %v7706 = vpow.pop %v7705
        %v7707 = vsel %vm3563, %v7700, 0.0
        %7708 = vadd.xlane.f32.xlu0 %v7707
        %v7709 = vpop.xlane.xlu0 %7708
        %v7710 = vsel %vm3563, %v7702, 0.0
        %7711 = vadd.xlane.f32.xlu0 %v7710
        %v7712 = vpop.xlane.xlu0 %7711
        %v7713 = vsel %vm3563, %v7704, 0.0
        %7714 = vadd.xlane.f32.xlu0 %v7713
        %v7715 = vpop.xlane.xlu0 %7714
        %v7716 = vsel %vm3563, %v7706, 0.0
        %7717 = vadd.xlane.f32.xlu0 %v7716
        %v7718 = vpop.xlane.xlu0 %7717
        %v7719 = vrcp.pop %v7709
        %v7720 = vrcp.pop %v7712
        %v7721 = vrcp.pop %v7715
        %v7722 = vrcp.pop %v7718
        %v7723 = vmul.f32 %v7700, %v7719
        %v7724 = vmul.f32 %v7702, %v7720
        %v7725 = vmul.f32 %v7704, %v7721
        %v7726 = vmul.f32 %v7706, %v7722
        %v7728 = vsel %vm3608, %v7723, 0
        %v7730 = vsel %vm2057, %v7359, 0
        %7732 = vmatprep.subr.mxu0 0.0
        %7733 = vmatpush1.msra.mxu0 %v7730
        %7734 = vmatprep.subr.mxu0 0.0
        %7735 = vmatpush1.msra.mxu0 0.0
        %7736 = vmatprep.subr.mxu0 0.0
        %7737 = vmatpush1.msra.mxu0 0.0
        %7738 = vmatprep.subr.mxu0 0.0
        %7739 = vmatpush1.msra.mxu0 0.0
        %7740 = vmatprep.subr.mxu0 0.0
        %7741 = vmatpush1.msra.mxu0 0.0
        %7742 = vmatprep.subr.mxu0 0.0
        %7743 = vmatpush1.msra.mxu0 0.0
        %7744 = vmatprep.subr.mxu0 0.0
        %7745 = vmatpush1.msra.mxu0 0.0
        %7746 = vmatprep.subr.mxu0 0.0
        %7747 = vmatpush1.msra.mxu0 0.0
        %7748 = vmatprep.subr.mxu0 0.0
        %7749 = vmatpush1.msra.mxu0 0.0
        %7750 = vmatprep.subr.mxu0 0.0
        %7751 = vmatpush1.msra.mxu0 0.0
        %7752 = vmatprep.subr.mxu0 0.0
        %7753 = vmatpush1.msra.mxu0 0.0
        %7754 = vmatprep.subr.mxu0 0.0
        %7755 = vmatpush1.msra.mxu0 0.0
        %7756 = vmatprep.subr.mxu0 0.0
        %7757 = vmatpush1.msra.mxu0 0.0
        %7758 = vmatprep.subr.mxu0 0.0
        %7759 = vmatpush1.msra.mxu0 0.0
        %7760 = vmatprep.subr.mxu0 0.0
        %7761 = vmatpush1.msra.mxu0 0.0
        %7762 = vmatprep.subr.mxu0 0.0
        %7763 = vmatpush1.msra.mxu0 0.0
        %7764 = vmatprep.subr.mxu0 0.0
        %7765 = vmatpush1.msra.mxu0 0.0
        %7766 = vmatprep.subr.mxu0 0.0
        %7767 = vmatpush1.msra.mxu0 0.0
        %7768 = vmatprep.subr.mxu0 0.0
        %7769 = vmatpush1.msra.mxu0 0.0
        %7770 = vmatprep.subr.mxu0 0.0
        %7771 = vmatpush1.msra.mxu0 0.0
        %7772 = vmatprep.subr.mxu0 0.0
        %7773 = vmatpush1.msra.mxu0 0.0
        %7774 = vmatprep.subr.mxu0 0.0
        %7775 = vmatpush1.msra.mxu0 0.0
        %7776 = vmatprep.subr.mxu0 0.0
        %7777 = vmatpush1.msra.mxu0 0.0
        %7778 = vmatprep.subr.mxu0 0.0
        %7779 = vmatpush1.msra.mxu0 0.0
        %7780 = vmatprep.subr.mxu0 0.0
        %7781 = vmatpush1.msra.mxu0 0.0
        %7782 = vmatprep.subr.mxu0 0.0
        %7783 = vmatpush1.msra.mxu0 0.0
        %7784 = vmatprep.subr.mxu0 0.0
        %7785 = vmatpush1.msra.mxu0 0.0
        %7786 = vmatprep.subr.mxu0 0.0
        %7787 = vmatpush1.msra.mxu0 0.0
        %7788 = vmatprep.subr.mxu0 0.0
        %7789 = vmatpush1.msra.mxu0 0.0
        %7790 = vmatprep.subr.mxu0 0.0
        %7791 = vmatpush1.msra.mxu0 0.0
        %7792 = vmatprep.subr.mxu0 0.0
        %7793 = vmatpush1.msra.mxu0 0.0
        %7794 = vmatprep.subr.mxu0 0.0
        %7795 = vmatpush1.msra.mxu0 0.0
        %7796 = vmatprep.mubr.f32.mxu0 0.0
        %7797 = vmatmul.mubr.f32.gmra.mrb[0].mxu0 %v7728
        %v7798 = vpop.f32.mrb[0].mxu0
        %v7799 = vadd.f32 0.0, %v7798
        %v7800 = vpop.f32.mrb[0].mxu0
        %7801 = vdwg.mxu0
        %v7803 = vsel %vm3608, %v7724, 0
        %v7805 = vsel %vm2057, %v7378, 0
        %7807 = vmatprep.subr.mxu0 0.0
        %7808 = vmatpush1.msra.mxu0 %v7805
        %7809 = vmatprep.subr.mxu0 0.0
        %7810 = vmatpush1.msra.mxu0 0.0
        %7811 = vmatprep.subr.mxu0 0.0
        %7812 = vmatpush1.msra.mxu0 0.0
        %7813 = vmatprep.subr.mxu0 0.0
        %7814 = vmatpush1.msra.mxu0 0.0
        %7815 = vmatprep.subr.mxu0 0.0
        %7816 = vmatpush1.msra.mxu0 0.0
        %7817 = vmatprep.subr.mxu0 0.0
        %7818 = vmatpush1.msra.mxu0 0.0
        %7819 = vmatprep.subr.mxu0 0.0
        %7820 = vmatpush1.msra.mxu0 0.0
        %7821 = vmatprep.subr.mxu0 0.0
        %7822 = vmatpush1.msra.mxu0 0.0
        %7823 = vmatprep.subr.mxu0 0.0
        %7824 = vmatpush1.msra.mxu0 0.0
        %7825 = vmatprep.subr.mxu0 0.0
        %7826 = vmatpush1.msra.mxu0 0.0
        %7827 = vmatprep.subr.mxu0 0.0
        %7828 = vmatpush1.msra.mxu0 0.0
        %7829 = vmatprep.subr.mxu0 0.0
        %7830 = vmatpush1.msra.mxu0 0.0
        %7831 = vmatprep.subr.mxu0 0.0
        %7832 = vmatpush1.msra.mxu0 0.0
        %7833 = vmatprep.subr.mxu0 0.0
        %7834 = vmatpush1.msra.mxu0 0.0
        %7835 = vmatprep.subr.mxu0 0.0
        %7836 = vmatpush1.msra.mxu0 0.0
        %7837 = vmatprep.subr.mxu0 0.0
        %7838 = vmatpush1.msra.mxu0 0.0
        %7839 = vmatprep.subr.mxu0 0.0
        %7840 = vmatpush1.msra.mxu0 0.0
        %7841 = vmatprep.subr.mxu0 0.0
        %7842 = vmatpush1.msra.mxu0 0.0
        %7843 = vmatprep.subr.mxu0 0.0
        %7844 = vmatpush1.msra.mxu0 0.0
        %7845 = vmatprep.subr.mxu0 0.0
        %7846 = vmatpush1.msra.mxu0 0.0
        %7847 = vmatprep.subr.mxu0 0.0
        %7848 = vmatpush1.msra.mxu0 0.0
        %7849 = vmatprep.subr.mxu0 0.0
        %7850 = vmatpush1.msra.mxu0 0.0
        %7851 = vmatprep.subr.mxu0 0.0
        %7852 = vmatpush1.msra.mxu0 0.0
        %7853 = vmatprep.subr.mxu0 0.0
        %7854 = vmatpush1.msra.mxu0 0.0
        %7855 = vmatprep.subr.mxu0 0.0
        %7856 = vmatpush1.msra.mxu0 0.0
        %7857 = vmatprep.subr.mxu0 0.0
        %7858 = vmatpush1.msra.mxu0 0.0
        %7859 = vmatprep.subr.mxu0 0.0
        %7860 = vmatpush1.msra.mxu0 0.0
        %7861 = vmatprep.subr.mxu0 0.0
        %7862 = vmatpush1.msra.mxu0 0.0
        %7863 = vmatprep.subr.mxu0 0.0
        %7864 = vmatpush1.msra.mxu0 0.0
        %7865 = vmatprep.subr.mxu0 0.0
        %7866 = vmatpush1.msra.mxu0 0.0
        %7867 = vmatprep.subr.mxu0 0.0
        %7868 = vmatpush1.msra.mxu0 0.0
        %7869 = vmatprep.subr.mxu0 0.0
        %7870 = vmatpush1.msra.mxu0 0.0
        %7871 = vmatprep.mubr.f32.mxu0 0.0
        %7872 = vmatmul.mubr.f32.gmra.mrb[0].mxu0 %v7803
        %v7873 = vpop.f32.mrb[0].mxu0
        %v7874 = vadd.f32 0.0, %v7873
        %v7875 = vpop.f32.mrb[0].mxu0
        %7876 = vdwg.mxu0
        %v7878 = vsel %vm3608, %v7725, 0
        %v7880 = vsel %vm2057, %v7380, 0
        %7882 = vmatprep.subr.mxu0 0.0
        %7883 = vmatpush1.msra.mxu0 %v7880
        %7884 = vmatprep.subr.mxu0 0.0
        %7885 = vmatpush1.msra.mxu0 0.0
        %7886 = vmatprep.subr.mxu0 0.0
        %7887 = vmatpush1.msra.mxu0 0.0
        %7888 = vmatprep.subr.mxu0 0.0
        %7889 = vmatpush1.msra.mxu0 0.0
        %7890 = vmatprep.subr.mxu0 0.0
        %7891 = vmatpush1.msra.mxu0 0.0
        %7892 = vmatprep.subr.mxu0 0.0
        %7893 = vmatpush1.msra.mxu0 0.0
        %7894 = vmatprep.subr.mxu0 0.0
        %7895 = vmatpush1.msra.mxu0 0.0
        %7896 = vmatprep.subr.mxu0 0.0
        %7897 = vmatpush1.msra.mxu0 0.0
        %7898 = vmatprep.subr.mxu0 0.0
        %7899 = vmatpush1.msra.mxu0 0.0
        %7900 = vmatprep.subr.mxu0 0.0
        %7901 = vmatpush1.msra.mxu0 0.0
        %7902 = vmatprep.subr.mxu0 0.0
        %7903 = vmatpush1.msra.mxu0 0.0
        %7904 = vmatprep.subr.mxu0 0.0
        %7905 = vmatpush1.msra.mxu0 0.0
        %7906 = vmatprep.subr.mxu0 0.0
        %7907 = vmatpush1.msra.mxu0 0.0
        %7908 = vmatprep.subr.mxu0 0.0
        %7909 = vmatpush1.msra.mxu0 0.0
        %7910 = vmatprep.subr.mxu0 0.0
        %7911 = vmatpush1.msra.mxu0 0.0
        %7912 = vmatprep.subr.mxu0 0.0
        %7913 = vmatpush1.msra.mxu0 0.0
        %7914 = vmatprep.subr.mxu0 0.0
        %7915 = vmatpush1.msra.mxu0 0.0
        %7916 = vmatprep.subr.mxu0 0.0
        %7917 = vmatpush1.msra.mxu0 0.0
        %7918 = vmatprep.subr.mxu0 0.0
        %7919 = vmatpush1.msra.mxu0 0.0
        %7920 = vmatprep.subr.mxu0 0.0
        %7921 = vmatpush1.msra.mxu0 0.0
        %7922 = vmatprep.subr.mxu0 0.0
        %7923 = vmatpush1.msra.mxu0 0.0
        %7924 = vmatprep.subr.mxu0 0.0
        %7925 = vmatpush1.msra.mxu0 0.0
        %7926 = vmatprep.subr.mxu0 0.0
        %7927 = vmatpush1.msra.mxu0 0.0
        %7928 = vmatprep.subr.mxu0 0.0
        %7929 = vmatpush1.msra.mxu0 0.0
        %7930 = vmatprep.subr.mxu0 0.0
        %7931 = vmatpush1.msra.mxu0 0.0
        %7932 = vmatprep.subr.mxu0 0.0
        %7933 = vmatpush1.msra.mxu0 0.0
        %7934 = vmatprep.subr.mxu0 0.0
        %7935 = vmatpush1.msra.mxu0 0.0
        %7936 = vmatprep.subr.mxu0 0.0
        %7937 = vmatpush1.msra.mxu0 0.0
        %7938 = vmatprep.subr.mxu0 0.0
        %7939 = vmatpush1.msra.mxu0 0.0
        %7940 = vmatprep.subr.mxu0 0.0
        %7941 = vmatpush1.msra.mxu0 0.0
        %7942 = vmatprep.subr.mxu0 0.0
        %7943 = vmatpush1.msra.mxu0 0.0
        %7944 = vmatprep.subr.mxu0 0.0
        %7945 = vmatpush1.msra.mxu0 0.0
        %7946 = vmatprep.mubr.f32.mxu0 0.0
        %7947 = vmatmul.mubr.f32.gmra.mrb[0].mxu0 %v7878
        %v7948 = vpop.f32.mrb[0].mxu0
        %v7949 = vadd.f32 0.0, %v7948
        %v7950 = vpop.f32.mrb[0].mxu0
        %7951 = vdwg.mxu0
        %v7953 = vsel %vm3608, %v7726, 0
        %v7955 = vsel %vm2057, %v7382, 0
        %7957 = vmatprep.subr.mxu0 0.0
        %7958 = vmatpush1.msra.mxu0 %v7955
        %7959 = vmatprep.subr.mxu0 0.0
        %7960 = vmatpush1.msra.mxu0 0.0
        %7961 = vmatprep.subr.mxu0 0.0
        %7962 = vmatpush1.msra.mxu0 0.0
        %7963 = vmatprep.subr.mxu0 0.0
        %7964 = vmatpush1.msra.mxu0 0.0
        %7965 = vmatprep.subr.mxu0 0.0
        %7966 = vmatpush1.msra.mxu0 0.0
        %7967 = vmatprep.subr.mxu0 0.0
        %7968 = vmatpush1.msra.mxu0 0.0
        %7969 = vmatprep.subr.mxu0 0.0
        %7970 = vmatpush1.msra.mxu0 0.0
        %7971 = vmatprep.subr.mxu0 0.0
        %7972 = vmatpush1.msra.mxu0 0.0
        %7973 = vmatprep.subr.mxu0 0.0
        %7974 = vmatpush1.msra.mxu0 0.0
        %7975 = vmatprep.subr.mxu0 0.0
        %7976 = vmatpush1.msra.mxu0 0.0
        %7977 = vmatprep.subr.mxu0 0.0
        %7978 = vmatpush1.msra.mxu0 0.0
        %7979 = vmatprep.subr.mxu0 0.0
        %7980 = vmatpush1.msra.mxu0 0.0
        %7981 = vmatprep.subr.mxu0 0.0
        %7982 = vmatpush1.msra.mxu0 0.0
        %7983 = vmatprep.subr.mxu0 0.0
        %7984 = vmatpush1.msra.mxu0 0.0
        %7985 = vmatprep.subr.mxu0 0.0
        %7986 = vmatpush1.msra.mxu0 0.0
        %7987 = vmatprep.subr.mxu0 0.0
        %7988 = vmatpush1.msra.mxu0 0.0
        %7989 = vmatprep.subr.mxu0 0.0
        %7990 = vmatpush1.msra.mxu0 0.0
        %7991 = vmatprep.subr.mxu0 0.0
        %7992 = vmatpush1.msra.mxu0 0.0
        %7993 = vmatprep.subr.mxu0 0.0
        %7994 = vmatpush1.msra.mxu0 0.0
        %7995 = vmatprep.subr.mxu0 0.0
        %7996 = vmatpush1.msra.mxu0 0.0
        %7997 = vmatprep.subr.mxu0 0.0
        %7998 = vmatpush1.msra.mxu0 0.0
        %7999 = vmatprep.subr.mxu0 0.0
        %8000 = vmatpush1.msra.mxu0 0.0
        %8001 = vmatprep.subr.mxu0 0.0
        %8002 = vmatpush1.msra.mxu0 0.0
        %8003 = vmatprep.subr.mxu0 0.0
        %8004 = vmatpush1.msra.mxu0 0.0
        %8005 = vmatprep.subr.mxu0 0.0
        %8006 = vmatpush1.msra.mxu0 0.0
        %8007 = vmatprep.subr.mxu0 0.0
        %8008 = vmatpush1.msra.mxu0 0.0
        %8009 = vmatprep.subr.mxu0 0.0
        %8010 = vmatpush1.msra.mxu0 0.0
        %8011 = vmatprep.subr.mxu0 0.0
        %8012 = vmatpush1.msra.mxu0 0.0
        %8013 = vmatprep.subr.mxu0 0.0
        %8014 = vmatpush1.msra.mxu0 0.0
        %8015 = vmatprep.subr.mxu0 0.0
        %8016 = vmatpush1.msra.mxu0 0.0
        %8017 = vmatprep.subr.mxu0 0.0
        %8018 = vmatpush1.msra.mxu0 0.0
        %8019 = vmatprep.subr.mxu0 0.0
        %8020 = vmatpush1.msra.mxu0 0.0
        %8021 = vmatprep.mubr.f32.mxu0 0.0
        %8022 = vmatmul.mubr.f32.gmra.mrb[0].mxu0 %v7953
        %v8023 = vpop.f32.mrb[0].mxu0
        %v8024 = vadd.f32 0.0, %v8023
        %v8025 = vpop.f32.mrb[0].mxu0
        %8026 = vdwg.mxu0
        %8028 = vrot.lane.b32.xlu0 %v7874, 32
        %v8029 = vpop.permute.xlu0 %8028
        %8032 = vrot.lane.b32.xlu0 %v7949, 64
        %v8033 = vpop.permute.xlu0 %8032
        %8036 = vrot.lane.b32.xlu0 %v8024, 96
        %v8037 = vpop.permute.xlu0 %8036
        %v8039 = vsel %vm2864, %v7799, %v8029
        %v8040 = vsel %vm2872, %v8039, %v8033
        %v8041 = vsel %vm2880, %v8040, %v8037
        %8042 = vmatprep.subr.mxu0 0.0
        %8043 = vmatpush1.msra.mxu0 %v7136
        %8044 = vmatprep.subr.mxu0 0.0
        %8045 = vmatpush1.msra.mxu0 %v7137
        %8046 = vmatprep.subr.mxu0 0.0
        %8047 = vmatpush1.msra.mxu0 %v7138
        %8048 = vmatprep.subr.mxu0 0.0
        %8049 = vmatpush1.msra.mxu0 %v7139
        %8050 = vmatprep.subr.mxu0 0.0
        %8051 = vmatpush1.msra.mxu0 %v7140
        %8052 = vmatprep.subr.mxu0 0.0
        %8053 = vmatpush1.msra.mxu0 %v7141
        %8054 = vmatprep.subr.mxu0 0.0
        %8055 = vmatpush1.msra.mxu0 %v7142
        %8056 = vmatprep.subr.mxu0 0.0
        %8057 = vmatpush1.msra.mxu0 %v7143
        %8058 = vmatprep.subr.mxu0 0.0
        %8059 = vmatpush1.msra.mxu0 %v7144
        %8060 = vmatprep.subr.mxu0 0.0
        %8061 = vmatpush1.msra.mxu0 %v7145
        %8062 = vmatprep.subr.mxu0 0.0
        %8063 = vmatpush1.msra.mxu0 %v7146
        %8064 = vmatprep.subr.mxu0 0.0
        %8065 = vmatpush1.msra.mxu0 %v7147
        %8066 = vmatprep.subr.mxu0 0.0
        %8067 = vmatpush1.msra.mxu0 %v7148
        %8068 = vmatprep.subr.mxu0 0.0
        %8069 = vmatpush1.msra.mxu0 %v7149
        %8070 = vmatprep.subr.mxu0 0.0
        %8071 = vmatpush1.msra.mxu0 %v7150
        %8072 = vmatprep.subr.mxu0 0.0
        %8073 = vmatpush1.msra.mxu0 %v7151
        %8074 = vmatprep.subr.mxu0 0.0
        %8075 = vmatpush1.msra.mxu0 0.0
        %8076 = vmatprep.subr.mxu0 0.0
        %8077 = vmatpush1.msra.mxu0 0.0
        %8078 = vmatprep.subr.mxu0 0.0
        %8079 = vmatpush1.msra.mxu0 0.0
        %8080 = vmatprep.subr.mxu0 0.0
        %8081 = vmatpush1.msra.mxu0 0.0
        %8082 = vmatprep.subr.mxu0 0.0
        %8083 = vmatpush1.msra.mxu0 0.0
        %8084 = vmatprep.subr.mxu0 0.0
        %8085 = vmatpush1.msra.mxu0 0.0
        %8086 = vmatprep.subr.mxu0 0.0
        %8087 = vmatpush1.msra.mxu0 0.0
        %8088 = vmatprep.subr.mxu0 0.0
        %8089 = vmatpush1.msra.mxu0 0.0
        %8090 = vmatprep.subr.mxu0 0.0
        %8091 = vmatpush1.msra.mxu0 0.0
        %8092 = vmatprep.subr.mxu0 0.0
        %8093 = vmatpush1.msra.mxu0 0.0
        %8094 = vmatprep.subr.mxu0 0.0
        %8095 = vmatpush1.msra.mxu0 0.0
        %8096 = vmatprep.subr.mxu0 0.0
        %8097 = vmatpush1.msra.mxu0 0.0
        %8098 = vmatprep.subr.mxu0 0.0
        %8099 = vmatpush1.msra.mxu0 0.0
        %8100 = vmatprep.subr.mxu0 0.0
        %8101 = vmatpush1.msra.mxu0 0.0
        %8102 = vmatprep.subr.mxu0 0.0
        %8103 = vmatpush1.msra.mxu0 0.0
        %8104 = vmatprep.subr.mxu0 0.0
        %8105 = vmatpush1.msra.mxu0 0.0
        %8106 = vmatprep.mubr.f32.mxu0 0.0
        %8107 = vmatmul.mubr.f32.gmra.mrb[0].mxu0 %v8041
        %v8108 = vpop.f32.mrb[0].mxu0
        %v8109 = vadd.f32 0.0, %v8108
        %v8110 = vpop.f32.mrb[0].mxu0
        %8111 = vdwg.mxu0
        %v8113 = vrot.slane %v5022, 4
        %v8116 = vrot.slane %v7081, 4
        %v8118 = vsel %vm2057, %v3991, %v8113
        %v8119 = vsel %vm2057, %v6050, %v8116
        %v8121 = vlaneseq
        %v8122 = vshrl.u32 %v8121, 7
        %v8123 = vsub.s32 0, %v8122
        %v8124 = vrot.slane %v567, %v8123
        %8126 = vmatprep.subr.mxu0 0.0
        %8127 = vmatpush1.msra.mxu0 %v551
        %8128 = vmatprep.subr.mxu0 0.0
        %8129 = vmatpush1.msra.mxu0 %v552
        %8130 = vmatprep.subr.mxu0 0.0
        %8131 = vmatpush1.msra.mxu0 %v553
        %8132 = vmatprep.subr.mxu0 0.0
        %8133 = vmatpush1.msra.mxu0 %v554
        %8134 = vmatprep.subr.mxu0 0.0
        %8135 = vmatpush1.msra.mxu0 %v555
        %8136 = vmatprep.subr.mxu0 0.0
        %8137 = vmatpush1.msra.mxu0 %v556
        %8138 = vmatprep.subr.mxu0 0.0
        %8139 = vmatpush1.msra.mxu0 %v557
        %8140 = vmatprep.subr.mxu0 0.0
        %8141 = vmatpush1.msra.mxu0 %v558
        %8142 = vmatprep.subr.mxu0 0.0
        %8143 = vmatpush1.msra.mxu0 %v559
        %8144 = vmatprep.subr.mxu0 0.0
        %8145 = vmatpush1.msra.mxu0 %v560
        %8146 = vmatprep.subr.mxu0 0.0
        %8147 = vmatpush1.msra.mxu0 %v561
        %8148 = vmatprep.subr.mxu0 0.0
        %8149 = vmatpush1.msra.mxu0 %v562
        %8150 = vmatprep.subr.mxu0 0.0
        %8151 = vmatpush1.msra.mxu0 %v563
        %8152 = vmatprep.subr.mxu0 0.0
        %8153 = vmatpush1.msra.mxu0 %v564
        %8154 = vmatprep.subr.mxu0 0.0
        %8155 = vmatpush1.msra.mxu0 %v565
        %8156 = vmatprep.subr.mxu0 0.0
        %8157 = vmatpush1.msra.mxu0 %v566
        %8158 = vmatprep.subr.mxu0 0.0
        %8159 = vmatpush1.msra.mxu0 0.0
        %8160 = vmatprep.subr.mxu0 0.0
        %8161 = vmatpush1.msra.mxu0 0.0
        %8162 = vmatprep.subr.mxu0 0.0
        %8163 = vmatpush1.msra.mxu0 0.0
        %8164 = vmatprep.subr.mxu0 0.0
        %8165 = vmatpush1.msra.mxu0 0.0
        %8166 = vmatprep.subr.mxu0 0.0
        %8167 = vmatpush1.msra.mxu0 0.0
        %8168 = vmatprep.subr.mxu0 0.0
        %8169 = vmatpush1.msra.mxu0 0.0
        %8170 = vmatprep.subr.mxu0 0.0
        %8171 = vmatpush1.msra.mxu0 0.0
        %8172 = vmatprep.subr.mxu0 0.0
        %8173 = vmatpush1.msra.mxu0 0.0
        %8174 = vmatprep.subr.mxu0 0.0
        %8175 = vmatpush1.msra.mxu0 0.0
        %8176 = vmatprep.subr.mxu0 0.0
        %8177 = vmatpush1.msra.mxu0 0.0
        %8178 = vmatprep.subr.mxu0 0.0
        %8179 = vmatpush1.msra.mxu0 0.0
        %8180 = vmatprep.subr.mxu0 0.0
        %8181 = vmatpush1.msra.mxu0 0.0
        %8182 = vmatprep.subr.mxu0 0.0
        %8183 = vmatpush1.msra.mxu0 0.0
        %8184 = vmatprep.subr.mxu0 0.0
        %8185 = vmatpush1.msra.mxu0 0.0
        %8186 = vmatprep.subr.mxu0 0.0
        %8187 = vmatpush1.msra.mxu0 0.0
        %8188 = vmatprep.subr.mxu0 0.0
        %8189 = vmatpush1.msra.mxu0 0.0
        %8190 = vmatprep.mubr.f32.mxu0 0.0
        %8191 = vmatmul.mubr.f32.gmra.mrb[0].mxu0 %v2955
        %v8192 = vpop.f32.mrb[0].mxu0
        %v8193 = vadd.f32 %v8124, %v8192
        %v8194 = vpop.f32.mrb[0].mxu0
        %8195 = vmatprep.mubr.f32.mxu0 0.0
        %8196 = vmatmul.mubr.f32.gmra.mrb[0].mxu0 %v2960
        %v8197 = vpop.f32.mrb[0].mxu0
        %v8198 = vadd.f32 %v8124, %v8197
        %v8199 = vpop.f32.mrb[0].mxu0
        %8200 = vmatprep.mubr.f32.mxu0 0.0
        %8201 = vmatmul.mubr.f32.gmra.mrb[0].mxu0 %v2965
        %v8202 = vpop.f32.mrb[0].mxu0
        %v8203 = vadd.f32 %v8124, %v8202
        %v8204 = vpop.f32.mrb[0].mxu0
        %8205 = vdwg.mxu0
        %v8206 = vmax.f32 %v8193, 0.0
        %v8207 = vmax.f32 %v8198, 0.0
        %v8208 = vmax.f32 %v8203, 0.0
        %8209 = vmatprep.subr.mxu0 0.0
        %8210 = vmatpush1.msra.mxu0 %v551
        %8211 = vmatprep.subr.mxu0 0.0
        %8212 = vmatpush1.msra.mxu0 %v552
        %8213 = vmatprep.subr.mxu0 0.0
        %8214 = vmatpush1.msra.mxu0 %v553
        %8215 = vmatprep.subr.mxu0 0.0
        %8216 = vmatpush1.msra.mxu0 %v554
        %8217 = vmatprep.subr.mxu0 0.0
        %8218 = vmatpush1.msra.mxu0 %v555
        %8219 = vmatprep.subr.mxu0 0.0
        %8220 = vmatpush1.msra.mxu0 %v556
        %8221 = vmatprep.subr.mxu0 0.0
        %8222 = vmatpush1.msra.mxu0 %v557
        %8223 = vmatprep.subr.mxu0 0.0
        %8224 = vmatpush1.msra.mxu0 %v558
        %8225 = vmatprep.subr.mxu0 0.0
        %8226 = vmatpush1.msra.mxu0 %v559
        %8227 = vmatprep.subr.mxu0 0.0
        %8228 = vmatpush1.msra.mxu0 %v560
        %8229 = vmatprep.subr.mxu0 0.0
        %8230 = vmatpush1.msra.mxu0 %v561
        %8231 = vmatprep.subr.mxu0 0.0
        %8232 = vmatpush1.msra.mxu0 %v562
        %8233 = vmatprep.subr.mxu0 0.0
        %8234 = vmatpush1.msra.mxu0 %v563
        %8235 = vmatprep.subr.mxu0 0.0
        %8236 = vmatpush1.msra.mxu0 %v564
        %8237 = vmatprep.subr.mxu0 0.0
        %8238 = vmatpush1.msra.mxu0 %v565
        %8239 = vmatprep.subr.mxu0 0.0
        %8240 = vmatpush1.msra.mxu0 %v566
        %8241 = vmatprep.subr.mxu0 0.0
        %8242 = vmatpush1.msra.mxu0 0.0
        %8243 = vmatprep.subr.mxu0 0.0
        %8244 = vmatpush1.msra.mxu0 0.0
        %8245 = vmatprep.subr.mxu0 0.0
        %8246 = vmatpush1.msra.mxu0 0.0
        %8247 = vmatprep.subr.mxu0 0.0
        %8248 = vmatpush1.msra.mxu0 0.0
        %8249 = vmatprep.subr.mxu0 0.0
        %8250 = vmatpush1.msra.mxu0 0.0
        %8251 = vmatprep.subr.mxu0 0.0
        %8252 = vmatpush1.msra.mxu0 0.0
        %8253 = vmatprep.subr.mxu0 0.0
        %8254 = vmatpush1.msra.mxu0 0.0
        %8255 = vmatprep.subr.mxu0 0.0
        %8256 = vmatpush1.msra.mxu0 0.0
        %8257 = vmatprep.subr.mxu0 0.0
        %8258 = vmatpush1.msra.mxu0 0.0
        %8259 = vmatprep.subr.mxu0 0.0
        %8260 = vmatpush1.msra.mxu0 0.0
        %8261 = vmatprep.subr.mxu0 0.0
        %8262 = vmatpush1.msra.mxu0 0.0
        %8263 = vmatprep.subr.mxu0 0.0
        %8264 = vmatpush1.msra.mxu0 0.0
        %8265 = vmatprep.subr.mxu0 0.0
        %8266 = vmatpush1.msra.mxu0 0.0
        %8267 = vmatprep.subr.mxu0 0.0
        %8268 = vmatpush1.msra.mxu0 0.0
        %8269 = vmatprep.subr.mxu0 0.0
        %8270 = vmatpush1.msra.mxu0 0.0
        %8271 = vmatprep.subr.mxu0 0.0
        %8272 = vmatpush1.msra.mxu0 0.0
        %8273 = vmatprep.mubr.f32.mxu0 0.0
        %8274 = vmatmul.mubr.f32.gmra.mrb[0].mxu0 %v8118
        %v8275 = vpop.f32.mrb[0].mxu0
        %v8276 = vadd.f32 %v8124, %v8275
        %v8277 = vpop.f32.mrb[0].mxu0
        %8278 = vmatprep.mubr.f32.mxu0 0.0
        %8279 = vmatmul.mubr.f32.gmra.mrb[0].mxu0 %v8119
        %v8280 = vpop.f32.mrb[0].mxu0
        %v8281 = vadd.f32 %v8124, %v8280
        %v8282 = vpop.f32.mrb[0].mxu0
        %8283 = vmatprep.mubr.f32.mxu0 0.0
        %8284 = vmatmul.mubr.f32.gmra.mrb[0].mxu0 %v8109
        %v8285 = vpop.f32.mrb[0].mxu0
        %v8286 = vadd.f32 %v8124, %v8285
        %v8287 = vpop.f32.mrb[0].mxu0
        %8288 = vdwg.mxu0
        %v8289 = vmax.f32 %v8276, 0.0
        %v8290 = vmax.f32 %v8281, 0.0
        %v8291 = vmax.f32 %v8286, 0.0
        %v8292 = vmul.f32 %v8206, %v8206
        %v8293 = vmul.f32 %v8207, %v8207
        %v8294 = vmul.f32 %v8208, %v8208
        %8295 = vadd.xlane.f32.xlu0 %v8292
        %v8296 = vpop.xlane.xlu0 %8295
        %8297 = vadd.xlane.f32.xlu0 %v8293
        %v8298 = vpop.xlane.xlu0 %8297
        %v8299 = vsel %vm2057, %v8294, 0.0
        %8300 = vadd.xlane.f32.xlu0 %v8299
        %v8301 = vpop.xlane.xlu0 %8300
        %v8302 = vmax.f32 %v8296, 1e-24
        %v8303 = vmax.f32 %v8298, 1e-24
        %v8304 = vmax.f32 %v8301, 1e-24
        %v8305 = vrsqrt.pop %v8302
        %v8306 = vrsqrt.pop %v8303
        %v8307 = vrsqrt.pop %v8304
        %v8308 = vmul.f32 %v8206, %v8305
        %v8309 = vmul.f32 %v8207, %v8306
        %v8310 = vmul.f32 %v8208, %v8307
        %v8311 = vmul.f32 %v8289, %v8289
        %v8312 = vmul.f32 %v8290, %v8290
        %v8313 = vmul.f32 %v8291, %v8291
        %8314 = vadd.xlane.f32.xlu0 %v8311
        %v8315 = vpop.xlane.xlu0 %8314
        %8316 = vadd.xlane.f32.xlu0 %v8312
        %v8317 = vpop.xlane.xlu0 %8316
        %v8318 = vsel %vm2057, %v8313, 0.0
        %8319 = vadd.xlane.f32.xlu0 %v8318
        %v8320 = vpop.xlane.xlu0 %8319
        %v8321 = vmax.f32 %v8315, 1e-24
        %v8322 = vmax.f32 %v8317, 1e-24
        %v8323 = vmax.f32 %v8320, 1e-24
        %v8324 = vrsqrt.pop %v8321
        %v8325 = vrsqrt.pop %v8322
        %v8326 = vrsqrt.pop %v8323
        %v8327 = vmul.f32 %v8289, %v8324
        %v8328 = vmul.f32 %v8290, %v8325
        %v8329 = vmul.f32 %v8291, %v8326
        %v8330 = vadd.f32 %v8308, %v8327
        %v8331 = vadd.f32 %v8309, %v8328
        %v8332 = vadd.f32 %v8310, %v8329
        %8333 = vst [vmem:[%s547] sm:$0xff] %v8330
        %8334 = vst [vmem:[%s547 + $0x8] sm:$0xff] %v8331
        %8335 = vst [vmem:[%s547 + $0x10] sm:$0xf] %v8332
        %s8336 = sand.u32 %s277, 1
        %s8337 = scalar_lea.sflag [#allocation4], %s8336
        %s8338 = sand.u32 %s277, 1
        %s8339 = smul.addr %s8338, 24
        %s8340 = scalar_lea.vmem [#allocation20], %s8339
        // Predicated region
        $region109: #{tpu_custom_call.1} parent=63 // pred_check
          %p8341 = pneg %p287
        $region110: #{tpu_custom_call.1} parent=63 // pred_check_branch
          %8343 = sbr.rel (%p8341) target = $region112
        $region111: #{tpu_custom_call.1} parent=63 // pred_region
          %s8345 = ssub.s32 384, 384
          %8346 = vsyncadd %s8337, %s8345
          %s8347 = smul.addr %s33, 3
          %s8348 = smul.addr %s8347, 128
          %s8349 = scalar_lea.hbm %s11, %s8348
          %s8350 = sshll.u32 %s8340, 4
          %s8351 = int_to_ptr.vmem [resolvable:$true] %s8350
          %8356 = dma.vmem_to_hbm [thread:$0]  %s8351, 384, %s8349, %s8337, 128, 128, 8
        $region112: #{tpu_custom_call.1} parent=63 // pred_fallthru
          _
      $region64: #{tpu_custom_call.1} parent=5 // pred_fallthru
        _
      %p8357 = scmp.le.s32.totalorder 2, %s28
      // Predicated region
      $region113: #{tpu_custom_call.1} parent=5 // pred_check
        %p8358 = pneg %p8357
      $region114: #{tpu_custom_call.1} parent=5 // pred_check_branch
        %8360 = sbr.rel (%p8358) target = $region116
      $region115: #{tpu_custom_call.1} parent=5 // pred_region
        %s8361 = ssub.s32 %s28, 2
        // Predicated region
        $region117: #{tpu_custom_call.1} parent=115 // pred_check
          %p8362 = pneg %p293
        $region118: #{tpu_custom_call.1} parent=115 // pred_check_branch
          %8364 = sbr.rel (%p8362) target = $region120
        $region119: #{tpu_custom_call.1} parent=115 // pred_region
          %s8365 = sand.u32 %s278, 1
          %s8366 = scalar_lea.sflag [#allocation4], %s8365
          %s8367 = sand.u32 %s278, 1
          %s8368 = smul.addr %s8367, 24
          %s8369 = scalar_lea.vmem [#allocation20], %s8368
          %8370 = dma.done %s8366, 384
        $region120: #{tpu_custom_call.1} parent=115 // pred_fallthru
          _
      $region116: #{tpu_custom_call.1} parent=5 // pred_fallthru
        _
    $region6: #{tpu_custom_call.1} parent=1 // loop_footer
      %s32 = sadd.s32 1, %s28
    $region7: #{tpu_custom_call.1} parent=1 // loop_footer_branch
      %27 = sbr.rel target = $region3
    $region8: #{tpu_custom_call.1} parent=1 // loop_exit
      _
    %8371 = vsyncpa [#allocation3], 1
    %s8372 = scalar_lea.sflag [#allocation3], 1
    %8373 = vsyncpa %s8372, 1
    %8374 = vsyncpa [#allocation6], 1
    %8375 = vsyncpa [#allocation9], 1
    %8376 = vsyncpa [#allocation12], 1
    %8377 = vsyncpa [#allocation15], 1
    %8378 = vsyncpa [#allocation18], 1
    %8379 = vsyncpa [#allocation4], 1
    %s8380 = scalar_lea.sflag [#allocation4], 1
    %8381 = vsyncpa %s8380, 1

</llo_original>
